<compile_context>
chip_gen: v5e
topology: v5e:2x2
jax: 0.10.0
libtpu: 0.0.40
codegen_flags: <defaults>
</compile_context>

<pallas_src>
import functools

import jax
import jax.numpy as jnp
from jax import lax
from jax.experimental import pallas as pl
from jax.experimental.pallas import tpu as pltpu

BN_EPSILON = 1e-05
BN_MOMENTUM = 0.997  # running-stat momentum only; does not affect the forward value


def _conv_stats_kernel(x_ref, w_ref, y_ref, sum_ref, sumsq_ref, *,
                       KH, KW, stride, H_out, W_out):
    """Phase 1: in-kernel im2col conv (MXU) + single-pass channel moments.

    x_ref     : (NB, stride*stride, Hq, Wq, C_in) bf16  phase-decomposed images
    w_ref     : (KH, KW, C_in, C_out)              bf16  (grid-invariant)
    y_ref     : (NB, C_out, H_out*W_out)           bf16  channel-major writeback
    sum_ref   : (8, C_out) f32 grid-resident accumulator (rows identical)
    sumsq_ref : (8, C_out) f32
    """
    @pl.when(pl.program_id(1) == 0)
    def _():
        sum_ref[...] = jnp.zeros_like(sum_ref)
        sumsq_ref[...] = jnp.zeros_like(sumsq_ref)

    nb = x_ref.shape[0]
    c_in = x_ref.shape[-1]
    hw = H_out * W_out
    rows = nb * hw

    # im2col in VMEM: one small MXU matmul per kernel tap, f32 accumulation.
    acc = None
    for kh in range(KH):
        for kw in range(KW):
            phase = (kh % stride) * stride + (kw % stride)
            oh, ow = kh // stride, kw // stride
            slab = x_ref[:, phase, oh:oh + H_out, ow:ow + W_out, :]
            part = jnp.dot(slab.reshape(rows, c_in), w_ref[kh, kw],
                           preferred_element_type=jnp.float32)
            acc = part if acc is None else acc + part      # (rows, C_out) f32

    # Channel moments from the f32 accumulator (zero batch-padded rows
    # contribute nothing).  The (1, C_out) partials broadcast over the 8
    # sublanes of the aligned accumulator block; the wrapper reads row 0.
    sum_ref[...] += jnp.sum(acc, axis=0, keepdims=True)
    sumsq_ref[...] += jnp.sum(acc * acc, axis=0, keepdims=True)

    # Channel-major bf16 writeback: last dim H_out*W_out stays lane-dense even
    # when C_out < 128, and the final NCHW output needs no XLA transpose.
    # (Per-image 2-D transposes; bf16 cast happens after the f32 transpose.)
    for b in range(nb):
        y_ref[b, :, :] = acc[b * hw:(b + 1) * hw, :].T.astype(y_ref.dtype)


def _bn_relu_kernel(y_ref, scale_ref, shift_ref, out_ref):
    """Phase 2: folded BatchNorm (per-channel scale/shift) + ReLU."""
    y = y_ref[...].astype(jnp.float32)
    out_ref[...] = jnp.maximum(y * scale_ref[...] + shift_ref[...], 0.0)


def _phase_decompose(x_nhwc, stride, padding, n_pad, c_in_p, hq, wq):
    """Zero-pad and reorder (N,H,W,C) -> (N_pad, s*s, Hq, Wq, C_in_p) so every
    kernel tap becomes a unit-stride slice in the kernel, for any stride."""
    n, h, w, c = x_nhwc.shape
    s = stride
    x = jnp.pad(x_nhwc, ((0, n_pad - n),
                         (padding, s * hq - h - padding),
                         (padding, s * wq - w - padding),
                         (0, c_in_p - c)))
    x = x.reshape(n_pad, hq, s, wq, s, c_in_p)
    x = jnp.transpose(x, (0, 2, 4, 1, 3, 5))          # no-op transpose for s=1
    return x.reshape(n_pad, s * s, hq, wq, c_in_p)


@functools.partial(jax.jit, static_argnames=("stride", "padding",
                                             "rows_per_step", "vmem_budget"))
def conv_bn_relu(x_nchw, w_oihw, gamma, beta, *, stride, padding,
                 rows_per_step=1024, vmem_budget=20 * 1024 * 1024):
    N, C_in, H, W = x_nchw.shape
    C_out, _, KH, KW = w_oihw.shape
    s = int(stride)
    H_out = (H + 2 * padding - KH) // s + 1
    W_out = (W + 2 * padding - KW) // s + 1
    HW = H_out * W_out
    M = N * HW                                    # true BN reduction count

    C_in_p = ((C_in + 7) // 8) * 8                # align the matmul K dim
    Hq = pl.cdiv(H + 2 * padding, s)
    Wq = pl.cdiv(W + 2 * padding, s)

    # ---- tile sizing: ~rows_per_step rows per grid step, v7x-safe VMEM ----
    nb = max(1, min(N, rows_per_step // max(HW, 1)))

    def step_bytes(nb_):
        x_blk = nb_ * s * s * Hq * Wq * C_in_p * 2        # bf16
        w_blk = KH * KW * C_in_p * C_out * 2
        y_blk = nb_ * C_out * HW * 2
        acc = 2 * nb_ * HW * C_out * 4                    # f32 acc + transpose tmp
        return 2 * (x_blk + w_blk + y_blk) + acc          # double-buffered I/O

    while nb > 1 and step_bytes(nb) > vmem_budget:
        nb -= 1
    # TODO(synk): tile H for single images whose working set exceeds the budget
    # (not reachable for NASBench-sized inputs).

    num_par = 2 if pl.cdiv(N, nb) >= 2 else 1     # feed both TensorCores on v7x
    group = nb * num_par
    N_pad = pl.cdiv(N, group) * group
    grid_total = N_pad // nb
    inner = grid_total // num_par

    # ---- layout glue: one cheap pass, no KH*KW-inflated im2col in HBM ----
    # TODO(synk): accept/return NHWC to also drop this input transpose when the
    # surrounding model is channels-last.
    x_nhwc = jnp.transpose(x_nchw, (0, 2, 3, 1)).astype(jnp.bfloat16)
    xr = _phase_decompose(x_nhwc, s, padding, N_pad, C_in_p, Hq, Wq)
    w = jnp.transpose(w_oihw, (2, 3, 1, 0)).astype(jnp.bfloat16)   # (KH,KW,Cin,Cout)
    w = jnp.pad(w, ((0, 0), (0, 0), (0, C_in_p - C_in), (0, 0)))

    kernel = functools.partial(_conv_stats_kernel, KH=KH, KW=KW, stride=s,
                               H_out=H_out, W_out=W_out)
    cost = pl.CostEstimate(
        flops=2 * N_pad * HW * KH * KW * C_in_p * C_out,
        transcendentals=0,
        bytes_accessed=xr.size * 2 + w.size * 2 + N_pad * C_out * HW * 2)

    y, psum, psumsq = pl.pallas_call(
        kernel,
        out_shape=(jax.ShapeDtypeStruct((N_pad, C_out, HW), jnp.bfloat16),
                   jax.ShapeDtypeStruct((num_par * 8, C_out), jnp.float32),
                   jax.ShapeDtypeStruct((num_par * 8, C_out), jnp.float32)),
        grid_spec=pltpu.PrefetchScalarGridSpec(
            num_scalar_prefetch=0,
            grid=(num_par, inner),
            in_specs=[
                pl.BlockSpec((nb, s * s, Hq, Wq, C_in_p),
                             lambda p, i: (p * inner + i, 0, 0, 0, 0)),
                # Grid-invariant weight (small).  TODO(synk): single-buffer it
                # via pipeline_mode=pl.Buffered(1) to reclaim Kdim*C_out*2 B of
                # VMEM for larger tiles on v7x.
                pl.BlockSpec((KH, KW, C_in_p, C_out),
                             lambda p, i: (0, 0, 0, 0)),
            ],
            out_specs=[
                pl.BlockSpec((nb, C_out, HW), lambda p, i: (p * inner + i, 0, 0)),
                pl.BlockSpec((8, C_out), lambda p, i: (p, 0)),
                pl.BlockSpec((8, C_out), lambda p, i: (p, 0)),
            ]),
        compiler_params=pltpu.CompilerParams(
            dimension_semantics=("parallel", "arbitrary"),
            vmem_limit_bytes=48 * 1024 * 1024),
        cost_estimate=cost,
    )(xr, w)

    # ---- fold training-mode BN into per-channel scale/shift ----
    ch_sum = psum[0::8].sum(axis=0)                      # row 0 of each parallel chunk
    ch_sumsq = psumsq[0::8].sum(axis=0)
    mean = ch_sum / M                                    # divide by the REAL count
    var = jnp.maximum(ch_sumsq / M - mean * mean, 0.0)   # biased variance (training BN)
    scale = gamma.astype(jnp.float32) * lax.rsqrt(var + BN_EPSILON)
    shift = beta.astype(jnp.float32) - mean * scale
    scale = scale.reshape(1, C_out, 1)
    shift = shift.reshape(1, C_out, 1)

    out = pl.pallas_call(
        _bn_relu_kernel,
        out_shape=jax.ShapeDtypeStruct((N_pad, C_out, HW), jnp.float32),
        grid_spec=pltpu.PrefetchScalarGridSpec(
            num_scalar_prefetch=0,
            grid=(grid_total,),
            in_specs=[pl.BlockSpec((nb, C_out, HW), lambda i: (i, 0, 0)),
                      pl.BlockSpec((1, C_out, 1), lambda i: (0, 0, 0)),
                      pl.BlockSpec((1, C_out, 1), lambda i: (0, 0, 0))],
            out_specs=pl.BlockSpec((nb, C_out, HW), lambda i: (i, 0, 0))),
        compiler_params=pltpu.CompilerParams(
            dimension_semantics=("parallel",),
            vmem_limit_bytes=48 * 1024 * 1024),
        # (no input_output_aliases: y is bf16, the module's output is f32)
    )(y, scale, shift)

    # (N_pad, C_out, H*W) -> NCHW is a pure slice + metadata reshape: the
    # channel-major kernel writeback already eliminated the layout transpose.
    return out[:N].reshape(N, C_out, H_out, W_out)


def reference(x, w, gamma, beta, *, stride, padding):
    """Pure-JAX f32 reference (Conv2d -> training-mode BN -> ReLU)."""
    y = lax.conv_general_dilated(
        x.astype(jnp.float32), w.astype(jnp.float32),
        window_strides=(stride, stride),
        padding=[(padding, padding), (padding, padding)],
        dimension_numbers=('NCHW', 'OIHW', 'NCHW'))
    mean = y.mean(axis=(0, 2, 3), keepdims=True)
    var = y.var(axis=(0, 2, 3), keepdims=True)   # biased, as PyTorch BN normalizes
    y = (y - mean) / jnp.sqrt(var + BN_EPSILON)
    y = y * gamma.reshape(1, -1, 1, 1) + beta.reshape(1, -1, 1, 1)
    return jnp.maximum(y, 0.0)


if __name__ == "__main__":
    # Small shapes consistent with the module: NCHW input, 3x3 conv, stride 1, pad 1.
    N, C_in, H, W = 2, 4, 16, 16
    C_out, K, stride, padding = 8, 3, 1, 1

    key = jax.random.PRNGKey(0)
    kx, kw = jax.random.split(key)
    x = jax.random.normal(kx, (N, C_in, H, W), dtype=jnp.float32)
    # Conv2d weight shape (C_out, C_in, K, K), no bias.
    w = jax.random.normal(kw, (C_out, C_in, K, K), dtype=jnp.float32) * 0.1
    # BatchNorm2d(affine=True) default init: weight=1, bias=0.
    gamma = jnp.ones((C_out,), jnp.float32)
    beta = jnp.zeros((C_out,), jnp.float32)

    out = conv_bn_relu(x, w, gamma, beta, stride=stride, padding=padding)
    out = jax.block_until_ready(out)

    ref = reference(x, w, gamma, beta, stride=stride, padding=padding)
    assert out.shape == (N, C_out, H, W), out.shape
    max_err = float(jnp.max(jnp.abs(out - ref)))
    # bf16 MXU operands + bf16 y intermediate (f32 accumulation/statistics)
    # -> compare at bf16-level tolerance.
    assert jnp.allclose(out, ref, rtol=2e-2, atol=2e-2), max_err

    print("KERNEL_OK")
</pallas_src>

<mosaic_0001>
module attributes {stable_mosaic.version = 11 : i64} {
  func.func @_bn_relu_kernel(%arg0: i32, %arg1: memref<2x8x256xbf16, #tpu.memory_space<vmem>>, %arg2: memref<1x8x1xf32, #tpu.memory_space<vmem>>, %arg3: memref<1x8x1xf32, #tpu.memory_space<vmem>>, %arg4: memref<2x8x256xf32, #tpu.memory_space<vmem>>) attributes {dimension_semantics = [#tpu.dimension_semantics<parallel>], iteration_bounds = array<i64: 1>, scalar_prefetch = 0 : i64, scratch_operands = 0 : i64, tpu.core_type = #tpu.core_type<tc>, window_params = [{transform_indices = @transform_0, window_bounds = array<i64: 2, 8, 256>}, {pipeline_mode = #tpu.pipeline_mode<synchronous>, transform_indices = @transform_1, window_bounds = array<i64: 1, 8, 1>}, {pipeline_mode = #tpu.pipeline_mode<synchronous>, transform_indices = @transform_2, window_bounds = array<i64: 1, 8, 1>}, {transform_indices = @transform_3, window_bounds = array<i64: 2, 8, 256>}]} {
    %c0 = arith.constant 0 : index
    %c0_0 = arith.constant 0 : index
    %c0_1 = arith.constant 0 : index
    %0 = vector.load %arg1[%c0, %c0_0, %c0_1] : memref<2x8x256xbf16, #tpu.memory_space<vmem>>, vector<2x8x256xbf16>
    %1 = arith.extf %0 : vector<2x8x256xbf16> to vector<2x8x256xf32>
    %c0_2 = arith.constant 0 : index
    %c0_3 = arith.constant 0 : index
    %c0_4 = arith.constant 0 : index
    %2 = vector.load %arg2[%c0_2, %c0_3, %c0_4] : memref<1x8x1xf32, #tpu.memory_space<vmem>>, vector<1x8x1xf32>
    %3 = vector.broadcast %2 : vector<1x8x1xf32> to vector<2x8x256xf32>
    %4 = arith.mulf %1, %3 : vector<2x8x256xf32>
    %c0_5 = arith.constant 0 : index
    %c0_6 = arith.constant 0 : index
    %c0_7 = arith.constant 0 : index
    %5 = vector.load %arg3[%c0_5, %c0_6, %c0_7] : memref<1x8x1xf32, #tpu.memory_space<vmem>>, vector<1x8x1xf32>
    %6 = vector.broadcast %5 : vector<1x8x1xf32> to vector<2x8x256xf32>
    %7 = arith.addf %4, %6 : vector<2x8x256xf32>
    %cst = arith.constant 0.000000e+00 : f32
    %8 = vector.broadcast %cst : f32 to vector<2x8x256xf32>
    %9 = arith.maximumf %7, %8 : vector<2x8x256xf32>
    %c0_8 = arith.constant 0 : index
    %c0_9 = arith.constant 0 : index
    %c0_10 = arith.constant 0 : index
    %10 = vector.load %arg4[%c0_8, %c0_9, %c0_10] : memref<2x8x256xf32, #tpu.memory_space<vmem>>, vector<2x8x256xf32>
    tpu.vector_store %arg4[%c0_8, %c0_9, %c0_10], %9 {strides = array<i32>} : memref<2x8x256xf32, #tpu.memory_space<vmem>>, vector<2x8x256xf32>,
    return
  }
  func.func @transform_0(%arg0: i32) -> (i32, i32, i32) {
    %c0_i32 = arith.constant 0 : i32
    %c0_i32_0 = arith.constant 0 : i32
    %c0_i32_1 = arith.constant 0 : i32
    return %arg0, %c0_i32, %c0_i32_0 : i32, i32, i32
  }
  func.func @transform_1(%arg0: i32) -> (i32, i32, i32) {
    %c0_i32 = arith.constant 0 : i32
    %c0_i32_0 = arith.constant 0 : i32
    %c0_i32_1 = arith.constant 0 : i32
    %c0_i32_2 = arith.constant 0 : i32
    return %c0_i32, %c0_i32_0, %c0_i32_1 : i32, i32, i32
  }
  func.func @transform_2(%arg0: i32) -> (i32, i32, i32) {
    %c0_i32 = arith.constant 0 : i32
    %c0_i32_0 = arith.constant 0 : i32
    %c0_i32_1 = arith.constant 0 : i32
    %c0_i32_2 = arith.constant 0 : i32
    return %c0_i32, %c0_i32_0, %c0_i32_1 : i32, i32, i32
  }
  func.func @transform_3(%arg0: i32) -> (i32, i32, i32) {
    %c0_i32 = arith.constant 0 : i32
    %c0_i32_0 = arith.constant 0 : i32
    %c0_i32_1 = arith.constant 0 : i32
    return %arg0, %c0_i32, %c0_i32_0 : i32, i32, i32
  }
}

module attributes {stable_mosaic.version = 11 : i64} {
  func.func @_conv_stats_kernel(%arg0: i32, %arg1: i32, %arg2: memref<2x1x18x18x8xbf16, #tpu.memory_space<vmem>>, %arg3: memref<3x3x8x8xbf16, #tpu.memory_space<vmem>>, %arg4: memref<2x8x256xbf16, #tpu.memory_space<vmem>>, %arg5: memref<8x8xf32, #tpu.memory_space<vmem>>, %arg6: memref<8x8xf32, #tpu.memory_space<vmem>>) attributes {dimension_semantics = [#tpu.dimension_semantics<parallel>, #tpu.dimension_semantics<arbitrary>], iteration_bounds = array<i64: 1, 1>, scalar_prefetch = 0 : i64, scratch_operands = 0 : i64, tpu.core_type = #tpu.core_type<tc>, window_params = [{transform_indices = @transform_0, window_bounds = array<i64: 2, 1, 18, 18, 8>}, {pipeline_mode = #tpu.pipeline_mode<synchronous>, transform_indices = @transform_1, window_bounds = array<i64: 3, 3, 8, 8>}, {transform_indices = @transform_2, window_bounds = array<i64: 2, 8, 256>}, {transform_indices = @transform_3, window_bounds = array<i64: 8, 8>}, {transform_indices = @transform_4, window_bounds = array<i64: 8, 8>}]} {
    %c0_i32 = arith.constant 0 : i32
    %0 = arith.cmpi eq, %arg1, %c0_i32 : i32
    %1 = arith.extui %0 : i1 to i32
    %c0_i32_0 = arith.constant 0 : i32
    %2 = arith.cmpi ne, %1, %c0_i32_0 : i32
    scf.if %2 {
      %cst_103 = arith.constant 0.000000e+00 : f32
      %90 = vector.broadcast %cst_103 : f32 to vector<8x8xf32>
      %c0_104 = arith.constant 0 : index
      %c0_105 = arith.constant 0 : index
      %91 = vector.load %arg5[%c0_104, %c0_105] : memref<8x8xf32, #tpu.memory_space<vmem>>, vector<8x8xf32>
      tpu.vector_store %arg5[%c0_104, %c0_105], %90 {strides = array<i32>} : memref<8x8xf32, #tpu.memory_space<vmem>>, vector<8x8xf32>,
      %cst_106 = arith.constant 0.000000e+00 : f32
      %92 = vector.broadcast %cst_106 : f32 to vector<8x8xf32>
      %c0_107 = arith.constant 0 : index
      %c0_108 = arith.constant 0 : index
      %93 = vector.load %arg6[%c0_107, %c0_108] : memref<8x8xf32, #tpu.memory_space<vmem>>, vector<8x8xf32>
      tpu.vector_store %arg6[%c0_107, %c0_108], %92 {strides = array<i32>} : memref<8x8xf32, #tpu.memory_space<vmem>>, vector<8x8xf32>,
    } else {
    }
    %c0 = arith.constant 0 : index
    %c0_1 = arith.constant 0 : index
    %c0_2 = arith.constant 0 : index
    %c0_3 = arith.constant 0 : index
    %c0_4 = arith.constant 0 : index
    %3 = vector.load %arg2[%c0, %c0_1, %c0_2, %c0_3, %c0_4] : memref<2x1x18x18x8xbf16, #tpu.memory_space<vmem>>, vector<2x1x16x16x8xbf16>
    %4 = vector.shape_cast %3 : vector<2x1x16x16x8xbf16> to vector<2x16x16x8xbf16>
    %5 = vector.shape_cast %4 : vector<2x16x16x8xbf16> to vector<512x8xbf16>
    %c0_5 = arith.constant 0 : index
    %c0_6 = arith.constant 0 : index
    %c0_7 = arith.constant 0 : index
    %c0_8 = arith.constant 0 : index
    %6 = vector.load %arg3[%c0_5, %c0_6, %c0_7, %c0_8] : memref<3x3x8x8xbf16, #tpu.memory_space<vmem>>, vector<1x1x8x8xbf16>
    %7 = vector.shape_cast %6 : vector<1x1x8x8xbf16> to vector<8x8xbf16>
    %cst = arith.constant dense<0.000000e+00> : vector<512x8xf32>
    %8 = tpu.matmul %5, %7, %cst {dimension_numbers = #tpu.dot_dimension_numbers<[1], [0], [0], [1], [0, 0, 1, 1], [], []>} : vector<512x8xbf16>, vector<8x8xbf16>, vector<512x8xf32> -> vector<512x8xf32>
    %c0_9 = arith.constant 0 : index
    %c0_10 = arith.constant 0 : index
    %c0_11 = arith.constant 0 : index
    %c1 = arith.constant 1 : index
    %c0_12 = arith.constant 0 : index
    %9 = vector.load %arg2[%c0_9, %c0_10, %c0_11, %c1, %c0_12] : memref<2x1x18x18x8xbf16, #tpu.memory_space<vmem>>, vector<2x1x16x16x8xbf16>
    %10 = vector.shape_cast %9 : vector<2x1x16x16x8xbf16> to vector<2x16x16x8xbf16>
    %11 = vector.shape_cast %10 : vector<2x16x16x8xbf16> to vector<512x8xbf16>
    %c0_13 = arith.constant 0 : index
    %c1_14 = arith.constant 1 : index
    %c0_15 = arith.constant 0 : index
    %c0_16 = arith.constant 0 : index
    %12 = vector.load %arg3[%c0_13, %c1_14, %c0_15, %c0_16] : memref<3x3x8x8xbf16, #tpu.memory_space<vmem>>, vector<1x1x8x8xbf16>
    %13 = vector.shape_cast %12 : vector<1x1x8x8xbf16> to vector<8x8xbf16>
    %cst_17 = arith.constant dense<0.000000e+00> : vector<512x8xf32>
    %14 = tpu.matmul %11, %13, %cst_17 {dimension_numbers = #tpu.dot_dimension_numbers<[1], [0], [0], [1], [0, 0, 1, 1], [], []>} : vector<512x8xbf16>, vector<8x8xbf16>, vector<512x8xf32> -> vector<512x8xf32>
    %15 = arith.addf %8, %14 : vector<512x8xf32>
    %c0_18 = arith.constant 0 : index
    %c0_19 = arith.constant 0 : index
    %c0_20 = arith.constant 0 : index
    %c2 = arith.constant 2 : index
    %c0_21 = arith.constant 0 : index
    %16 = vector.load %arg2[%c0_18, %c0_19, %c0_20, %c2, %c0_21] : memref<2x1x18x18x8xbf16, #tpu.memory_space<vmem>>, vector<2x1x16x16x8xbf16>
    %17 = vector.shape_cast %16 : vector<2x1x16x16x8xbf16> to vector<2x16x16x8xbf16>
    %18 = vector.shape_cast %17 : vector<2x16x16x8xbf16> to vector<512x8xbf16>
    %c0_22 = arith.constant 0 : index
    %c2_23 = arith.constant 2 : index
    %c0_24 = arith.constant 0 : index
    %c0_25 = arith.constant 0 : index
    %19 = vector.load %arg3[%c0_22, %c2_23, %c0_24, %c0_25] : memref<3x3x8x8xbf16, #tpu.memory_space<vmem>>, vector<1x1x8x8xbf16>
    %20 = vector.shape_cast %19 : vector<1x1x8x8xbf16> to vector<8x8xbf16>
    %cst_26 = arith.constant dense<0.000000e+00> : vector<512x8xf32>
    %21 = tpu.matmul %18, %20, %cst_26 {dimension_numbers = #tpu.dot_dimension_numbers<[1], [0], [0], [1], [0, 0, 1, 1], [], []>} : vector<512x8xbf16>, vector<8x8xbf16>, vector<512x8xf32> -> vector<512x8xf32>
    %22 = arith.addf %15, %21 : vector<512x8xf32>
    %c0_27 = arith.constant 0 : index
    %c0_28 = arith.constant 0 : index
    %c1_29 = arith.constant 1 : index
    %c0_30 = arith.constant 0 : index
    %c0_31 = arith.constant 0 : index
    %23 = vector.load %arg2[%c0_27, %c0_28, %c1_29, %c0_30, %c0_31] : memref<2x1x18x18x8xbf16, #tpu.memory_space<vmem>>, vector<2x1x16x16x8xbf16>
    %24 = vector.shape_cast %23 : vector<2x1x16x16x8xbf16> to vector<2x16x16x8xbf16>
    %25 = vector.shape_cast %24 : vector<2x16x16x8xbf16> to vector<512x8xbf16>
    %c1_32 = arith.constant 1 : index
    %c0_33 = arith.constant 0 : index
    %c0_34 = arith.constant 0 : index
    %c0_35 = arith.constant 0 : index
    %26 = vector.load %arg3[%c1_32, %c0_33, %c0_34, %c0_35] : memref<3x3x8x8xbf16, #tpu.memory_space<vmem>>, vector<1x1x8x8xbf16>
    %27 = vector.shape_cast %26 : vector<1x1x8x8xbf16> to vector<8x8xbf16>
    %cst_36 = arith.constant dense<0.000000e+00> : vector<512x8xf32>
    %28 = tpu.matmul %25, %27, %cst_36 {dimension_numbers = #tpu.dot_dimension_numbers<[1], [0], [0], [1], [0, 0, 1, 1], [], []>} : vector<512x8xbf16>, vector<8x8xbf16>, vector<512x8xf32> -> vector<512x8xf32>
    %29 = arith.addf %22, %28 : vector<512x8xf32>
    %c0_37 = arith.constant 0 : index
    %c0_38 = arith.constant 0 : index
    %c1_39 = arith.constant 1 : index
    %c1_40 = arith.constant 1 : index
    %c0_41 = arith.constant 0 : index
    %30 = vector.load %arg2[%c0_37, %c0_38, %c1_39, %c1_40, %c0_41] : memref<2x1x18x18x8xbf16, #tpu.memory_space<vmem>>, vector<2x1x16x16x8xbf16>
    %31 = vector.shape_cast %30 : vector<2x1x16x16x8xbf16> to vector<2x16x16x8xbf16>
    %32 = vector.shape_cast %31 : vector<2x16x16x8xbf16> to vector<512x8xbf16>
    %c1_42 = arith.constant 1 : index
    %c1_43 = arith.constant 1 : index
    %c0_44 = arith.constant 0 : index
    %c0_45 = arith.constant 0 : index
    %33 = vector.load %arg3[%c1_42, %c1_43, %c0_44, %c0_45] : memref<3x3x8x8xbf16, #tpu.memory_space<vmem>>, vector<1x1x8x8xbf16>
    %34 = vector.shape_cast %33 : vector<1x1x8x8xbf16> to vector<8x8xbf16>
    %cst_46 = arith.constant dense<0.000000e+00> : vector<512x8xf32>
    %35 = tpu.matmul %32, %34, %cst_46 {dimension_numbers = #tpu.dot_dimension_numbers<[1], [0], [0], [1], [0, 0, 1, 1], [], []>} : vector<512x8xbf16>, vector<8x8xbf16>, vector<512x8xf32> -> vector<512x8xf32>
    %36 = arith.addf %29, %35 : vector<512x8xf32>
    %c0_47 = arith.constant 0 : index
    %c0_48 = arith.constant 0 : index
    %c1_49 = arith.constant 1 : index
    %c2_50 = arith.constant 2 : index
    %c0_51 = arith.constant 0 : index
    %37 = vector.load %arg2[%c0_47, %c0_48, %c1_49, %c2_50, %c0_51] : memref<2x1x18x18x8xbf16, #tpu.memory_space<vmem>>, vector<2x1x16x16x8xbf16>
    %38 = vector.shape_cast %37 : vector<2x1x16x16x8xbf16> to vector<2x16x16x8xbf16>
    %39 = vector.shape_cast %38 : vector<2x16x16x8xbf16> to vector<512x8xbf16>
    %c1_52 = arith.constant 1 : index
    %c2_53 = arith.constant 2 : index
    %c0_54 = arith.constant 0 : index
    %c0_55 = arith.constant 0 : index
    %40 = vector.load %arg3[%c1_52, %c2_53, %c0_54, %c0_55] : memref<3x3x8x8xbf16, #tpu.memory_space<vmem>>, vector<1x1x8x8xbf16>
    %41 = vector.shape_cast %40 : vector<1x1x8x8xbf16> to vector<8x8xbf16>
    %cst_56 = arith.constant dense<0.000000e+00> : vector<512x8xf32>
    %42 = tpu.matmul %39, %41, %cst_56 {dimension_numbers = #tpu.dot_dimension_numbers<[1], [0], [0], [1], [0, 0, 1, 1], [], []>} : vector<512x8xbf16>, vector<8x8xbf16>, vector<512x8xf32> -> vector<512x8xf32>
    %43 = arith.addf %36, %42 : vector<512x8xf32>
    %c0_57 = arith.constant 0 : index
    %c0_58 = arith.constant 0 : index
    %c2_59 = arith.constant 2 : index
    %c0_60 = arith.constant 0 : index
    %c0_61 = arith.constant 0 : index
    %44 = vector.load %arg2[%c0_57, %c0_58, %c2_59, %c0_60, %c0_61] : memref<2x1x18x18x8xbf16, #tpu.memory_space<vmem>>, vector<2x1x16x16x8xbf16>
    %45 = vector.shape_cast %44 : vector<2x1x16x16x8xbf16> to vector<2x16x16x8xbf16>
    %46 = vector.shape_cast %45 : vector<2x16x16x8xbf16> to vector<512x8xbf16>
    %c2_62 = arith.constant 2 : index
    %c0_63 = arith.constant 0 : index
    %c0_64 = arith.constant 0 : index
    %c0_65 = arith.constant 0 : index
    %47 = vector.load %arg3[%c2_62, %c0_63, %c0_64, %c0_65] : memref<3x3x8x8xbf16, #tpu.memory_space<vmem>>, vector<1x1x8x8xbf16>
    %48 = vector.shape_cast %47 : vector<1x1x8x8xbf16> to vector<8x8xbf16>
    %cst_66 = arith.constant dense<0.000000e+00> : vector<512x8xf32>
    %49 = tpu.matmul %46, %48, %cst_66 {dimension_numbers = #tpu.dot_dimension_numbers<[1], [0], [0], [1], [0, 0, 1, 1], [], []>} : vector<512x8xbf16>, vector<8x8xbf16>, vector<512x8xf32> -> vector<512x8xf32>
    %50 = arith.addf %43, %49 : vector<512x8xf32>
    %c0_67 = arith.constant 0 : index
    %c0_68 = arith.constant 0 : index
    %c2_69 = arith.constant 2 : index
    %c1_70 = arith.constant 1 : index
    %c0_71 = arith.constant 0 : index
    %51 = vector.load %arg2[%c0_67, %c0_68, %c2_69, %c1_70, %c0_71] : memref<2x1x18x18x8xbf16, #tpu.memory_space<vmem>>, vector<2x1x16x16x8xbf16>
    %52 = vector.shape_cast %51 : vector<2x1x16x16x8xbf16> to vector<2x16x16x8xbf16>
    %53 = vector.shape_cast %52 : vector<2x16x16x8xbf16> to vector<512x8xbf16>
    %c2_72 = arith.constant 2 : index
    %c1_73 = arith.constant 1 : index
    %c0_74 = arith.constant 0 : index
    %c0_75 = arith.constant 0 : index
    %54 = vector.load %arg3[%c2_72, %c1_73, %c0_74, %c0_75] : memref<3x3x8x8xbf16, #tpu.memory_space<vmem>>, vector<1x1x8x8xbf16>
    %55 = vector.shape_cast %54 : vector<1x1x8x8xbf16> to vector<8x8xbf16>
    %cst_76 = arith.constant dense<0.000000e+00> : vector<512x8xf32>
    %56 = tpu.matmul %53, %55, %cst_76 {dimension_numbers = #tpu.dot_dimension_numbers<[1], [0], [0], [1], [0, 0, 1, 1], [], []>} : vector<512x8xbf16>, vector<8x8xbf16>, vector<512x8xf32> -> vector<512x8xf32>
    %57 = arith.addf %50, %56 : vector<512x8xf32>
    %c0_77 = arith.constant 0 : index
    %c0_78 = arith.constant 0 : index
    %c2_79 = arith.constant 2 : index
    %c2_80 = arith.constant 2 : index
    %c0_81 = arith.constant 0 : index
    %58 = vector.load %arg2[%c0_77, %c0_78, %c2_79, %c2_80, %c0_81] : memref<2x1x18x18x8xbf16, #tpu.memory_space<vmem>>, vector<2x1x16x16x8xbf16>
    %59 = vector.shape_cast %58 : vector<2x1x16x16x8xbf16> to vector<2x16x16x8xbf16>
    %60 = vector.shape_cast %59 : vector<2x16x16x8xbf16> to vector<512x8xbf16>
    %c2_82 = arith.constant 2 : index
    %c2_83 = arith.constant 2 : index
    %c0_84 = arith.constant 0 : index
    %c0_85 = arith.constant 0 : index
    %61 = vector.load %arg3[%c2_82, %c2_83, %c0_84, %c0_85] : memref<3x3x8x8xbf16, #tpu.memory_space<vmem>>, vector<1x1x8x8xbf16>
    %62 = vector.shape_cast %61 : vector<1x1x8x8xbf16> to vector<8x8xbf16>
    %cst_86 = arith.constant dense<0.000000e+00> : vector<512x8xf32>
    %63 = tpu.matmul %60, %62, %cst_86 {dimension_numbers = #tpu.dot_dimension_numbers<[1], [0], [0], [1], [0, 0, 1, 1], [], []>} : vector<512x8xbf16>, vector<8x8xbf16>, vector<512x8xf32> -> vector<512x8xf32>
    %64 = arith.addf %57, %63 : vector<512x8xf32>
    %c0_87 = arith.constant 0 : index
    %c0_88 = arith.constant 0 : index
    %65 = vector.load %arg5[%c0_87, %c0_88] : memref<8x8xf32, #tpu.memory_space<vmem>>, vector<8x8xf32>
    %cst_89 = arith.constant dense<0.000000e+00> : vector<8xf32>
    %66 = vector.multi_reduction <add>, %64, %cst_89 [0] : vector<512x8xf32> to vector<8xf32>
    %67 = vector.shape_cast %66 : vector<8xf32> to vector<1x8xf32>
    %68 = vector.broadcast %67 : vector<1x8xf32> to vector<8x8xf32>
    %69 = arith.addf %65, %68 : vector<8x8xf32>
    %c0_90 = arith.constant 0 : index
    %c0_91 = arith.constant 0 : index
    %70 = vector.load %arg5[%c0_90, %c0_91] : memref<8x8xf32, #tpu.memory_space<vmem>>, vector<8x8xf32>
    tpu.vector_store %arg5[%c0_90, %c0_91], %69 {strides = array<i32>} : memref<8x8xf32, #tpu.memory_space<vmem>>, vector<8x8xf32>,
    %c0_92 = arith.constant 0 : index
    %c0_93 = arith.constant 0 : index
    %71 = vector.load %arg6[%c0_92, %c0_93] : memref<8x8xf32, #tpu.memory_space<vmem>>, vector<8x8xf32>
    %72 = arith.mulf %64, %64 : vector<512x8xf32>
    %cst_94 = arith.constant dense<0.000000e+00> : vector<8xf32>
    %73 = vector.multi_reduction <add>, %72, %cst_94 [0] : vector<512x8xf32> to vector<8xf32>
    %74 = vector.shape_cast %73 : vector<8xf32> to vector<1x8xf32>
    %75 = vector.broadcast %74 : vector<1x8xf32> to vector<8x8xf32>
    %76 = arith.addf %71, %75 : vector<8x8xf32>
    %c0_95 = arith.constant 0 : index
    %c0_96 = arith.constant 0 : index
    %77 = vector.load %arg6[%c0_95, %c0_96] : memref<8x8xf32, #tpu.memory_space<vmem>>, vector<8x8xf32>
    tpu.vector_store %arg6[%c0_95, %c0_96], %76 {strides = array<i32>} : memref<8x8xf32, #tpu.memory_space<vmem>>, vector<8x8xf32>,
    %78 = vector.extract_strided_slice %64 {offsets = [0, 0], sizes = [256, 8], strides = [1, 1]} : vector<512x8xf32> to vector<256x8xf32>
    %79 = tpu.transpose %78, [1, 0] : vector<256x8xf32> -> vector<8x256xf32>
    %80 = arith.truncf %79 : vector<8x256xf32> to vector<8x256xbf16>
    %c0_97 = arith.constant 0 : index
    %c0_98 = arith.constant 0 : index
    %c0_99 = arith.constant 0 : index
    %81 = vector.load %arg4[%c0_97, %c0_98, %c0_99] : memref<2x8x256xbf16, #tpu.memory_space<vmem>>, vector<1x8x256xbf16>
    %82 = vector.shape_cast %81 : vector<1x8x256xbf16> to vector<8x256xbf16>
    %83 = vector.shape_cast %80 : vector<8x256xbf16> to vector<1x8x256xbf16>
    tpu.vector_store %arg4[%c0_97, %c0_98, %c0_99], %83 {strides = array<i32>} : memref<2x8x256xbf16, #tpu.memory_space<vmem>>, vector<1x8x256xbf16>,
    %84 = vector.extract_strided_slice %64 {offsets = [256, 0], sizes = [256, 8], strides = [1, 1]} : vector<512x8xf32> to vector<256x8xf32>
    %85 = tpu.transpose %84, [1, 0] : vector<256x8xf32> -> vector<8x256xf32>
    %86 = arith.truncf %85 : vector<8x256xf32> to vector<8x256xbf16>
    %c1_100 = arith.constant 1 : index
    %c0_101 = arith.constant 0 : index
    %c0_102 = arith.constant 0 : index
    %87 = vector.load %arg4[%c1_100, %c0_101, %c0_102] : memref<2x8x256xbf16, #tpu.memory_space<vmem>>, vector<1x8x256xbf16>
    %88 = vector.shape_cast %87 : vector<1x8x256xbf16> to vector<8x256xbf16>
    %89 = vector.shape_cast %86 : vector<8x256xbf16> to vector<1x8x256xbf16>
    tpu.vector_store %arg4[%c1_100, %c0_101, %c0_102], %89 {strides = array<i32>} : memref<2x8x256xbf16, #tpu.memory_space<vmem>>, vector<1x8x256xbf16>,
    return
  }
  func.func @transform_0(%arg0: i32, %arg1: i32) -> (i32, i32, i32, i32, i32) {
    %c1_i32 = arith.constant 1 : i32
    %0 = arith.muli %arg0, %c1_i32 : i32
    %1 = arith.addi %0, %arg1 : i32
    %c0_i32 = arith.constant 0 : i32
    %c0_i32_0 = arith.constant 0 : i32
    %c0_i32_1 = arith.constant 0 : i32
    %c0_i32_2 = arith.constant 0 : i32
    %c0_i32_3 = arith.constant 0 : i32
    return %1, %c0_i32, %c0_i32_0, %c0_i32_1, %c0_i32_2 : i32, i32, i32, i32, i32
  }
  func.func @transform_1(%arg0: i32, %arg1: i32) -> (i32, i32, i32, i32) {
    %c0_i32 = arith.constant 0 : i32
    %c0_i32_0 = arith.constant 0 : i32
    %c0_i32_1 = arith.constant 0 : i32
    %c0_i32_2 = arith.constant 0 : i32
    %c0_i32_3 = arith.constant 0 : i32
    return %c0_i32, %c0_i32_0, %c0_i32_1, %c0_i32_2 : i32, i32, i32, i32
  }
  func.func @transform_2(%arg0: i32, %arg1: i32) -> (i32, i32, i32) {
    %c1_i32 = arith.constant 1 : i32
    %0 = arith.muli %arg0, %c1_i32 : i32
    %1 = arith.addi %0, %arg1 : i32
    %c0_i32 = arith.constant 0 : i32
    %c0_i32_0 = arith.constant 0 : i32
    %c0_i32_1 = arith.constant 0 : i32
    return %1, %c0_i32, %c0_i32_0 : i32, i32, i32
  }
  func.func @transform_3(%arg0: i32, %arg1: i32) -> (i32, i32) {
    %c0_i32 = arith.constant 0 : i32
    %c0_i32_0 = arith.constant 0 : i32
    return %arg0, %c0_i32 : i32, i32
  }
  func.func @transform_4(%arg0: i32, %arg1: i32) -> (i32, i32) {
    %c0_i32 = arith.constant 0 : i32
    %c0_i32_0 = arith.constant 0 : i32
    return %arg0, %c0_i32 : i32, i32
  }
}

</mosaic_0001>

<llo_original>
// kernel: conv_bn_relu.3
$region0: #{conv_bn_relu.3}
  #allocation0 [shape = 'u32[]', space=smem, size = 0x4, offset = 0x4, fixed_abs, tag = 'smem constant byte address 0x4 - core index']
  #allocation1 [shape = 'u32[72,128]{1,0:T(1,128)}', space=vmem, size = 0x9000, scoped, tag = 'internal scratch']
  %s0 = inlined_call_operand.vmem [shape: bf16[2,8,256], index: 0, kind: input, shape index: {}]
  %s1 = inlined_call_operand.vmem [shape: f32[1,8,1], index: 1, kind: input, shape index: {}]
  %s2 = inlined_call_operand.vmem [shape: f32[1,8,1], index: 2, kind: input, shape index: {}]
  %s3 = inlined_call_operand.vmem [shape: f32[2,8,256], index: 3, kind: output, shape index: {}]
  %s4 = sld [smem:[#allocation0]]
  $region22: #{conv_bn_relu.3} parent=0
    _
  %s6 = ssub.s32 1, %s4
  %s7 = scalar_select 0, %s6, %s4
  // Predicated region
  $region2: #{conv_bn_relu.3} parent=0 // pred_check
    _
  $region3: #{conv_bn_relu.3} parent=0 // pred_check_branch
    %9 = sbr.rel (0) target = $region5
  $region4: #{conv_bn_relu.3} parent=0 // pred_region
    _
  $region5: #{conv_bn_relu.3} parent=0 // pred_fallthru
    _
  // Predicated region
  $region6: #{conv_bn_relu.3} parent=0 // pred_check
    _
  $region7: #{conv_bn_relu.3} parent=0 // pred_check_branch
    %11 = sbr.rel (0) target = $region9
  $region8: #{conv_bn_relu.3} parent=0 // pred_region
    _
  $region9: #{conv_bn_relu.3} parent=0 // pred_fallthru
    _
  // Predicated region
  $region10: #{conv_bn_relu.3} parent=0 // pred_check
    _
  $region11: #{conv_bn_relu.3} parent=0 // pred_check_branch
    %13 = sbr.rel (0) target = $region13
  $region12: #{conv_bn_relu.3} parent=0 // pred_region
    _
  $region13: #{conv_bn_relu.3} parent=0 // pred_fallthru
    _
  %v14 = vld [vmem:[%s0] sm:$0xff]
  %v15 = vld [vmem:[%s0 + $0x8] sm:$0xff]
  %v16 = vunpack.c.l.bf16 %v14
  %v17 = vunpack.c.h.bf16 %v14
  %v18 = vunpack.c.l.bf16 %v15
  %v19 = vunpack.c.h.bf16 %v15
  %v20 = vld [vmem:[%s1] sm:$0xff]
  %22 = vset.pattern.permute.xlu0 0
  %23 = vperm.xlu0 %22, %v20
  %v24 = vpop.permute.xlu0 %23
  %v26 = vmul.f32 %v16, %v24
  %v27 = vmul.f32 %v17, %v24
  %v28 = vmul.f32 %v18, %v24
  %v29 = vmul.f32 %v19, %v24
  %v30 = vld [vmem:[%s2] sm:$0xff]
  %32 = vset.pattern.permute.xlu0 0
  %33 = vperm.xlu0 %32, %v30
  %v34 = vpop.permute.xlu0 %33
  %v36 = vadd.f32 %v26, %v34
  %v37 = vadd.f32 %v27, %v34
  %v38 = vadd.f32 %v28, %v34
  %v39 = vadd.f32 %v29, %v34
  %v40 = vmax.f32 %v36, 0.0
  %v41 = vmax.f32 %v37, 0.0
  %v42 = vmax.f32 %v38, 0.0
  %v43 = vmax.f32 %v39, 0.0
  %44 = vst [vmem:[%s3] sm:$0xff] %v40
  %45 = vst [vmem:[%s3 + $0x8] sm:$0xff] %v41
  %46 = vst [vmem:[%s3 + $0x10] sm:$0xff] %v42
  %47 = vst [vmem:[%s3 + $0x18] sm:$0xff] %v43
  // Predicated region
  $region14: #{conv_bn_relu.3} parent=0 // pred_check
    _
  $region15: #{conv_bn_relu.3} parent=0 // pred_check_branch
    %49 = sbr.rel (0) target = $region17
  $region16: #{conv_bn_relu.3} parent=0 // pred_region
    _
  $region17: #{conv_bn_relu.3} parent=0 // pred_fallthru
    _
  // Predicated region
  $region18: #{conv_bn_relu.3} parent=0 // pred_check
    _
  $region19: #{conv_bn_relu.3} parent=0 // pred_check_branch
    %51 = sbr.rel (0) target = $region21
  $region20: #{conv_bn_relu.3} parent=0 // pred_region
    _
  $region21: #{conv_bn_relu.3} parent=0 // pred_fallthru
    _

// kernel: conv_bn_relu.2
$region0: #{conv_bn_relu.2}
  #allocation0 [shape = 'u32[]', space=smem, size = 0x4, offset = 0x4, fixed_abs, tag = 'smem constant byte address 0x4 - core index']
  #allocation1 [shape = 'u32[72,128]{1,0:T(1,128)}', space=vmem, size = 0x9000, scoped, tag = 'internal scratch']
  %s0 = inlined_call_operand.vmem [shape: bf16[2,1,18,18,8], index: 0, kind: input, shape index: {}]
  %s1 = inlined_call_operand.vmem [shape: bf16[3,3,8,8], index: 1, kind: input, shape index: {}]
  %s2 = inlined_call_operand.vmem [shape: bf16[2,8,256], index: 2, kind: output, shape index: {0}]
  %s3 = inlined_call_operand.vmem [shape: f32[8,8], index: 3, kind: output, shape index: {1}]
  %s4 = inlined_call_operand.vmem [shape: f32[8,8], index: 4, kind: output, shape index: {2}]
  %5 = xla_tuple %s2, %s3, %s4
  %s6 = sld [smem:[#allocation0]]
  $region38: #{conv_bn_relu.2} parent=0
    _
  %s8 = ssub.s32 1, %s6
  %s9 = scalar_select 0, %s8, %s6
  // Predicated region
  $region2: #{conv_bn_relu.2} parent=0 // pred_check
    _
  $region3: #{conv_bn_relu.2} parent=0 // pred_check_branch
    %11 = sbr.rel (0) target = $region5
  $region4: #{conv_bn_relu.2} parent=0 // pred_region
    %s12 = sadd.s32 0, 0
    %s13 = smul.u32 2, %s12
    %p14 = scmp.lt.s32.totalorder %s13, 1
    %s15 = scalar_select %p14, %s13, 1
    %s16 = smul.addr %s15, 54
    %s17 = smul.addr %s16, 4
    %s18 = scalar_lea.vmem %s0, %s17
    %s19 = sadd.s32 0, 0
    %s20 = smul.u32 2, %s19
  $region5: #{conv_bn_relu.2} parent=0 // pred_fallthru
    _
  // Predicated region
  $region6: #{conv_bn_relu.2} parent=0 // pred_check
    _
  $region7: #{conv_bn_relu.2} parent=0 // pred_check_branch
    %22 = sbr.rel (0) target = $region9
  $region8: #{conv_bn_relu.2} parent=0 // pred_region
    _
  $region9: #{conv_bn_relu.2} parent=0 // pred_fallthru
    _
  %s23 = sadd.s32 0, 0
  %s24 = smul.u32 2, %s23
  %p25 = scmp.lt.s32.totalorder %s24, 1
  %s26 = scalar_select %p25, %s24, 1
  %s27 = smul.addr %s26, 54
  %s28 = smul.addr %s27, 4
  %s29 = scalar_lea.vmem %s0, %s28
  %s30 = sadd.s32 0, 0
  %s31 = smul.u32 2, %s30
  %p32 = scmp.lt.s32.totalorder %s31, 1
  %s33 = scalar_select %p32, %s31, 1
  %s34 = smul.addr %s33, 2
  %s35 = smul.addr %s34, 4
  %s36 = scalar_lea.vmem %s2, %s35
  %s37 = sadd.s32 0, 0
  %s38 = smul.u32 2, %s37
  %p39 = scmp.lt.s32.totalorder %s38, 1
  %s40 = scalar_select %p39, %s38, 1
  %s41 = smul.addr %s40, 54
  %s42 = smul.addr %s41, 4
  %s43 = scalar_lea.vmem %s0, %s42
  %s44 = sadd.s32 0, 0
  %s45 = smul.u32 2, %s44
  %s46 = sadd.s32 0, 0
  %s47 = smul.u32 2, %s46
  %p48 = scmp.lt.s32.totalorder %s47, 1
  %s49 = scalar_select %p48, %s47, 1
  %s50 = smul.addr %s49, 2
  %s51 = smul.addr %s50, 4
  %s52 = scalar_lea.vmem %s2, %s51
  %s53 = sadd.s32 0, 0
  %s54 = smul.u32 2, %s53
  %p56 = scmp.eq.s32.totalorder 0, 0
  // Predicated region
  $region10: #{conv_bn_relu.2} parent=0 // pred_check
    %p57 = pneg %p56
  $region11: #{conv_bn_relu.2} parent=0 // pred_check_branch
    %59 = sbr.rel (%p57) target = $region13
  $region12: #{conv_bn_relu.2} parent=0 // pred_region
    %vm60 = vcmask 64512
    %61 = vst.msk [vmem:[%s3] sm:$0xff] %vm60, 0.0
    %62 = vst.msk [vmem:[%s4] sm:$0xff] %vm60, 0.0
  $region13: #{conv_bn_relu.2} parent=0 // pred_fallthru
    _
  %v63 = vld [vmem:[%s43] sm:$0xf]
  %v64 = vld [vmem:[%s43 + $0x4] sm:$0xf]
  %v65 = vld [vmem:[%s43 + $0xc] sm:$0xf]
  %v66 = vld [vmem:[%s43 + $0x10] sm:$0xf]
  %v67 = vld [vmem:[%s43 + $0x18] sm:$0xf]
  %v68 = vld [vmem:[%s43 + $0x1c] sm:$0xf]
  %v69 = vld [vmem:[%s43 + $0x24] sm:$0xf]
  %v70 = vld [vmem:[%s43 + $0x28] sm:$0xf]
  %v71 = vld [vmem:[%s43 + $0x30] sm:$0xf]
  %v72 = vld [vmem:[%s43 + $0x34] sm:$0xf]
  %v73 = vld [vmem:[%s43 + $0x3c] sm:$0xf]
  %v74 = vld [vmem:[%s43 + $0x40] sm:$0xf]
  %v75 = vld [vmem:[%s43 + $0x48] sm:$0xf]
  %v76 = vld [vmem:[%s43 + $0x4c] sm:$0xf]
  %v77 = vld [vmem:[%s43 + $0x54] sm:$0xf]
  %v78 = vld [vmem:[%s43 + $0x58] sm:$0xf]
  %v79 = vld [vmem:[%s43 + $0x60] sm:$0xf]
  %v80 = vld [vmem:[%s43 + $0x64] sm:$0xf]
  %v81 = vld [vmem:[%s43 + $0x6c] sm:$0xf]
  %v82 = vld [vmem:[%s43 + $0x70] sm:$0xf]
  %v83 = vld [vmem:[%s43 + $0x78] sm:$0xf]
  %v84 = vld [vmem:[%s43 + $0x7c] sm:$0xf]
  %v85 = vld [vmem:[%s43 + $0x84] sm:$0xf]
  %v86 = vld [vmem:[%s43 + $0x88] sm:$0xf]
  %v87 = vld [vmem:[%s43 + $0x90] sm:$0xf]
  %v88 = vld [vmem:[%s43 + $0x94] sm:$0xf]
  %v89 = vld [vmem:[%s43 + $0x9c] sm:$0xf]
  %v90 = vld [vmem:[%s43 + $0xa0] sm:$0xf]
  %v91 = vld [vmem:[%s43 + $0xa8] sm:$0xf]
  %v92 = vld [vmem:[%s43 + $0xac] sm:$0xf]
  %v93 = vld [vmem:[%s43 + $0xb4] sm:$0xf]
  %v94 = vld [vmem:[%s43 + $0xb8] sm:$0xf]
  %v95 = vld [vmem:[%s43 + $0xd8] sm:$0xf]
  %v96 = vld [vmem:[%s43 + $0xdc] sm:$0xf]
  %v97 = vld [vmem:[%s43 + $0xe4] sm:$0xf]
  %v98 = vld [vmem:[%s43 + $0xe8] sm:$0xf]
  %v99 = vld [vmem:[%s43 + $0xf0] sm:$0xf]
  %v100 = vld [vmem:[%s43 + $0xf4] sm:$0xf]
  %v101 = vld [vmem:[%s43 + $0xfc] sm:$0xf]
  %v102 = vld [vmem:[%s43 + $0x100] sm:$0xf]
  %v103 = vld [vmem:[%s43 + $0x108] sm:$0xf]
  %v104 = vld [vmem:[%s43 + $0x10c] sm:$0xf]
  %v105 = vld [vmem:[%s43 + $0x114] sm:$0xf]
  %v106 = vld [vmem:[%s43 + $0x118] sm:$0xf]
  %v107 = vld [vmem:[%s43 + $0x120] sm:$0xf]
  %v108 = vld [vmem:[%s43 + $0x124] sm:$0xf]
  %v109 = vld [vmem:[%s43 + $0x12c] sm:$0xf]
  %v110 = vld [vmem:[%s43 + $0x130] sm:$0xf]
  %v111 = vld [vmem:[%s43 + $0x138] sm:$0xf]
  %v112 = vld [vmem:[%s43 + $0x13c] sm:$0xf]
  %v113 = vld [vmem:[%s43 + $0x144] sm:$0xf]
  %v114 = vld [vmem:[%s43 + $0x148] sm:$0xf]
  %v115 = vld [vmem:[%s43 + $0x150] sm:$0xf]
  %v116 = vld [vmem:[%s43 + $0x154] sm:$0xf]
  %v117 = vld [vmem:[%s43 + $0x15c] sm:$0xf]
  %v118 = vld [vmem:[%s43 + $0x160] sm:$0xf]
  %v119 = vld [vmem:[%s43 + $0x168] sm:$0xf]
  %v120 = vld [vmem:[%s43 + $0x16c] sm:$0xf]
  %v121 = vld [vmem:[%s43 + $0x174] sm:$0xf]
  %v122 = vld [vmem:[%s43 + $0x178] sm:$0xf]
  %v123 = vld [vmem:[%s43 + $0x180] sm:$0xf]
  %v124 = vld [vmem:[%s43 + $0x184] sm:$0xf]
  %v125 = vld [vmem:[%s43 + $0x18c] sm:$0xf]
  %v126 = vld [vmem:[%s43 + $0x190] sm:$0xf]
  %v127 = vld [vmem:[%s1] sm:$0xf]
  %v128 = vld [vmem:[%s43 + $0x8] sm:$0x1]
  %v129 = vld [vmem:[%s43 + $0x14] sm:$0x1]
  %v130 = vld [vmem:[%s43 + $0x20] sm:$0x1]
  %v131 = vld [vmem:[%s43 + $0x2c] sm:$0x1]
  %v132 = vld [vmem:[%s43 + $0x38] sm:$0x1]
  %v133 = vld [vmem:[%s43 + $0x44] sm:$0x1]
  %v134 = vld [vmem:[%s43 + $0x50] sm:$0x1]
  %v135 = vld [vmem:[%s43 + $0x5c] sm:$0x1]
  %v136 = vld [vmem:[%s43 + $0x68] sm:$0x1]
  %v137 = vld [vmem:[%s43 + $0x74] sm:$0x1]
  %v138 = vld [vmem:[%s43 + $0x80] sm:$0x1]
  %v139 = vld [vmem:[%s43 + $0x8c] sm:$0x1]
  %v140 = vld [vmem:[%s43 + $0x98] sm:$0x1]
  %v141 = vld [vmem:[%s43 + $0xa4] sm:$0x1]
  %v142 = vld [vmem:[%s43 + $0xb0] sm:$0x1]
  %v143 = vld [vmem:[%s43 + $0xbc] sm:$0x1]
  %v144 = vld [vmem:[%s43 + $0xe0] sm:$0x1]
  %v145 = vld [vmem:[%s43 + $0xec] sm:$0x1]
  %v146 = vld [vmem:[%s43 + $0xf8] sm:$0x1]
  %v147 = vld [vmem:[%s43 + $0x104] sm:$0x1]
  %v148 = vld [vmem:[%s43 + $0x110] sm:$0x1]
  %v149 = vld [vmem:[%s43 + $0x11c] sm:$0x1]
  %v150 = vld [vmem:[%s43 + $0x128] sm:$0x1]
  %v151 = vld [vmem:[%s43 + $0x134] sm:$0x1]
  %v152 = vld [vmem:[%s43 + $0x140] sm:$0x1]
  %v153 = vld [vmem:[%s43 + $0x14c] sm:$0x1]
  %v154 = vld [vmem:[%s43 + $0x158] sm:$0x1]
  %v155 = vld [vmem:[%s43 + $0x164] sm:$0x1]
  %v156 = vld [vmem:[%s43 + $0x170] sm:$0x1]
  %v157 = vld [vmem:[%s43 + $0x17c] sm:$0x1]
  %v158 = vld [vmem:[%s43 + $0x188] sm:$0x1]
  %v159 = vld [vmem:[%s43 + $0x194] sm:$0x1]
  %vm160 = vsmask.f32 3328
  %vm161 = vsmask.f32 7440
  %vm162 = vmor %vm160, %vm161
  %v164 = vshrl.u32 %v63, 16
  %v166 = vrot.slane %v164, 4
  %v167 = vshll.u32 %v63, 16
  %v169 = vrot.slane %v167, 5
  %v170 = vor.u32 %v166, %v169
  %v171 = vrot.slane %v170, 4
  %v173 = vshll.u32 %v64, 16
  %v175 = vrot.slane %v173, 5
  %v176 = vsel %vm162, %v171, %v175
  %v177 = vshrl.u32 %v64, 16
  %v179 = vrot.slane %v177, 4
  %v180 = vor.u32 %v179, %v175
  %v181 = vrot.slane %v180, 4
  %v183 = vshll.u32 %v128, 16
  %v185 = vrot.slane %v183, 5
  %v186 = vsel %vm162, %v181, %v185
  %v188 = vshrl.u32 %v65, 16
  %v190 = vrot.slane %v188, 4
  %v191 = vshll.u32 %v65, 16
  %v193 = vrot.slane %v191, 5
  %v194 = vor.u32 %v190, %v193
  %v195 = vrot.slane %v194, 4
  %v197 = vshll.u32 %v66, 16
  %v199 = vrot.slane %v197, 5
  %v200 = vsel %vm162, %v195, %v199
  %v201 = vshrl.u32 %v66, 16
  %v203 = vrot.slane %v201, 4
  %v204 = vor.u32 %v203, %v199
  %v205 = vrot.slane %v204, 4
  %v207 = vshll.u32 %v129, 16
  %v209 = vrot.slane %v207, 5
  %v210 = vsel %vm162, %v205, %v209
  %v212 = vshrl.u32 %v67, 16
  %v214 = vrot.slane %v212, 4
  %v215 = vshll.u32 %v67, 16
  %v217 = vrot.slane %v215, 5
  %v218 = vor.u32 %v214, %v217
  %v219 = vrot.slane %v218, 4
  %v221 = vshll.u32 %v68, 16
  %v223 = vrot.slane %v221, 5
  %v224 = vsel %vm162, %v219, %v223
  %v225 = vshrl.u32 %v68, 16
  %v227 = vrot.slane %v225, 4
  %v228 = vor.u32 %v227, %v223
  %v229 = vrot.slane %v228, 4
  %v231 = vshll.u32 %v130, 16
  %v233 = vrot.slane %v231, 5
  %v234 = vsel %vm162, %v229, %v233
  %v236 = vshrl.u32 %v69, 16
  %v238 = vrot.slane %v236, 4
  %v239 = vshll.u32 %v69, 16
  %v241 = vrot.slane %v239, 5
  %v242 = vor.u32 %v238, %v241
  %v243 = vrot.slane %v242, 4
  %v245 = vshll.u32 %v70, 16
  %v247 = vrot.slane %v245, 5
  %v248 = vsel %vm162, %v243, %v247
  %v249 = vshrl.u32 %v70, 16
  %v251 = vrot.slane %v249, 4
  %v252 = vor.u32 %v251, %v247
  %v253 = vrot.slane %v252, 4
  %v255 = vshll.u32 %v131, 16
  %v257 = vrot.slane %v255, 5
  %v258 = vsel %vm162, %v253, %v257
  %v260 = vshrl.u32 %v71, 16
  %v262 = vrot.slane %v260, 4
  %v263 = vshll.u32 %v71, 16
  %v265 = vrot.slane %v263, 5
  %v266 = vor.u32 %v262, %v265
  %v267 = vrot.slane %v266, 4
  %v269 = vshll.u32 %v72, 16
  %v271 = vrot.slane %v269, 5
  %v272 = vsel %vm162, %v267, %v271
  %v273 = vshrl.u32 %v72, 16
  %v275 = vrot.slane %v273, 4
  %v276 = vor.u32 %v275, %v271
  %v277 = vrot.slane %v276, 4
  %v279 = vshll.u32 %v132, 16
  %v281 = vrot.slane %v279, 5
  %v282 = vsel %vm162, %v277, %v281
  %v284 = vshrl.u32 %v73, 16
  %v286 = vrot.slane %v284, 4
  %v287 = vshll.u32 %v73, 16
  %v289 = vrot.slane %v287, 5
  %v290 = vor.u32 %v286, %v289
  %v291 = vrot.slane %v290, 4
  %v293 = vshll.u32 %v74, 16
  %v295 = vrot.slane %v293, 5
  %v296 = vsel %vm162, %v291, %v295
  %v297 = vshrl.u32 %v74, 16
  %v299 = vrot.slane %v297, 4
  %v300 = vor.u32 %v299, %v295
  %v301 = vrot.slane %v300, 4
  %v303 = vshll.u32 %v133, 16
  %v305 = vrot.slane %v303, 5
  %v306 = vsel %vm162, %v301, %v305
  %v308 = vshrl.u32 %v75, 16
  %v310 = vrot.slane %v308, 4
  %v311 = vshll.u32 %v75, 16
  %v313 = vrot.slane %v311, 5
  %v314 = vor.u32 %v310, %v313
  %v315 = vrot.slane %v314, 4
  %v317 = vshll.u32 %v76, 16
  %v319 = vrot.slane %v317, 5
  %v320 = vsel %vm162, %v315, %v319
  %v321 = vshrl.u32 %v76, 16
  %v323 = vrot.slane %v321, 4
  %v324 = vor.u32 %v323, %v319
  %v325 = vrot.slane %v324, 4
  %v327 = vshll.u32 %v134, 16
  %v329 = vrot.slane %v327, 5
  %v330 = vsel %vm162, %v325, %v329
  %v332 = vshrl.u32 %v77, 16
  %v334 = vrot.slane %v332, 4
  %v335 = vshll.u32 %v77, 16
  %v337 = vrot.slane %v335, 5
  %v338 = vor.u32 %v334, %v337
  %v339 = vrot.slane %v338, 4
  %v341 = vshll.u32 %v78, 16
  %v343 = vrot.slane %v341, 5
  %v344 = vsel %vm162, %v339, %v343
  %v345 = vshrl.u32 %v78, 16
  %v347 = vrot.slane %v345, 4
  %v348 = vor.u32 %v347, %v343
  %v349 = vrot.slane %v348, 4
  %v351 = vshll.u32 %v135, 16
  %v353 = vrot.slane %v351, 5
  %v354 = vsel %vm162, %v349, %v353
  %v356 = vshrl.u32 %v79, 16
  %v358 = vrot.slane %v356, 4
  %v359 = vshll.u32 %v79, 16
  %v361 = vrot.slane %v359, 5
  %v362 = vor.u32 %v358, %v361
  %v363 = vrot.slane %v362, 4
  %v365 = vshll.u32 %v80, 16
  %v367 = vrot.slane %v365, 5
  %v368 = vsel %vm162, %v363, %v367
  %v369 = vshrl.u32 %v80, 16
  %v371 = vrot.slane %v369, 4
  %v372 = vor.u32 %v371, %v367
  %v373 = vrot.slane %v372, 4
  %v375 = vshll.u32 %v136, 16
  %v377 = vrot.slane %v375, 5
  %v378 = vsel %vm162, %v373, %v377
  %v380 = vshrl.u32 %v81, 16
  %v382 = vrot.slane %v380, 4
  %v383 = vshll.u32 %v81, 16
  %v385 = vrot.slane %v383, 5
  %v386 = vor.u32 %v382, %v385
  %v387 = vrot.slane %v386, 4
  %v389 = vshll.u32 %v82, 16
  %v391 = vrot.slane %v389, 5
  %v392 = vsel %vm162, %v387, %v391
  %v393 = vshrl.u32 %v82, 16
  %v395 = vrot.slane %v393, 4
  %v396 = vor.u32 %v395, %v391
  %v397 = vrot.slane %v396, 4
  %v399 = vshll.u32 %v137, 16
  %v401 = vrot.slane %v399, 5
  %v402 = vsel %vm162, %v397, %v401
  %v404 = vshrl.u32 %v83, 16
  %v406 = vrot.slane %v404, 4
  %v407 = vshll.u32 %v83, 16
  %v409 = vrot.slane %v407, 5
  %v410 = vor.u32 %v406, %v409
  %v411 = vrot.slane %v410, 4
  %v413 = vshll.u32 %v84, 16
  %v415 = vrot.slane %v413, 5
  %v416 = vsel %vm162, %v411, %v415
  %v417 = vshrl.u32 %v84, 16
  %v419 = vrot.slane %v417, 4
  %v420 = vor.u32 %v419, %v415
  %v421 = vrot.slane %v420, 4
  %v423 = vshll.u32 %v138, 16
  %v425 = vrot.slane %v423, 5
  %v426 = vsel %vm162, %v421, %v425
  %v428 = vshrl.u32 %v85, 16
  %v430 = vrot.slane %v428, 4
  %v431 = vshll.u32 %v85, 16
  %v433 = vrot.slane %v431, 5
  %v434 = vor.u32 %v430, %v433
  %v435 = vrot.slane %v434, 4
  %v437 = vshll.u32 %v86, 16
  %v439 = vrot.slane %v437, 5
  %v440 = vsel %vm162, %v435, %v439
  %v441 = vshrl.u32 %v86, 16
  %v443 = vrot.slane %v441, 4
  %v444 = vor.u32 %v443, %v439
  %v445 = vrot.slane %v444, 4
  %v447 = vshll.u32 %v139, 16
  %v449 = vrot.slane %v447, 5
  %v450 = vsel %vm162, %v445, %v449
  %v452 = vshrl.u32 %v87, 16
  %v454 = vrot.slane %v452, 4
  %v455 = vshll.u32 %v87, 16
  %v457 = vrot.slane %v455, 5
  %v458 = vor.u32 %v454, %v457
  %v459 = vrot.slane %v458, 4
  %v461 = vshll.u32 %v88, 16
  %v463 = vrot.slane %v461, 5
  %v464 = vsel %vm162, %v459, %v463
  %v465 = vshrl.u32 %v88, 16
  %v467 = vrot.slane %v465, 4
  %v468 = vor.u32 %v467, %v463
  %v469 = vrot.slane %v468, 4
  %v471 = vshll.u32 %v140, 16
  %v473 = vrot.slane %v471, 5
  %v474 = vsel %vm162, %v469, %v473
  %v476 = vshrl.u32 %v89, 16
  %v478 = vrot.slane %v476, 4
  %v479 = vshll.u32 %v89, 16
  %v481 = vrot.slane %v479, 5
  %v482 = vor.u32 %v478, %v481
  %v483 = vrot.slane %v482, 4
  %v485 = vshll.u32 %v90, 16
  %v487 = vrot.slane %v485, 5
  %v488 = vsel %vm162, %v483, %v487
  %v489 = vshrl.u32 %v90, 16
  %v491 = vrot.slane %v489, 4
  %v492 = vor.u32 %v491, %v487
  %v493 = vrot.slane %v492, 4
  %v495 = vshll.u32 %v141, 16
  %v497 = vrot.slane %v495, 5
  %v498 = vsel %vm162, %v493, %v497
  %v500 = vshrl.u32 %v91, 16
  %v502 = vrot.slane %v500, 4
  %v503 = vshll.u32 %v91, 16
  %v505 = vrot.slane %v503, 5
  %v506 = vor.u32 %v502, %v505
  %v507 = vrot.slane %v506, 4
  %v509 = vshll.u32 %v92, 16
  %v511 = vrot.slane %v509, 5
  %v512 = vsel %vm162, %v507, %v511
  %v513 = vshrl.u32 %v92, 16
  %v515 = vrot.slane %v513, 4
  %v516 = vor.u32 %v515, %v511
  %v517 = vrot.slane %v516, 4
  %v519 = vshll.u32 %v142, 16
  %v521 = vrot.slane %v519, 5
  %v522 = vsel %vm162, %v517, %v521
  %v524 = vshrl.u32 %v93, 16
  %v526 = vrot.slane %v524, 4
  %v527 = vshll.u32 %v93, 16
  %v529 = vrot.slane %v527, 5
  %v530 = vor.u32 %v526, %v529
  %v531 = vrot.slane %v530, 4
  %v533 = vshll.u32 %v94, 16
  %v535 = vrot.slane %v533, 5
  %v536 = vsel %vm162, %v531, %v535
  %v537 = vshrl.u32 %v94, 16
  %v539 = vrot.slane %v537, 4
  %v540 = vor.u32 %v539, %v535
  %v541 = vrot.slane %v540, 4
  %v543 = vshll.u32 %v143, 16
  %v545 = vrot.slane %v543, 5
  %v546 = vsel %vm162, %v541, %v545
  %v548 = vshrl.u32 %v95, 16
  %v550 = vrot.slane %v548, 4
  %v551 = vshll.u32 %v95, 16
  %v553 = vrot.slane %v551, 5
  %v554 = vor.u32 %v550, %v553
  %v555 = vrot.slane %v554, 4
  %v557 = vshll.u32 %v96, 16
  %v559 = vrot.slane %v557, 5
  %v560 = vsel %vm162, %v555, %v559
  %v561 = vshrl.u32 %v96, 16
  %v563 = vrot.slane %v561, 4
  %v564 = vor.u32 %v563, %v559
  %v565 = vrot.slane %v564, 4
  %v567 = vshll.u32 %v144, 16
  %v569 = vrot.slane %v567, 5
  %v570 = vsel %vm162, %v565, %v569
  %v572 = vshrl.u32 %v97, 16
  %v574 = vrot.slane %v572, 4
  %v575 = vshll.u32 %v97, 16
  %v577 = vrot.slane %v575, 5
  %v578 = vor.u32 %v574, %v577
  %v579 = vrot.slane %v578, 4
  %v581 = vshll.u32 %v98, 16
  %v583 = vrot.slane %v581, 5
  %v584 = vsel %vm162, %v579, %v583
  %v585 = vshrl.u32 %v98, 16
  %v587 = vrot.slane %v585, 4
  %v588 = vor.u32 %v587, %v583
  %v589 = vrot.slane %v588, 4
  %v591 = vshll.u32 %v145, 16
  %v593 = vrot.slane %v591, 5
  %v594 = vsel %vm162, %v589, %v593
  %v596 = vshrl.u32 %v99, 16
  %v598 = vrot.slane %v596, 4
  %v599 = vshll.u32 %v99, 16
  %v601 = vrot.slane %v599, 5
  %v602 = vor.u32 %v598, %v601
  %v603 = vrot.slane %v602, 4
  %v605 = vshll.u32 %v100, 16
  %v607 = vrot.slane %v605, 5
  %v608 = vsel %vm162, %v603, %v607
  %v609 = vshrl.u32 %v100, 16
  %v611 = vrot.slane %v609, 4
  %v612 = vor.u32 %v611, %v607
  %v613 = vrot.slane %v612, 4
  %v615 = vshll.u32 %v146, 16
  %v617 = vrot.slane %v615, 5
  %v618 = vsel %vm162, %v613, %v617
  %v620 = vshrl.u32 %v101, 16
  %v622 = vrot.slane %v620, 4
  %v623 = vshll.u32 %v101, 16
  %v625 = vrot.slane %v623, 5
  %v626 = vor.u32 %v622, %v625
  %v627 = vrot.slane %v626, 4
  %v629 = vshll.u32 %v102, 16
  %v631 = vrot.slane %v629, 5
  %v632 = vsel %vm162, %v627, %v631
  %v633 = vshrl.u32 %v102, 16
  %v635 = vrot.slane %v633, 4
  %v636 = vor.u32 %v635, %v631
  %v637 = vrot.slane %v636, 4
  %v639 = vshll.u32 %v147, 16
  %v641 = vrot.slane %v639, 5
  %v642 = vsel %vm162, %v637, %v641
  %v644 = vshrl.u32 %v103, 16
  %v646 = vrot.slane %v644, 4
  %v647 = vshll.u32 %v103, 16
  %v649 = vrot.slane %v647, 5
  %v650 = vor.u32 %v646, %v649
  %v651 = vrot.slane %v650, 4
  %v653 = vshll.u32 %v104, 16
  %v655 = vrot.slane %v653, 5
  %v656 = vsel %vm162, %v651, %v655
  %v657 = vshrl.u32 %v104, 16
  %v659 = vrot.slane %v657, 4
  %v660 = vor.u32 %v659, %v655
  %v661 = vrot.slane %v660, 4
  %v663 = vshll.u32 %v148, 16
  %v665 = vrot.slane %v663, 5
  %v666 = vsel %vm162, %v661, %v665
  %v668 = vshrl.u32 %v105, 16
  %v670 = vrot.slane %v668, 4
  %v671 = vshll.u32 %v105, 16
  %v673 = vrot.slane %v671, 5
  %v674 = vor.u32 %v670, %v673
  %v675 = vrot.slane %v674, 4
  %v677 = vshll.u32 %v106, 16
  %v679 = vrot.slane %v677, 5
  %v680 = vsel %vm162, %v675, %v679
  %v681 = vshrl.u32 %v106, 16
  %v683 = vrot.slane %v681, 4
  %v684 = vor.u32 %v683, %v679
  %v685 = vrot.slane %v684, 4
  %v687 = vshll.u32 %v149, 16
  %v689 = vrot.slane %v687, 5
  %v690 = vsel %vm162, %v685, %v689
  %v692 = vshrl.u32 %v107, 16
  %v694 = vrot.slane %v692, 4
  %v695 = vshll.u32 %v107, 16
  %v697 = vrot.slane %v695, 5
  %v698 = vor.u32 %v694, %v697
  %v699 = vrot.slane %v698, 4
  %v701 = vshll.u32 %v108, 16
  %v703 = vrot.slane %v701, 5
  %v704 = vsel %vm162, %v699, %v703
  %v705 = vshrl.u32 %v108, 16
  %v707 = vrot.slane %v705, 4
  %v708 = vor.u32 %v707, %v703
  %v709 = vrot.slane %v708, 4
  %v711 = vshll.u32 %v150, 16
  %v713 = vrot.slane %v711, 5
  %v714 = vsel %vm162, %v709, %v713
  %v716 = vshrl.u32 %v109, 16
  %v718 = vrot.slane %v716, 4
  %v719 = vshll.u32 %v109, 16
  %v721 = vrot.slane %v719, 5
  %v722 = vor.u32 %v718, %v721
  %v723 = vrot.slane %v722, 4
  %v725 = vshll.u32 %v110, 16
  %v727 = vrot.slane %v725, 5
  %v728 = vsel %vm162, %v723, %v727
  %v729 = vshrl.u32 %v110, 16
  %v731 = vrot.slane %v729, 4
  %v732 = vor.u32 %v731, %v727
  %v733 = vrot.slane %v732, 4
  %v735 = vshll.u32 %v151, 16
  %v737 = vrot.slane %v735, 5
  %v738 = vsel %vm162, %v733, %v737
  %v740 = vshrl.u32 %v111, 16
  %v742 = vrot.slane %v740, 4
  %v743 = vshll.u32 %v111, 16
  %v745 = vrot.slane %v743, 5
  %v746 = vor.u32 %v742, %v745
  %v747 = vrot.slane %v746, 4
  %v749 = vshll.u32 %v112, 16
  %v751 = vrot.slane %v749, 5
  %v752 = vsel %vm162, %v747, %v751
  %v753 = vshrl.u32 %v112, 16
  %v755 = vrot.slane %v753, 4
  %v756 = vor.u32 %v755, %v751
  %v757 = vrot.slane %v756, 4
  %v759 = vshll.u32 %v152, 16
  %v761 = vrot.slane %v759, 5
  %v762 = vsel %vm162, %v757, %v761
  %v764 = vshrl.u32 %v113, 16
  %v766 = vrot.slane %v764, 4
  %v767 = vshll.u32 %v113, 16
  %v769 = vrot.slane %v767, 5
  %v770 = vor.u32 %v766, %v769
  %v771 = vrot.slane %v770, 4
  %v773 = vshll.u32 %v114, 16
  %v775 = vrot.slane %v773, 5
  %v776 = vsel %vm162, %v771, %v775
  %v777 = vshrl.u32 %v114, 16
  %v779 = vrot.slane %v777, 4
  %v780 = vor.u32 %v779, %v775
  %v781 = vrot.slane %v780, 4
  %v783 = vshll.u32 %v153, 16
  %v785 = vrot.slane %v783, 5
  %v786 = vsel %vm162, %v781, %v785
  %v788 = vshrl.u32 %v115, 16
  %v790 = vrot.slane %v788, 4
  %v791 = vshll.u32 %v115, 16
  %v793 = vrot.slane %v791, 5
  %v794 = vor.u32 %v790, %v793
  %v795 = vrot.slane %v794, 4
  %v797 = vshll.u32 %v116, 16
  %v799 = vrot.slane %v797, 5
  %v800 = vsel %vm162, %v795, %v799
  %v801 = vshrl.u32 %v116, 16
  %v803 = vrot.slane %v801, 4
  %v804 = vor.u32 %v803, %v799
  %v805 = vrot.slane %v804, 4
  %v807 = vshll.u32 %v154, 16
  %v809 = vrot.slane %v807, 5
  %v810 = vsel %vm162, %v805, %v809
  %v812 = vshrl.u32 %v117, 16
  %v814 = vrot.slane %v812, 4
  %v815 = vshll.u32 %v117, 16
  %v817 = vrot.slane %v815, 5
  %v818 = vor.u32 %v814, %v817
  %v819 = vrot.slane %v818, 4
  %v821 = vshll.u32 %v118, 16
  %v823 = vrot.slane %v821, 5
  %v824 = vsel %vm162, %v819, %v823
  %v825 = vshrl.u32 %v118, 16
  %v827 = vrot.slane %v825, 4
  %v828 = vor.u32 %v827, %v823
  %v829 = vrot.slane %v828, 4
  %v831 = vshll.u32 %v155, 16
  %v833 = vrot.slane %v831, 5
  %v834 = vsel %vm162, %v829, %v833
  %v836 = vshrl.u32 %v119, 16
  %v838 = vrot.slane %v836, 4
  %v839 = vshll.u32 %v119, 16
  %v841 = vrot.slane %v839, 5
  %v842 = vor.u32 %v838, %v841
  %v843 = vrot.slane %v842, 4
  %v845 = vshll.u32 %v120, 16
  %v847 = vrot.slane %v845, 5
  %v848 = vsel %vm162, %v843, %v847
  %v849 = vshrl.u32 %v120, 16
  %v851 = vrot.slane %v849, 4
  %v852 = vor.u32 %v851, %v847
  %v853 = vrot.slane %v852, 4
  %v855 = vshll.u32 %v156, 16
  %v857 = vrot.slane %v855, 5
  %v858 = vsel %vm162, %v853, %v857
  %v860 = vshrl.u32 %v121, 16
  %v862 = vrot.slane %v860, 4
  %v863 = vshll.u32 %v121, 16
  %v865 = vrot.slane %v863, 5
  %v866 = vor.u32 %v862, %v865
  %v867 = vrot.slane %v866, 4
  %v869 = vshll.u32 %v122, 16
  %v871 = vrot.slane %v869, 5
  %v872 = vsel %vm162, %v867, %v871
  %v873 = vshrl.u32 %v122, 16
  %v875 = vrot.slane %v873, 4
  %v876 = vor.u32 %v875, %v871
  %v877 = vrot.slane %v876, 4
  %v879 = vshll.u32 %v157, 16
  %v881 = vrot.slane %v879, 5
  %v882 = vsel %vm162, %v877, %v881
  %v884 = vshrl.u32 %v123, 16
  %v886 = vrot.slane %v884, 4
  %v887 = vshll.u32 %v123, 16
  %v889 = vrot.slane %v887, 5
  %v890 = vor.u32 %v886, %v889
  %v891 = vrot.slane %v890, 4
  %v893 = vshll.u32 %v124, 16
  %v895 = vrot.slane %v893, 5
  %v896 = vsel %vm162, %v891, %v895
  %v897 = vshrl.u32 %v124, 16
  %v899 = vrot.slane %v897, 4
  %v900 = vor.u32 %v899, %v895
  %v901 = vrot.slane %v900, 4
  %v903 = vshll.u32 %v158, 16
  %v905 = vrot.slane %v903, 5
  %v906 = vsel %vm162, %v901, %v905
  %v908 = vshrl.u32 %v125, 16
  %v910 = vrot.slane %v908, 4
  %v911 = vshll.u32 %v125, 16
  %v913 = vrot.slane %v911, 5
  %v914 = vor.u32 %v910, %v913
  %v915 = vrot.slane %v914, 4
  %v917 = vshll.u32 %v126, 16
  %v919 = vrot.slane %v917, 5
  %v920 = vsel %vm162, %v915, %v919
  %v921 = vshrl.u32 %v126, 16
  %v923 = vrot.slane %v921, 4
  %v924 = vor.u32 %v923, %v919
  %v925 = vrot.slane %v924, 4
  %v927 = vshll.u32 %v159, 16
  %v929 = vrot.slane %v927, 5
  %v930 = vsel %vm162, %v925, %v929
  %s931 = scalar_lea.vmem %s1, 4
  %v932 = vld [vmem:[%s931] sm:$0xf]
  %v933 = vunpack.c.l.b16 %v176
  %v934 = vunpack.c.l.b16 %v186
  %v935 = vunpack.c.l.b16 %v200
  %v936 = vunpack.c.l.b16 %v210
  %v937 = vunpack.c.l.b16 %v224
  %v938 = vunpack.c.l.b16 %v234
  %v939 = vunpack.c.l.b16 %v248
  %v940 = vunpack.c.l.b16 %v258
  %v941 = vunpack.c.l.b16 %v272
  %v942 = vunpack.c.l.b16 %v282
  %v943 = vunpack.c.l.b16 %v296
  %v944 = vunpack.c.l.b16 %v306
  %v945 = vunpack.c.l.b16 %v320
  %v946 = vunpack.c.l.b16 %v330
  %v947 = vunpack.c.l.b16 %v344
  %v948 = vunpack.c.l.b16 %v354
  %v949 = vunpack.c.l.b16 %v368
  %v950 = vunpack.c.l.b16 %v378
  %v951 = vunpack.c.l.b16 %v392
  %v952 = vunpack.c.l.b16 %v402
  %v953 = vunpack.c.l.b16 %v416
  %v954 = vunpack.c.l.b16 %v426
  %v955 = vunpack.c.l.b16 %v440
  %v956 = vunpack.c.l.b16 %v450
  %v957 = vunpack.c.l.b16 %v464
  %v958 = vunpack.c.l.b16 %v474
  %v959 = vunpack.c.l.b16 %v488
  %v960 = vunpack.c.l.b16 %v498
  %v961 = vunpack.c.l.b16 %v512
  %v962 = vunpack.c.l.b16 %v522
  %v963 = vunpack.c.l.b16 %v536
  %v964 = vunpack.c.l.b16 %v546
  %v965 = vunpack.c.l.b16 %v560
  %v966 = vunpack.c.l.b16 %v570
  %v967 = vunpack.c.l.b16 %v584
  %v968 = vunpack.c.l.b16 %v594
  %v969 = vunpack.c.l.b16 %v608
  %v970 = vunpack.c.l.b16 %v618
  %v971 = vunpack.c.l.b16 %v632
  %v972 = vunpack.c.l.b16 %v642
  %v973 = vunpack.c.l.b16 %v656
  %v974 = vunpack.c.l.b16 %v666
  %v975 = vunpack.c.l.b16 %v680
  %v976 = vunpack.c.l.b16 %v690
  %v977 = vunpack.c.l.b16 %v704
  %v978 = vunpack.c.l.b16 %v714
  %v979 = vunpack.c.l.b16 %v728
  %v980 = vunpack.c.l.b16 %v738
  %v981 = vunpack.c.l.b16 %v752
  %v982 = vunpack.c.l.b16 %v762
  %v983 = vunpack.c.l.b16 %v776
  %v984 = vunpack.c.l.b16 %v786
  %v985 = vunpack.c.l.b16 %v800
  %v986 = vunpack.c.l.b16 %v810
  %v987 = vunpack.c.l.b16 %v824
  %v988 = vunpack.c.l.b16 %v834
  %v989 = vunpack.c.l.b16 %v848
  %v990 = vunpack.c.l.b16 %v858
  %v991 = vunpack.c.l.b16 %v872
  %v992 = vunpack.c.l.b16 %v882
  %v993 = vunpack.c.l.b16 %v896
  %v994 = vunpack.c.l.b16 %v906
  %v995 = vunpack.c.l.b16 %v920
  %v996 = vunpack.c.l.b16 %v930
  %v997 = vpack.c.b16 %v934, %v933
  %v998 = vpack.c.b16 %v936, %v935
  %v999 = vpack.c.b16 %v938, %v937
  %v1000 = vpack.c.b16 %v940, %v939
  %v1001 = vpack.c.b16 %v942, %v941
  %v1002 = vpack.c.b16 %v944, %v943
  %v1003 = vpack.c.b16 %v946, %v945
  %v1004 = vpack.c.b16 %v948, %v947
  %v1005 = vpack.c.b16 %v950, %v949
  %v1006 = vpack.c.b16 %v952, %v951
  %v1007 = vpack.c.b16 %v954, %v953
  %v1008 = vpack.c.b16 %v956, %v955
  %v1009 = vpack.c.b16 %v958, %v957
  %v1010 = vpack.c.b16 %v960, %v959
  %v1011 = vpack.c.b16 %v962, %v961
  %v1012 = vpack.c.b16 %v964, %v963
  %v1013 = vpack.c.b16 %v966, %v965
  %v1014 = vpack.c.b16 %v968, %v967
  %v1015 = vpack.c.b16 %v970, %v969
  %v1016 = vpack.c.b16 %v972, %v971
  %v1017 = vpack.c.b16 %v974, %v973
  %v1018 = vpack.c.b16 %v976, %v975
  %v1019 = vpack.c.b16 %v978, %v977
  %v1020 = vpack.c.b16 %v980, %v979
  %v1021 = vpack.c.b16 %v982, %v981
  %v1022 = vpack.c.b16 %v984, %v983
  %v1023 = vpack.c.b16 %v986, %v985
  %v1024 = vpack.c.b16 %v988, %v987
  %v1025 = vpack.c.b16 %v990, %v989
  %v1026 = vpack.c.b16 %v992, %v991
  %v1027 = vpack.c.b16 %v994, %v993
  %v1028 = vpack.c.b16 %v996, %v995
  %vm1029 = vcmask 64512
  %v1031 = vsel %vm1029, %v997, 0
  %v1034 = vsel %vm1029, %v998, 0
  %v1037 = vsel %vm1029, %v999, 0
  %v1040 = vsel %vm1029, %v1000, 0
  %v1043 = vsel %vm1029, %v1001, 0
  %v1046 = vsel %vm1029, %v1002, 0
  %v1049 = vsel %vm1029, %v1003, 0
  %v1052 = vsel %vm1029, %v1004, 0
  %v1055 = vsel %vm1029, %v1005, 0
  %v1058 = vsel %vm1029, %v1006, 0
  %v1061 = vsel %vm1029, %v1007, 0
  %v1064 = vsel %vm1029, %v1008, 0
  %v1067 = vsel %vm1029, %v1009, 0
  %v1070 = vsel %vm1029, %v1010, 0
  %v1073 = vsel %vm1029, %v1011, 0
  %v1076 = vsel %vm1029, %v1012, 0
  %v1079 = vsel %vm1029, %v1013, 0
  %v1082 = vsel %vm1029, %v1014, 0
  %v1085 = vsel %vm1029, %v1015, 0
  %v1088 = vsel %vm1029, %v1016, 0
  %v1091 = vsel %vm1029, %v1017, 0
  %v1094 = vsel %vm1029, %v1018, 0
  %v1097 = vsel %vm1029, %v1019, 0
  %v1100 = vsel %vm1029, %v1020, 0
  %v1103 = vsel %vm1029, %v1021, 0
  %v1106 = vsel %vm1029, %v1022, 0
  %v1109 = vsel %vm1029, %v1023, 0
  %v1112 = vsel %vm1029, %v1024, 0
  %v1115 = vsel %vm1029, %v1025, 0
  %v1118 = vsel %vm1029, %v1026, 0
  %v1121 = vsel %vm1029, %v1027, 0
  %v1124 = vsel %vm1029, %v1028, 0
  %vm1126 = vcmask 1043456
  %v1128 = vsel %vm1126, %v932, 0
  %1130 = vmatpush.bf16.msra.mxu0 0
  %1131 = vmatpush.bf16.msra.mxu0 0
  %1132 = vmatpush.bf16.msra.mxu0 0
  %1133 = vmatpush.bf16.msra.mxu0 0
  %1134 = vmatpush.bf16.msra.mxu0 0
  %1135 = vmatpush.bf16.msra.mxu0 0
  %1136 = vmatpush.bf16.msra.mxu0 0
  %1137 = vmatpush.bf16.msra.mxu0 %v1128
  %1138 = vmatmul.bf16.gmra.mxu0 %v1031
  %v1139 = vpop.f32.mrf.mxu0
  %v1140 = vadd.f32 0.0, %v1139
  %v1141 = vpop.f32.mrf.mxu0
  %v1142 = vadd.f32 0.0, %v1141
  %1143 = vmatmul.bf16.gmra.mxu0 %v1034
  %v1144 = vpop.f32.mrf.mxu0
  %v1145 = vadd.f32 0.0, %v1144
  %v1146 = vpop.f32.mrf.mxu0
  %v1147 = vadd.f32 0.0, %v1146
  %1148 = vmatmul.bf16.gmra.mxu0 %v1037
  %v1149 = vpop.f32.mrf.mxu0
  %v1150 = vadd.f32 0.0, %v1149
  %v1151 = vpop.f32.mrf.mxu0
  %v1152 = vadd.f32 0.0, %v1151
  %1153 = vmatmul.bf16.gmra.mxu0 %v1040
  %v1154 = vpop.f32.mrf.mxu0
  %v1155 = vadd.f32 0.0, %v1154
  %v1156 = vpop.f32.mrf.mxu0
  %v1157 = vadd.f32 0.0, %v1156
  %1158 = vmatmul.bf16.gmra.mxu0 %v1043
  %v1159 = vpop.f32.mrf.mxu0
  %v1160 = vadd.f32 0.0, %v1159
  %v1161 = vpop.f32.mrf.mxu0
  %v1162 = vadd.f32 0.0, %v1161
  %1163 = vmatmul.bf16.gmra.mxu0 %v1046
  %v1164 = vpop.f32.mrf.mxu0
  %v1165 = vadd.f32 0.0, %v1164
  %v1166 = vpop.f32.mrf.mxu0
  %v1167 = vadd.f32 0.0, %v1166
  %1168 = vmatmul.bf16.gmra.mxu0 %v1049
  %v1169 = vpop.f32.mrf.mxu0
  %v1170 = vadd.f32 0.0, %v1169
  %v1171 = vpop.f32.mrf.mxu0
  %v1172 = vadd.f32 0.0, %v1171
  %1173 = vmatmul.bf16.gmra.mxu0 %v1052
  %v1174 = vpop.f32.mrf.mxu0
  %v1175 = vadd.f32 0.0, %v1174
  %v1176 = vpop.f32.mrf.mxu0
  %v1177 = vadd.f32 0.0, %v1176
  %1178 = vmatmul.bf16.gmra.mxu0 %v1055
  %v1179 = vpop.f32.mrf.mxu0
  %v1180 = vadd.f32 0.0, %v1179
  %v1181 = vpop.f32.mrf.mxu0
  %v1182 = vadd.f32 0.0, %v1181
  %1183 = vmatmul.bf16.gmra.mxu0 %v1058
  %v1184 = vpop.f32.mrf.mxu0
  %v1185 = vadd.f32 0.0, %v1184
  %v1186 = vpop.f32.mrf.mxu0
  %v1187 = vadd.f32 0.0, %v1186
  %1188 = vmatmul.bf16.gmra.mxu0 %v1061
  %v1189 = vpop.f32.mrf.mxu0
  %v1190 = vadd.f32 0.0, %v1189
  %v1191 = vpop.f32.mrf.mxu0
  %v1192 = vadd.f32 0.0, %v1191
  %1193 = vmatmul.bf16.gmra.mxu0 %v1064
  %v1194 = vpop.f32.mrf.mxu0
  %v1195 = vadd.f32 0.0, %v1194
  %v1196 = vpop.f32.mrf.mxu0
  %v1197 = vadd.f32 0.0, %v1196
  %1198 = vmatmul.bf16.gmra.mxu0 %v1067
  %v1199 = vpop.f32.mrf.mxu0
  %v1200 = vadd.f32 0.0, %v1199
  %v1201 = vpop.f32.mrf.mxu0
  %v1202 = vadd.f32 0.0, %v1201
  %1203 = vmatmul.bf16.gmra.mxu0 %v1070
  %v1204 = vpop.f32.mrf.mxu0
  %v1205 = vadd.f32 0.0, %v1204
  %v1206 = vpop.f32.mrf.mxu0
  %v1207 = vadd.f32 0.0, %v1206
  %1208 = vmatmul.bf16.gmra.mxu0 %v1073
  %v1209 = vpop.f32.mrf.mxu0
  %v1210 = vadd.f32 0.0, %v1209
  %v1211 = vpop.f32.mrf.mxu0
  %v1212 = vadd.f32 0.0, %v1211
  %1213 = vmatmul.bf16.gmra.mxu0 %v1076
  %v1214 = vpop.f32.mrf.mxu0
  %v1215 = vadd.f32 0.0, %v1214
  %v1216 = vpop.f32.mrf.mxu0
  %v1217 = vadd.f32 0.0, %v1216
  %1218 = vmatmul.bf16.gmra.mxu0 %v1079
  %v1219 = vpop.f32.mrf.mxu0
  %v1220 = vadd.f32 0.0, %v1219
  %v1221 = vpop.f32.mrf.mxu0
  %v1222 = vadd.f32 0.0, %v1221
  %1223 = vmatmul.bf16.gmra.mxu0 %v1082
  %v1224 = vpop.f32.mrf.mxu0
  %v1225 = vadd.f32 0.0, %v1224
  %v1226 = vpop.f32.mrf.mxu0
  %v1227 = vadd.f32 0.0, %v1226
  %1228 = vmatmul.bf16.gmra.mxu0 %v1085
  %v1229 = vpop.f32.mrf.mxu0
  %v1230 = vadd.f32 0.0, %v1229
  %v1231 = vpop.f32.mrf.mxu0
  %v1232 = vadd.f32 0.0, %v1231
  %1233 = vmatmul.bf16.gmra.mxu0 %v1088
  %v1234 = vpop.f32.mrf.mxu0
  %v1235 = vadd.f32 0.0, %v1234
  %v1236 = vpop.f32.mrf.mxu0
  %v1237 = vadd.f32 0.0, %v1236
  %1238 = vmatmul.bf16.gmra.mxu0 %v1091
  %v1239 = vpop.f32.mrf.mxu0
  %v1240 = vadd.f32 0.0, %v1239
  %v1241 = vpop.f32.mrf.mxu0
  %v1242 = vadd.f32 0.0, %v1241
  %1243 = vmatmul.bf16.gmra.mxu0 %v1094
  %v1244 = vpop.f32.mrf.mxu0
  %v1245 = vadd.f32 0.0, %v1244
  %v1246 = vpop.f32.mrf.mxu0
  %v1247 = vadd.f32 0.0, %v1246
  %1248 = vmatmul.bf16.gmra.mxu0 %v1097
  %v1249 = vpop.f32.mrf.mxu0
  %v1250 = vadd.f32 0.0, %v1249
  %v1251 = vpop.f32.mrf.mxu0
  %v1252 = vadd.f32 0.0, %v1251
  %1253 = vmatmul.bf16.gmra.mxu0 %v1100
  %v1254 = vpop.f32.mrf.mxu0
  %v1255 = vadd.f32 0.0, %v1254
  %v1256 = vpop.f32.mrf.mxu0
  %v1257 = vadd.f32 0.0, %v1256
  %1258 = vmatmul.bf16.gmra.mxu0 %v1103
  %v1259 = vpop.f32.mrf.mxu0
  %v1260 = vadd.f32 0.0, %v1259
  %v1261 = vpop.f32.mrf.mxu0
  %v1262 = vadd.f32 0.0, %v1261
  %1263 = vmatmul.bf16.gmra.mxu0 %v1106
  %v1264 = vpop.f32.mrf.mxu0
  %v1265 = vadd.f32 0.0, %v1264
  %v1266 = vpop.f32.mrf.mxu0
  %v1267 = vadd.f32 0.0, %v1266
  %1268 = vmatmul.bf16.gmra.mxu0 %v1109
  %v1269 = vpop.f32.mrf.mxu0
  %v1270 = vadd.f32 0.0, %v1269
  %v1271 = vpop.f32.mrf.mxu0
  %v1272 = vadd.f32 0.0, %v1271
  %1273 = vmatmul.bf16.gmra.mxu0 %v1112
  %v1274 = vpop.f32.mrf.mxu0
  %v1275 = vadd.f32 0.0, %v1274
  %v1276 = vpop.f32.mrf.mxu0
  %v1277 = vadd.f32 0.0, %v1276
  %1278 = vmatmul.bf16.gmra.mxu0 %v1115
  %v1279 = vpop.f32.mrf.mxu0
  %v1280 = vadd.f32 0.0, %v1279
  %v1281 = vpop.f32.mrf.mxu0
  %v1282 = vadd.f32 0.0, %v1281
  %1283 = vmatmul.bf16.gmra.mxu0 %v1118
  %v1284 = vpop.f32.mrf.mxu0
  %v1285 = vadd.f32 0.0, %v1284
  %v1286 = vpop.f32.mrf.mxu0
  %v1287 = vadd.f32 0.0, %v1286
  %1288 = vmatmul.bf16.gmra.mxu0 %v1121
  %v1289 = vpop.f32.mrf.mxu0
  %v1290 = vadd.f32 0.0, %v1289
  %v1291 = vpop.f32.mrf.mxu0
  %v1292 = vadd.f32 0.0, %v1291
  %1293 = vmatmul.bf16.gmra.mxu0 %v1124
  %v1294 = vpop.f32.mrf.mxu0
  %v1295 = vadd.f32 0.0, %v1294
  %v1296 = vpop.f32.mrf.mxu0
  %v1297 = vadd.f32 0.0, %v1296
  %1298 = vdwg.mxu0
  %v1363 = vunpack.c.l.b16 %v63
  %v1364 = vunpack.c.l.b16 %v64
  %v1365 = vunpack.c.l.b16 %v65
  %v1366 = vunpack.c.l.b16 %v66
  %v1367 = vunpack.c.l.b16 %v67
  %v1368 = vunpack.c.l.b16 %v68
  %v1369 = vunpack.c.l.b16 %v69
  %v1370 = vunpack.c.l.b16 %v70
  %v1371 = vunpack.c.l.b16 %v71
  %v1372 = vunpack.c.l.b16 %v72
  %v1373 = vunpack.c.l.b16 %v73
  %v1374 = vunpack.c.l.b16 %v74
  %v1375 = vunpack.c.l.b16 %v75
  %v1376 = vunpack.c.l.b16 %v76
  %v1377 = vunpack.c.l.b16 %v77
  %v1378 = vunpack.c.l.b16 %v78
  %v1379 = vunpack.c.l.b16 %v79
  %v1380 = vunpack.c.l.b16 %v80
  %v1381 = vunpack.c.l.b16 %v81
  %v1382 = vunpack.c.l.b16 %v82
  %v1383 = vunpack.c.l.b16 %v83
  %v1384 = vunpack.c.l.b16 %v84
  %v1385 = vunpack.c.l.b16 %v85
  %v1386 = vunpack.c.l.b16 %v86
  %v1387 = vunpack.c.l.b16 %v87
  %v1388 = vunpack.c.l.b16 %v88
  %v1389 = vunpack.c.l.b16 %v89
  %v1390 = vunpack.c.l.b16 %v90
  %v1391 = vunpack.c.l.b16 %v91
  %v1392 = vunpack.c.l.b16 %v92
  %v1393 = vunpack.c.l.b16 %v93
  %v1394 = vunpack.c.l.b16 %v94
  %v1395 = vunpack.c.l.b16 %v95
  %v1396 = vunpack.c.l.b16 %v96
  %v1397 = vunpack.c.l.b16 %v97
  %v1398 = vunpack.c.l.b16 %v98
  %v1399 = vunpack.c.l.b16 %v99
  %v1400 = vunpack.c.l.b16 %v100
  %v1401 = vunpack.c.l.b16 %v101
  %v1402 = vunpack.c.l.b16 %v102
  %v1403 = vunpack.c.l.b16 %v103
  %v1404 = vunpack.c.l.b16 %v104
  %v1405 = vunpack.c.l.b16 %v105
  %v1406 = vunpack.c.l.b16 %v106
  %v1407 = vunpack.c.l.b16 %v107
  %v1408 = vunpack.c.l.b16 %v108
  %v1409 = vunpack.c.l.b16 %v109
  %v1410 = vunpack.c.l.b16 %v110
  %v1411 = vunpack.c.l.b16 %v111
  %v1412 = vunpack.c.l.b16 %v112
  %v1413 = vunpack.c.l.b16 %v113
  %v1414 = vunpack.c.l.b16 %v114
  %v1415 = vunpack.c.l.b16 %v115
  %v1416 = vunpack.c.l.b16 %v116
  %v1417 = vunpack.c.l.b16 %v117
  %v1418 = vunpack.c.l.b16 %v118
  %v1419 = vunpack.c.l.b16 %v119
  %v1420 = vunpack.c.l.b16 %v120
  %v1421 = vunpack.c.l.b16 %v121
  %v1422 = vunpack.c.l.b16 %v122
  %v1423 = vunpack.c.l.b16 %v123
  %v1424 = vunpack.c.l.b16 %v124
  %v1425 = vunpack.c.l.b16 %v125
  %v1426 = vunpack.c.l.b16 %v126
  %v1427 = vpack.c.b16 %v1364, %v1363
  %v1428 = vpack.c.b16 %v1366, %v1365
  %v1429 = vpack.c.b16 %v1368, %v1367
  %v1430 = vpack.c.b16 %v1370, %v1369
  %v1431 = vpack.c.b16 %v1372, %v1371
  %v1432 = vpack.c.b16 %v1374, %v1373
  %v1433 = vpack.c.b16 %v1376, %v1375
  %v1434 = vpack.c.b16 %v1378, %v1377
  %v1435 = vpack.c.b16 %v1380, %v1379
  %v1436 = vpack.c.b16 %v1382, %v1381
  %v1437 = vpack.c.b16 %v1384, %v1383
  %v1438 = vpack.c.b16 %v1386, %v1385
  %v1439 = vpack.c.b16 %v1388, %v1387
  %v1440 = vpack.c.b16 %v1390, %v1389
  %v1441 = vpack.c.b16 %v1392, %v1391
  %v1442 = vpack.c.b16 %v1394, %v1393
  %v1443 = vpack.c.b16 %v1396, %v1395
  %v1444 = vpack.c.b16 %v1398, %v1397
  %v1445 = vpack.c.b16 %v1400, %v1399
  %v1446 = vpack.c.b16 %v1402, %v1401
  %v1447 = vpack.c.b16 %v1404, %v1403
  %v1448 = vpack.c.b16 %v1406, %v1405
  %v1449 = vpack.c.b16 %v1408, %v1407
  %v1450 = vpack.c.b16 %v1410, %v1409
  %v1451 = vpack.c.b16 %v1412, %v1411
  %v1452 = vpack.c.b16 %v1414, %v1413
  %v1453 = vpack.c.b16 %v1416, %v1415
  %v1454 = vpack.c.b16 %v1418, %v1417
  %v1455 = vpack.c.b16 %v1420, %v1419
  %v1456 = vpack.c.b16 %v1422, %v1421
  %v1457 = vpack.c.b16 %v1424, %v1423
  %v1458 = vpack.c.b16 %v1426, %v1425
  %v1460 = vsel %vm1029, %v1427, 0
  %v1463 = vsel %vm1029, %v1428, 0
  %v1466 = vsel %vm1029, %v1429, 0
  %v1469 = vsel %vm1029, %v1430, 0
  %v1472 = vsel %vm1029, %v1431, 0
  %v1475 = vsel %vm1029, %v1432, 0
  %v1478 = vsel %vm1029, %v1433, 0
  %v1481 = vsel %vm1029, %v1434, 0
  %v1484 = vsel %vm1029, %v1435, 0
  %v1487 = vsel %vm1029, %v1436, 0
  %v1490 = vsel %vm1029, %v1437, 0
  %v1493 = vsel %vm1029, %v1438, 0
  %v1496 = vsel %vm1029, %v1439, 0
  %v1499 = vsel %vm1029, %v1440, 0
  %v1502 = vsel %vm1029, %v1441, 0
  %v1505 = vsel %vm1029, %v1442, 0
  %v1508 = vsel %vm1029, %v1443, 0
  %v1511 = vsel %vm1029, %v1444, 0
  %v1514 = vsel %vm1029, %v1445, 0
  %v1517 = vsel %vm1029, %v1446, 0
  %v1520 = vsel %vm1029, %v1447, 0
  %v1523 = vsel %vm1029, %v1448, 0
  %v1526 = vsel %vm1029, %v1449, 0
  %v1529 = vsel %vm1029, %v1450, 0
  %v1532 = vsel %vm1029, %v1451, 0
  %v1535 = vsel %vm1029, %v1452, 0
  %v1538 = vsel %vm1029, %v1453, 0
  %v1541 = vsel %vm1029, %v1454, 0
  %v1544 = vsel %vm1029, %v1455, 0
  %v1547 = vsel %vm1029, %v1456, 0
  %v1550 = vsel %vm1029, %v1457, 0
  %v1553 = vsel %vm1029, %v1458, 0
  %v1556 = vsel %vm1126, %v127, 0
  %1558 = vmatpush.bf16.msra.mxu0 0
  %1559 = vmatpush.bf16.msra.mxu0 0
  %1560 = vmatpush.bf16.msra.mxu0 0
  %1561 = vmatpush.bf16.msra.mxu0 0
  %1562 = vmatpush.bf16.msra.mxu0 0
  %1563 = vmatpush.bf16.msra.mxu0 0
  %1564 = vmatpush.bf16.msra.mxu0 0
  %1565 = vmatpush.bf16.msra.mxu0 %v1556
  %1566 = vmatmul.bf16.gmra.mxu0 %v1460
  %v1567 = vpop.f32.mrf.mxu0
  %v1568 = vadd.f32 %v1140, %v1567
  %v1569 = vpop.f32.mrf.mxu0
  %v1570 = vadd.f32 %v1142, %v1569
  %1571 = vmatmul.bf16.gmra.mxu0 %v1463
  %v1572 = vpop.f32.mrf.mxu0
  %v1573 = vadd.f32 %v1145, %v1572
  %v1574 = vpop.f32.mrf.mxu0
  %v1575 = vadd.f32 %v1147, %v1574
  %1576 = vmatmul.bf16.gmra.mxu0 %v1466
  %v1577 = vpop.f32.mrf.mxu0
  %v1578 = vadd.f32 %v1150, %v1577
  %v1579 = vpop.f32.mrf.mxu0
  %v1580 = vadd.f32 %v1152, %v1579
  %1581 = vmatmul.bf16.gmra.mxu0 %v1469
  %v1582 = vpop.f32.mrf.mxu0
  %v1583 = vadd.f32 %v1155, %v1582
  %v1584 = vpop.f32.mrf.mxu0
  %v1585 = vadd.f32 %v1157, %v1584
  %1586 = vmatmul.bf16.gmra.mxu0 %v1472
  %v1587 = vpop.f32.mrf.mxu0
  %v1588 = vadd.f32 %v1160, %v1587
  %v1589 = vpop.f32.mrf.mxu0
  %v1590 = vadd.f32 %v1162, %v1589
  %1591 = vmatmul.bf16.gmra.mxu0 %v1475
  %v1592 = vpop.f32.mrf.mxu0
  %v1593 = vadd.f32 %v1165, %v1592
  %v1594 = vpop.f32.mrf.mxu0
  %v1595 = vadd.f32 %v1167, %v1594
  %1596 = vmatmul.bf16.gmra.mxu0 %v1478
  %v1597 = vpop.f32.mrf.mxu0
  %v1598 = vadd.f32 %v1170, %v1597
  %v1599 = vpop.f32.mrf.mxu0
  %v1600 = vadd.f32 %v1172, %v1599
  %1601 = vmatmul.bf16.gmra.mxu0 %v1481
  %v1602 = vpop.f32.mrf.mxu0
  %v1603 = vadd.f32 %v1175, %v1602
  %v1604 = vpop.f32.mrf.mxu0
  %v1605 = vadd.f32 %v1177, %v1604
  %1606 = vmatmul.bf16.gmra.mxu0 %v1484
  %v1607 = vpop.f32.mrf.mxu0
  %v1608 = vadd.f32 %v1180, %v1607
  %v1609 = vpop.f32.mrf.mxu0
  %v1610 = vadd.f32 %v1182, %v1609
  %1611 = vmatmul.bf16.gmra.mxu0 %v1487
  %v1612 = vpop.f32.mrf.mxu0
  %v1613 = vadd.f32 %v1185, %v1612
  %v1614 = vpop.f32.mrf.mxu0
  %v1615 = vadd.f32 %v1187, %v1614
  %1616 = vmatmul.bf16.gmra.mxu0 %v1490
  %v1617 = vpop.f32.mrf.mxu0
  %v1618 = vadd.f32 %v1190, %v1617
  %v1619 = vpop.f32.mrf.mxu0
  %v1620 = vadd.f32 %v1192, %v1619
  %1621 = vmatmul.bf16.gmra.mxu0 %v1493
  %v1622 = vpop.f32.mrf.mxu0
  %v1623 = vadd.f32 %v1195, %v1622
  %v1624 = vpop.f32.mrf.mxu0
  %v1625 = vadd.f32 %v1197, %v1624
  %1626 = vmatmul.bf16.gmra.mxu0 %v1496
  %v1627 = vpop.f32.mrf.mxu0
  %v1628 = vadd.f32 %v1200, %v1627
  %v1629 = vpop.f32.mrf.mxu0
  %v1630 = vadd.f32 %v1202, %v1629
  %1631 = vmatmul.bf16.gmra.mxu0 %v1499
  %v1632 = vpop.f32.mrf.mxu0
  %v1633 = vadd.f32 %v1205, %v1632
  %v1634 = vpop.f32.mrf.mxu0
  %v1635 = vadd.f32 %v1207, %v1634
  %1636 = vmatmul.bf16.gmra.mxu0 %v1502
  %v1637 = vpop.f32.mrf.mxu0
  %v1638 = vadd.f32 %v1210, %v1637
  %v1639 = vpop.f32.mrf.mxu0
  %v1640 = vadd.f32 %v1212, %v1639
  %1641 = vmatmul.bf16.gmra.mxu0 %v1505
  %v1642 = vpop.f32.mrf.mxu0
  %v1643 = vadd.f32 %v1215, %v1642
  %v1644 = vpop.f32.mrf.mxu0
  %v1645 = vadd.f32 %v1217, %v1644
  %1646 = vmatmul.bf16.gmra.mxu0 %v1508
  %v1647 = vpop.f32.mrf.mxu0
  %v1648 = vadd.f32 %v1220, %v1647
  %v1649 = vpop.f32.mrf.mxu0
  %v1650 = vadd.f32 %v1222, %v1649
  %1651 = vmatmul.bf16.gmra.mxu0 %v1511
  %v1652 = vpop.f32.mrf.mxu0
  %v1653 = vadd.f32 %v1225, %v1652
  %v1654 = vpop.f32.mrf.mxu0
  %v1655 = vadd.f32 %v1227, %v1654
  %1656 = vmatmul.bf16.gmra.mxu0 %v1514
  %v1657 = vpop.f32.mrf.mxu0
  %v1658 = vadd.f32 %v1230, %v1657
  %v1659 = vpop.f32.mrf.mxu0
  %v1660 = vadd.f32 %v1232, %v1659
  %1661 = vmatmul.bf16.gmra.mxu0 %v1517
  %v1662 = vpop.f32.mrf.mxu0
  %v1663 = vadd.f32 %v1235, %v1662
  %v1664 = vpop.f32.mrf.mxu0
  %v1665 = vadd.f32 %v1237, %v1664
  %1666 = vmatmul.bf16.gmra.mxu0 %v1520
  %v1667 = vpop.f32.mrf.mxu0
  %v1668 = vadd.f32 %v1240, %v1667
  %v1669 = vpop.f32.mrf.mxu0
  %v1670 = vadd.f32 %v1242, %v1669
  %1671 = vmatmul.bf16.gmra.mxu0 %v1523
  %v1672 = vpop.f32.mrf.mxu0
  %v1673 = vadd.f32 %v1245, %v1672
  %v1674 = vpop.f32.mrf.mxu0
  %v1675 = vadd.f32 %v1247, %v1674
  %1676 = vmatmul.bf16.gmra.mxu0 %v1526
  %v1677 = vpop.f32.mrf.mxu0
  %v1678 = vadd.f32 %v1250, %v1677
  %v1679 = vpop.f32.mrf.mxu0
  %v1680 = vadd.f32 %v1252, %v1679
  %1681 = vmatmul.bf16.gmra.mxu0 %v1529
  %v1682 = vpop.f32.mrf.mxu0
  %v1683 = vadd.f32 %v1255, %v1682
  %v1684 = vpop.f32.mrf.mxu0
  %v1685 = vadd.f32 %v1257, %v1684
  %1686 = vmatmul.bf16.gmra.mxu0 %v1532
  %v1687 = vpop.f32.mrf.mxu0
  %v1688 = vadd.f32 %v1260, %v1687
  %v1689 = vpop.f32.mrf.mxu0
  %v1690 = vadd.f32 %v1262, %v1689
  %1691 = vmatmul.bf16.gmra.mxu0 %v1535
  %v1692 = vpop.f32.mrf.mxu0
  %v1693 = vadd.f32 %v1265, %v1692
  %v1694 = vpop.f32.mrf.mxu0
  %v1695 = vadd.f32 %v1267, %v1694
  %1696 = vmatmul.bf16.gmra.mxu0 %v1538
  %v1697 = vpop.f32.mrf.mxu0
  %v1698 = vadd.f32 %v1270, %v1697
  %v1699 = vpop.f32.mrf.mxu0
  %v1700 = vadd.f32 %v1272, %v1699
  %1701 = vmatmul.bf16.gmra.mxu0 %v1541
  %v1702 = vpop.f32.mrf.mxu0
  %v1703 = vadd.f32 %v1275, %v1702
  %v1704 = vpop.f32.mrf.mxu0
  %v1705 = vadd.f32 %v1277, %v1704
  %1706 = vmatmul.bf16.gmra.mxu0 %v1544
  %v1707 = vpop.f32.mrf.mxu0
  %v1708 = vadd.f32 %v1280, %v1707
  %v1709 = vpop.f32.mrf.mxu0
  %v1710 = vadd.f32 %v1282, %v1709
  %1711 = vmatmul.bf16.gmra.mxu0 %v1547
  %v1712 = vpop.f32.mrf.mxu0
  %v1713 = vadd.f32 %v1285, %v1712
  %v1714 = vpop.f32.mrf.mxu0
  %v1715 = vadd.f32 %v1287, %v1714
  %1716 = vmatmul.bf16.gmra.mxu0 %v1550
  %v1717 = vpop.f32.mrf.mxu0
  %v1718 = vadd.f32 %v1290, %v1717
  %v1719 = vpop.f32.mrf.mxu0
  %v1720 = vadd.f32 %v1292, %v1719
  %1721 = vmatmul.bf16.gmra.mxu0 %v1553
  %v1722 = vpop.f32.mrf.mxu0
  %v1723 = vadd.f32 %v1295, %v1722
  %v1724 = vpop.f32.mrf.mxu0
  %v1725 = vadd.f32 %v1297, %v1724
  %1726 = vdwg.mxu0
  %v1727 = vld [vmem:[%s43] sm:$0xe]
  %v1728 = vld [vmem:[%s43 + $0xc] sm:$0xe]
  %v1729 = vld [vmem:[%s43 + $0x18] sm:$0xe]
  %v1730 = vld [vmem:[%s43 + $0x24] sm:$0xe]
  %v1731 = vld [vmem:[%s43 + $0x30] sm:$0xe]
  %v1732 = vld [vmem:[%s43 + $0x3c] sm:$0xe]
  %v1733 = vld [vmem:[%s43 + $0x48] sm:$0xe]
  %v1734 = vld [vmem:[%s43 + $0x54] sm:$0xe]
  %v1735 = vld [vmem:[%s43 + $0x60] sm:$0xe]
  %v1736 = vld [vmem:[%s43 + $0x6c] sm:$0xe]
  %v1737 = vld [vmem:[%s43 + $0x78] sm:$0xe]
  %v1738 = vld [vmem:[%s43 + $0x84] sm:$0xe]
  %v1739 = vld [vmem:[%s43 + $0x90] sm:$0xe]
  %v1740 = vld [vmem:[%s43 + $0x9c] sm:$0xe]
  %v1741 = vld [vmem:[%s43 + $0xa8] sm:$0xe]
  %v1742 = vld [vmem:[%s43 + $0xb4] sm:$0xe]
  %v1743 = vld [vmem:[%s43 + $0xd8] sm:$0xe]
  %v1744 = vld [vmem:[%s43 + $0xe4] sm:$0xe]
  %v1745 = vld [vmem:[%s43 + $0xf0] sm:$0xe]
  %v1746 = vld [vmem:[%s43 + $0xfc] sm:$0xe]
  %v1747 = vld [vmem:[%s43 + $0x108] sm:$0xe]
  %v1748 = vld [vmem:[%s43 + $0x114] sm:$0xe]
  %v1749 = vld [vmem:[%s43 + $0x120] sm:$0xe]
  %v1750 = vld [vmem:[%s43 + $0x12c] sm:$0xe]
  %v1751 = vld [vmem:[%s43 + $0x138] sm:$0xe]
  %v1752 = vld [vmem:[%s43 + $0x144] sm:$0xe]
  %v1753 = vld [vmem:[%s43 + $0x150] sm:$0xe]
  %v1754 = vld [vmem:[%s43 + $0x15c] sm:$0xe]
  %v1755 = vld [vmem:[%s43 + $0x168] sm:$0xe]
  %v1756 = vld [vmem:[%s43 + $0x174] sm:$0xe]
  %v1757 = vld [vmem:[%s43 + $0x180] sm:$0xe]
  %v1758 = vld [vmem:[%s43 + $0x18c] sm:$0xe]
  %vm1823 = vcmask 1042432
  %vm1824 = vcmask 1046532
  %vm1825 = vmor %vm1823, %vm1824
  %v1826 = vrot.slane %v1727, 5
  %v1827 = vrot.slane %v1826, 4
  %v1828 = vrot.slane %v64, 5
  %v1829 = vsel %vm1825, %v1827, %v1828
  %v1830 = vrot.slane %v1828, 4
  %v1831 = vrot.slane %v128, 5
  %v1832 = vsel %vm1825, %v1830, %v1831
  %v1833 = vrot.slane %v1728, 5
  %v1834 = vrot.slane %v1833, 4
  %v1835 = vrot.slane %v66, 5
  %v1836 = vsel %vm1825, %v1834, %v1835
  %v1837 = vrot.slane %v1835, 4
  %v1838 = vrot.slane %v129, 5
  %v1839 = vsel %vm1825, %v1837, %v1838
  %v1840 = vrot.slane %v1729, 5
  %v1841 = vrot.slane %v1840, 4
  %v1842 = vrot.slane %v68, 5
  %v1843 = vsel %vm1825, %v1841, %v1842
  %v1844 = vrot.slane %v1842, 4
  %v1845 = vrot.slane %v130, 5
  %v1846 = vsel %vm1825, %v1844, %v1845
  %v1847 = vrot.slane %v1730, 5
  %v1848 = vrot.slane %v1847, 4
  %v1849 = vrot.slane %v70, 5
  %v1850 = vsel %vm1825, %v1848, %v1849
  %v1851 = vrot.slane %v1849, 4
  %v1852 = vrot.slane %v131, 5
  %v1853 = vsel %vm1825, %v1851, %v1852
  %v1854 = vrot.slane %v1731, 5
  %v1855 = vrot.slane %v1854, 4
  %v1856 = vrot.slane %v72, 5
  %v1857 = vsel %vm1825, %v1855, %v1856
  %v1858 = vrot.slane %v1856, 4
  %v1859 = vrot.slane %v132, 5
  %v1860 = vsel %vm1825, %v1858, %v1859
  %v1861 = vrot.slane %v1732, 5
  %v1862 = vrot.slane %v1861, 4
  %v1863 = vrot.slane %v74, 5
  %v1864 = vsel %vm1825, %v1862, %v1863
  %v1865 = vrot.slane %v1863, 4
  %v1866 = vrot.slane %v133, 5
  %v1867 = vsel %vm1825, %v1865, %v1866
  %v1868 = vrot.slane %v1733, 5
  %v1869 = vrot.slane %v1868, 4
  %v1870 = vrot.slane %v76, 5
  %v1871 = vsel %vm1825, %v1869, %v1870
  %v1872 = vrot.slane %v1870, 4
  %v1873 = vrot.slane %v134, 5
  %v1874 = vsel %vm1825, %v1872, %v1873
  %v1875 = vrot.slane %v1734, 5
  %v1876 = vrot.slane %v1875, 4
  %v1877 = vrot.slane %v78, 5
  %v1878 = vsel %vm1825, %v1876, %v1877
  %v1879 = vrot.slane %v1877, 4
  %v1880 = vrot.slane %v135, 5
  %v1881 = vsel %vm1825, %v1879, %v1880
  %v1882 = vrot.slane %v1735, 5
  %v1883 = vrot.slane %v1882, 4
  %v1884 = vrot.slane %v80, 5
  %v1885 = vsel %vm1825, %v1883, %v1884
  %v1886 = vrot.slane %v1884, 4
  %v1887 = vrot.slane %v136, 5
  %v1888 = vsel %vm1825, %v1886, %v1887
  %v1889 = vrot.slane %v1736, 5
  %v1890 = vrot.slane %v1889, 4
  %v1891 = vrot.slane %v82, 5
  %v1892 = vsel %vm1825, %v1890, %v1891
  %v1893 = vrot.slane %v1891, 4
  %v1894 = vrot.slane %v137, 5
  %v1895 = vsel %vm1825, %v1893, %v1894
  %v1896 = vrot.slane %v1737, 5
  %v1897 = vrot.slane %v1896, 4
  %v1898 = vrot.slane %v84, 5
  %v1899 = vsel %vm1825, %v1897, %v1898
  %v1900 = vrot.slane %v1898, 4
  %v1901 = vrot.slane %v138, 5
  %v1902 = vsel %vm1825, %v1900, %v1901
  %v1903 = vrot.slane %v1738, 5
  %v1904 = vrot.slane %v1903, 4
  %v1905 = vrot.slane %v86, 5
  %v1906 = vsel %vm1825, %v1904, %v1905
  %v1907 = vrot.slane %v1905, 4
  %v1908 = vrot.slane %v139, 5
  %v1909 = vsel %vm1825, %v1907, %v1908
  %v1910 = vrot.slane %v1739, 5
  %v1911 = vrot.slane %v1910, 4
  %v1912 = vrot.slane %v88, 5
  %v1913 = vsel %vm1825, %v1911, %v1912
  %v1914 = vrot.slane %v1912, 4
  %v1915 = vrot.slane %v140, 5
  %v1916 = vsel %vm1825, %v1914, %v1915
  %v1917 = vrot.slane %v1740, 5
  %v1918 = vrot.slane %v1917, 4
  %v1919 = vrot.slane %v90, 5
  %v1920 = vsel %vm1825, %v1918, %v1919
  %v1921 = vrot.slane %v1919, 4
  %v1922 = vrot.slane %v141, 5
  %v1923 = vsel %vm1825, %v1921, %v1922
  %v1924 = vrot.slane %v1741, 5
  %v1925 = vrot.slane %v1924, 4
  %v1926 = vrot.slane %v92, 5
  %v1927 = vsel %vm1825, %v1925, %v1926
  %v1928 = vrot.slane %v1926, 4
  %v1929 = vrot.slane %v142, 5
  %v1930 = vsel %vm1825, %v1928, %v1929
  %v1931 = vrot.slane %v1742, 5
  %v1932 = vrot.slane %v1931, 4
  %v1933 = vrot.slane %v94, 5
  %v1934 = vsel %vm1825, %v1932, %v1933
  %v1935 = vrot.slane %v1933, 4
  %v1936 = vrot.slane %v143, 5
  %v1937 = vsel %vm1825, %v1935, %v1936
  %v1938 = vrot.slane %v1743, 5
  %v1939 = vrot.slane %v1938, 4
  %v1940 = vrot.slane %v96, 5
  %v1941 = vsel %vm1825, %v1939, %v1940
  %v1942 = vrot.slane %v1940, 4
  %v1943 = vrot.slane %v144, 5
  %v1944 = vsel %vm1825, %v1942, %v1943
  %v1945 = vrot.slane %v1744, 5
  %v1946 = vrot.slane %v1945, 4
  %v1947 = vrot.slane %v98, 5
  %v1948 = vsel %vm1825, %v1946, %v1947
  %v1949 = vrot.slane %v1947, 4
  %v1950 = vrot.slane %v145, 5
  %v1951 = vsel %vm1825, %v1949, %v1950
  %v1952 = vrot.slane %v1745, 5
  %v1953 = vrot.slane %v1952, 4
  %v1954 = vrot.slane %v100, 5
  %v1955 = vsel %vm1825, %v1953, %v1954
  %v1956 = vrot.slane %v1954, 4
  %v1957 = vrot.slane %v146, 5
  %v1958 = vsel %vm1825, %v1956, %v1957
  %v1959 = vrot.slane %v1746, 5
  %v1960 = vrot.slane %v1959, 4
  %v1961 = vrot.slane %v102, 5
  %v1962 = vsel %vm1825, %v1960, %v1961
  %v1963 = vrot.slane %v1961, 4
  %v1964 = vrot.slane %v147, 5
  %v1965 = vsel %vm1825, %v1963, %v1964
  %v1966 = vrot.slane %v1747, 5
  %v1967 = vrot.slane %v1966, 4
  %v1968 = vrot.slane %v104, 5
  %v1969 = vsel %vm1825, %v1967, %v1968
  %v1970 = vrot.slane %v1968, 4
  %v1971 = vrot.slane %v148, 5
  %v1972 = vsel %vm1825, %v1970, %v1971
  %v1973 = vrot.slane %v1748, 5
  %v1974 = vrot.slane %v1973, 4
  %v1975 = vrot.slane %v106, 5
  %v1976 = vsel %vm1825, %v1974, %v1975
  %v1977 = vrot.slane %v1975, 4
  %v1978 = vrot.slane %v149, 5
  %v1979 = vsel %vm1825, %v1977, %v1978
  %v1980 = vrot.slane %v1749, 5
  %v1981 = vrot.slane %v1980, 4
  %v1982 = vrot.slane %v108, 5
  %v1983 = vsel %vm1825, %v1981, %v1982
  %v1984 = vrot.slane %v1982, 4
  %v1985 = vrot.slane %v150, 5
  %v1986 = vsel %vm1825, %v1984, %v1985
  %v1987 = vrot.slane %v1750, 5
  %v1988 = vrot.slane %v1987, 4
  %v1989 = vrot.slane %v110, 5
  %v1990 = vsel %vm1825, %v1988, %v1989
  %v1991 = vrot.slane %v1989, 4
  %v1992 = vrot.slane %v151, 5
  %v1993 = vsel %vm1825, %v1991, %v1992
  %v1994 = vrot.slane %v1751, 5
  %v1995 = vrot.slane %v1994, 4
  %v1996 = vrot.slane %v112, 5
  %v1997 = vsel %vm1825, %v1995, %v1996
  %v1998 = vrot.slane %v1996, 4
  %v1999 = vrot.slane %v152, 5
  %v2000 = vsel %vm1825, %v1998, %v1999
  %v2001 = vrot.slane %v1752, 5
  %v2002 = vrot.slane %v2001, 4
  %v2003 = vrot.slane %v114, 5
  %v2004 = vsel %vm1825, %v2002, %v2003
  %v2005 = vrot.slane %v2003, 4
  %v2006 = vrot.slane %v153, 5
  %v2007 = vsel %vm1825, %v2005, %v2006
  %v2008 = vrot.slane %v1753, 5
  %v2009 = vrot.slane %v2008, 4
  %v2010 = vrot.slane %v116, 5
  %v2011 = vsel %vm1825, %v2009, %v2010
  %v2012 = vrot.slane %v2010, 4
  %v2013 = vrot.slane %v154, 5
  %v2014 = vsel %vm1825, %v2012, %v2013
  %v2015 = vrot.slane %v1754, 5
  %v2016 = vrot.slane %v2015, 4
  %v2017 = vrot.slane %v118, 5
  %v2018 = vsel %vm1825, %v2016, %v2017
  %v2019 = vrot.slane %v2017, 4
  %v2020 = vrot.slane %v155, 5
  %v2021 = vsel %vm1825, %v2019, %v2020
  %v2022 = vrot.slane %v1755, 5
  %v2023 = vrot.slane %v2022, 4
  %v2024 = vrot.slane %v120, 5
  %v2025 = vsel %vm1825, %v2023, %v2024
  %v2026 = vrot.slane %v2024, 4
  %v2027 = vrot.slane %v156, 5
  %v2028 = vsel %vm1825, %v2026, %v2027
  %v2029 = vrot.slane %v1756, 5
  %v2030 = vrot.slane %v2029, 4
  %v2031 = vrot.slane %v122, 5
  %v2032 = vsel %vm1825, %v2030, %v2031
  %v2033 = vrot.slane %v2031, 4
  %v2034 = vrot.slane %v157, 5
  %v2035 = vsel %vm1825, %v2033, %v2034
  %v2036 = vrot.slane %v1757, 5
  %v2037 = vrot.slane %v2036, 4
  %v2038 = vrot.slane %v124, 5
  %v2039 = vsel %vm1825, %v2037, %v2038
  %v2040 = vrot.slane %v2038, 4
  %v2041 = vrot.slane %v158, 5
  %v2042 = vsel %vm1825, %v2040, %v2041
  %v2043 = vrot.slane %v1758, 5
  %v2044 = vrot.slane %v2043, 4
  %v2045 = vrot.slane %v126, 5
  %v2046 = vsel %vm1825, %v2044, %v2045
  %v2047 = vrot.slane %v2045, 4
  %v2048 = vrot.slane %v159, 5
  %v2049 = vsel %vm1825, %v2047, %v2048
  %s2050 = scalar_lea.vmem %s1, 8
  %v2051 = vld [vmem:[%s2050] sm:$0xf]
  %v2052 = vunpack.c.l.b16 %v1829
  %v2053 = vunpack.c.l.b16 %v1832
  %v2054 = vunpack.c.l.b16 %v1836
  %v2055 = vunpack.c.l.b16 %v1839
  %v2056 = vunpack.c.l.b16 %v1843
  %v2057 = vunpack.c.l.b16 %v1846
  %v2058 = vunpack.c.l.b16 %v1850
  %v2059 = vunpack.c.l.b16 %v1853
  %v2060 = vunpack.c.l.b16 %v1857
  %v2061 = vunpack.c.l.b16 %v1860
  %v2062 = vunpack.c.l.b16 %v1864
  %v2063 = vunpack.c.l.b16 %v1867
  %v2064 = vunpack.c.l.b16 %v1871
  %v2065 = vunpack.c.l.b16 %v1874
  %v2066 = vunpack.c.l.b16 %v1878
  %v2067 = vunpack.c.l.b16 %v1881
  %v2068 = vunpack.c.l.b16 %v1885
  %v2069 = vunpack.c.l.b16 %v1888
  %v2070 = vunpack.c.l.b16 %v1892
  %v2071 = vunpack.c.l.b16 %v1895
  %v2072 = vunpack.c.l.b16 %v1899
  %v2073 = vunpack.c.l.b16 %v1902
  %v2074 = vunpack.c.l.b16 %v1906
  %v2075 = vunpack.c.l.b16 %v1909
  %v2076 = vunpack.c.l.b16 %v1913
  %v2077 = vunpack.c.l.b16 %v1916
  %v2078 = vunpack.c.l.b16 %v1920
  %v2079 = vunpack.c.l.b16 %v1923
  %v2080 = vunpack.c.l.b16 %v1927
  %v2081 = vunpack.c.l.b16 %v1930
  %v2082 = vunpack.c.l.b16 %v1934
  %v2083 = vunpack.c.l.b16 %v1937
  %v2084 = vunpack.c.l.b16 %v1941
  %v2085 = vunpack.c.l.b16 %v1944
  %v2086 = vunpack.c.l.b16 %v1948
  %v2087 = vunpack.c.l.b16 %v1951
  %v2088 = vunpack.c.l.b16 %v1955
  %v2089 = vunpack.c.l.b16 %v1958
  %v2090 = vunpack.c.l.b16 %v1962
  %v2091 = vunpack.c.l.b16 %v1965
  %v2092 = vunpack.c.l.b16 %v1969
  %v2093 = vunpack.c.l.b16 %v1972
  %v2094 = vunpack.c.l.b16 %v1976
  %v2095 = vunpack.c.l.b16 %v1979
  %v2096 = vunpack.c.l.b16 %v1983
  %v2097 = vunpack.c.l.b16 %v1986
  %v2098 = vunpack.c.l.b16 %v1990
  %v2099 = vunpack.c.l.b16 %v1993
  %v2100 = vunpack.c.l.b16 %v1997
  %v2101 = vunpack.c.l.b16 %v2000
  %v2102 = vunpack.c.l.b16 %v2004
  %v2103 = vunpack.c.l.b16 %v2007
  %v2104 = vunpack.c.l.b16 %v2011
  %v2105 = vunpack.c.l.b16 %v2014
  %v2106 = vunpack.c.l.b16 %v2018
  %v2107 = vunpack.c.l.b16 %v2021
  %v2108 = vunpack.c.l.b16 %v2025
  %v2109 = vunpack.c.l.b16 %v2028
  %v2110 = vunpack.c.l.b16 %v2032
  %v2111 = vunpack.c.l.b16 %v2035
  %v2112 = vunpack.c.l.b16 %v2039
  %v2113 = vunpack.c.l.b16 %v2042
  %v2114 = vunpack.c.l.b16 %v2046
  %v2115 = vunpack.c.l.b16 %v2049
  %v2116 = vpack.c.b16 %v2053, %v2052
  %v2117 = vpack.c.b16 %v2055, %v2054
  %v2118 = vpack.c.b16 %v2057, %v2056
  %v2119 = vpack.c.b16 %v2059, %v2058
  %v2120 = vpack.c.b16 %v2061, %v2060
  %v2121 = vpack.c.b16 %v2063, %v2062
  %v2122 = vpack.c.b16 %v2065, %v2064
  %v2123 = vpack.c.b16 %v2067, %v2066
  %v2124 = vpack.c.b16 %v2069, %v2068
  %v2125 = vpack.c.b16 %v2071, %v2070
  %v2126 = vpack.c.b16 %v2073, %v2072
  %v2127 = vpack.c.b16 %v2075, %v2074
  %v2128 = vpack.c.b16 %v2077, %v2076
  %v2129 = vpack.c.b16 %v2079, %v2078
  %v2130 = vpack.c.b16 %v2081, %v2080
  %v2131 = vpack.c.b16 %v2083, %v2082
  %v2132 = vpack.c.b16 %v2085, %v2084
  %v2133 = vpack.c.b16 %v2087, %v2086
  %v2134 = vpack.c.b16 %v2089, %v2088
  %v2135 = vpack.c.b16 %v2091, %v2090
  %v2136 = vpack.c.b16 %v2093, %v2092
  %v2137 = vpack.c.b16 %v2095, %v2094
  %v2138 = vpack.c.b16 %v2097, %v2096
  %v2139 = vpack.c.b16 %v2099, %v2098
  %v2140 = vpack.c.b16 %v2101, %v2100
  %v2141 = vpack.c.b16 %v2103, %v2102
  %v2142 = vpack.c.b16 %v2105, %v2104
  %v2143 = vpack.c.b16 %v2107, %v2106
  %v2144 = vpack.c.b16 %v2109, %v2108
  %v2145 = vpack.c.b16 %v2111, %v2110
  %v2146 = vpack.c.b16 %v2113, %v2112
  %v2147 = vpack.c.b16 %v2115, %v2114
  %v2149 = vsel %vm1029, %v2116, 0
  %v2152 = vsel %vm1029, %v2117, 0
  %v2155 = vsel %vm1029, %v2118, 0
  %v2158 = vsel %vm1029, %v2119, 0
  %v2161 = vsel %vm1029, %v2120, 0
  %v2164 = vsel %vm1029, %v2121, 0
  %v2167 = vsel %vm1029, %v2122, 0
  %v2170 = vsel %vm1029, %v2123, 0
  %v2173 = vsel %vm1029, %v2124, 0
  %v2176 = vsel %vm1029, %v2125, 0
  %v2179 = vsel %vm1029, %v2126, 0
  %v2182 = vsel %vm1029, %v2127, 0
  %v2185 = vsel %vm1029, %v2128, 0
  %v2188 = vsel %vm1029, %v2129, 0
  %v2191 = vsel %vm1029, %v2130, 0
  %v2194 = vsel %vm1029, %v2131, 0
  %v2197 = vsel %vm1029, %v2132, 0
  %v2200 = vsel %vm1029, %v2133, 0
  %v2203 = vsel %vm1029, %v2134, 0
  %v2206 = vsel %vm1029, %v2135, 0
  %v2209 = vsel %vm1029, %v2136, 0
  %v2212 = vsel %vm1029, %v2137, 0
  %v2215 = vsel %vm1029, %v2138, 0
  %v2218 = vsel %vm1029, %v2139, 0
  %v2221 = vsel %vm1029, %v2140, 0
  %v2224 = vsel %vm1029, %v2141, 0
  %v2227 = vsel %vm1029, %v2142, 0
  %v2230 = vsel %vm1029, %v2143, 0
  %v2233 = vsel %vm1029, %v2144, 0
  %v2236 = vsel %vm1029, %v2145, 0
  %v2239 = vsel %vm1029, %v2146, 0
  %v2242 = vsel %vm1029, %v2147, 0
  %v2245 = vsel %vm1126, %v2051, 0
  %2247 = vmatpush.bf16.msra.mxu0 0
  %2248 = vmatpush.bf16.msra.mxu0 0
  %2249 = vmatpush.bf16.msra.mxu0 0
  %2250 = vmatpush.bf16.msra.mxu0 0
  %2251 = vmatpush.bf16.msra.mxu0 0
  %2252 = vmatpush.bf16.msra.mxu0 0
  %2253 = vmatpush.bf16.msra.mxu0 0
  %2254 = vmatpush.bf16.msra.mxu0 %v2245
  %2255 = vmatmul.bf16.gmra.mxu0 %v2149
  %v2256 = vpop.f32.mrf.mxu0
  %v2257 = vadd.f32 0.0, %v2256
  %v2258 = vpop.f32.mrf.mxu0
  %v2259 = vadd.f32 0.0, %v2258
  %2260 = vmatmul.bf16.gmra.mxu0 %v2152
  %v2261 = vpop.f32.mrf.mxu0
  %v2262 = vadd.f32 0.0, %v2261
  %v2263 = vpop.f32.mrf.mxu0
  %v2264 = vadd.f32 0.0, %v2263
  %2265 = vmatmul.bf16.gmra.mxu0 %v2155
  %v2266 = vpop.f32.mrf.mxu0
  %v2267 = vadd.f32 0.0, %v2266
  %v2268 = vpop.f32.mrf.mxu0
  %v2269 = vadd.f32 0.0, %v2268
  %2270 = vmatmul.bf16.gmra.mxu0 %v2158
  %v2271 = vpop.f32.mrf.mxu0
  %v2272 = vadd.f32 0.0, %v2271
  %v2273 = vpop.f32.mrf.mxu0
  %v2274 = vadd.f32 0.0, %v2273
  %2275 = vmatmul.bf16.gmra.mxu0 %v2161
  %v2276 = vpop.f32.mrf.mxu0
  %v2277 = vadd.f32 0.0, %v2276
  %v2278 = vpop.f32.mrf.mxu0
  %v2279 = vadd.f32 0.0, %v2278
  %2280 = vmatmul.bf16.gmra.mxu0 %v2164
  %v2281 = vpop.f32.mrf.mxu0
  %v2282 = vadd.f32 0.0, %v2281
  %v2283 = vpop.f32.mrf.mxu0
  %v2284 = vadd.f32 0.0, %v2283
  %2285 = vmatmul.bf16.gmra.mxu0 %v2167
  %v2286 = vpop.f32.mrf.mxu0
  %v2287 = vadd.f32 0.0, %v2286
  %v2288 = vpop.f32.mrf.mxu0
  %v2289 = vadd.f32 0.0, %v2288
  %2290 = vmatmul.bf16.gmra.mxu0 %v2170
  %v2291 = vpop.f32.mrf.mxu0
  %v2292 = vadd.f32 0.0, %v2291
  %v2293 = vpop.f32.mrf.mxu0
  %v2294 = vadd.f32 0.0, %v2293
  %2295 = vmatmul.bf16.gmra.mxu0 %v2173
  %v2296 = vpop.f32.mrf.mxu0
  %v2297 = vadd.f32 0.0, %v2296
  %v2298 = vpop.f32.mrf.mxu0
  %v2299 = vadd.f32 0.0, %v2298
  %2300 = vmatmul.bf16.gmra.mxu0 %v2176
  %v2301 = vpop.f32.mrf.mxu0
  %v2302 = vadd.f32 0.0, %v2301
  %v2303 = vpop.f32.mrf.mxu0
  %v2304 = vadd.f32 0.0, %v2303
  %2305 = vmatmul.bf16.gmra.mxu0 %v2179
  %v2306 = vpop.f32.mrf.mxu0
  %v2307 = vadd.f32 0.0, %v2306
  %v2308 = vpop.f32.mrf.mxu0
  %v2309 = vadd.f32 0.0, %v2308
  %2310 = vmatmul.bf16.gmra.mxu0 %v2182
  %v2311 = vpop.f32.mrf.mxu0
  %v2312 = vadd.f32 0.0, %v2311
  %v2313 = vpop.f32.mrf.mxu0
  %v2314 = vadd.f32 0.0, %v2313
  %2315 = vmatmul.bf16.gmra.mxu0 %v2185
  %v2316 = vpop.f32.mrf.mxu0
  %v2317 = vadd.f32 0.0, %v2316
  %v2318 = vpop.f32.mrf.mxu0
  %v2319 = vadd.f32 0.0, %v2318
  %2320 = vmatmul.bf16.gmra.mxu0 %v2188
  %v2321 = vpop.f32.mrf.mxu0
  %v2322 = vadd.f32 0.0, %v2321
  %v2323 = vpop.f32.mrf.mxu0
  %v2324 = vadd.f32 0.0, %v2323
  %2325 = vmatmul.bf16.gmra.mxu0 %v2191
  %v2326 = vpop.f32.mrf.mxu0
  %v2327 = vadd.f32 0.0, %v2326
  %v2328 = vpop.f32.mrf.mxu0
  %v2329 = vadd.f32 0.0, %v2328
  %2330 = vmatmul.bf16.gmra.mxu0 %v2194
  %v2331 = vpop.f32.mrf.mxu0
  %v2332 = vadd.f32 0.0, %v2331
  %v2333 = vpop.f32.mrf.mxu0
  %v2334 = vadd.f32 0.0, %v2333
  %2335 = vmatmul.bf16.gmra.mxu0 %v2197
  %v2336 = vpop.f32.mrf.mxu0
  %v2337 = vadd.f32 0.0, %v2336
  %v2338 = vpop.f32.mrf.mxu0
  %v2339 = vadd.f32 0.0, %v2338
  %2340 = vmatmul.bf16.gmra.mxu0 %v2200
  %v2341 = vpop.f32.mrf.mxu0
  %v2342 = vadd.f32 0.0, %v2341
  %v2343 = vpop.f32.mrf.mxu0
  %v2344 = vadd.f32 0.0, %v2343
  %2345 = vmatmul.bf16.gmra.mxu0 %v2203
  %v2346 = vpop.f32.mrf.mxu0
  %v2347 = vadd.f32 0.0, %v2346
  %v2348 = vpop.f32.mrf.mxu0
  %v2349 = vadd.f32 0.0, %v2348
  %2350 = vmatmul.bf16.gmra.mxu0 %v2206
  %v2351 = vpop.f32.mrf.mxu0
  %v2352 = vadd.f32 0.0, %v2351
  %v2353 = vpop.f32.mrf.mxu0
  %v2354 = vadd.f32 0.0, %v2353
  %2355 = vmatmul.bf16.gmra.mxu0 %v2209
  %v2356 = vpop.f32.mrf.mxu0
  %v2357 = vadd.f32 0.0, %v2356
  %v2358 = vpop.f32.mrf.mxu0
  %v2359 = vadd.f32 0.0, %v2358
  %2360 = vmatmul.bf16.gmra.mxu0 %v2212
  %v2361 = vpop.f32.mrf.mxu0
  %v2362 = vadd.f32 0.0, %v2361
  %v2363 = vpop.f32.mrf.mxu0
  %v2364 = vadd.f32 0.0, %v2363
  %2365 = vmatmul.bf16.gmra.mxu0 %v2215
  %v2366 = vpop.f32.mrf.mxu0
  %v2367 = vadd.f32 0.0, %v2366
  %v2368 = vpop.f32.mrf.mxu0
  %v2369 = vadd.f32 0.0, %v2368
  %2370 = vmatmul.bf16.gmra.mxu0 %v2218
  %v2371 = vpop.f32.mrf.mxu0
  %v2372 = vadd.f32 0.0, %v2371
  %v2373 = vpop.f32.mrf.mxu0
  %v2374 = vadd.f32 0.0, %v2373
  %2375 = vmatmul.bf16.gmra.mxu0 %v2221
  %v2376 = vpop.f32.mrf.mxu0
  %v2377 = vadd.f32 0.0, %v2376
  %v2378 = vpop.f32.mrf.mxu0
  %v2379 = vadd.f32 0.0, %v2378
  %2380 = vmatmul.bf16.gmra.mxu0 %v2224
  %v2381 = vpop.f32.mrf.mxu0
  %v2382 = vadd.f32 0.0, %v2381
  %v2383 = vpop.f32.mrf.mxu0
  %v2384 = vadd.f32 0.0, %v2383
  %2385 = vmatmul.bf16.gmra.mxu0 %v2227
  %v2386 = vpop.f32.mrf.mxu0
  %v2387 = vadd.f32 0.0, %v2386
  %v2388 = vpop.f32.mrf.mxu0
  %v2389 = vadd.f32 0.0, %v2388
  %2390 = vmatmul.bf16.gmra.mxu0 %v2230
  %v2391 = vpop.f32.mrf.mxu0
  %v2392 = vadd.f32 0.0, %v2391
  %v2393 = vpop.f32.mrf.mxu0
  %v2394 = vadd.f32 0.0, %v2393
  %2395 = vmatmul.bf16.gmra.mxu0 %v2233
  %v2396 = vpop.f32.mrf.mxu0
  %v2397 = vadd.f32 0.0, %v2396
  %v2398 = vpop.f32.mrf.mxu0
  %v2399 = vadd.f32 0.0, %v2398
  %2400 = vmatmul.bf16.gmra.mxu0 %v2236
  %v2401 = vpop.f32.mrf.mxu0
  %v2402 = vadd.f32 0.0, %v2401
  %v2403 = vpop.f32.mrf.mxu0
  %v2404 = vadd.f32 0.0, %v2403
  %2405 = vmatmul.bf16.gmra.mxu0 %v2239
  %v2406 = vpop.f32.mrf.mxu0
  %v2407 = vadd.f32 0.0, %v2406
  %v2408 = vpop.f32.mrf.mxu0
  %v2409 = vadd.f32 0.0, %v2408
  %2410 = vmatmul.bf16.gmra.mxu0 %v2242
  %v2411 = vpop.f32.mrf.mxu0
  %v2412 = vadd.f32 0.0, %v2411
  %v2413 = vpop.f32.mrf.mxu0
  %v2414 = vadd.f32 0.0, %v2413
  %2415 = vdwg.mxu0
  %v2416 = vadd.f32 %v1568, %v2257
  %v2417 = vadd.f32 %v1570, %v2259
  %v2418 = vadd.f32 %v1573, %v2262
  %v2419 = vadd.f32 %v1575, %v2264
  %v2420 = vadd.f32 %v1578, %v2267
  %v2421 = vadd.f32 %v1580, %v2269
  %v2422 = vadd.f32 %v1583, %v2272
  %v2423 = vadd.f32 %v1585, %v2274
  %v2424 = vadd.f32 %v1588, %v2277
  %v2425 = vadd.f32 %v1590, %v2279
  %v2426 = vadd.f32 %v1593, %v2282
  %v2427 = vadd.f32 %v1595, %v2284
  %v2428 = vadd.f32 %v1598, %v2287
  %v2429 = vadd.f32 %v1600, %v2289
  %v2430 = vadd.f32 %v1603, %v2292
  %v2431 = vadd.f32 %v1605, %v2294
  %v2432 = vadd.f32 %v1608, %v2297
  %v2433 = vadd.f32 %v1610, %v2299
  %v2434 = vadd.f32 %v1613, %v2302
  %v2435 = vadd.f32 %v1615, %v2304
  %v2436 = vadd.f32 %v1618, %v2307
  %v2437 = vadd.f32 %v1620, %v2309
  %v2438 = vadd.f32 %v1623, %v2312
  %v2439 = vadd.f32 %v1625, %v2314
  %v2440 = vadd.f32 %v1628, %v2317
  %v2441 = vadd.f32 %v1630, %v2319
  %v2442 = vadd.f32 %v1633, %v2322
  %v2443 = vadd.f32 %v1635, %v2324
  %v2444 = vadd.f32 %v1638, %v2327
  %v2445 = vadd.f32 %v1640, %v2329
  %v2446 = vadd.f32 %v1643, %v2332
  %v2447 = vadd.f32 %v1645, %v2334
  %v2448 = vadd.f32 %v1648, %v2337
  %v2449 = vadd.f32 %v1650, %v2339
  %v2450 = vadd.f32 %v1653, %v2342
  %v2451 = vadd.f32 %v1655, %v2344
  %v2452 = vadd.f32 %v1658, %v2347
  %v2453 = vadd.f32 %v1660, %v2349
  %v2454 = vadd.f32 %v1663, %v2352
  %v2455 = vadd.f32 %v1665, %v2354
  %v2456 = vadd.f32 %v1668, %v2357
  %v2457 = vadd.f32 %v1670, %v2359
  %v2458 = vadd.f32 %v1673, %v2362
  %v2459 = vadd.f32 %v1675, %v2364
  %v2460 = vadd.f32 %v1678, %v2367
  %v2461 = vadd.f32 %v1680, %v2369
  %v2462 = vadd.f32 %v1683, %v2372
  %v2463 = vadd.f32 %v1685, %v2374
  %v2464 = vadd.f32 %v1688, %v2377
  %v2465 = vadd.f32 %v1690, %v2379
  %v2466 = vadd.f32 %v1693, %v2382
  %v2467 = vadd.f32 %v1695, %v2384
  %v2468 = vadd.f32 %v1698, %v2387
  %v2469 = vadd.f32 %v1700, %v2389
  %v2470 = vadd.f32 %v1703, %v2392
  %v2471 = vadd.f32 %v1705, %v2394
  %v2472 = vadd.f32 %v1708, %v2397
  %v2473 = vadd.f32 %v1710, %v2399
  %v2474 = vadd.f32 %v1713, %v2402
  %v2475 = vadd.f32 %v1715, %v2404
  %v2476 = vadd.f32 %v1718, %v2407
  %v2477 = vadd.f32 %v1720, %v2409
  %v2478 = vadd.f32 %v1723, %v2412
  %v2479 = vadd.f32 %v1725, %v2414
  %s2480 = scalar_lea.vmem %s43, 12
  %v2481 = vld [vmem:[%s2480] sm:$0xf]
  %v2482 = vld [vmem:[%s2480 + $0x4] sm:$0xf]
  %v2483 = vld [vmem:[%s2480 + $0xc] sm:$0xf]
  %v2484 = vld [vmem:[%s2480 + $0x10] sm:$0xf]
  %v2485 = vld [vmem:[%s2480 + $0x18] sm:$0xf]
  %v2486 = vld [vmem:[%s2480 + $0x1c] sm:$0xf]
  %v2487 = vld [vmem:[%s2480 + $0x24] sm:$0xf]
  %v2488 = vld [vmem:[%s2480 + $0x28] sm:$0xf]
  %v2489 = vld [vmem:[%s2480 + $0x30] sm:$0xf]
  %v2490 = vld [vmem:[%s2480 + $0x34] sm:$0xf]
  %v2491 = vld [vmem:[%s2480 + $0x3c] sm:$0xf]
  %v2492 = vld [vmem:[%s2480 + $0x40] sm:$0xf]
  %v2493 = vld [vmem:[%s2480 + $0x48] sm:$0xf]
  %v2494 = vld [vmem:[%s2480 + $0x4c] sm:$0xf]
  %v2495 = vld [vmem:[%s2480 + $0x54] sm:$0xf]
  %v2496 = vld [vmem:[%s2480 + $0x58] sm:$0xf]
  %v2497 = vld [vmem:[%s2480 + $0x60] sm:$0xf]
  %v2498 = vld [vmem:[%s2480 + $0x64] sm:$0xf]
  %v2499 = vld [vmem:[%s2480 + $0x6c] sm:$0xf]
  %v2500 = vld [vmem:[%s2480 + $0x70] sm:$0xf]
  %v2501 = vld [vmem:[%s2480 + $0x78] sm:$0xf]
  %v2502 = vld [vmem:[%s2480 + $0x7c] sm:$0xf]
  %v2503 = vld [vmem:[%s2480 + $0x84] sm:$0xf]
  %v2504 = vld [vmem:[%s2480 + $0x88] sm:$0xf]
  %v2505 = vld [vmem:[%s2480 + $0x90] sm:$0xf]
  %v2506 = vld [vmem:[%s2480 + $0x94] sm:$0xf]
  %v2507 = vld [vmem:[%s2480 + $0x9c] sm:$0xf]
  %v2508 = vld [vmem:[%s2480 + $0xa0] sm:$0xf]
  %v2509 = vld [vmem:[%s2480 + $0xa8] sm:$0xf]
  %v2510 = vld [vmem:[%s2480 + $0xac] sm:$0xf]
  %v2511 = vld [vmem:[%s2480 + $0xb4] sm:$0xf]
  %v2512 = vld [vmem:[%s2480 + $0xb8] sm:$0xf]
  %v2513 = vld [vmem:[%s2480 + $0xd8] sm:$0xf]
  %v2514 = vld [vmem:[%s2480 + $0xdc] sm:$0xf]
  %v2515 = vld [vmem:[%s2480 + $0xe4] sm:$0xf]
  %v2516 = vld [vmem:[%s2480 + $0xe8] sm:$0xf]
  %v2517 = vld [vmem:[%s2480 + $0xf0] sm:$0xf]
  %v2518 = vld [vmem:[%s2480 + $0xf4] sm:$0xf]
  %v2519 = vld [vmem:[%s2480 + $0xfc] sm:$0xf]
  %v2520 = vld [vmem:[%s2480 + $0x100] sm:$0xf]
  %v2521 = vld [vmem:[%s2480 + $0x108] sm:$0xf]
  %v2522 = vld [vmem:[%s2480 + $0x10c] sm:$0xf]
  %v2523 = vld [vmem:[%s2480 + $0x114] sm:$0xf]
  %v2524 = vld [vmem:[%s2480 + $0x118] sm:$0xf]
  %v2525 = vld [vmem:[%s2480 + $0x120] sm:$0xf]
  %v2526 = vld [vmem:[%s2480 + $0x124] sm:$0xf]
  %v2527 = vld [vmem:[%s2480 + $0x12c] sm:$0xf]
  %v2528 = vld [vmem:[%s2480 + $0x130] sm:$0xf]
  %v2529 = vld [vmem:[%s2480 + $0x138] sm:$0xf]
  %v2530 = vld [vmem:[%s2480 + $0x13c] sm:$0xf]
  %v2531 = vld [vmem:[%s2480 + $0x144] sm:$0xf]
  %v2532 = vld [vmem:[%s2480 + $0x148] sm:$0xf]
  %v2533 = vld [vmem:[%s2480 + $0x150] sm:$0xf]
  %v2534 = vld [vmem:[%s2480 + $0x154] sm:$0xf]
  %v2535 = vld [vmem:[%s2480 + $0x15c] sm:$0xf]
  %v2536 = vld [vmem:[%s2480 + $0x160] sm:$0xf]
  %v2537 = vld [vmem:[%s2480 + $0x168] sm:$0xf]
  %v2538 = vld [vmem:[%s2480 + $0x16c] sm:$0xf]
  %v2539 = vld [vmem:[%s2480 + $0x174] sm:$0xf]
  %v2540 = vld [vmem:[%s2480 + $0x178] sm:$0xf]
  %v2541 = vld [vmem:[%s2480 + $0x180] sm:$0xf]
  %v2542 = vld [vmem:[%s2480 + $0x184] sm:$0xf]
  %v2543 = vld [vmem:[%s2480 + $0x18c] sm:$0xf]
  %v2544 = vld [vmem:[%s2480 + $0x190] sm:$0xf]
  %s2545 = scalar_lea.vmem %s1, 12
  %v2546 = vld [vmem:[%s2545] sm:$0xf]
  %v2611 = vunpack.c.l.b16 %v2481
  %v2612 = vunpack.c.l.b16 %v2482
  %v2613 = vunpack.c.l.b16 %v2483
  %v2614 = vunpack.c.l.b16 %v2484
  %v2615 = vunpack.c.l.b16 %v2485
  %v2616 = vunpack.c.l.b16 %v2486
  %v2617 = vunpack.c.l.b16 %v2487
  %v2618 = vunpack.c.l.b16 %v2488
  %v2619 = vunpack.c.l.b16 %v2489
  %v2620 = vunpack.c.l.b16 %v2490
  %v2621 = vunpack.c.l.b16 %v2491
  %v2622 = vunpack.c.l.b16 %v2492
  %v2623 = vunpack.c.l.b16 %v2493
  %v2624 = vunpack.c.l.b16 %v2494
  %v2625 = vunpack.c.l.b16 %v2495
  %v2626 = vunpack.c.l.b16 %v2496
  %v2627 = vunpack.c.l.b16 %v2497
  %v2628 = vunpack.c.l.b16 %v2498
  %v2629 = vunpack.c.l.b16 %v2499
  %v2630 = vunpack.c.l.b16 %v2500
  %v2631 = vunpack.c.l.b16 %v2501
  %v2632 = vunpack.c.l.b16 %v2502
  %v2633 = vunpack.c.l.b16 %v2503
  %v2634 = vunpack.c.l.b16 %v2504
  %v2635 = vunpack.c.l.b16 %v2505
  %v2636 = vunpack.c.l.b16 %v2506
  %v2637 = vunpack.c.l.b16 %v2507
  %v2638 = vunpack.c.l.b16 %v2508
  %v2639 = vunpack.c.l.b16 %v2509
  %v2640 = vunpack.c.l.b16 %v2510
  %v2641 = vunpack.c.l.b16 %v2511
  %v2642 = vunpack.c.l.b16 %v2512
  %v2643 = vunpack.c.l.b16 %v2513
  %v2644 = vunpack.c.l.b16 %v2514
  %v2645 = vunpack.c.l.b16 %v2515
  %v2646 = vunpack.c.l.b16 %v2516
  %v2647 = vunpack.c.l.b16 %v2517
  %v2648 = vunpack.c.l.b16 %v2518
  %v2649 = vunpack.c.l.b16 %v2519
  %v2650 = vunpack.c.l.b16 %v2520
  %v2651 = vunpack.c.l.b16 %v2521
  %v2652 = vunpack.c.l.b16 %v2522
  %v2653 = vunpack.c.l.b16 %v2523
  %v2654 = vunpack.c.l.b16 %v2524
  %v2655 = vunpack.c.l.b16 %v2525
  %v2656 = vunpack.c.l.b16 %v2526
  %v2657 = vunpack.c.l.b16 %v2527
  %v2658 = vunpack.c.l.b16 %v2528
  %v2659 = vunpack.c.l.b16 %v2529
  %v2660 = vunpack.c.l.b16 %v2530
  %v2661 = vunpack.c.l.b16 %v2531
  %v2662 = vunpack.c.l.b16 %v2532
  %v2663 = vunpack.c.l.b16 %v2533
  %v2664 = vunpack.c.l.b16 %v2534
  %v2665 = vunpack.c.l.b16 %v2535
  %v2666 = vunpack.c.l.b16 %v2536
  %v2667 = vunpack.c.l.b16 %v2537
  %v2668 = vunpack.c.l.b16 %v2538
  %v2669 = vunpack.c.l.b16 %v2539
  %v2670 = vunpack.c.l.b16 %v2540
  %v2671 = vunpack.c.l.b16 %v2541
  %v2672 = vunpack.c.l.b16 %v2542
  %v2673 = vunpack.c.l.b16 %v2543
  %v2674 = vunpack.c.l.b16 %v2544
  %v2675 = vpack.c.b16 %v2612, %v2611
  %v2676 = vpack.c.b16 %v2614, %v2613
  %v2677 = vpack.c.b16 %v2616, %v2615
  %v2678 = vpack.c.b16 %v2618, %v2617
  %v2679 = vpack.c.b16 %v2620, %v2619
  %v2680 = vpack.c.b16 %v2622, %v2621
  %v2681 = vpack.c.b16 %v2624, %v2623
  %v2682 = vpack.c.b16 %v2626, %v2625
  %v2683 = vpack.c.b16 %v2628, %v2627
  %v2684 = vpack.c.b16 %v2630, %v2629
  %v2685 = vpack.c.b16 %v2632, %v2631
  %v2686 = vpack.c.b16 %v2634, %v2633
  %v2687 = vpack.c.b16 %v2636, %v2635
  %v2688 = vpack.c.b16 %v2638, %v2637
  %v2689 = vpack.c.b16 %v2640, %v2639
  %v2690 = vpack.c.b16 %v2642, %v2641
  %v2691 = vpack.c.b16 %v2644, %v2643
  %v2692 = vpack.c.b16 %v2646, %v2645
  %v2693 = vpack.c.b16 %v2648, %v2647
  %v2694 = vpack.c.b16 %v2650, %v2649
  %v2695 = vpack.c.b16 %v2652, %v2651
  %v2696 = vpack.c.b16 %v2654, %v2653
  %v2697 = vpack.c.b16 %v2656, %v2655
  %v2698 = vpack.c.b16 %v2658, %v2657
  %v2699 = vpack.c.b16 %v2660, %v2659
  %v2700 = vpack.c.b16 %v2662, %v2661
  %v2701 = vpack.c.b16 %v2664, %v2663
  %v2702 = vpack.c.b16 %v2666, %v2665
  %v2703 = vpack.c.b16 %v2668, %v2667
  %v2704 = vpack.c.b16 %v2670, %v2669
  %v2705 = vpack.c.b16 %v2672, %v2671
  %v2706 = vpack.c.b16 %v2674, %v2673
  %v2708 = vsel %vm1029, %v2675, 0
  %v2711 = vsel %vm1029, %v2676, 0
  %v2714 = vsel %vm1029, %v2677, 0
  %v2717 = vsel %vm1029, %v2678, 0
  %v2720 = vsel %vm1029, %v2679, 0
  %v2723 = vsel %vm1029, %v2680, 0
  %v2726 = vsel %vm1029, %v2681, 0
  %v2729 = vsel %vm1029, %v2682, 0
  %v2732 = vsel %vm1029, %v2683, 0
  %v2735 = vsel %vm1029, %v2684, 0
  %v2738 = vsel %vm1029, %v2685, 0
  %v2741 = vsel %vm1029, %v2686, 0
  %v2744 = vsel %vm1029, %v2687, 0
  %v2747 = vsel %vm1029, %v2688, 0
  %v2750 = vsel %vm1029, %v2689, 0
  %v2753 = vsel %vm1029, %v2690, 0
  %v2756 = vsel %vm1029, %v2691, 0
  %v2759 = vsel %vm1029, %v2692, 0
  %v2762 = vsel %vm1029, %v2693, 0
  %v2765 = vsel %vm1029, %v2694, 0
  %v2768 = vsel %vm1029, %v2695, 0
  %v2771 = vsel %vm1029, %v2696, 0
  %v2774 = vsel %vm1029, %v2697, 0
  %v2777 = vsel %vm1029, %v2698, 0
  %v2780 = vsel %vm1029, %v2699, 0
  %v2783 = vsel %vm1029, %v2700, 0
  %v2786 = vsel %vm1029, %v2701, 0
  %v2789 = vsel %vm1029, %v2702, 0
  %v2792 = vsel %vm1029, %v2703, 0
  %v2795 = vsel %vm1029, %v2704, 0
  %v2798 = vsel %vm1029, %v2705, 0
  %v2801 = vsel %vm1029, %v2706, 0
  %v2804 = vsel %vm1126, %v2546, 0
  %2806 = vmatpush.bf16.msra.mxu0 0
  %2807 = vmatpush.bf16.msra.mxu0 0
  %2808 = vmatpush.bf16.msra.mxu0 0
  %2809 = vmatpush.bf16.msra.mxu0 0
  %2810 = vmatpush.bf16.msra.mxu0 0
  %2811 = vmatpush.bf16.msra.mxu0 0
  %2812 = vmatpush.bf16.msra.mxu0 0
  %2813 = vmatpush.bf16.msra.mxu0 %v2804
  %2814 = vmatmul.bf16.gmra.mxu0 %v2708
  %v2815 = vpop.f32.mrf.mxu0
  %v2816 = vadd.f32 0.0, %v2815
  %v2817 = vpop.f32.mrf.mxu0
  %v2818 = vadd.f32 0.0, %v2817
  %2819 = vmatmul.bf16.gmra.mxu0 %v2711
  %v2820 = vpop.f32.mrf.mxu0
  %v2821 = vadd.f32 0.0, %v2820
  %v2822 = vpop.f32.mrf.mxu0
  %v2823 = vadd.f32 0.0, %v2822
  %2824 = vmatmul.bf16.gmra.mxu0 %v2714
  %v2825 = vpop.f32.mrf.mxu0
  %v2826 = vadd.f32 0.0, %v2825
  %v2827 = vpop.f32.mrf.mxu0
  %v2828 = vadd.f32 0.0, %v2827
  %2829 = vmatmul.bf16.gmra.mxu0 %v2717
  %v2830 = vpop.f32.mrf.mxu0
  %v2831 = vadd.f32 0.0, %v2830
  %v2832 = vpop.f32.mrf.mxu0
  %v2833 = vadd.f32 0.0, %v2832
  %2834 = vmatmul.bf16.gmra.mxu0 %v2720
  %v2835 = vpop.f32.mrf.mxu0
  %v2836 = vadd.f32 0.0, %v2835
  %v2837 = vpop.f32.mrf.mxu0
  %v2838 = vadd.f32 0.0, %v2837
  %2839 = vmatmul.bf16.gmra.mxu0 %v2723
  %v2840 = vpop.f32.mrf.mxu0
  %v2841 = vadd.f32 0.0, %v2840
  %v2842 = vpop.f32.mrf.mxu0
  %v2843 = vadd.f32 0.0, %v2842
  %2844 = vmatmul.bf16.gmra.mxu0 %v2726
  %v2845 = vpop.f32.mrf.mxu0
  %v2846 = vadd.f32 0.0, %v2845
  %v2847 = vpop.f32.mrf.mxu0
  %v2848 = vadd.f32 0.0, %v2847
  %2849 = vmatmul.bf16.gmra.mxu0 %v2729
  %v2850 = vpop.f32.mrf.mxu0
  %v2851 = vadd.f32 0.0, %v2850
  %v2852 = vpop.f32.mrf.mxu0
  %v2853 = vadd.f32 0.0, %v2852
  %2854 = vmatmul.bf16.gmra.mxu0 %v2732
  %v2855 = vpop.f32.mrf.mxu0
  %v2856 = vadd.f32 0.0, %v2855
  %v2857 = vpop.f32.mrf.mxu0
  %v2858 = vadd.f32 0.0, %v2857
  %2859 = vmatmul.bf16.gmra.mxu0 %v2735
  %v2860 = vpop.f32.mrf.mxu0
  %v2861 = vadd.f32 0.0, %v2860
  %v2862 = vpop.f32.mrf.mxu0
  %v2863 = vadd.f32 0.0, %v2862
  %2864 = vmatmul.bf16.gmra.mxu0 %v2738
  %v2865 = vpop.f32.mrf.mxu0
  %v2866 = vadd.f32 0.0, %v2865
  %v2867 = vpop.f32.mrf.mxu0
  %v2868 = vadd.f32 0.0, %v2867
  %2869 = vmatmul.bf16.gmra.mxu0 %v2741
  %v2870 = vpop.f32.mrf.mxu0
  %v2871 = vadd.f32 0.0, %v2870
  %v2872 = vpop.f32.mrf.mxu0
  %v2873 = vadd.f32 0.0, %v2872
  %2874 = vmatmul.bf16.gmra.mxu0 %v2744
  %v2875 = vpop.f32.mrf.mxu0
  %v2876 = vadd.f32 0.0, %v2875
  %v2877 = vpop.f32.mrf.mxu0
  %v2878 = vadd.f32 0.0, %v2877
  %2879 = vmatmul.bf16.gmra.mxu0 %v2747
  %v2880 = vpop.f32.mrf.mxu0
  %v2881 = vadd.f32 0.0, %v2880
  %v2882 = vpop.f32.mrf.mxu0
  %v2883 = vadd.f32 0.0, %v2882
  %2884 = vmatmul.bf16.gmra.mxu0 %v2750
  %v2885 = vpop.f32.mrf.mxu0
  %v2886 = vadd.f32 0.0, %v2885
  %v2887 = vpop.f32.mrf.mxu0
  %v2888 = vadd.f32 0.0, %v2887
  %2889 = vmatmul.bf16.gmra.mxu0 %v2753
  %v2890 = vpop.f32.mrf.mxu0
  %v2891 = vadd.f32 0.0, %v2890
  %v2892 = vpop.f32.mrf.mxu0
  %v2893 = vadd.f32 0.0, %v2892
  %2894 = vmatmul.bf16.gmra.mxu0 %v2756
  %v2895 = vpop.f32.mrf.mxu0
  %v2896 = vadd.f32 0.0, %v2895
  %v2897 = vpop.f32.mrf.mxu0
  %v2898 = vadd.f32 0.0, %v2897
  %2899 = vmatmul.bf16.gmra.mxu0 %v2759
  %v2900 = vpop.f32.mrf.mxu0
  %v2901 = vadd.f32 0.0, %v2900
  %v2902 = vpop.f32.mrf.mxu0
  %v2903 = vadd.f32 0.0, %v2902
  %2904 = vmatmul.bf16.gmra.mxu0 %v2762
  %v2905 = vpop.f32.mrf.mxu0
  %v2906 = vadd.f32 0.0, %v2905
  %v2907 = vpop.f32.mrf.mxu0
  %v2908 = vadd.f32 0.0, %v2907
  %2909 = vmatmul.bf16.gmra.mxu0 %v2765
  %v2910 = vpop.f32.mrf.mxu0
  %v2911 = vadd.f32 0.0, %v2910
  %v2912 = vpop.f32.mrf.mxu0
  %v2913 = vadd.f32 0.0, %v2912
  %2914 = vmatmul.bf16.gmra.mxu0 %v2768
  %v2915 = vpop.f32.mrf.mxu0
  %v2916 = vadd.f32 0.0, %v2915
  %v2917 = vpop.f32.mrf.mxu0
  %v2918 = vadd.f32 0.0, %v2917
  %2919 = vmatmul.bf16.gmra.mxu0 %v2771
  %v2920 = vpop.f32.mrf.mxu0
  %v2921 = vadd.f32 0.0, %v2920
  %v2922 = vpop.f32.mrf.mxu0
  %v2923 = vadd.f32 0.0, %v2922
  %2924 = vmatmul.bf16.gmra.mxu0 %v2774
  %v2925 = vpop.f32.mrf.mxu0
  %v2926 = vadd.f32 0.0, %v2925
  %v2927 = vpop.f32.mrf.mxu0
  %v2928 = vadd.f32 0.0, %v2927
  %2929 = vmatmul.bf16.gmra.mxu0 %v2777
  %v2930 = vpop.f32.mrf.mxu0
  %v2931 = vadd.f32 0.0, %v2930
  %v2932 = vpop.f32.mrf.mxu0
  %v2933 = vadd.f32 0.0, %v2932
  %2934 = vmatmul.bf16.gmra.mxu0 %v2780
  %v2935 = vpop.f32.mrf.mxu0
  %v2936 = vadd.f32 0.0, %v2935
  %v2937 = vpop.f32.mrf.mxu0
  %v2938 = vadd.f32 0.0, %v2937
  %2939 = vmatmul.bf16.gmra.mxu0 %v2783
  %v2940 = vpop.f32.mrf.mxu0
  %v2941 = vadd.f32 0.0, %v2940
  %v2942 = vpop.f32.mrf.mxu0
  %v2943 = vadd.f32 0.0, %v2942
  %2944 = vmatmul.bf16.gmra.mxu0 %v2786
  %v2945 = vpop.f32.mrf.mxu0
  %v2946 = vadd.f32 0.0, %v2945
  %v2947 = vpop.f32.mrf.mxu0
  %v2948 = vadd.f32 0.0, %v2947
  %2949 = vmatmul.bf16.gmra.mxu0 %v2789
  %v2950 = vpop.f32.mrf.mxu0
  %v2951 = vadd.f32 0.0, %v2950
  %v2952 = vpop.f32.mrf.mxu0
  %v2953 = vadd.f32 0.0, %v2952
  %2954 = vmatmul.bf16.gmra.mxu0 %v2792
  %v2955 = vpop.f32.mrf.mxu0
  %v2956 = vadd.f32 0.0, %v2955
  %v2957 = vpop.f32.mrf.mxu0
  %v2958 = vadd.f32 0.0, %v2957
  %2959 = vmatmul.bf16.gmra.mxu0 %v2795
  %v2960 = vpop.f32.mrf.mxu0
  %v2961 = vadd.f32 0.0, %v2960
  %v2962 = vpop.f32.mrf.mxu0
  %v2963 = vadd.f32 0.0, %v2962
  %2964 = vmatmul.bf16.gmra.mxu0 %v2798
  %v2965 = vpop.f32.mrf.mxu0
  %v2966 = vadd.f32 0.0, %v2965
  %v2967 = vpop.f32.mrf.mxu0
  %v2968 = vadd.f32 0.0, %v2967
  %2969 = vmatmul.bf16.gmra.mxu0 %v2801
  %v2970 = vpop.f32.mrf.mxu0
  %v2971 = vadd.f32 0.0, %v2970
  %v2972 = vpop.f32.mrf.mxu0
  %v2973 = vadd.f32 0.0, %v2972
  %2974 = vdwg.mxu0
  %v2975 = vadd.f32 %v2416, %v2816
  %v2976 = vadd.f32 %v2417, %v2818
  %v2977 = vadd.f32 %v2418, %v2821
  %v2978 = vadd.f32 %v2419, %v2823
  %v2979 = vadd.f32 %v2420, %v2826
  %v2980 = vadd.f32 %v2421, %v2828
  %v2981 = vadd.f32 %v2422, %v2831
  %v2982 = vadd.f32 %v2423, %v2833
  %v2983 = vadd.f32 %v2424, %v2836
  %v2984 = vadd.f32 %v2425, %v2838
  %v2985 = vadd.f32 %v2426, %v2841
  %v2986 = vadd.f32 %v2427, %v2843
  %v2987 = vadd.f32 %v2428, %v2846
  %v2988 = vadd.f32 %v2429, %v2848
  %v2989 = vadd.f32 %v2430, %v2851
  %v2990 = vadd.f32 %v2431, %v2853
  %v2991 = vadd.f32 %v2432, %v2856
  %v2992 = vadd.f32 %v2433, %v2858
  %v2993 = vadd.f32 %v2434, %v2861
  %v2994 = vadd.f32 %v2435, %v2863
  %v2995 = vadd.f32 %v2436, %v2866
  %v2996 = vadd.f32 %v2437, %v2868
  %v2997 = vadd.f32 %v2438, %v2871
  %v2998 = vadd.f32 %v2439, %v2873
  %v2999 = vadd.f32 %v2440, %v2876
  %v3000 = vadd.f32 %v2441, %v2878
  %v3001 = vadd.f32 %v2442, %v2881
  %v3002 = vadd.f32 %v2443, %v2883
  %v3003 = vadd.f32 %v2444, %v2886
  %v3004 = vadd.f32 %v2445, %v2888
  %v3005 = vadd.f32 %v2446, %v2891
  %v3006 = vadd.f32 %v2447, %v2893
  %v3007 = vadd.f32 %v2448, %v2896
  %v3008 = vadd.f32 %v2449, %v2898
  %v3009 = vadd.f32 %v2450, %v2901
  %v3010 = vadd.f32 %v2451, %v2903
  %v3011 = vadd.f32 %v2452, %v2906
  %v3012 = vadd.f32 %v2453, %v2908
  %v3013 = vadd.f32 %v2454, %v2911
  %v3014 = vadd.f32 %v2455, %v2913
  %v3015 = vadd.f32 %v2456, %v2916
  %v3016 = vadd.f32 %v2457, %v2918
  %v3017 = vadd.f32 %v2458, %v2921
  %v3018 = vadd.f32 %v2459, %v2923
  %v3019 = vadd.f32 %v2460, %v2926
  %v3020 = vadd.f32 %v2461, %v2928
  %v3021 = vadd.f32 %v2462, %v2931
  %v3022 = vadd.f32 %v2463, %v2933
  %v3023 = vadd.f32 %v2464, %v2936
  %v3024 = vadd.f32 %v2465, %v2938
  %v3025 = vadd.f32 %v2466, %v2941
  %v3026 = vadd.f32 %v2467, %v2943
  %v3027 = vadd.f32 %v2468, %v2946
  %v3028 = vadd.f32 %v2469, %v2948
  %v3029 = vadd.f32 %v2470, %v2951
  %v3030 = vadd.f32 %v2471, %v2953
  %v3031 = vadd.f32 %v2472, %v2956
  %v3032 = vadd.f32 %v2473, %v2958
  %v3033 = vadd.f32 %v2474, %v2961
  %v3034 = vadd.f32 %v2475, %v2963
  %v3035 = vadd.f32 %v2476, %v2966
  %v3036 = vadd.f32 %v2477, %v2968
  %v3037 = vadd.f32 %v2478, %v2971
  %v3038 = vadd.f32 %v2479, %v2973
  %v3039 = vld [vmem:[%s2480] sm:$0xf]
  %v3040 = vld [vmem:[%s2480 + $0x4] sm:$0xf]
  %v3041 = vld [vmem:[%s2480 + $0x8] sm:$0x1]
  %v3042 = vld [vmem:[%s2480 + $0xc] sm:$0xf]
  %v3043 = vld [vmem:[%s2480 + $0x10] sm:$0xf]
  %v3044 = vld [vmem:[%s2480 + $0x14] sm:$0x1]
  %v3045 = vld [vmem:[%s2480 + $0x18] sm:$0xf]
  %v3046 = vld [vmem:[%s2480 + $0x1c] sm:$0xf]
  %v3047 = vld [vmem:[%s2480 + $0x20] sm:$0x1]
  %v3048 = vld [vmem:[%s2480 + $0x24] sm:$0xf]
  %v3049 = vld [vmem:[%s2480 + $0x28] sm:$0xf]
  %v3050 = vld [vmem:[%s2480 + $0x2c] sm:$0x1]
  %v3051 = vld [vmem:[%s2480 + $0x30] sm:$0xf]
  %v3052 = vld [vmem:[%s2480 + $0x34] sm:$0xf]
  %v3053 = vld [vmem:[%s2480 + $0x38] sm:$0x1]
  %v3054 = vld [vmem:[%s2480 + $0x3c] sm:$0xf]
  %v3055 = vld [vmem:[%s2480 + $0x40] sm:$0xf]
  %v3056 = vld [vmem:[%s2480 + $0x44] sm:$0x1]
  %v3057 = vld [vmem:[%s2480 + $0x48] sm:$0xf]
  %v3058 = vld [vmem:[%s2480 + $0x4c] sm:$0xf]
  %v3059 = vld [vmem:[%s2480 + $0x50] sm:$0x1]
  %v3060 = vld [vmem:[%s2480 + $0x54] sm:$0xf]
  %v3061 = vld [vmem:[%s2480 + $0x58] sm:$0xf]
  %v3062 = vld [vmem:[%s2480 + $0x5c] sm:$0x1]
  %v3063 = vld [vmem:[%s2480 + $0x60] sm:$0xf]
  %v3064 = vld [vmem:[%s2480 + $0x64] sm:$0xf]
  %v3065 = vld [vmem:[%s2480 + $0x68] sm:$0x1]
  %v3066 = vld [vmem:[%s2480 + $0x6c] sm:$0xf]
  %v3067 = vld [vmem:[%s2480 + $0x70] sm:$0xf]
  %v3068 = vld [vmem:[%s2480 + $0x74] sm:$0x1]
  %v3069 = vld [vmem:[%s2480 + $0x78] sm:$0xf]
  %v3070 = vld [vmem:[%s2480 + $0x7c] sm:$0xf]
  %v3071 = vld [vmem:[%s2480 + $0x80] sm:$0x1]
  %v3072 = vld [vmem:[%s2480 + $0x84] sm:$0xf]
  %v3073 = vld [vmem:[%s2480 + $0x88] sm:$0xf]
  %v3074 = vld [vmem:[%s2480 + $0x8c] sm:$0x1]
  %v3075 = vld [vmem:[%s2480 + $0x90] sm:$0xf]
  %v3076 = vld [vmem:[%s2480 + $0x94] sm:$0xf]
  %v3077 = vld [vmem:[%s2480 + $0x98] sm:$0x1]
  %v3078 = vld [vmem:[%s2480 + $0x9c] sm:$0xf]
  %v3079 = vld [vmem:[%s2480 + $0xa0] sm:$0xf]
  %v3080 = vld [vmem:[%s2480 + $0xa4] sm:$0x1]
  %v3081 = vld [vmem:[%s2480 + $0xa8] sm:$0xf]
  %v3082 = vld [vmem:[%s2480 + $0xac] sm:$0xf]
  %v3083 = vld [vmem:[%s2480 + $0xb0] sm:$0x1]
  %v3084 = vld [vmem:[%s2480 + $0xb4] sm:$0xf]
  %v3085 = vld [vmem:[%s2480 + $0xb8] sm:$0xf]
  %v3086 = vld [vmem:[%s2480 + $0xbc] sm:$0x1]
  %v3087 = vld [vmem:[%s2480 + $0xd8] sm:$0xf]
  %v3088 = vld [vmem:[%s2480 + $0xdc] sm:$0xf]
  %v3089 = vld [vmem:[%s2480 + $0xe0] sm:$0x1]
  %v3090 = vld [vmem:[%s2480 + $0xe4] sm:$0xf]
  %v3091 = vld [vmem:[%s2480 + $0xe8] sm:$0xf]
  %v3092 = vld [vmem:[%s2480 + $0xec] sm:$0x1]
  %v3093 = vld [vmem:[%s2480 + $0xf0] sm:$0xf]
  %v3094 = vld [vmem:[%s2480 + $0xf4] sm:$0xf]
  %v3095 = vld [vmem:[%s2480 + $0xf8] sm:$0x1]
  %v3096 = vld [vmem:[%s2480 + $0xfc] sm:$0xf]
  %v3097 = vld [vmem:[%s2480 + $0x100] sm:$0xf]
  %v3098 = vld [vmem:[%s2480 + $0x104] sm:$0x1]
  %v3099 = vld [vmem:[%s2480 + $0x108] sm:$0xf]
  %v3100 = vld [vmem:[%s2480 + $0x10c] sm:$0xf]
  %v3101 = vld [vmem:[%s2480 + $0x110] sm:$0x1]
  %v3102 = vld [vmem:[%s2480 + $0x114] sm:$0xf]
  %v3103 = vld [vmem:[%s2480 + $0x118] sm:$0xf]
  %v3104 = vld [vmem:[%s2480 + $0x11c] sm:$0x1]
  %v3105 = vld [vmem:[%s2480 + $0x120] sm:$0xf]
  %v3106 = vld [vmem:[%s2480 + $0x124] sm:$0xf]
  %v3107 = vld [vmem:[%s2480 + $0x128] sm:$0x1]
  %v3108 = vld [vmem:[%s2480 + $0x12c] sm:$0xf]
  %v3109 = vld [vmem:[%s2480 + $0x130] sm:$0xf]
  %v3110 = vld [vmem:[%s2480 + $0x134] sm:$0x1]
  %v3111 = vld [vmem:[%s2480 + $0x138] sm:$0xf]
  %v3112 = vld [vmem:[%s2480 + $0x13c] sm:$0xf]
  %v3113 = vld [vmem:[%s2480 + $0x140] sm:$0x1]
  %v3114 = vld [vmem:[%s2480 + $0x144] sm:$0xf]
  %v3115 = vld [vmem:[%s2480 + $0x148] sm:$0xf]
  %v3116 = vld [vmem:[%s2480 + $0x14c] sm:$0x1]
  %v3117 = vld [vmem:[%s2480 + $0x150] sm:$0xf]
  %v3118 = vld [vmem:[%s2480 + $0x154] sm:$0xf]
  %v3119 = vld [vmem:[%s2480 + $0x158] sm:$0x1]
  %v3120 = vld [vmem:[%s2480 + $0x15c] sm:$0xf]
  %v3121 = vld [vmem:[%s2480 + $0x160] sm:$0xf]
  %v3122 = vld [vmem:[%s2480 + $0x164] sm:$0x1]
  %v3123 = vld [vmem:[%s2480 + $0x168] sm:$0xf]
  %v3124 = vld [vmem:[%s2480 + $0x16c] sm:$0xf]
  %v3125 = vld [vmem:[%s2480 + $0x170] sm:$0x1]
  %v3126 = vld [vmem:[%s2480 + $0x174] sm:$0xf]
  %v3127 = vld [vmem:[%s2480 + $0x178] sm:$0xf]
  %v3128 = vld [vmem:[%s2480 + $0x17c] sm:$0x1]
  %v3129 = vld [vmem:[%s2480 + $0x180] sm:$0xf]
  %v3130 = vld [vmem:[%s2480 + $0x184] sm:$0xf]
  %v3131 = vld [vmem:[%s2480 + $0x188] sm:$0x1]
  %v3132 = vld [vmem:[%s2480 + $0x18c] sm:$0xf]
  %v3133 = vld [vmem:[%s2480 + $0x190] sm:$0xf]
  %v3134 = vld [vmem:[%s2480 + $0x194] sm:$0x1]
  %v3136 = vshrl.u32 %v3039, 16
  %v3138 = vrot.slane %v3136, 4
  %v3139 = vshll.u32 %v3039, 16
  %v3141 = vrot.slane %v3139, 5
  %v3142 = vor.u32 %v3138, %v3141
  %v3143 = vrot.slane %v3142, 4
  %v3145 = vshll.u32 %v3040, 16
  %v3147 = vrot.slane %v3145, 5
  %v3148 = vsel %vm162, %v3143, %v3147
  %v3149 = vshrl.u32 %v3040, 16
  %v3151 = vrot.slane %v3149, 4
  %v3152 = vor.u32 %v3151, %v3147
  %v3153 = vrot.slane %v3152, 4
  %v3155 = vshll.u32 %v3041, 16
  %v3157 = vrot.slane %v3155, 5
  %v3158 = vsel %vm162, %v3153, %v3157
  %v3160 = vshrl.u32 %v3042, 16
  %v3162 = vrot.slane %v3160, 4
  %v3163 = vshll.u32 %v3042, 16
  %v3165 = vrot.slane %v3163, 5
  %v3166 = vor.u32 %v3162, %v3165
  %v3167 = vrot.slane %v3166, 4
  %v3169 = vshll.u32 %v3043, 16
  %v3171 = vrot.slane %v3169, 5
  %v3172 = vsel %vm162, %v3167, %v3171
  %v3173 = vshrl.u32 %v3043, 16
  %v3175 = vrot.slane %v3173, 4
  %v3176 = vor.u32 %v3175, %v3171
  %v3177 = vrot.slane %v3176, 4
  %v3179 = vshll.u32 %v3044, 16
  %v3181 = vrot.slane %v3179, 5
  %v3182 = vsel %vm162, %v3177, %v3181
  %v3184 = vshrl.u32 %v3045, 16
  %v3186 = vrot.slane %v3184, 4
  %v3187 = vshll.u32 %v3045, 16
  %v3189 = vrot.slane %v3187, 5
  %v3190 = vor.u32 %v3186, %v3189
  %v3191 = vrot.slane %v3190, 4
  %v3193 = vshll.u32 %v3046, 16
  %v3195 = vrot.slane %v3193, 5
  %v3196 = vsel %vm162, %v3191, %v3195
  %v3197 = vshrl.u32 %v3046, 16
  %v3199 = vrot.slane %v3197, 4
  %v3200 = vor.u32 %v3199, %v3195
  %v3201 = vrot.slane %v3200, 4
  %v3203 = vshll.u32 %v3047, 16
  %v3205 = vrot.slane %v3203, 5
  %v3206 = vsel %vm162, %v3201, %v3205
  %v3208 = vshrl.u32 %v3048, 16
  %v3210 = vrot.slane %v3208, 4
  %v3211 = vshll.u32 %v3048, 16
  %v3213 = vrot.slane %v3211, 5
  %v3214 = vor.u32 %v3210, %v3213
  %v3215 = vrot.slane %v3214, 4
  %v3217 = vshll.u32 %v3049, 16
  %v3219 = vrot.slane %v3217, 5
  %v3220 = vsel %vm162, %v3215, %v3219
  %v3221 = vshrl.u32 %v3049, 16
  %v3223 = vrot.slane %v3221, 4
  %v3224 = vor.u32 %v3223, %v3219
  %v3225 = vrot.slane %v3224, 4
  %v3227 = vshll.u32 %v3050, 16
  %v3229 = vrot.slane %v3227, 5
  %v3230 = vsel %vm162, %v3225, %v3229
  %v3232 = vshrl.u32 %v3051, 16
  %v3234 = vrot.slane %v3232, 4
  %v3235 = vshll.u32 %v3051, 16
  %v3237 = vrot.slane %v3235, 5
  %v3238 = vor.u32 %v3234, %v3237
  %v3239 = vrot.slane %v3238, 4
  %v3241 = vshll.u32 %v3052, 16
  %v3243 = vrot.slane %v3241, 5
  %v3244 = vsel %vm162, %v3239, %v3243
  %v3245 = vshrl.u32 %v3052, 16
  %v3247 = vrot.slane %v3245, 4
  %v3248 = vor.u32 %v3247, %v3243
  %v3249 = vrot.slane %v3248, 4
  %v3251 = vshll.u32 %v3053, 16
  %v3253 = vrot.slane %v3251, 5
  %v3254 = vsel %vm162, %v3249, %v3253
  %v3256 = vshrl.u32 %v3054, 16
  %v3258 = vrot.slane %v3256, 4
  %v3259 = vshll.u32 %v3054, 16
  %v3261 = vrot.slane %v3259, 5
  %v3262 = vor.u32 %v3258, %v3261
  %v3263 = vrot.slane %v3262, 4
  %v3265 = vshll.u32 %v3055, 16
  %v3267 = vrot.slane %v3265, 5
  %v3268 = vsel %vm162, %v3263, %v3267
  %v3269 = vshrl.u32 %v3055, 16
  %v3271 = vrot.slane %v3269, 4
  %v3272 = vor.u32 %v3271, %v3267
  %v3273 = vrot.slane %v3272, 4
  %v3275 = vshll.u32 %v3056, 16
  %v3277 = vrot.slane %v3275, 5
  %v3278 = vsel %vm162, %v3273, %v3277
  %v3280 = vshrl.u32 %v3057, 16
  %v3282 = vrot.slane %v3280, 4
  %v3283 = vshll.u32 %v3057, 16
  %v3285 = vrot.slane %v3283, 5
  %v3286 = vor.u32 %v3282, %v3285
  %v3287 = vrot.slane %v3286, 4
  %v3289 = vshll.u32 %v3058, 16
  %v3291 = vrot.slane %v3289, 5
  %v3292 = vsel %vm162, %v3287, %v3291
  %v3293 = vshrl.u32 %v3058, 16
  %v3295 = vrot.slane %v3293, 4
  %v3296 = vor.u32 %v3295, %v3291
  %v3297 = vrot.slane %v3296, 4
  %v3299 = vshll.u32 %v3059, 16
  %v3301 = vrot.slane %v3299, 5
  %v3302 = vsel %vm162, %v3297, %v3301
  %v3304 = vshrl.u32 %v3060, 16
  %v3306 = vrot.slane %v3304, 4
  %v3307 = vshll.u32 %v3060, 16
  %v3309 = vrot.slane %v3307, 5
  %v3310 = vor.u32 %v3306, %v3309
  %v3311 = vrot.slane %v3310, 4
  %v3313 = vshll.u32 %v3061, 16
  %v3315 = vrot.slane %v3313, 5
  %v3316 = vsel %vm162, %v3311, %v3315
  %v3317 = vshrl.u32 %v3061, 16
  %v3319 = vrot.slane %v3317, 4
  %v3320 = vor.u32 %v3319, %v3315
  %v3321 = vrot.slane %v3320, 4
  %v3323 = vshll.u32 %v3062, 16
  %v3325 = vrot.slane %v3323, 5
  %v3326 = vsel %vm162, %v3321, %v3325
  %v3328 = vshrl.u32 %v3063, 16
  %v3330 = vrot.slane %v3328, 4
  %v3331 = vshll.u32 %v3063, 16
  %v3333 = vrot.slane %v3331, 5
  %v3334 = vor.u32 %v3330, %v3333
  %v3335 = vrot.slane %v3334, 4
  %v3337 = vshll.u32 %v3064, 16
  %v3339 = vrot.slane %v3337, 5
  %v3340 = vsel %vm162, %v3335, %v3339
  %v3341 = vshrl.u32 %v3064, 16
  %v3343 = vrot.slane %v3341, 4
  %v3344 = vor.u32 %v3343, %v3339
  %v3345 = vrot.slane %v3344, 4
  %v3347 = vshll.u32 %v3065, 16
  %v3349 = vrot.slane %v3347, 5
  %v3350 = vsel %vm162, %v3345, %v3349
  %v3352 = vshrl.u32 %v3066, 16
  %v3354 = vrot.slane %v3352, 4
  %v3355 = vshll.u32 %v3066, 16
  %v3357 = vrot.slane %v3355, 5
  %v3358 = vor.u32 %v3354, %v3357
  %v3359 = vrot.slane %v3358, 4
  %v3361 = vshll.u32 %v3067, 16
  %v3363 = vrot.slane %v3361, 5
  %v3364 = vsel %vm162, %v3359, %v3363
  %v3365 = vshrl.u32 %v3067, 16
  %v3367 = vrot.slane %v3365, 4
  %v3368 = vor.u32 %v3367, %v3363
  %v3369 = vrot.slane %v3368, 4
  %v3371 = vshll.u32 %v3068, 16
  %v3373 = vrot.slane %v3371, 5
  %v3374 = vsel %vm162, %v3369, %v3373
  %v3376 = vshrl.u32 %v3069, 16
  %v3378 = vrot.slane %v3376, 4
  %v3379 = vshll.u32 %v3069, 16
  %v3381 = vrot.slane %v3379, 5
  %v3382 = vor.u32 %v3378, %v3381
  %v3383 = vrot.slane %v3382, 4
  %v3385 = vshll.u32 %v3070, 16
  %v3387 = vrot.slane %v3385, 5
  %v3388 = vsel %vm162, %v3383, %v3387
  %v3389 = vshrl.u32 %v3070, 16
  %v3391 = vrot.slane %v3389, 4
  %v3392 = vor.u32 %v3391, %v3387
  %v3393 = vrot.slane %v3392, 4
  %v3395 = vshll.u32 %v3071, 16
  %v3397 = vrot.slane %v3395, 5
  %v3398 = vsel %vm162, %v3393, %v3397
  %v3400 = vshrl.u32 %v3072, 16
  %v3402 = vrot.slane %v3400, 4
  %v3403 = vshll.u32 %v3072, 16
  %v3405 = vrot.slane %v3403, 5
  %v3406 = vor.u32 %v3402, %v3405
  %v3407 = vrot.slane %v3406, 4
  %v3409 = vshll.u32 %v3073, 16
  %v3411 = vrot.slane %v3409, 5
  %v3412 = vsel %vm162, %v3407, %v3411
  %v3413 = vshrl.u32 %v3073, 16
  %v3415 = vrot.slane %v3413, 4
  %v3416 = vor.u32 %v3415, %v3411
  %v3417 = vrot.slane %v3416, 4
  %v3419 = vshll.u32 %v3074, 16
  %v3421 = vrot.slane %v3419, 5
  %v3422 = vsel %vm162, %v3417, %v3421
  %v3424 = vshrl.u32 %v3075, 16
  %v3426 = vrot.slane %v3424, 4
  %v3427 = vshll.u32 %v3075, 16
  %v3429 = vrot.slane %v3427, 5
  %v3430 = vor.u32 %v3426, %v3429
  %v3431 = vrot.slane %v3430, 4
  %v3433 = vshll.u32 %v3076, 16
  %v3435 = vrot.slane %v3433, 5
  %v3436 = vsel %vm162, %v3431, %v3435
  %v3437 = vshrl.u32 %v3076, 16
  %v3439 = vrot.slane %v3437, 4
  %v3440 = vor.u32 %v3439, %v3435
  %v3441 = vrot.slane %v3440, 4
  %v3443 = vshll.u32 %v3077, 16
  %v3445 = vrot.slane %v3443, 5
  %v3446 = vsel %vm162, %v3441, %v3445
  %v3448 = vshrl.u32 %v3078, 16
  %v3450 = vrot.slane %v3448, 4
  %v3451 = vshll.u32 %v3078, 16
  %v3453 = vrot.slane %v3451, 5
  %v3454 = vor.u32 %v3450, %v3453
  %v3455 = vrot.slane %v3454, 4
  %v3457 = vshll.u32 %v3079, 16
  %v3459 = vrot.slane %v3457, 5
  %v3460 = vsel %vm162, %v3455, %v3459
  %v3461 = vshrl.u32 %v3079, 16
  %v3463 = vrot.slane %v3461, 4
  %v3464 = vor.u32 %v3463, %v3459
  %v3465 = vrot.slane %v3464, 4
  %v3467 = vshll.u32 %v3080, 16
  %v3469 = vrot.slane %v3467, 5
  %v3470 = vsel %vm162, %v3465, %v3469
  %v3472 = vshrl.u32 %v3081, 16
  %v3474 = vrot.slane %v3472, 4
  %v3475 = vshll.u32 %v3081, 16
  %v3477 = vrot.slane %v3475, 5
  %v3478 = vor.u32 %v3474, %v3477
  %v3479 = vrot.slane %v3478, 4
  %v3481 = vshll.u32 %v3082, 16
  %v3483 = vrot.slane %v3481, 5
  %v3484 = vsel %vm162, %v3479, %v3483
  %v3485 = vshrl.u32 %v3082, 16
  %v3487 = vrot.slane %v3485, 4
  %v3488 = vor.u32 %v3487, %v3483
  %v3489 = vrot.slane %v3488, 4
  %v3491 = vshll.u32 %v3083, 16
  %v3493 = vrot.slane %v3491, 5
  %v3494 = vsel %vm162, %v3489, %v3493
  %v3496 = vshrl.u32 %v3084, 16
  %v3498 = vrot.slane %v3496, 4
  %v3499 = vshll.u32 %v3084, 16
  %v3501 = vrot.slane %v3499, 5
  %v3502 = vor.u32 %v3498, %v3501
  %v3503 = vrot.slane %v3502, 4
  %v3505 = vshll.u32 %v3085, 16
  %v3507 = vrot.slane %v3505, 5
  %v3508 = vsel %vm162, %v3503, %v3507
  %v3509 = vshrl.u32 %v3085, 16
  %v3511 = vrot.slane %v3509, 4
  %v3512 = vor.u32 %v3511, %v3507
  %v3513 = vrot.slane %v3512, 4
  %v3515 = vshll.u32 %v3086, 16
  %v3517 = vrot.slane %v3515, 5
  %v3518 = vsel %vm162, %v3513, %v3517
  %v3520 = vshrl.u32 %v3087, 16
  %v3522 = vrot.slane %v3520, 4
  %v3523 = vshll.u32 %v3087, 16
  %v3525 = vrot.slane %v3523, 5
  %v3526 = vor.u32 %v3522, %v3525
  %v3527 = vrot.slane %v3526, 4
  %v3529 = vshll.u32 %v3088, 16
  %v3531 = vrot.slane %v3529, 5
  %v3532 = vsel %vm162, %v3527, %v3531
  %v3533 = vshrl.u32 %v3088, 16
  %v3535 = vrot.slane %v3533, 4
  %v3536 = vor.u32 %v3535, %v3531
  %v3537 = vrot.slane %v3536, 4
  %v3539 = vshll.u32 %v3089, 16
  %v3541 = vrot.slane %v3539, 5
  %v3542 = vsel %vm162, %v3537, %v3541
  %v3544 = vshrl.u32 %v3090, 16
  %v3546 = vrot.slane %v3544, 4
  %v3547 = vshll.u32 %v3090, 16
  %v3549 = vrot.slane %v3547, 5
  %v3550 = vor.u32 %v3546, %v3549
  %v3551 = vrot.slane %v3550, 4
  %v3553 = vshll.u32 %v3091, 16
  %v3555 = vrot.slane %v3553, 5
  %v3556 = vsel %vm162, %v3551, %v3555
  %v3557 = vshrl.u32 %v3091, 16
  %v3559 = vrot.slane %v3557, 4
  %v3560 = vor.u32 %v3559, %v3555
  %v3561 = vrot.slane %v3560, 4
  %v3563 = vshll.u32 %v3092, 16
  %v3565 = vrot.slane %v3563, 5
  %v3566 = vsel %vm162, %v3561, %v3565
  %v3568 = vshrl.u32 %v3093, 16
  %v3570 = vrot.slane %v3568, 4
  %v3571 = vshll.u32 %v3093, 16
  %v3573 = vrot.slane %v3571, 5
  %v3574 = vor.u32 %v3570, %v3573
  %v3575 = vrot.slane %v3574, 4
  %v3577 = vshll.u32 %v3094, 16
  %v3579 = vrot.slane %v3577, 5
  %v3580 = vsel %vm162, %v3575, %v3579
  %v3581 = vshrl.u32 %v3094, 16
  %v3583 = vrot.slane %v3581, 4
  %v3584 = vor.u32 %v3583, %v3579
  %v3585 = vrot.slane %v3584, 4
  %v3587 = vshll.u32 %v3095, 16
  %v3589 = vrot.slane %v3587, 5
  %v3590 = vsel %vm162, %v3585, %v3589
  %v3592 = vshrl.u32 %v3096, 16
  %v3594 = vrot.slane %v3592, 4
  %v3595 = vshll.u32 %v3096, 16
  %v3597 = vrot.slane %v3595, 5
  %v3598 = vor.u32 %v3594, %v3597
  %v3599 = vrot.slane %v3598, 4
  %v3601 = vshll.u32 %v3097, 16
  %v3603 = vrot.slane %v3601, 5
  %v3604 = vsel %vm162, %v3599, %v3603
  %v3605 = vshrl.u32 %v3097, 16
  %v3607 = vrot.slane %v3605, 4
  %v3608 = vor.u32 %v3607, %v3603
  %v3609 = vrot.slane %v3608, 4
  %v3611 = vshll.u32 %v3098, 16
  %v3613 = vrot.slane %v3611, 5
  %v3614 = vsel %vm162, %v3609, %v3613
  %v3616 = vshrl.u32 %v3099, 16
  %v3618 = vrot.slane %v3616, 4
  %v3619 = vshll.u32 %v3099, 16
  %v3621 = vrot.slane %v3619, 5
  %v3622 = vor.u32 %v3618, %v3621
  %v3623 = vrot.slane %v3622, 4
  %v3625 = vshll.u32 %v3100, 16
  %v3627 = vrot.slane %v3625, 5
  %v3628 = vsel %vm162, %v3623, %v3627
  %v3629 = vshrl.u32 %v3100, 16
  %v3631 = vrot.slane %v3629, 4
  %v3632 = vor.u32 %v3631, %v3627
  %v3633 = vrot.slane %v3632, 4
  %v3635 = vshll.u32 %v3101, 16
  %v3637 = vrot.slane %v3635, 5
  %v3638 = vsel %vm162, %v3633, %v3637
  %v3640 = vshrl.u32 %v3102, 16
  %v3642 = vrot.slane %v3640, 4
  %v3643 = vshll.u32 %v3102, 16
  %v3645 = vrot.slane %v3643, 5
  %v3646 = vor.u32 %v3642, %v3645
  %v3647 = vrot.slane %v3646, 4
  %v3649 = vshll.u32 %v3103, 16
  %v3651 = vrot.slane %v3649, 5
  %v3652 = vsel %vm162, %v3647, %v3651
  %v3653 = vshrl.u32 %v3103, 16
  %v3655 = vrot.slane %v3653, 4
  %v3656 = vor.u32 %v3655, %v3651
  %v3657 = vrot.slane %v3656, 4
  %v3659 = vshll.u32 %v3104, 16
  %v3661 = vrot.slane %v3659, 5
  %v3662 = vsel %vm162, %v3657, %v3661
  %v3664 = vshrl.u32 %v3105, 16
  %v3666 = vrot.slane %v3664, 4
  %v3667 = vshll.u32 %v3105, 16
  %v3669 = vrot.slane %v3667, 5
  %v3670 = vor.u32 %v3666, %v3669
  %v3671 = vrot.slane %v3670, 4
  %v3673 = vshll.u32 %v3106, 16
  %v3675 = vrot.slane %v3673, 5
  %v3676 = vsel %vm162, %v3671, %v3675
  %v3677 = vshrl.u32 %v3106, 16
  %v3679 = vrot.slane %v3677, 4
  %v3680 = vor.u32 %v3679, %v3675
  %v3681 = vrot.slane %v3680, 4
  %v3683 = vshll.u32 %v3107, 16
  %v3685 = vrot.slane %v3683, 5
  %v3686 = vsel %vm162, %v3681, %v3685
  %v3688 = vshrl.u32 %v3108, 16
  %v3690 = vrot.slane %v3688, 4
  %v3691 = vshll.u32 %v3108, 16
  %v3693 = vrot.slane %v3691, 5
  %v3694 = vor.u32 %v3690, %v3693
  %v3695 = vrot.slane %v3694, 4
  %v3697 = vshll.u32 %v3109, 16
  %v3699 = vrot.slane %v3697, 5
  %v3700 = vsel %vm162, %v3695, %v3699
  %v3701 = vshrl.u32 %v3109, 16
  %v3703 = vrot.slane %v3701, 4
  %v3704 = vor.u32 %v3703, %v3699
  %v3705 = vrot.slane %v3704, 4
  %v3707 = vshll.u32 %v3110, 16
  %v3709 = vrot.slane %v3707, 5
  %v3710 = vsel %vm162, %v3705, %v3709
  %v3712 = vshrl.u32 %v3111, 16
  %v3714 = vrot.slane %v3712, 4
  %v3715 = vshll.u32 %v3111, 16
  %v3717 = vrot.slane %v3715, 5
  %v3718 = vor.u32 %v3714, %v3717
  %v3719 = vrot.slane %v3718, 4
  %v3721 = vshll.u32 %v3112, 16
  %v3723 = vrot.slane %v3721, 5
  %v3724 = vsel %vm162, %v3719, %v3723
  %v3725 = vshrl.u32 %v3112, 16
  %v3727 = vrot.slane %v3725, 4
  %v3728 = vor.u32 %v3727, %v3723
  %v3729 = vrot.slane %v3728, 4
  %v3731 = vshll.u32 %v3113, 16
  %v3733 = vrot.slane %v3731, 5
  %v3734 = vsel %vm162, %v3729, %v3733
  %v3736 = vshrl.u32 %v3114, 16
  %v3738 = vrot.slane %v3736, 4
  %v3739 = vshll.u32 %v3114, 16
  %v3741 = vrot.slane %v3739, 5
  %v3742 = vor.u32 %v3738, %v3741
  %v3743 = vrot.slane %v3742, 4
  %v3745 = vshll.u32 %v3115, 16
  %v3747 = vrot.slane %v3745, 5
  %v3748 = vsel %vm162, %v3743, %v3747
  %v3749 = vshrl.u32 %v3115, 16
  %v3751 = vrot.slane %v3749, 4
  %v3752 = vor.u32 %v3751, %v3747
  %v3753 = vrot.slane %v3752, 4
  %v3755 = vshll.u32 %v3116, 16
  %v3757 = vrot.slane %v3755, 5
  %v3758 = vsel %vm162, %v3753, %v3757
  %v3760 = vshrl.u32 %v3117, 16
  %v3762 = vrot.slane %v3760, 4
  %v3763 = vshll.u32 %v3117, 16
  %v3765 = vrot.slane %v3763, 5
  %v3766 = vor.u32 %v3762, %v3765
  %v3767 = vrot.slane %v3766, 4
  %v3769 = vshll.u32 %v3118, 16
  %v3771 = vrot.slane %v3769, 5
  %v3772 = vsel %vm162, %v3767, %v3771
  %v3773 = vshrl.u32 %v3118, 16
  %v3775 = vrot.slane %v3773, 4
  %v3776 = vor.u32 %v3775, %v3771
  %v3777 = vrot.slane %v3776, 4
  %v3779 = vshll.u32 %v3119, 16
  %v3781 = vrot.slane %v3779, 5
  %v3782 = vsel %vm162, %v3777, %v3781
  %v3784 = vshrl.u32 %v3120, 16
  %v3786 = vrot.slane %v3784, 4
  %v3787 = vshll.u32 %v3120, 16
  %v3789 = vrot.slane %v3787, 5
  %v3790 = vor.u32 %v3786, %v3789
  %v3791 = vrot.slane %v3790, 4
  %v3793 = vshll.u32 %v3121, 16
  %v3795 = vrot.slane %v3793, 5
  %v3796 = vsel %vm162, %v3791, %v3795
  %v3797 = vshrl.u32 %v3121, 16
  %v3799 = vrot.slane %v3797, 4
  %v3800 = vor.u32 %v3799, %v3795
  %v3801 = vrot.slane %v3800, 4
  %v3803 = vshll.u32 %v3122, 16
  %v3805 = vrot.slane %v3803, 5
  %v3806 = vsel %vm162, %v3801, %v3805
  %v3808 = vshrl.u32 %v3123, 16
  %v3810 = vrot.slane %v3808, 4
  %v3811 = vshll.u32 %v3123, 16
  %v3813 = vrot.slane %v3811, 5
  %v3814 = vor.u32 %v3810, %v3813
  %v3815 = vrot.slane %v3814, 4
  %v3817 = vshll.u32 %v3124, 16
  %v3819 = vrot.slane %v3817, 5
  %v3820 = vsel %vm162, %v3815, %v3819
  %v3821 = vshrl.u32 %v3124, 16
  %v3823 = vrot.slane %v3821, 4
  %v3824 = vor.u32 %v3823, %v3819
  %v3825 = vrot.slane %v3824, 4
  %v3827 = vshll.u32 %v3125, 16
  %v3829 = vrot.slane %v3827, 5
  %v3830 = vsel %vm162, %v3825, %v3829
  %v3832 = vshrl.u32 %v3126, 16
  %v3834 = vrot.slane %v3832, 4
  %v3835 = vshll.u32 %v3126, 16
  %v3837 = vrot.slane %v3835, 5
  %v3838 = vor.u32 %v3834, %v3837
  %v3839 = vrot.slane %v3838, 4
  %v3841 = vshll.u32 %v3127, 16
  %v3843 = vrot.slane %v3841, 5
  %v3844 = vsel %vm162, %v3839, %v3843
  %v3845 = vshrl.u32 %v3127, 16
  %v3847 = vrot.slane %v3845, 4
  %v3848 = vor.u32 %v3847, %v3843
  %v3849 = vrot.slane %v3848, 4
  %v3851 = vshll.u32 %v3128, 16
  %v3853 = vrot.slane %v3851, 5
  %v3854 = vsel %vm162, %v3849, %v3853
  %v3856 = vshrl.u32 %v3129, 16
  %v3858 = vrot.slane %v3856, 4
  %v3859 = vshll.u32 %v3129, 16
  %v3861 = vrot.slane %v3859, 5
  %v3862 = vor.u32 %v3858, %v3861
  %v3863 = vrot.slane %v3862, 4
  %v3865 = vshll.u32 %v3130, 16
  %v3867 = vrot.slane %v3865, 5
  %v3868 = vsel %vm162, %v3863, %v3867
  %v3869 = vshrl.u32 %v3130, 16
  %v3871 = vrot.slane %v3869, 4
  %v3872 = vor.u32 %v3871, %v3867
  %v3873 = vrot.slane %v3872, 4
  %v3875 = vshll.u32 %v3131, 16
  %v3877 = vrot.slane %v3875, 5
  %v3878 = vsel %vm162, %v3873, %v3877
  %v3880 = vshrl.u32 %v3132, 16
  %v3882 = vrot.slane %v3880, 4
  %v3883 = vshll.u32 %v3132, 16
  %v3885 = vrot.slane %v3883, 5
  %v3886 = vor.u32 %v3882, %v3885
  %v3887 = vrot.slane %v3886, 4
  %v3889 = vshll.u32 %v3133, 16
  %v3891 = vrot.slane %v3889, 5
  %v3892 = vsel %vm162, %v3887, %v3891
  %v3893 = vshrl.u32 %v3133, 16
  %v3895 = vrot.slane %v3893, 4
  %v3896 = vor.u32 %v3895, %v3891
  %v3897 = vrot.slane %v3896, 4
  %v3899 = vshll.u32 %v3134, 16
  %v3901 = vrot.slane %v3899, 5
  %v3902 = vsel %vm162, %v3897, %v3901
  %s3903 = scalar_lea.vmem %s1, 16
  %v3904 = vld [vmem:[%s3903] sm:$0xf]
  %v3905 = vunpack.c.l.b16 %v3148
  %v3906 = vunpack.c.l.b16 %v3158
  %v3907 = vunpack.c.l.b16 %v3172
  %v3908 = vunpack.c.l.b16 %v3182
  %v3909 = vunpack.c.l.b16 %v3196
  %v3910 = vunpack.c.l.b16 %v3206
  %v3911 = vunpack.c.l.b16 %v3220
  %v3912 = vunpack.c.l.b16 %v3230
  %v3913 = vunpack.c.l.b16 %v3244
  %v3914 = vunpack.c.l.b16 %v3254
  %v3915 = vunpack.c.l.b16 %v3268
  %v3916 = vunpack.c.l.b16 %v3278
  %v3917 = vunpack.c.l.b16 %v3292
  %v3918 = vunpack.c.l.b16 %v3302
  %v3919 = vunpack.c.l.b16 %v3316
  %v3920 = vunpack.c.l.b16 %v3326
  %v3921 = vunpack.c.l.b16 %v3340
  %v3922 = vunpack.c.l.b16 %v3350
  %v3923 = vunpack.c.l.b16 %v3364
  %v3924 = vunpack.c.l.b16 %v3374
  %v3925 = vunpack.c.l.b16 %v3388
  %v3926 = vunpack.c.l.b16 %v3398
  %v3927 = vunpack.c.l.b16 %v3412
  %v3928 = vunpack.c.l.b16 %v3422
  %v3929 = vunpack.c.l.b16 %v3436
  %v3930 = vunpack.c.l.b16 %v3446
  %v3931 = vunpack.c.l.b16 %v3460
  %v3932 = vunpack.c.l.b16 %v3470
  %v3933 = vunpack.c.l.b16 %v3484
  %v3934 = vunpack.c.l.b16 %v3494
  %v3935 = vunpack.c.l.b16 %v3508
  %v3936 = vunpack.c.l.b16 %v3518
  %v3937 = vunpack.c.l.b16 %v3532
  %v3938 = vunpack.c.l.b16 %v3542
  %v3939 = vunpack.c.l.b16 %v3556
  %v3940 = vunpack.c.l.b16 %v3566
  %v3941 = vunpack.c.l.b16 %v3580
  %v3942 = vunpack.c.l.b16 %v3590
  %v3943 = vunpack.c.l.b16 %v3604
  %v3944 = vunpack.c.l.b16 %v3614
  %v3945 = vunpack.c.l.b16 %v3628
  %v3946 = vunpack.c.l.b16 %v3638
  %v3947 = vunpack.c.l.b16 %v3652
  %v3948 = vunpack.c.l.b16 %v3662
  %v3949 = vunpack.c.l.b16 %v3676
  %v3950 = vunpack.c.l.b16 %v3686
  %v3951 = vunpack.c.l.b16 %v3700
  %v3952 = vunpack.c.l.b16 %v3710
  %v3953 = vunpack.c.l.b16 %v3724
  %v3954 = vunpack.c.l.b16 %v3734
  %v3955 = vunpack.c.l.b16 %v3748
  %v3956 = vunpack.c.l.b16 %v3758
  %v3957 = vunpack.c.l.b16 %v3772
  %v3958 = vunpack.c.l.b16 %v3782
  %v3959 = vunpack.c.l.b16 %v3796
  %v3960 = vunpack.c.l.b16 %v3806
  %v3961 = vunpack.c.l.b16 %v3820
  %v3962 = vunpack.c.l.b16 %v3830
  %v3963 = vunpack.c.l.b16 %v3844
  %v3964 = vunpack.c.l.b16 %v3854
  %v3965 = vunpack.c.l.b16 %v3868
  %v3966 = vunpack.c.l.b16 %v3878
  %v3967 = vunpack.c.l.b16 %v3892
  %v3968 = vunpack.c.l.b16 %v3902
  %v3969 = vpack.c.b16 %v3906, %v3905
  %v3970 = vpack.c.b16 %v3908, %v3907
  %v3971 = vpack.c.b16 %v3910, %v3909
  %v3972 = vpack.c.b16 %v3912, %v3911
  %v3973 = vpack.c.b16 %v3914, %v3913
  %v3974 = vpack.c.b16 %v3916, %v3915
  %v3975 = vpack.c.b16 %v3918, %v3917
  %v3976 = vpack.c.b16 %v3920, %v3919
  %v3977 = vpack.c.b16 %v3922, %v3921
  %v3978 = vpack.c.b16 %v3924, %v3923
  %v3979 = vpack.c.b16 %v3926, %v3925
  %v3980 = vpack.c.b16 %v3928, %v3927
  %v3981 = vpack.c.b16 %v3930, %v3929
  %v3982 = vpack.c.b16 %v3932, %v3931
  %v3983 = vpack.c.b16 %v3934, %v3933
  %v3984 = vpack.c.b16 %v3936, %v3935
  %v3985 = vpack.c.b16 %v3938, %v3937
  %v3986 = vpack.c.b16 %v3940, %v3939
  %v3987 = vpack.c.b16 %v3942, %v3941
  %v3988 = vpack.c.b16 %v3944, %v3943
  %v3989 = vpack.c.b16 %v3946, %v3945
  %v3990 = vpack.c.b16 %v3948, %v3947
  %v3991 = vpack.c.b16 %v3950, %v3949
  %v3992 = vpack.c.b16 %v3952, %v3951
  %v3993 = vpack.c.b16 %v3954, %v3953
  %v3994 = vpack.c.b16 %v3956, %v3955
  %v3995 = vpack.c.b16 %v3958, %v3957
  %v3996 = vpack.c.b16 %v3960, %v3959
  %v3997 = vpack.c.b16 %v3962, %v3961
  %v3998 = vpack.c.b16 %v3964, %v3963
  %v3999 = vpack.c.b16 %v3966, %v3965
  %v4000 = vpack.c.b16 %v3968, %v3967
  %v4002 = vsel %vm1029, %v3969, 0
  %v4005 = vsel %vm1029, %v3970, 0
  %v4008 = vsel %vm1029, %v3971, 0
  %v4011 = vsel %vm1029, %v3972, 0
  %v4014 = vsel %vm1029, %v3973, 0
  %v4017 = vsel %vm1029, %v3974, 0
  %v4020 = vsel %vm1029, %v3975, 0
  %v4023 = vsel %vm1029, %v3976, 0
  %v4026 = vsel %vm1029, %v3977, 0
  %v4029 = vsel %vm1029, %v3978, 0
  %v4032 = vsel %vm1029, %v3979, 0
  %v4035 = vsel %vm1029, %v3980, 0
  %v4038 = vsel %vm1029, %v3981, 0
  %v4041 = vsel %vm1029, %v3982, 0
  %v4044 = vsel %vm1029, %v3983, 0
  %v4047 = vsel %vm1029, %v3984, 0
  %v4050 = vsel %vm1029, %v3985, 0
  %v4053 = vsel %vm1029, %v3986, 0
  %v4056 = vsel %vm1029, %v3987, 0
  %v4059 = vsel %vm1029, %v3988, 0
  %v4062 = vsel %vm1029, %v3989, 0
  %v4065 = vsel %vm1029, %v3990, 0
  %v4068 = vsel %vm1029, %v3991, 0
  %v4071 = vsel %vm1029, %v3992, 0
  %v4074 = vsel %vm1029, %v3993, 0
  %v4077 = vsel %vm1029, %v3994, 0
  %v4080 = vsel %vm1029, %v3995, 0
  %v4083 = vsel %vm1029, %v3996, 0
  %v4086 = vsel %vm1029, %v3997, 0
  %v4089 = vsel %vm1029, %v3998, 0
  %v4092 = vsel %vm1029, %v3999, 0
  %v4095 = vsel %vm1029, %v4000, 0
  %v4098 = vsel %vm1126, %v3904, 0
  %4100 = vmatpush.bf16.msra.mxu0 0
  %4101 = vmatpush.bf16.msra.mxu0 0
  %4102 = vmatpush.bf16.msra.mxu0 0
  %4103 = vmatpush.bf16.msra.mxu0 0
  %4104 = vmatpush.bf16.msra.mxu0 0
  %4105 = vmatpush.bf16.msra.mxu0 0
  %4106 = vmatpush.bf16.msra.mxu0 0
  %4107 = vmatpush.bf16.msra.mxu0 %v4098
  %4108 = vmatmul.bf16.gmra.mxu0 %v4002
  %v4109 = vpop.f32.mrf.mxu0
  %v4110 = vadd.f32 0.0, %v4109
  %v4111 = vpop.f32.mrf.mxu0
  %v4112 = vadd.f32 0.0, %v4111
  %4113 = vmatmul.bf16.gmra.mxu0 %v4005
  %v4114 = vpop.f32.mrf.mxu0
  %v4115 = vadd.f32 0.0, %v4114
  %v4116 = vpop.f32.mrf.mxu0
  %v4117 = vadd.f32 0.0, %v4116
  %4118 = vmatmul.bf16.gmra.mxu0 %v4008
  %v4119 = vpop.f32.mrf.mxu0
  %v4120 = vadd.f32 0.0, %v4119
  %v4121 = vpop.f32.mrf.mxu0
  %v4122 = vadd.f32 0.0, %v4121
  %4123 = vmatmul.bf16.gmra.mxu0 %v4011
  %v4124 = vpop.f32.mrf.mxu0
  %v4125 = vadd.f32 0.0, %v4124
  %v4126 = vpop.f32.mrf.mxu0
  %v4127 = vadd.f32 0.0, %v4126
  %4128 = vmatmul.bf16.gmra.mxu0 %v4014
  %v4129 = vpop.f32.mrf.mxu0
  %v4130 = vadd.f32 0.0, %v4129
  %v4131 = vpop.f32.mrf.mxu0
  %v4132 = vadd.f32 0.0, %v4131
  %4133 = vmatmul.bf16.gmra.mxu0 %v4017
  %v4134 = vpop.f32.mrf.mxu0
  %v4135 = vadd.f32 0.0, %v4134
  %v4136 = vpop.f32.mrf.mxu0
  %v4137 = vadd.f32 0.0, %v4136
  %4138 = vmatmul.bf16.gmra.mxu0 %v4020
  %v4139 = vpop.f32.mrf.mxu0
  %v4140 = vadd.f32 0.0, %v4139
  %v4141 = vpop.f32.mrf.mxu0
  %v4142 = vadd.f32 0.0, %v4141
  %4143 = vmatmul.bf16.gmra.mxu0 %v4023
  %v4144 = vpop.f32.mrf.mxu0
  %v4145 = vadd.f32 0.0, %v4144
  %v4146 = vpop.f32.mrf.mxu0
  %v4147 = vadd.f32 0.0, %v4146
  %4148 = vmatmul.bf16.gmra.mxu0 %v4026
  %v4149 = vpop.f32.mrf.mxu0
  %v4150 = vadd.f32 0.0, %v4149
  %v4151 = vpop.f32.mrf.mxu0
  %v4152 = vadd.f32 0.0, %v4151
  %4153 = vmatmul.bf16.gmra.mxu0 %v4029
  %v4154 = vpop.f32.mrf.mxu0
  %v4155 = vadd.f32 0.0, %v4154
  %v4156 = vpop.f32.mrf.mxu0
  %v4157 = vadd.f32 0.0, %v4156
  %4158 = vmatmul.bf16.gmra.mxu0 %v4032
  %v4159 = vpop.f32.mrf.mxu0
  %v4160 = vadd.f32 0.0, %v4159
  %v4161 = vpop.f32.mrf.mxu0
  %v4162 = vadd.f32 0.0, %v4161
  %4163 = vmatmul.bf16.gmra.mxu0 %v4035
  %v4164 = vpop.f32.mrf.mxu0
  %v4165 = vadd.f32 0.0, %v4164
  %v4166 = vpop.f32.mrf.mxu0
  %v4167 = vadd.f32 0.0, %v4166
  %4168 = vmatmul.bf16.gmra.mxu0 %v4038
  %v4169 = vpop.f32.mrf.mxu0
  %v4170 = vadd.f32 0.0, %v4169
  %v4171 = vpop.f32.mrf.mxu0
  %v4172 = vadd.f32 0.0, %v4171
  %4173 = vmatmul.bf16.gmra.mxu0 %v4041
  %v4174 = vpop.f32.mrf.mxu0
  %v4175 = vadd.f32 0.0, %v4174
  %v4176 = vpop.f32.mrf.mxu0
  %v4177 = vadd.f32 0.0, %v4176
  %4178 = vmatmul.bf16.gmra.mxu0 %v4044
  %v4179 = vpop.f32.mrf.mxu0
  %v4180 = vadd.f32 0.0, %v4179
  %v4181 = vpop.f32.mrf.mxu0
  %v4182 = vadd.f32 0.0, %v4181
  %4183 = vmatmul.bf16.gmra.mxu0 %v4047
  %v4184 = vpop.f32.mrf.mxu0
  %v4185 = vadd.f32 0.0, %v4184
  %v4186 = vpop.f32.mrf.mxu0
  %v4187 = vadd.f32 0.0, %v4186
  %4188 = vmatmul.bf16.gmra.mxu0 %v4050
  %v4189 = vpop.f32.mrf.mxu0
  %v4190 = vadd.f32 0.0, %v4189
  %v4191 = vpop.f32.mrf.mxu0
  %v4192 = vadd.f32 0.0, %v4191
  %4193 = vmatmul.bf16.gmra.mxu0 %v4053
  %v4194 = vpop.f32.mrf.mxu0
  %v4195 = vadd.f32 0.0, %v4194
  %v4196 = vpop.f32.mrf.mxu0
  %v4197 = vadd.f32 0.0, %v4196
  %4198 = vmatmul.bf16.gmra.mxu0 %v4056
  %v4199 = vpop.f32.mrf.mxu0
  %v4200 = vadd.f32 0.0, %v4199
  %v4201 = vpop.f32.mrf.mxu0
  %v4202 = vadd.f32 0.0, %v4201
  %4203 = vmatmul.bf16.gmra.mxu0 %v4059
  %v4204 = vpop.f32.mrf.mxu0
  %v4205 = vadd.f32 0.0, %v4204
  %v4206 = vpop.f32.mrf.mxu0
  %v4207 = vadd.f32 0.0, %v4206
  %4208 = vmatmul.bf16.gmra.mxu0 %v4062
  %v4209 = vpop.f32.mrf.mxu0
  %v4210 = vadd.f32 0.0, %v4209
  %v4211 = vpop.f32.mrf.mxu0
  %v4212 = vadd.f32 0.0, %v4211
  %4213 = vmatmul.bf16.gmra.mxu0 %v4065
  %v4214 = vpop.f32.mrf.mxu0
  %v4215 = vadd.f32 0.0, %v4214
  %v4216 = vpop.f32.mrf.mxu0
  %v4217 = vadd.f32 0.0, %v4216
  %4218 = vmatmul.bf16.gmra.mxu0 %v4068
  %v4219 = vpop.f32.mrf.mxu0
  %v4220 = vadd.f32 0.0, %v4219
  %v4221 = vpop.f32.mrf.mxu0
  %v4222 = vadd.f32 0.0, %v4221
  %4223 = vmatmul.bf16.gmra.mxu0 %v4071
  %v4224 = vpop.f32.mrf.mxu0
  %v4225 = vadd.f32 0.0, %v4224
  %v4226 = vpop.f32.mrf.mxu0
  %v4227 = vadd.f32 0.0, %v4226
  %4228 = vmatmul.bf16.gmra.mxu0 %v4074
  %v4229 = vpop.f32.mrf.mxu0
  %v4230 = vadd.f32 0.0, %v4229
  %v4231 = vpop.f32.mrf.mxu0
  %v4232 = vadd.f32 0.0, %v4231
  %4233 = vmatmul.bf16.gmra.mxu0 %v4077
  %v4234 = vpop.f32.mrf.mxu0
  %v4235 = vadd.f32 0.0, %v4234
  %v4236 = vpop.f32.mrf.mxu0
  %v4237 = vadd.f32 0.0, %v4236
  %4238 = vmatmul.bf16.gmra.mxu0 %v4080
  %v4239 = vpop.f32.mrf.mxu0
  %v4240 = vadd.f32 0.0, %v4239
  %v4241 = vpop.f32.mrf.mxu0
  %v4242 = vadd.f32 0.0, %v4241
  %4243 = vmatmul.bf16.gmra.mxu0 %v4083
  %v4244 = vpop.f32.mrf.mxu0
  %v4245 = vadd.f32 0.0, %v4244
  %v4246 = vpop.f32.mrf.mxu0
  %v4247 = vadd.f32 0.0, %v4246
  %4248 = vmatmul.bf16.gmra.mxu0 %v4086
  %v4249 = vpop.f32.mrf.mxu0
  %v4250 = vadd.f32 0.0, %v4249
  %v4251 = vpop.f32.mrf.mxu0
  %v4252 = vadd.f32 0.0, %v4251
  %4253 = vmatmul.bf16.gmra.mxu0 %v4089
  %v4254 = vpop.f32.mrf.mxu0
  %v4255 = vadd.f32 0.0, %v4254
  %v4256 = vpop.f32.mrf.mxu0
  %v4257 = vadd.f32 0.0, %v4256
  %4258 = vmatmul.bf16.gmra.mxu0 %v4092
  %v4259 = vpop.f32.mrf.mxu0
  %v4260 = vadd.f32 0.0, %v4259
  %v4261 = vpop.f32.mrf.mxu0
  %v4262 = vadd.f32 0.0, %v4261
  %4263 = vmatmul.bf16.gmra.mxu0 %v4095
  %v4264 = vpop.f32.mrf.mxu0
  %v4265 = vadd.f32 0.0, %v4264
  %v4266 = vpop.f32.mrf.mxu0
  %v4267 = vadd.f32 0.0, %v4266
  %4268 = vdwg.mxu0
  %v4269 = vadd.f32 %v2975, %v4110
  %v4270 = vadd.f32 %v2976, %v4112
  %v4271 = vadd.f32 %v2977, %v4115
  %v4272 = vadd.f32 %v2978, %v4117
  %v4273 = vadd.f32 %v2979, %v4120
  %v4274 = vadd.f32 %v2980, %v4122
  %v4275 = vadd.f32 %v2981, %v4125
  %v4276 = vadd.f32 %v2982, %v4127
  %v4277 = vadd.f32 %v2983, %v4130
  %v4278 = vadd.f32 %v2984, %v4132
  %v4279 = vadd.f32 %v2985, %v4135
  %v4280 = vadd.f32 %v2986, %v4137
  %v4281 = vadd.f32 %v2987, %v4140
  %v4282 = vadd.f32 %v2988, %v4142
  %v4283 = vadd.f32 %v2989, %v4145
  %v4284 = vadd.f32 %v2990, %v4147
  %v4285 = vadd.f32 %v2991, %v4150
  %v4286 = vadd.f32 %v2992, %v4152
  %v4287 = vadd.f32 %v2993, %v4155
  %v4288 = vadd.f32 %v2994, %v4157
  %v4289 = vadd.f32 %v2995, %v4160
  %v4290 = vadd.f32 %v2996, %v4162
  %v4291 = vadd.f32 %v2997, %v4165
  %v4292 = vadd.f32 %v2998, %v4167
  %v4293 = vadd.f32 %v2999, %v4170
  %v4294 = vadd.f32 %v3000, %v4172
  %v4295 = vadd.f32 %v3001, %v4175
  %v4296 = vadd.f32 %v3002, %v4177
  %v4297 = vadd.f32 %v3003, %v4180
  %v4298 = vadd.f32 %v3004, %v4182
  %v4299 = vadd.f32 %v3005, %v4185
  %v4300 = vadd.f32 %v3006, %v4187
  %v4301 = vadd.f32 %v3007, %v4190
  %v4302 = vadd.f32 %v3008, %v4192
  %v4303 = vadd.f32 %v3009, %v4195
  %v4304 = vadd.f32 %v3010, %v4197
  %v4305 = vadd.f32 %v3011, %v4200
  %v4306 = vadd.f32 %v3012, %v4202
  %v4307 = vadd.f32 %v3013, %v4205
  %v4308 = vadd.f32 %v3014, %v4207
  %v4309 = vadd.f32 %v3015, %v4210
  %v4310 = vadd.f32 %v3016, %v4212
  %v4311 = vadd.f32 %v3017, %v4215
  %v4312 = vadd.f32 %v3018, %v4217
  %v4313 = vadd.f32 %v3019, %v4220
  %v4314 = vadd.f32 %v3020, %v4222
  %v4315 = vadd.f32 %v3021, %v4225
  %v4316 = vadd.f32 %v3022, %v4227
  %v4317 = vadd.f32 %v3023, %v4230
  %v4318 = vadd.f32 %v3024, %v4232
  %v4319 = vadd.f32 %v3025, %v4235
  %v4320 = vadd.f32 %v3026, %v4237
  %v4321 = vadd.f32 %v3027, %v4240
  %v4322 = vadd.f32 %v3028, %v4242
  %v4323 = vadd.f32 %v3029, %v4245
  %v4324 = vadd.f32 %v3030, %v4247
  %v4325 = vadd.f32 %v3031, %v4250
  %v4326 = vadd.f32 %v3032, %v4252
  %v4327 = vadd.f32 %v3033, %v4255
  %v4328 = vadd.f32 %v3034, %v4257
  %v4329 = vadd.f32 %v3035, %v4260
  %v4330 = vadd.f32 %v3036, %v4262
  %v4331 = vadd.f32 %v3037, %v4265
  %v4332 = vadd.f32 %v3038, %v4267
  %v4333 = vld [vmem:[%s2480] sm:$0xe]
  %v4334 = vld [vmem:[%s2480 + $0xc] sm:$0xe]
  %v4335 = vld [vmem:[%s2480 + $0x18] sm:$0xe]
  %v4336 = vld [vmem:[%s2480 + $0x24] sm:$0xe]
  %v4337 = vld [vmem:[%s2480 + $0x30] sm:$0xe]
  %v4338 = vld [vmem:[%s2480 + $0x3c] sm:$0xe]
  %v4339 = vld [vmem:[%s2480 + $0x48] sm:$0xe]
  %v4340 = vld [vmem:[%s2480 + $0x54] sm:$0xe]
  %v4341 = vld [vmem:[%s2480 + $0x60] sm:$0xe]
  %v4342 = vld [vmem:[%s2480 + $0x6c] sm:$0xe]
  %v4343 = vld [vmem:[%s2480 + $0x78] sm:$0xe]
  %v4344 = vld [vmem:[%s2480 + $0x84] sm:$0xe]
  %v4345 = vld [vmem:[%s2480 + $0x90] sm:$0xe]
  %v4346 = vld [vmem:[%s2480 + $0x9c] sm:$0xe]
  %v4347 = vld [vmem:[%s2480 + $0xa8] sm:$0xe]
  %v4348 = vld [vmem:[%s2480 + $0xb4] sm:$0xe]
  %v4349 = vld [vmem:[%s2480 + $0xd8] sm:$0xe]
  %v4350 = vld [vmem:[%s2480 + $0xe4] sm:$0xe]
  %v4351 = vld [vmem:[%s2480 + $0xf0] sm:$0xe]
  %v4352 = vld [vmem:[%s2480 + $0xfc] sm:$0xe]
  %v4353 = vld [vmem:[%s2480 + $0x108] sm:$0xe]
  %v4354 = vld [vmem:[%s2480 + $0x114] sm:$0xe]
  %v4355 = vld [vmem:[%s2480 + $0x120] sm:$0xe]
  %v4356 = vld [vmem:[%s2480 + $0x12c] sm:$0xe]
  %v4357 = vld [vmem:[%s2480 + $0x138] sm:$0xe]
  %v4358 = vld [vmem:[%s2480 + $0x144] sm:$0xe]
  %v4359 = vld [vmem:[%s2480 + $0x150] sm:$0xe]
  %v4360 = vld [vmem:[%s2480 + $0x15c] sm:$0xe]
  %v4361 = vld [vmem:[%s2480 + $0x168] sm:$0xe]
  %v4362 = vld [vmem:[%s2480 + $0x174] sm:$0xe]
  %v4363 = vld [vmem:[%s2480 + $0x180] sm:$0xe]
  %v4364 = vld [vmem:[%s2480 + $0x18c] sm:$0xe]
  %v4461 = vrot.slane %v4333, 5
  %v4462 = vrot.slane %v4461, 4
  %v4463 = vrot.slane %v3040, 5
  %v4464 = vsel %vm1825, %v4462, %v4463
  %v4465 = vrot.slane %v4463, 4
  %v4466 = vrot.slane %v3041, 5
  %v4467 = vsel %vm1825, %v4465, %v4466
  %v4468 = vrot.slane %v4334, 5
  %v4469 = vrot.slane %v4468, 4
  %v4470 = vrot.slane %v3043, 5
  %v4471 = vsel %vm1825, %v4469, %v4470
  %v4472 = vrot.slane %v4470, 4
  %v4473 = vrot.slane %v3044, 5
  %v4474 = vsel %vm1825, %v4472, %v4473
  %v4475 = vrot.slane %v4335, 5
  %v4476 = vrot.slane %v4475, 4
  %v4477 = vrot.slane %v3046, 5
  %v4478 = vsel %vm1825, %v4476, %v4477
  %v4479 = vrot.slane %v4477, 4
  %v4480 = vrot.slane %v3047, 5
  %v4481 = vsel %vm1825, %v4479, %v4480
  %v4482 = vrot.slane %v4336, 5
  %v4483 = vrot.slane %v4482, 4
  %v4484 = vrot.slane %v3049, 5
  %v4485 = vsel %vm1825, %v4483, %v4484
  %v4486 = vrot.slane %v4484, 4
  %v4487 = vrot.slane %v3050, 5
  %v4488 = vsel %vm1825, %v4486, %v4487
  %v4489 = vrot.slane %v4337, 5
  %v4490 = vrot.slane %v4489, 4
  %v4491 = vrot.slane %v3052, 5
  %v4492 = vsel %vm1825, %v4490, %v4491
  %v4493 = vrot.slane %v4491, 4
  %v4494 = vrot.slane %v3053, 5
  %v4495 = vsel %vm1825, %v4493, %v4494
  %v4496 = vrot.slane %v4338, 5
  %v4497 = vrot.slane %v4496, 4
  %v4498 = vrot.slane %v3055, 5
  %v4499 = vsel %vm1825, %v4497, %v4498
  %v4500 = vrot.slane %v4498, 4
  %v4501 = vrot.slane %v3056, 5
  %v4502 = vsel %vm1825, %v4500, %v4501
  %v4503 = vrot.slane %v4339, 5
  %v4504 = vrot.slane %v4503, 4
  %v4505 = vrot.slane %v3058, 5
  %v4506 = vsel %vm1825, %v4504, %v4505
  %v4507 = vrot.slane %v4505, 4
  %v4508 = vrot.slane %v3059, 5
  %v4509 = vsel %vm1825, %v4507, %v4508
  %v4510 = vrot.slane %v4340, 5
  %v4511 = vrot.slane %v4510, 4
  %v4512 = vrot.slane %v3061, 5
  %v4513 = vsel %vm1825, %v4511, %v4512
  %v4514 = vrot.slane %v4512, 4
  %v4515 = vrot.slane %v3062, 5
  %v4516 = vsel %vm1825, %v4514, %v4515
  %v4517 = vrot.slane %v4341, 5
  %v4518 = vrot.slane %v4517, 4
  %v4519 = vrot.slane %v3064, 5
  %v4520 = vsel %vm1825, %v4518, %v4519
  %v4521 = vrot.slane %v4519, 4
  %v4522 = vrot.slane %v3065, 5
  %v4523 = vsel %vm1825, %v4521, %v4522
  %v4524 = vrot.slane %v4342, 5
  %v4525 = vrot.slane %v4524, 4
  %v4526 = vrot.slane %v3067, 5
  %v4527 = vsel %vm1825, %v4525, %v4526
  %v4528 = vrot.slane %v4526, 4
  %v4529 = vrot.slane %v3068, 5
  %v4530 = vsel %vm1825, %v4528, %v4529
  %v4531 = vrot.slane %v4343, 5
  %v4532 = vrot.slane %v4531, 4
  %v4533 = vrot.slane %v3070, 5
  %v4534 = vsel %vm1825, %v4532, %v4533
  %v4535 = vrot.slane %v4533, 4
  %v4536 = vrot.slane %v3071, 5
  %v4537 = vsel %vm1825, %v4535, %v4536
  %v4538 = vrot.slane %v4344, 5
  %v4539 = vrot.slane %v4538, 4
  %v4540 = vrot.slane %v3073, 5
  %v4541 = vsel %vm1825, %v4539, %v4540
  %v4542 = vrot.slane %v4540, 4
  %v4543 = vrot.slane %v3074, 5
  %v4544 = vsel %vm1825, %v4542, %v4543
  %v4545 = vrot.slane %v4345, 5
  %v4546 = vrot.slane %v4545, 4
  %v4547 = vrot.slane %v3076, 5
  %v4548 = vsel %vm1825, %v4546, %v4547
  %v4549 = vrot.slane %v4547, 4
  %v4550 = vrot.slane %v3077, 5
  %v4551 = vsel %vm1825, %v4549, %v4550
  %v4552 = vrot.slane %v4346, 5
  %v4553 = vrot.slane %v4552, 4
  %v4554 = vrot.slane %v3079, 5
  %v4555 = vsel %vm1825, %v4553, %v4554
  %v4556 = vrot.slane %v4554, 4
  %v4557 = vrot.slane %v3080, 5
  %v4558 = vsel %vm1825, %v4556, %v4557
  %v4559 = vrot.slane %v4347, 5
  %v4560 = vrot.slane %v4559, 4
  %v4561 = vrot.slane %v3082, 5
  %v4562 = vsel %vm1825, %v4560, %v4561
  %v4563 = vrot.slane %v4561, 4
  %v4564 = vrot.slane %v3083, 5
  %v4565 = vsel %vm1825, %v4563, %v4564
  %v4566 = vrot.slane %v4348, 5
  %v4567 = vrot.slane %v4566, 4
  %v4568 = vrot.slane %v3085, 5
  %v4569 = vsel %vm1825, %v4567, %v4568
  %v4570 = vrot.slane %v4568, 4
  %v4571 = vrot.slane %v3086, 5
  %v4572 = vsel %vm1825, %v4570, %v4571
  %v4573 = vrot.slane %v4349, 5
  %v4574 = vrot.slane %v4573, 4
  %v4575 = vrot.slane %v3088, 5
  %v4576 = vsel %vm1825, %v4574, %v4575
  %v4577 = vrot.slane %v4575, 4
  %v4578 = vrot.slane %v3089, 5
  %v4579 = vsel %vm1825, %v4577, %v4578
  %v4580 = vrot.slane %v4350, 5
  %v4581 = vrot.slane %v4580, 4
  %v4582 = vrot.slane %v3091, 5
  %v4583 = vsel %vm1825, %v4581, %v4582
  %v4584 = vrot.slane %v4582, 4
  %v4585 = vrot.slane %v3092, 5
  %v4586 = vsel %vm1825, %v4584, %v4585
  %v4587 = vrot.slane %v4351, 5
  %v4588 = vrot.slane %v4587, 4
  %v4589 = vrot.slane %v3094, 5
  %v4590 = vsel %vm1825, %v4588, %v4589
  %v4591 = vrot.slane %v4589, 4
  %v4592 = vrot.slane %v3095, 5
  %v4593 = vsel %vm1825, %v4591, %v4592
  %v4594 = vrot.slane %v4352, 5
  %v4595 = vrot.slane %v4594, 4
  %v4596 = vrot.slane %v3097, 5
  %v4597 = vsel %vm1825, %v4595, %v4596
  %v4598 = vrot.slane %v4596, 4
  %v4599 = vrot.slane %v3098, 5
  %v4600 = vsel %vm1825, %v4598, %v4599
  %v4601 = vrot.slane %v4353, 5
  %v4602 = vrot.slane %v4601, 4
  %v4603 = vrot.slane %v3100, 5
  %v4604 = vsel %vm1825, %v4602, %v4603
  %v4605 = vrot.slane %v4603, 4
  %v4606 = vrot.slane %v3101, 5
  %v4607 = vsel %vm1825, %v4605, %v4606
  %v4608 = vrot.slane %v4354, 5
  %v4609 = vrot.slane %v4608, 4
  %v4610 = vrot.slane %v3103, 5
  %v4611 = vsel %vm1825, %v4609, %v4610
  %v4612 = vrot.slane %v4610, 4
  %v4613 = vrot.slane %v3104, 5
  %v4614 = vsel %vm1825, %v4612, %v4613
  %v4615 = vrot.slane %v4355, 5
  %v4616 = vrot.slane %v4615, 4
  %v4617 = vrot.slane %v3106, 5
  %v4618 = vsel %vm1825, %v4616, %v4617
  %v4619 = vrot.slane %v4617, 4
  %v4620 = vrot.slane %v3107, 5
  %v4621 = vsel %vm1825, %v4619, %v4620
  %v4622 = vrot.slane %v4356, 5
  %v4623 = vrot.slane %v4622, 4
  %v4624 = vrot.slane %v3109, 5
  %v4625 = vsel %vm1825, %v4623, %v4624
  %v4626 = vrot.slane %v4624, 4
  %v4627 = vrot.slane %v3110, 5
  %v4628 = vsel %vm1825, %v4626, %v4627
  %v4629 = vrot.slane %v4357, 5
  %v4630 = vrot.slane %v4629, 4
  %v4631 = vrot.slane %v3112, 5
  %v4632 = vsel %vm1825, %v4630, %v4631
  %v4633 = vrot.slane %v4631, 4
  %v4634 = vrot.slane %v3113, 5
  %v4635 = vsel %vm1825, %v4633, %v4634
  %v4636 = vrot.slane %v4358, 5
  %v4637 = vrot.slane %v4636, 4
  %v4638 = vrot.slane %v3115, 5
  %v4639 = vsel %vm1825, %v4637, %v4638
  %v4640 = vrot.slane %v4638, 4
  %v4641 = vrot.slane %v3116, 5
  %v4642 = vsel %vm1825, %v4640, %v4641
  %v4643 = vrot.slane %v4359, 5
  %v4644 = vrot.slane %v4643, 4
  %v4645 = vrot.slane %v3118, 5
  %v4646 = vsel %vm1825, %v4644, %v4645
  %v4647 = vrot.slane %v4645, 4
  %v4648 = vrot.slane %v3119, 5
  %v4649 = vsel %vm1825, %v4647, %v4648
  %v4650 = vrot.slane %v4360, 5
  %v4651 = vrot.slane %v4650, 4
  %v4652 = vrot.slane %v3121, 5
  %v4653 = vsel %vm1825, %v4651, %v4652
  %v4654 = vrot.slane %v4652, 4
  %v4655 = vrot.slane %v3122, 5
  %v4656 = vsel %vm1825, %v4654, %v4655
  %v4657 = vrot.slane %v4361, 5
  %v4658 = vrot.slane %v4657, 4
  %v4659 = vrot.slane %v3124, 5
  %v4660 = vsel %vm1825, %v4658, %v4659
  %v4661 = vrot.slane %v4659, 4
  %v4662 = vrot.slane %v3125, 5
  %v4663 = vsel %vm1825, %v4661, %v4662
  %v4664 = vrot.slane %v4362, 5
  %v4665 = vrot.slane %v4664, 4
  %v4666 = vrot.slane %v3127, 5
  %v4667 = vsel %vm1825, %v4665, %v4666
  %v4668 = vrot.slane %v4666, 4
  %v4669 = vrot.slane %v3128, 5
  %v4670 = vsel %vm1825, %v4668, %v4669
  %v4671 = vrot.slane %v4363, 5
  %v4672 = vrot.slane %v4671, 4
  %v4673 = vrot.slane %v3130, 5
  %v4674 = vsel %vm1825, %v4672, %v4673
  %v4675 = vrot.slane %v4673, 4
  %v4676 = vrot.slane %v3131, 5
  %v4677 = vsel %vm1825, %v4675, %v4676
  %v4678 = vrot.slane %v4364, 5
  %v4679 = vrot.slane %v4678, 4
  %v4680 = vrot.slane %v3133, 5
  %v4681 = vsel %vm1825, %v4679, %v4680
  %v4682 = vrot.slane %v4680, 4
  %v4683 = vrot.slane %v3134, 5
  %v4684 = vsel %vm1825, %v4682, %v4683
  %s4685 = scalar_lea.vmem %s1, 20
  %v4686 = vld [vmem:[%s4685] sm:$0xf]
  %v4687 = vunpack.c.l.b16 %v4464
  %v4688 = vunpack.c.l.b16 %v4467
  %v4689 = vunpack.c.l.b16 %v4471
  %v4690 = vunpack.c.l.b16 %v4474
  %v4691 = vunpack.c.l.b16 %v4478
  %v4692 = vunpack.c.l.b16 %v4481
  %v4693 = vunpack.c.l.b16 %v4485
  %v4694 = vunpack.c.l.b16 %v4488
  %v4695 = vunpack.c.l.b16 %v4492
  %v4696 = vunpack.c.l.b16 %v4495
  %v4697 = vunpack.c.l.b16 %v4499
  %v4698 = vunpack.c.l.b16 %v4502
  %v4699 = vunpack.c.l.b16 %v4506
  %v4700 = vunpack.c.l.b16 %v4509
  %v4701 = vunpack.c.l.b16 %v4513
  %v4702 = vunpack.c.l.b16 %v4516
  %v4703 = vunpack.c.l.b16 %v4520
  %v4704 = vunpack.c.l.b16 %v4523
  %v4705 = vunpack.c.l.b16 %v4527
  %v4706 = vunpack.c.l.b16 %v4530
  %v4707 = vunpack.c.l.b16 %v4534
  %v4708 = vunpack.c.l.b16 %v4537
  %v4709 = vunpack.c.l.b16 %v4541
  %v4710 = vunpack.c.l.b16 %v4544
  %v4711 = vunpack.c.l.b16 %v4548
  %v4712 = vunpack.c.l.b16 %v4551
  %v4713 = vunpack.c.l.b16 %v4555
  %v4714 = vunpack.c.l.b16 %v4558
  %v4715 = vunpack.c.l.b16 %v4562
  %v4716 = vunpack.c.l.b16 %v4565
  %v4717 = vunpack.c.l.b16 %v4569
  %v4718 = vunpack.c.l.b16 %v4572
  %v4719 = vunpack.c.l.b16 %v4576
  %v4720 = vunpack.c.l.b16 %v4579
  %v4721 = vunpack.c.l.b16 %v4583
  %v4722 = vunpack.c.l.b16 %v4586
  %v4723 = vunpack.c.l.b16 %v4590
  %v4724 = vunpack.c.l.b16 %v4593
  %v4725 = vunpack.c.l.b16 %v4597
  %v4726 = vunpack.c.l.b16 %v4600
  %v4727 = vunpack.c.l.b16 %v4604
  %v4728 = vunpack.c.l.b16 %v4607
  %v4729 = vunpack.c.l.b16 %v4611
  %v4730 = vunpack.c.l.b16 %v4614
  %v4731 = vunpack.c.l.b16 %v4618
  %v4732 = vunpack.c.l.b16 %v4621
  %v4733 = vunpack.c.l.b16 %v4625
  %v4734 = vunpack.c.l.b16 %v4628
  %v4735 = vunpack.c.l.b16 %v4632
  %v4736 = vunpack.c.l.b16 %v4635
  %v4737 = vunpack.c.l.b16 %v4639
  %v4738 = vunpack.c.l.b16 %v4642
  %v4739 = vunpack.c.l.b16 %v4646
  %v4740 = vunpack.c.l.b16 %v4649
  %v4741 = vunpack.c.l.b16 %v4653
  %v4742 = vunpack.c.l.b16 %v4656
  %v4743 = vunpack.c.l.b16 %v4660
  %v4744 = vunpack.c.l.b16 %v4663
  %v4745 = vunpack.c.l.b16 %v4667
  %v4746 = vunpack.c.l.b16 %v4670
  %v4747 = vunpack.c.l.b16 %v4674
  %v4748 = vunpack.c.l.b16 %v4677
  %v4749 = vunpack.c.l.b16 %v4681
  %v4750 = vunpack.c.l.b16 %v4684
  %v4751 = vpack.c.b16 %v4688, %v4687
  %v4752 = vpack.c.b16 %v4690, %v4689
  %v4753 = vpack.c.b16 %v4692, %v4691
  %v4754 = vpack.c.b16 %v4694, %v4693
  %v4755 = vpack.c.b16 %v4696, %v4695
  %v4756 = vpack.c.b16 %v4698, %v4697
  %v4757 = vpack.c.b16 %v4700, %v4699
  %v4758 = vpack.c.b16 %v4702, %v4701
  %v4759 = vpack.c.b16 %v4704, %v4703
  %v4760 = vpack.c.b16 %v4706, %v4705
  %v4761 = vpack.c.b16 %v4708, %v4707
  %v4762 = vpack.c.b16 %v4710, %v4709
  %v4763 = vpack.c.b16 %v4712, %v4711
  %v4764 = vpack.c.b16 %v4714, %v4713
  %v4765 = vpack.c.b16 %v4716, %v4715
  %v4766 = vpack.c.b16 %v4718, %v4717
  %v4767 = vpack.c.b16 %v4720, %v4719
  %v4768 = vpack.c.b16 %v4722, %v4721
  %v4769 = vpack.c.b16 %v4724, %v4723
  %v4770 = vpack.c.b16 %v4726, %v4725
  %v4771 = vpack.c.b16 %v4728, %v4727
  %v4772 = vpack.c.b16 %v4730, %v4729
  %v4773 = vpack.c.b16 %v4732, %v4731
  %v4774 = vpack.c.b16 %v4734, %v4733
  %v4775 = vpack.c.b16 %v4736, %v4735
  %v4776 = vpack.c.b16 %v4738, %v4737
  %v4777 = vpack.c.b16 %v4740, %v4739
  %v4778 = vpack.c.b16 %v4742, %v4741
  %v4779 = vpack.c.b16 %v4744, %v4743
  %v4780 = vpack.c.b16 %v4746, %v4745
  %v4781 = vpack.c.b16 %v4748, %v4747
  %v4782 = vpack.c.b16 %v4750, %v4749
  %v4784 = vsel %vm1029, %v4751, 0
  %v4787 = vsel %vm1029, %v4752, 0
  %v4790 = vsel %vm1029, %v4753, 0
  %v4793 = vsel %vm1029, %v4754, 0
  %v4796 = vsel %vm1029, %v4755, 0
  %v4799 = vsel %vm1029, %v4756, 0
  %v4802 = vsel %vm1029, %v4757, 0
  %v4805 = vsel %vm1029, %v4758, 0
  %v4808 = vsel %vm1029, %v4759, 0
  %v4811 = vsel %vm1029, %v4760, 0
  %v4814 = vsel %vm1029, %v4761, 0
  %v4817 = vsel %vm1029, %v4762, 0
  %v4820 = vsel %vm1029, %v4763, 0
  %v4823 = vsel %vm1029, %v4764, 0
  %v4826 = vsel %vm1029, %v4765, 0
  %v4829 = vsel %vm1029, %v4766, 0
  %v4832 = vsel %vm1029, %v4767, 0
  %v4835 = vsel %vm1029, %v4768, 0
  %v4838 = vsel %vm1029, %v4769, 0
  %v4841 = vsel %vm1029, %v4770, 0
  %v4844 = vsel %vm1029, %v4771, 0
  %v4847 = vsel %vm1029, %v4772, 0
  %v4850 = vsel %vm1029, %v4773, 0
  %v4853 = vsel %vm1029, %v4774, 0
  %v4856 = vsel %vm1029, %v4775, 0
  %v4859 = vsel %vm1029, %v4776, 0
  %v4862 = vsel %vm1029, %v4777, 0
  %v4865 = vsel %vm1029, %v4778, 0
  %v4868 = vsel %vm1029, %v4779, 0
  %v4871 = vsel %vm1029, %v4780, 0
  %v4874 = vsel %vm1029, %v4781, 0
  %v4877 = vsel %vm1029, %v4782, 0
  %v4880 = vsel %vm1126, %v4686, 0
  %4882 = vmatpush.bf16.msra.mxu0 0
  %4883 = vmatpush.bf16.msra.mxu0 0
  %4884 = vmatpush.bf16.msra.mxu0 0
  %4885 = vmatpush.bf16.msra.mxu0 0
  %4886 = vmatpush.bf16.msra.mxu0 0
  %4887 = vmatpush.bf16.msra.mxu0 0
  %4888 = vmatpush.bf16.msra.mxu0 0
  %4889 = vmatpush.bf16.msra.mxu0 %v4880
  %4890 = vmatmul.bf16.gmra.mxu0 %v4784
  %v4891 = vpop.f32.mrf.mxu0
  %v4892 = vadd.f32 0.0, %v4891
  %v4893 = vpop.f32.mrf.mxu0
  %v4894 = vadd.f32 0.0, %v4893
  %4895 = vmatmul.bf16.gmra.mxu0 %v4787
  %v4896 = vpop.f32.mrf.mxu0
  %v4897 = vadd.f32 0.0, %v4896
  %v4898 = vpop.f32.mrf.mxu0
  %v4899 = vadd.f32 0.0, %v4898
  %4900 = vmatmul.bf16.gmra.mxu0 %v4790
  %v4901 = vpop.f32.mrf.mxu0
  %v4902 = vadd.f32 0.0, %v4901
  %v4903 = vpop.f32.mrf.mxu0
  %v4904 = vadd.f32 0.0, %v4903
  %4905 = vmatmul.bf16.gmra.mxu0 %v4793
  %v4906 = vpop.f32.mrf.mxu0
  %v4907 = vadd.f32 0.0, %v4906
  %v4908 = vpop.f32.mrf.mxu0
  %v4909 = vadd.f32 0.0, %v4908
  %4910 = vmatmul.bf16.gmra.mxu0 %v4796
  %v4911 = vpop.f32.mrf.mxu0
  %v4912 = vadd.f32 0.0, %v4911
  %v4913 = vpop.f32.mrf.mxu0
  %v4914 = vadd.f32 0.0, %v4913
  %4915 = vmatmul.bf16.gmra.mxu0 %v4799
  %v4916 = vpop.f32.mrf.mxu0
  %v4917 = vadd.f32 0.0, %v4916
  %v4918 = vpop.f32.mrf.mxu0
  %v4919 = vadd.f32 0.0, %v4918
  %4920 = vmatmul.bf16.gmra.mxu0 %v4802
  %v4921 = vpop.f32.mrf.mxu0
  %v4922 = vadd.f32 0.0, %v4921
  %v4923 = vpop.f32.mrf.mxu0
  %v4924 = vadd.f32 0.0, %v4923
  %4925 = vmatmul.bf16.gmra.mxu0 %v4805
  %v4926 = vpop.f32.mrf.mxu0
  %v4927 = vadd.f32 0.0, %v4926
  %v4928 = vpop.f32.mrf.mxu0
  %v4929 = vadd.f32 0.0, %v4928
  %4930 = vmatmul.bf16.gmra.mxu0 %v4808
  %v4931 = vpop.f32.mrf.mxu0
  %v4932 = vadd.f32 0.0, %v4931
  %v4933 = vpop.f32.mrf.mxu0
  %v4934 = vadd.f32 0.0, %v4933
  %4935 = vmatmul.bf16.gmra.mxu0 %v4811
  %v4936 = vpop.f32.mrf.mxu0
  %v4937 = vadd.f32 0.0, %v4936
  %v4938 = vpop.f32.mrf.mxu0
  %v4939 = vadd.f32 0.0, %v4938
  %4940 = vmatmul.bf16.gmra.mxu0 %v4814
  %v4941 = vpop.f32.mrf.mxu0
  %v4942 = vadd.f32 0.0, %v4941
  %v4943 = vpop.f32.mrf.mxu0
  %v4944 = vadd.f32 0.0, %v4943
  %4945 = vmatmul.bf16.gmra.mxu0 %v4817
  %v4946 = vpop.f32.mrf.mxu0
  %v4947 = vadd.f32 0.0, %v4946
  %v4948 = vpop.f32.mrf.mxu0
  %v4949 = vadd.f32 0.0, %v4948
  %4950 = vmatmul.bf16.gmra.mxu0 %v4820
  %v4951 = vpop.f32.mrf.mxu0
  %v4952 = vadd.f32 0.0, %v4951
  %v4953 = vpop.f32.mrf.mxu0
  %v4954 = vadd.f32 0.0, %v4953
  %4955 = vmatmul.bf16.gmra.mxu0 %v4823
  %v4956 = vpop.f32.mrf.mxu0
  %v4957 = vadd.f32 0.0, %v4956
  %v4958 = vpop.f32.mrf.mxu0
  %v4959 = vadd.f32 0.0, %v4958
  %4960 = vmatmul.bf16.gmra.mxu0 %v4826
  %v4961 = vpop.f32.mrf.mxu0
  %v4962 = vadd.f32 0.0, %v4961
  %v4963 = vpop.f32.mrf.mxu0
  %v4964 = vadd.f32 0.0, %v4963
  %4965 = vmatmul.bf16.gmra.mxu0 %v4829
  %v4966 = vpop.f32.mrf.mxu0
  %v4967 = vadd.f32 0.0, %v4966
  %v4968 = vpop.f32.mrf.mxu0
  %v4969 = vadd.f32 0.0, %v4968
  %4970 = vmatmul.bf16.gmra.mxu0 %v4832
  %v4971 = vpop.f32.mrf.mxu0
  %v4972 = vadd.f32 0.0, %v4971
  %v4973 = vpop.f32.mrf.mxu0
  %v4974 = vadd.f32 0.0, %v4973
  %4975 = vmatmul.bf16.gmra.mxu0 %v4835
  %v4976 = vpop.f32.mrf.mxu0
  %v4977 = vadd.f32 0.0, %v4976
  %v4978 = vpop.f32.mrf.mxu0
  %v4979 = vadd.f32 0.0, %v4978
  %4980 = vmatmul.bf16.gmra.mxu0 %v4838
  %v4981 = vpop.f32.mrf.mxu0
  %v4982 = vadd.f32 0.0, %v4981
  %v4983 = vpop.f32.mrf.mxu0
  %v4984 = vadd.f32 0.0, %v4983
  %4985 = vmatmul.bf16.gmra.mxu0 %v4841
  %v4986 = vpop.f32.mrf.mxu0
  %v4987 = vadd.f32 0.0, %v4986
  %v4988 = vpop.f32.mrf.mxu0
  %v4989 = vadd.f32 0.0, %v4988
  %4990 = vmatmul.bf16.gmra.mxu0 %v4844
  %v4991 = vpop.f32.mrf.mxu0
  %v4992 = vadd.f32 0.0, %v4991
  %v4993 = vpop.f32.mrf.mxu0
  %v4994 = vadd.f32 0.0, %v4993
  %4995 = vmatmul.bf16.gmra.mxu0 %v4847
  %v4996 = vpop.f32.mrf.mxu0
  %v4997 = vadd.f32 0.0, %v4996
  %v4998 = vpop.f32.mrf.mxu0
  %v4999 = vadd.f32 0.0, %v4998
  %5000 = vmatmul.bf16.gmra.mxu0 %v4850
  %v5001 = vpop.f32.mrf.mxu0
  %v5002 = vadd.f32 0.0, %v5001
  %v5003 = vpop.f32.mrf.mxu0
  %v5004 = vadd.f32 0.0, %v5003
  %5005 = vmatmul.bf16.gmra.mxu0 %v4853
  %v5006 = vpop.f32.mrf.mxu0
  %v5007 = vadd.f32 0.0, %v5006
  %v5008 = vpop.f32.mrf.mxu0
  %v5009 = vadd.f32 0.0, %v5008
  %5010 = vmatmul.bf16.gmra.mxu0 %v4856
  %v5011 = vpop.f32.mrf.mxu0
  %v5012 = vadd.f32 0.0, %v5011
  %v5013 = vpop.f32.mrf.mxu0
  %v5014 = vadd.f32 0.0, %v5013
  %5015 = vmatmul.bf16.gmra.mxu0 %v4859
  %v5016 = vpop.f32.mrf.mxu0
  %v5017 = vadd.f32 0.0, %v5016
  %v5018 = vpop.f32.mrf.mxu0
  %v5019 = vadd.f32 0.0, %v5018
  %5020 = vmatmul.bf16.gmra.mxu0 %v4862
  %v5021 = vpop.f32.mrf.mxu0
  %v5022 = vadd.f32 0.0, %v5021
  %v5023 = vpop.f32.mrf.mxu0
  %v5024 = vadd.f32 0.0, %v5023
  %5025 = vmatmul.bf16.gmra.mxu0 %v4865
  %v5026 = vpop.f32.mrf.mxu0
  %v5027 = vadd.f32 0.0, %v5026
  %v5028 = vpop.f32.mrf.mxu0
  %v5029 = vadd.f32 0.0, %v5028
  %5030 = vmatmul.bf16.gmra.mxu0 %v4868
  %v5031 = vpop.f32.mrf.mxu0
  %v5032 = vadd.f32 0.0, %v5031
  %v5033 = vpop.f32.mrf.mxu0
  %v5034 = vadd.f32 0.0, %v5033
  %5035 = vmatmul.bf16.gmra.mxu0 %v4871
  %v5036 = vpop.f32.mrf.mxu0
  %v5037 = vadd.f32 0.0, %v5036
  %v5038 = vpop.f32.mrf.mxu0
  %v5039 = vadd.f32 0.0, %v5038
  %5040 = vmatmul.bf16.gmra.mxu0 %v4874
  %v5041 = vpop.f32.mrf.mxu0
  %v5042 = vadd.f32 0.0, %v5041
  %v5043 = vpop.f32.mrf.mxu0
  %v5044 = vadd.f32 0.0, %v5043
  %5045 = vmatmul.bf16.gmra.mxu0 %v4877
  %v5046 = vpop.f32.mrf.mxu0
  %v5047 = vadd.f32 0.0, %v5046
  %v5048 = vpop.f32.mrf.mxu0
  %v5049 = vadd.f32 0.0, %v5048
  %5050 = vdwg.mxu0
  %v5051 = vadd.f32 %v4269, %v4892
  %v5052 = vadd.f32 %v4270, %v4894
  %v5053 = vadd.f32 %v4271, %v4897
  %v5054 = vadd.f32 %v4272, %v4899
  %v5055 = vadd.f32 %v4273, %v4902
  %v5056 = vadd.f32 %v4274, %v4904
  %v5057 = vadd.f32 %v4275, %v4907
  %v5058 = vadd.f32 %v4276, %v4909
  %v5059 = vadd.f32 %v4277, %v4912
  %v5060 = vadd.f32 %v4278, %v4914
  %v5061 = vadd.f32 %v4279, %v4917
  %v5062 = vadd.f32 %v4280, %v4919
  %v5063 = vadd.f32 %v4281, %v4922
  %v5064 = vadd.f32 %v4282, %v4924
  %v5065 = vadd.f32 %v4283, %v4927
  %v5066 = vadd.f32 %v4284, %v4929
  %v5067 = vadd.f32 %v4285, %v4932
  %v5068 = vadd.f32 %v4286, %v4934
  %v5069 = vadd.f32 %v4287, %v4937
  %v5070 = vadd.f32 %v4288, %v4939
  %v5071 = vadd.f32 %v4289, %v4942
  %v5072 = vadd.f32 %v4290, %v4944
  %v5073 = vadd.f32 %v4291, %v4947
  %v5074 = vadd.f32 %v4292, %v4949
  %v5075 = vadd.f32 %v4293, %v4952
  %v5076 = vadd.f32 %v4294, %v4954
  %v5077 = vadd.f32 %v4295, %v4957
  %v5078 = vadd.f32 %v4296, %v4959
  %v5079 = vadd.f32 %v4297, %v4962
  %v5080 = vadd.f32 %v4298, %v4964
  %v5081 = vadd.f32 %v4299, %v4967
  %v5082 = vadd.f32 %v4300, %v4969
  %v5083 = vadd.f32 %v4301, %v4972
  %v5084 = vadd.f32 %v4302, %v4974
  %v5085 = vadd.f32 %v4303, %v4977
  %v5086 = vadd.f32 %v4304, %v4979
  %v5087 = vadd.f32 %v4305, %v4982
  %v5088 = vadd.f32 %v4306, %v4984
  %v5089 = vadd.f32 %v4307, %v4987
  %v5090 = vadd.f32 %v4308, %v4989
  %v5091 = vadd.f32 %v4309, %v4992
  %v5092 = vadd.f32 %v4310, %v4994
  %v5093 = vadd.f32 %v4311, %v4997
  %v5094 = vadd.f32 %v4312, %v4999
  %v5095 = vadd.f32 %v4313, %v5002
  %v5096 = vadd.f32 %v4314, %v5004
  %v5097 = vadd.f32 %v4315, %v5007
  %v5098 = vadd.f32 %v4316, %v5009
  %v5099 = vadd.f32 %v4317, %v5012
  %v5100 = vadd.f32 %v4318, %v5014
  %v5101 = vadd.f32 %v4319, %v5017
  %v5102 = vadd.f32 %v4320, %v5019
  %v5103 = vadd.f32 %v4321, %v5022
  %v5104 = vadd.f32 %v4322, %v5024
  %v5105 = vadd.f32 %v4323, %v5027
  %v5106 = vadd.f32 %v4324, %v5029
  %v5107 = vadd.f32 %v4325, %v5032
  %v5108 = vadd.f32 %v4326, %v5034
  %v5109 = vadd.f32 %v4327, %v5037
  %v5110 = vadd.f32 %v4328, %v5039
  %v5111 = vadd.f32 %v4329, %v5042
  %v5112 = vadd.f32 %v4330, %v5044
  %v5113 = vadd.f32 %v4331, %v5047
  %v5114 = vadd.f32 %v4332, %v5049
  %s5115 = scalar_lea.vmem %s43, 24
  %v5116 = vld [vmem:[%s5115] sm:$0xf]
  %v5117 = vld [vmem:[%s5115 + $0x4] sm:$0xf]
  %v5118 = vld [vmem:[%s5115 + $0xc] sm:$0xf]
  %v5119 = vld [vmem:[%s5115 + $0x10] sm:$0xf]
  %v5120 = vld [vmem:[%s5115 + $0x18] sm:$0xf]
  %v5121 = vld [vmem:[%s5115 + $0x1c] sm:$0xf]
  %v5122 = vld [vmem:[%s5115 + $0x24] sm:$0xf]
  %v5123 = vld [vmem:[%s5115 + $0x28] sm:$0xf]
  %v5124 = vld [vmem:[%s5115 + $0x30] sm:$0xf]
  %v5125 = vld [vmem:[%s5115 + $0x34] sm:$0xf]
  %v5126 = vld [vmem:[%s5115 + $0x3c] sm:$0xf]
  %v5127 = vld [vmem:[%s5115 + $0x40] sm:$0xf]
  %v5128 = vld [vmem:[%s5115 + $0x48] sm:$0xf]
  %v5129 = vld [vmem:[%s5115 + $0x4c] sm:$0xf]
  %v5130 = vld [vmem:[%s5115 + $0x54] sm:$0xf]
  %v5131 = vld [vmem:[%s5115 + $0x58] sm:$0xf]
  %v5132 = vld [vmem:[%s5115 + $0x60] sm:$0xf]
  %v5133 = vld [vmem:[%s5115 + $0x64] sm:$0xf]
  %v5134 = vld [vmem:[%s5115 + $0x6c] sm:$0xf]
  %v5135 = vld [vmem:[%s5115 + $0x70] sm:$0xf]
  %v5136 = vld [vmem:[%s5115 + $0x78] sm:$0xf]
  %v5137 = vld [vmem:[%s5115 + $0x7c] sm:$0xf]
  %v5138 = vld [vmem:[%s5115 + $0x84] sm:$0xf]
  %v5139 = vld [vmem:[%s5115 + $0x88] sm:$0xf]
  %v5140 = vld [vmem:[%s5115 + $0x90] sm:$0xf]
  %v5141 = vld [vmem:[%s5115 + $0x94] sm:$0xf]
  %v5142 = vld [vmem:[%s5115 + $0x9c] sm:$0xf]
  %v5143 = vld [vmem:[%s5115 + $0xa0] sm:$0xf]
  %v5144 = vld [vmem:[%s5115 + $0xa8] sm:$0xf]
  %v5145 = vld [vmem:[%s5115 + $0xac] sm:$0xf]
  %v5146 = vld [vmem:[%s5115 + $0xb4] sm:$0xf]
  %v5147 = vld [vmem:[%s5115 + $0xb8] sm:$0xf]
  %v5148 = vld [vmem:[%s5115 + $0xd8] sm:$0xf]
  %v5149 = vld [vmem:[%s5115 + $0xdc] sm:$0xf]
  %v5150 = vld [vmem:[%s5115 + $0xe4] sm:$0xf]
  %v5151 = vld [vmem:[%s5115 + $0xe8] sm:$0xf]
  %v5152 = vld [vmem:[%s5115 + $0xf0] sm:$0xf]
  %v5153 = vld [vmem:[%s5115 + $0xf4] sm:$0xf]
  %v5154 = vld [vmem:[%s5115 + $0xfc] sm:$0xf]
  %v5155 = vld [vmem:[%s5115 + $0x100] sm:$0xf]
  %v5156 = vld [vmem:[%s5115 + $0x108] sm:$0xf]
  %v5157 = vld [vmem:[%s5115 + $0x10c] sm:$0xf]
  %v5158 = vld [vmem:[%s5115 + $0x114] sm:$0xf]
  %v5159 = vld [vmem:[%s5115 + $0x118] sm:$0xf]
  %v5160 = vld [vmem:[%s5115 + $0x120] sm:$0xf]
  %v5161 = vld [vmem:[%s5115 + $0x124] sm:$0xf]
  %v5162 = vld [vmem:[%s5115 + $0x12c] sm:$0xf]
  %v5163 = vld [vmem:[%s5115 + $0x130] sm:$0xf]
  %v5164 = vld [vmem:[%s5115 + $0x138] sm:$0xf]
  %v5165 = vld [vmem:[%s5115 + $0x13c] sm:$0xf]
  %v5166 = vld [vmem:[%s5115 + $0x144] sm:$0xf]
  %v5167 = vld [vmem:[%s5115 + $0x148] sm:$0xf]
  %v5168 = vld [vmem:[%s5115 + $0x150] sm:$0xf]
  %v5169 = vld [vmem:[%s5115 + $0x154] sm:$0xf]
  %v5170 = vld [vmem:[%s5115 + $0x15c] sm:$0xf]
  %v5171 = vld [vmem:[%s5115 + $0x160] sm:$0xf]
  %v5172 = vld [vmem:[%s5115 + $0x168] sm:$0xf]
  %v5173 = vld [vmem:[%s5115 + $0x16c] sm:$0xf]
  %v5174 = vld [vmem:[%s5115 + $0x174] sm:$0xf]
  %v5175 = vld [vmem:[%s5115 + $0x178] sm:$0xf]
  %v5176 = vld [vmem:[%s5115 + $0x180] sm:$0xf]
  %v5177 = vld [vmem:[%s5115 + $0x184] sm:$0xf]
  %v5178 = vld [vmem:[%s5115 + $0x18c] sm:$0xf]
  %v5179 = vld [vmem:[%s5115 + $0x190] sm:$0xf]
  %s5180 = scalar_lea.vmem %s1, 24
  %v5181 = vld [vmem:[%s5180] sm:$0xf]
  %v5246 = vunpack.c.l.b16 %v5116
  %v5247 = vunpack.c.l.b16 %v5117
  %v5248 = vunpack.c.l.b16 %v5118
  %v5249 = vunpack.c.l.b16 %v5119
  %v5250 = vunpack.c.l.b16 %v5120
  %v5251 = vunpack.c.l.b16 %v5121
  %v5252 = vunpack.c.l.b16 %v5122
  %v5253 = vunpack.c.l.b16 %v5123
  %v5254 = vunpack.c.l.b16 %v5124
  %v5255 = vunpack.c.l.b16 %v5125
  %v5256 = vunpack.c.l.b16 %v5126
  %v5257 = vunpack.c.l.b16 %v5127
  %v5258 = vunpack.c.l.b16 %v5128
  %v5259 = vunpack.c.l.b16 %v5129
  %v5260 = vunpack.c.l.b16 %v5130
  %v5261 = vunpack.c.l.b16 %v5131
  %v5262 = vunpack.c.l.b16 %v5132
  %v5263 = vunpack.c.l.b16 %v5133
  %v5264 = vunpack.c.l.b16 %v5134
  %v5265 = vunpack.c.l.b16 %v5135
  %v5266 = vunpack.c.l.b16 %v5136
  %v5267 = vunpack.c.l.b16 %v5137
  %v5268 = vunpack.c.l.b16 %v5138
  %v5269 = vunpack.c.l.b16 %v5139
  %v5270 = vunpack.c.l.b16 %v5140
  %v5271 = vunpack.c.l.b16 %v5141
  %v5272 = vunpack.c.l.b16 %v5142
  %v5273 = vunpack.c.l.b16 %v5143
  %v5274 = vunpack.c.l.b16 %v5144
  %v5275 = vunpack.c.l.b16 %v5145
  %v5276 = vunpack.c.l.b16 %v5146
  %v5277 = vunpack.c.l.b16 %v5147
  %v5278 = vunpack.c.l.b16 %v5148
  %v5279 = vunpack.c.l.b16 %v5149
  %v5280 = vunpack.c.l.b16 %v5150
  %v5281 = vunpack.c.l.b16 %v5151
  %v5282 = vunpack.c.l.b16 %v5152
  %v5283 = vunpack.c.l.b16 %v5153
  %v5284 = vunpack.c.l.b16 %v5154
  %v5285 = vunpack.c.l.b16 %v5155
  %v5286 = vunpack.c.l.b16 %v5156
  %v5287 = vunpack.c.l.b16 %v5157
  %v5288 = vunpack.c.l.b16 %v5158
  %v5289 = vunpack.c.l.b16 %v5159
  %v5290 = vunpack.c.l.b16 %v5160
  %v5291 = vunpack.c.l.b16 %v5161
  %v5292 = vunpack.c.l.b16 %v5162
  %v5293 = vunpack.c.l.b16 %v5163
  %v5294 = vunpack.c.l.b16 %v5164
  %v5295 = vunpack.c.l.b16 %v5165
  %v5296 = vunpack.c.l.b16 %v5166
  %v5297 = vunpack.c.l.b16 %v5167
  %v5298 = vunpack.c.l.b16 %v5168
  %v5299 = vunpack.c.l.b16 %v5169
  %v5300 = vunpack.c.l.b16 %v5170
  %v5301 = vunpack.c.l.b16 %v5171
  %v5302 = vunpack.c.l.b16 %v5172
  %v5303 = vunpack.c.l.b16 %v5173
  %v5304 = vunpack.c.l.b16 %v5174
  %v5305 = vunpack.c.l.b16 %v5175
  %v5306 = vunpack.c.l.b16 %v5176
  %v5307 = vunpack.c.l.b16 %v5177
  %v5308 = vunpack.c.l.b16 %v5178
  %v5309 = vunpack.c.l.b16 %v5179
  %v5310 = vpack.c.b16 %v5247, %v5246
  %v5311 = vpack.c.b16 %v5249, %v5248
  %v5312 = vpack.c.b16 %v5251, %v5250
  %v5313 = vpack.c.b16 %v5253, %v5252
  %v5314 = vpack.c.b16 %v5255, %v5254
  %v5315 = vpack.c.b16 %v5257, %v5256
  %v5316 = vpack.c.b16 %v5259, %v5258
  %v5317 = vpack.c.b16 %v5261, %v5260
  %v5318 = vpack.c.b16 %v5263, %v5262
  %v5319 = vpack.c.b16 %v5265, %v5264
  %v5320 = vpack.c.b16 %v5267, %v5266
  %v5321 = vpack.c.b16 %v5269, %v5268
  %v5322 = vpack.c.b16 %v5271, %v5270
  %v5323 = vpack.c.b16 %v5273, %v5272
  %v5324 = vpack.c.b16 %v5275, %v5274
  %v5325 = vpack.c.b16 %v5277, %v5276
  %v5326 = vpack.c.b16 %v5279, %v5278
  %v5327 = vpack.c.b16 %v5281, %v5280
  %v5328 = vpack.c.b16 %v5283, %v5282
  %v5329 = vpack.c.b16 %v5285, %v5284
  %v5330 = vpack.c.b16 %v5287, %v5286
  %v5331 = vpack.c.b16 %v5289, %v5288
  %v5332 = vpack.c.b16 %v5291, %v5290
  %v5333 = vpack.c.b16 %v5293, %v5292
  %v5334 = vpack.c.b16 %v5295, %v5294
  %v5335 = vpack.c.b16 %v5297, %v5296
  %v5336 = vpack.c.b16 %v5299, %v5298
  %v5337 = vpack.c.b16 %v5301, %v5300
  %v5338 = vpack.c.b16 %v5303, %v5302
  %v5339 = vpack.c.b16 %v5305, %v5304
  %v5340 = vpack.c.b16 %v5307, %v5306
  %v5341 = vpack.c.b16 %v5309, %v5308
  %v5343 = vsel %vm1029, %v5310, 0
  %v5346 = vsel %vm1029, %v5311, 0
  %v5349 = vsel %vm1029, %v5312, 0
  %v5352 = vsel %vm1029, %v5313, 0
  %v5355 = vsel %vm1029, %v5314, 0
  %v5358 = vsel %vm1029, %v5315, 0
  %v5361 = vsel %vm1029, %v5316, 0
  %v5364 = vsel %vm1029, %v5317, 0
  %v5367 = vsel %vm1029, %v5318, 0
  %v5370 = vsel %vm1029, %v5319, 0
  %v5373 = vsel %vm1029, %v5320, 0
  %v5376 = vsel %vm1029, %v5321, 0
  %v5379 = vsel %vm1029, %v5322, 0
  %v5382 = vsel %vm1029, %v5323, 0
  %v5385 = vsel %vm1029, %v5324, 0
  %v5388 = vsel %vm1029, %v5325, 0
  %v5391 = vsel %vm1029, %v5326, 0
  %v5394 = vsel %vm1029, %v5327, 0
  %v5397 = vsel %vm1029, %v5328, 0
  %v5400 = vsel %vm1029, %v5329, 0
  %v5403 = vsel %vm1029, %v5330, 0
  %v5406 = vsel %vm1029, %v5331, 0
  %v5409 = vsel %vm1029, %v5332, 0
  %v5412 = vsel %vm1029, %v5333, 0
  %v5415 = vsel %vm1029, %v5334, 0
  %v5418 = vsel %vm1029, %v5335, 0
  %v5421 = vsel %vm1029, %v5336, 0
  %v5424 = vsel %vm1029, %v5337, 0
  %v5427 = vsel %vm1029, %v5338, 0
  %v5430 = vsel %vm1029, %v5339, 0
  %v5433 = vsel %vm1029, %v5340, 0
  %v5436 = vsel %vm1029, %v5341, 0
  %v5439 = vsel %vm1126, %v5181, 0
  %5441 = vmatpush.bf16.msra.mxu0 0
  %5442 = vmatpush.bf16.msra.mxu0 0
  %5443 = vmatpush.bf16.msra.mxu0 0
  %5444 = vmatpush.bf16.msra.mxu0 0
  %5445 = vmatpush.bf16.msra.mxu0 0
  %5446 = vmatpush.bf16.msra.mxu0 0
  %5447 = vmatpush.bf16.msra.mxu0 0
  %5448 = vmatpush.bf16.msra.mxu0 %v5439
  %5449 = vmatmul.bf16.gmra.mxu0 %v5343
  %v5450 = vpop.f32.mrf.mxu0
  %v5451 = vadd.f32 0.0, %v5450
  %v5452 = vpop.f32.mrf.mxu0
  %v5453 = vadd.f32 0.0, %v5452
  %5454 = vmatmul.bf16.gmra.mxu0 %v5346
  %v5455 = vpop.f32.mrf.mxu0
  %v5456 = vadd.f32 0.0, %v5455
  %v5457 = vpop.f32.mrf.mxu0
  %v5458 = vadd.f32 0.0, %v5457
  %5459 = vmatmul.bf16.gmra.mxu0 %v5349
  %v5460 = vpop.f32.mrf.mxu0
  %v5461 = vadd.f32 0.0, %v5460
  %v5462 = vpop.f32.mrf.mxu0
  %v5463 = vadd.f32 0.0, %v5462
  %5464 = vmatmul.bf16.gmra.mxu0 %v5352
  %v5465 = vpop.f32.mrf.mxu0
  %v5466 = vadd.f32 0.0, %v5465
  %v5467 = vpop.f32.mrf.mxu0
  %v5468 = vadd.f32 0.0, %v5467
  %5469 = vmatmul.bf16.gmra.mxu0 %v5355
  %v5470 = vpop.f32.mrf.mxu0
  %v5471 = vadd.f32 0.0, %v5470
  %v5472 = vpop.f32.mrf.mxu0
  %v5473 = vadd.f32 0.0, %v5472
  %5474 = vmatmul.bf16.gmra.mxu0 %v5358
  %v5475 = vpop.f32.mrf.mxu0
  %v5476 = vadd.f32 0.0, %v5475
  %v5477 = vpop.f32.mrf.mxu0
  %v5478 = vadd.f32 0.0, %v5477
  %5479 = vmatmul.bf16.gmra.mxu0 %v5361
  %v5480 = vpop.f32.mrf.mxu0
  %v5481 = vadd.f32 0.0, %v5480
  %v5482 = vpop.f32.mrf.mxu0
  %v5483 = vadd.f32 0.0, %v5482
  %5484 = vmatmul.bf16.gmra.mxu0 %v5364
  %v5485 = vpop.f32.mrf.mxu0
  %v5486 = vadd.f32 0.0, %v5485
  %v5487 = vpop.f32.mrf.mxu0
  %v5488 = vadd.f32 0.0, %v5487
  %5489 = vmatmul.bf16.gmra.mxu0 %v5367
  %v5490 = vpop.f32.mrf.mxu0
  %v5491 = vadd.f32 0.0, %v5490
  %v5492 = vpop.f32.mrf.mxu0
  %v5493 = vadd.f32 0.0, %v5492
  %5494 = vmatmul.bf16.gmra.mxu0 %v5370
  %v5495 = vpop.f32.mrf.mxu0
  %v5496 = vadd.f32 0.0, %v5495
  %v5497 = vpop.f32.mrf.mxu0
  %v5498 = vadd.f32 0.0, %v5497
  %5499 = vmatmul.bf16.gmra.mxu0 %v5373
  %v5500 = vpop.f32.mrf.mxu0
  %v5501 = vadd.f32 0.0, %v5500
  %v5502 = vpop.f32.mrf.mxu0
  %v5503 = vadd.f32 0.0, %v5502
  %5504 = vmatmul.bf16.gmra.mxu0 %v5376
  %v5505 = vpop.f32.mrf.mxu0
  %v5506 = vadd.f32 0.0, %v5505
  %v5507 = vpop.f32.mrf.mxu0
  %v5508 = vadd.f32 0.0, %v5507
  %5509 = vmatmul.bf16.gmra.mxu0 %v5379
  %v5510 = vpop.f32.mrf.mxu0
  %v5511 = vadd.f32 0.0, %v5510
  %v5512 = vpop.f32.mrf.mxu0
  %v5513 = vadd.f32 0.0, %v5512
  %5514 = vmatmul.bf16.gmra.mxu0 %v5382
  %v5515 = vpop.f32.mrf.mxu0
  %v5516 = vadd.f32 0.0, %v5515
  %v5517 = vpop.f32.mrf.mxu0
  %v5518 = vadd.f32 0.0, %v5517
  %5519 = vmatmul.bf16.gmra.mxu0 %v5385
  %v5520 = vpop.f32.mrf.mxu0
  %v5521 = vadd.f32 0.0, %v5520
  %v5522 = vpop.f32.mrf.mxu0
  %v5523 = vadd.f32 0.0, %v5522
  %5524 = vmatmul.bf16.gmra.mxu0 %v5388
  %v5525 = vpop.f32.mrf.mxu0
  %v5526 = vadd.f32 0.0, %v5525
  %v5527 = vpop.f32.mrf.mxu0
  %v5528 = vadd.f32 0.0, %v5527
  %5529 = vmatmul.bf16.gmra.mxu0 %v5391
  %v5530 = vpop.f32.mrf.mxu0
  %v5531 = vadd.f32 0.0, %v5530
  %v5532 = vpop.f32.mrf.mxu0
  %v5533 = vadd.f32 0.0, %v5532
  %5534 = vmatmul.bf16.gmra.mxu0 %v5394
  %v5535 = vpop.f32.mrf.mxu0
  %v5536 = vadd.f32 0.0, %v5535
  %v5537 = vpop.f32.mrf.mxu0
  %v5538 = vadd.f32 0.0, %v5537
  %5539 = vmatmul.bf16.gmra.mxu0 %v5397
  %v5540 = vpop.f32.mrf.mxu0
  %v5541 = vadd.f32 0.0, %v5540
  %v5542 = vpop.f32.mrf.mxu0
  %v5543 = vadd.f32 0.0, %v5542
  %5544 = vmatmul.bf16.gmra.mxu0 %v5400
  %v5545 = vpop.f32.mrf.mxu0
  %v5546 = vadd.f32 0.0, %v5545
  %v5547 = vpop.f32.mrf.mxu0
  %v5548 = vadd.f32 0.0, %v5547
  %5549 = vmatmul.bf16.gmra.mxu0 %v5403
  %v5550 = vpop.f32.mrf.mxu0
  %v5551 = vadd.f32 0.0, %v5550
  %v5552 = vpop.f32.mrf.mxu0
  %v5553 = vadd.f32 0.0, %v5552
  %5554 = vmatmul.bf16.gmra.mxu0 %v5406
  %v5555 = vpop.f32.mrf.mxu0
  %v5556 = vadd.f32 0.0, %v5555
  %v5557 = vpop.f32.mrf.mxu0
  %v5558 = vadd.f32 0.0, %v5557
  %5559 = vmatmul.bf16.gmra.mxu0 %v5409
  %v5560 = vpop.f32.mrf.mxu0
  %v5561 = vadd.f32 0.0, %v5560
  %v5562 = vpop.f32.mrf.mxu0
  %v5563 = vadd.f32 0.0, %v5562
  %5564 = vmatmul.bf16.gmra.mxu0 %v5412
  %v5565 = vpop.f32.mrf.mxu0
  %v5566 = vadd.f32 0.0, %v5565
  %v5567 = vpop.f32.mrf.mxu0
  %v5568 = vadd.f32 0.0, %v5567
  %5569 = vmatmul.bf16.gmra.mxu0 %v5415
  %v5570 = vpop.f32.mrf.mxu0
  %v5571 = vadd.f32 0.0, %v5570
  %v5572 = vpop.f32.mrf.mxu0
  %v5573 = vadd.f32 0.0, %v5572
  %5574 = vmatmul.bf16.gmra.mxu0 %v5418
  %v5575 = vpop.f32.mrf.mxu0
  %v5576 = vadd.f32 0.0, %v5575
  %v5577 = vpop.f32.mrf.mxu0
  %v5578 = vadd.f32 0.0, %v5577
  %5579 = vmatmul.bf16.gmra.mxu0 %v5421
  %v5580 = vpop.f32.mrf.mxu0
  %v5581 = vadd.f32 0.0, %v5580
  %v5582 = vpop.f32.mrf.mxu0
  %v5583 = vadd.f32 0.0, %v5582
  %5584 = vmatmul.bf16.gmra.mxu0 %v5424
  %v5585 = vpop.f32.mrf.mxu0
  %v5586 = vadd.f32 0.0, %v5585
  %v5587 = vpop.f32.mrf.mxu0
  %v5588 = vadd.f32 0.0, %v5587
  %5589 = vmatmul.bf16.gmra.mxu0 %v5427
  %v5590 = vpop.f32.mrf.mxu0
  %v5591 = vadd.f32 0.0, %v5590
  %v5592 = vpop.f32.mrf.mxu0
  %v5593 = vadd.f32 0.0, %v5592
  %5594 = vmatmul.bf16.gmra.mxu0 %v5430
  %v5595 = vpop.f32.mrf.mxu0
  %v5596 = vadd.f32 0.0, %v5595
  %v5597 = vpop.f32.mrf.mxu0
  %v5598 = vadd.f32 0.0, %v5597
  %5599 = vmatmul.bf16.gmra.mxu0 %v5433
  %v5600 = vpop.f32.mrf.mxu0
  %v5601 = vadd.f32 0.0, %v5600
  %v5602 = vpop.f32.mrf.mxu0
  %v5603 = vadd.f32 0.0, %v5602
  %5604 = vmatmul.bf16.gmra.mxu0 %v5436
  %v5605 = vpop.f32.mrf.mxu0
  %v5606 = vadd.f32 0.0, %v5605
  %v5607 = vpop.f32.mrf.mxu0
  %v5608 = vadd.f32 0.0, %v5607
  %5609 = vdwg.mxu0
  %v5610 = vadd.f32 %v5051, %v5451
  %v5611 = vadd.f32 %v5052, %v5453
  %v5612 = vadd.f32 %v5053, %v5456
  %v5613 = vadd.f32 %v5054, %v5458
  %v5614 = vadd.f32 %v5055, %v5461
  %v5615 = vadd.f32 %v5056, %v5463
  %v5616 = vadd.f32 %v5057, %v5466
  %v5617 = vadd.f32 %v5058, %v5468
  %v5618 = vadd.f32 %v5059, %v5471
  %v5619 = vadd.f32 %v5060, %v5473
  %v5620 = vadd.f32 %v5061, %v5476
  %v5621 = vadd.f32 %v5062, %v5478
  %v5622 = vadd.f32 %v5063, %v5481
  %v5623 = vadd.f32 %v5064, %v5483
  %v5624 = vadd.f32 %v5065, %v5486
  %v5625 = vadd.f32 %v5066, %v5488
  %v5626 = vadd.f32 %v5067, %v5491
  %v5627 = vadd.f32 %v5068, %v5493
  %v5628 = vadd.f32 %v5069, %v5496
  %v5629 = vadd.f32 %v5070, %v5498
  %v5630 = vadd.f32 %v5071, %v5501
  %v5631 = vadd.f32 %v5072, %v5503
  %v5632 = vadd.f32 %v5073, %v5506
  %v5633 = vadd.f32 %v5074, %v5508
  %v5634 = vadd.f32 %v5075, %v5511
  %v5635 = vadd.f32 %v5076, %v5513
  %v5636 = vadd.f32 %v5077, %v5516
  %v5637 = vadd.f32 %v5078, %v5518
  %v5638 = vadd.f32 %v5079, %v5521
  %v5639 = vadd.f32 %v5080, %v5523
  %v5640 = vadd.f32 %v5081, %v5526
  %v5641 = vadd.f32 %v5082, %v5528
  %v5642 = vadd.f32 %v5083, %v5531
  %v5643 = vadd.f32 %v5084, %v5533
  %v5644 = vadd.f32 %v5085, %v5536
  %v5645 = vadd.f32 %v5086, %v5538
  %v5646 = vadd.f32 %v5087, %v5541
  %v5647 = vadd.f32 %v5088, %v5543
  %v5648 = vadd.f32 %v5089, %v5546
  %v5649 = vadd.f32 %v5090, %v5548
  %v5650 = vadd.f32 %v5091, %v5551
  %v5651 = vadd.f32 %v5092, %v5553
  %v5652 = vadd.f32 %v5093, %v5556
  %v5653 = vadd.f32 %v5094, %v5558
  %v5654 = vadd.f32 %v5095, %v5561
  %v5655 = vadd.f32 %v5096, %v5563
  %v5656 = vadd.f32 %v5097, %v5566
  %v5657 = vadd.f32 %v5098, %v5568
  %v5658 = vadd.f32 %v5099, %v5571
  %v5659 = vadd.f32 %v5100, %v5573
  %v5660 = vadd.f32 %v5101, %v5576
  %v5661 = vadd.f32 %v5102, %v5578
  %v5662 = vadd.f32 %v5103, %v5581
  %v5663 = vadd.f32 %v5104, %v5583
  %v5664 = vadd.f32 %v5105, %v5586
  %v5665 = vadd.f32 %v5106, %v5588
  %v5666 = vadd.f32 %v5107, %v5591
  %v5667 = vadd.f32 %v5108, %v5593
  %v5668 = vadd.f32 %v5109, %v5596
  %v5669 = vadd.f32 %v5110, %v5598
  %v5670 = vadd.f32 %v5111, %v5601
  %v5671 = vadd.f32 %v5112, %v5603
  %v5672 = vadd.f32 %v5113, %v5606
  %v5673 = vadd.f32 %v5114, %v5608
  %v5674 = vld [vmem:[%s5115] sm:$0xf]
  %v5675 = vld [vmem:[%s5115 + $0x4] sm:$0xf]
  %v5676 = vld [vmem:[%s5115 + $0x8] sm:$0x1]
  %v5677 = vld [vmem:[%s5115 + $0xc] sm:$0xf]
  %v5678 = vld [vmem:[%s5115 + $0x10] sm:$0xf]
  %v5679 = vld [vmem:[%s5115 + $0x14] sm:$0x1]
  %v5680 = vld [vmem:[%s5115 + $0x18] sm:$0xf]
  %v5681 = vld [vmem:[%s5115 + $0x1c] sm:$0xf]
  %v5682 = vld [vmem:[%s5115 + $0x20] sm:$0x1]
  %v5683 = vld [vmem:[%s5115 + $0x24] sm:$0xf]
  %v5684 = vld [vmem:[%s5115 + $0x28] sm:$0xf]
  %v5685 = vld [vmem:[%s5115 + $0x2c] sm:$0x1]
  %v5686 = vld [vmem:[%s5115 + $0x30] sm:$0xf]
  %v5687 = vld [vmem:[%s5115 + $0x34] sm:$0xf]
  %v5688 = vld [vmem:[%s5115 + $0x38] sm:$0x1]
  %v5689 = vld [vmem:[%s5115 + $0x3c] sm:$0xf]
  %v5690 = vld [vmem:[%s5115 + $0x40] sm:$0xf]
  %v5691 = vld [vmem:[%s5115 + $0x44] sm:$0x1]
  %v5692 = vld [vmem:[%s5115 + $0x48] sm:$0xf]
  %v5693 = vld [vmem:[%s5115 + $0x4c] sm:$0xf]
  %v5694 = vld [vmem:[%s5115 + $0x50] sm:$0x1]
  %v5695 = vld [vmem:[%s5115 + $0x54] sm:$0xf]
  %v5696 = vld [vmem:[%s5115 + $0x58] sm:$0xf]
  %v5697 = vld [vmem:[%s5115 + $0x5c] sm:$0x1]
  %v5698 = vld [vmem:[%s5115 + $0x60] sm:$0xf]
  %v5699 = vld [vmem:[%s5115 + $0x64] sm:$0xf]
  %v5700 = vld [vmem:[%s5115 + $0x68] sm:$0x1]
  %v5701 = vld [vmem:[%s5115 + $0x6c] sm:$0xf]
  %v5702 = vld [vmem:[%s5115 + $0x70] sm:$0xf]
  %v5703 = vld [vmem:[%s5115 + $0x74] sm:$0x1]
  %v5704 = vld [vmem:[%s5115 + $0x78] sm:$0xf]
  %v5705 = vld [vmem:[%s5115 + $0x7c] sm:$0xf]
  %v5706 = vld [vmem:[%s5115 + $0x80] sm:$0x1]
  %v5707 = vld [vmem:[%s5115 + $0x84] sm:$0xf]
  %v5708 = vld [vmem:[%s5115 + $0x88] sm:$0xf]
  %v5709 = vld [vmem:[%s5115 + $0x8c] sm:$0x1]
  %v5710 = vld [vmem:[%s5115 + $0x90] sm:$0xf]
  %v5711 = vld [vmem:[%s5115 + $0x94] sm:$0xf]
  %v5712 = vld [vmem:[%s5115 + $0x98] sm:$0x1]
  %v5713 = vld [vmem:[%s5115 + $0x9c] sm:$0xf]
  %v5714 = vld [vmem:[%s5115 + $0xa0] sm:$0xf]
  %v5715 = vld [vmem:[%s5115 + $0xa4] sm:$0x1]
  %v5716 = vld [vmem:[%s5115 + $0xa8] sm:$0xf]
  %v5717 = vld [vmem:[%s5115 + $0xac] sm:$0xf]
  %v5718 = vld [vmem:[%s5115 + $0xb0] sm:$0x1]
  %v5719 = vld [vmem:[%s5115 + $0xb4] sm:$0xf]
  %v5720 = vld [vmem:[%s5115 + $0xb8] sm:$0xf]
  %v5721 = vld [vmem:[%s5115 + $0xbc] sm:$0x1]
  %v5722 = vld [vmem:[%s5115 + $0xd8] sm:$0xf]
  %v5723 = vld [vmem:[%s5115 + $0xdc] sm:$0xf]
  %v5724 = vld [vmem:[%s5115 + $0xe0] sm:$0x1]
  %v5725 = vld [vmem:[%s5115 + $0xe4] sm:$0xf]
  %v5726 = vld [vmem:[%s5115 + $0xe8] sm:$0xf]
  %v5727 = vld [vmem:[%s5115 + $0xec] sm:$0x1]
  %v5728 = vld [vmem:[%s5115 + $0xf0] sm:$0xf]
  %v5729 = vld [vmem:[%s5115 + $0xf4] sm:$0xf]
  %v5730 = vld [vmem:[%s5115 + $0xf8] sm:$0x1]
  %v5731 = vld [vmem:[%s5115 + $0xfc] sm:$0xf]
  %v5732 = vld [vmem:[%s5115 + $0x100] sm:$0xf]
  %v5733 = vld [vmem:[%s5115 + $0x104] sm:$0x1]
  %v5734 = vld [vmem:[%s5115 + $0x108] sm:$0xf]
  %v5735 = vld [vmem:[%s5115 + $0x10c] sm:$0xf]
  %v5736 = vld [vmem:[%s5115 + $0x110] sm:$0x1]
  %v5737 = vld [vmem:[%s5115 + $0x114] sm:$0xf]
  %v5738 = vld [vmem:[%s5115 + $0x118] sm:$0xf]
  %v5739 = vld [vmem:[%s5115 + $0x11c] sm:$0x1]
  %v5740 = vld [vmem:[%s5115 + $0x120] sm:$0xf]
  %v5741 = vld [vmem:[%s5115 + $0x124] sm:$0xf]
  %v5742 = vld [vmem:[%s5115 + $0x128] sm:$0x1]
  %v5743 = vld [vmem:[%s5115 + $0x12c] sm:$0xf]
  %v5744 = vld [vmem:[%s5115 + $0x130] sm:$0xf]
  %v5745 = vld [vmem:[%s5115 + $0x134] sm:$0x1]
  %v5746 = vld [vmem:[%s5115 + $0x138] sm:$0xf]
  %v5747 = vld [vmem:[%s5115 + $0x13c] sm:$0xf]
  %v5748 = vld [vmem:[%s5115 + $0x140] sm:$0x1]
  %v5749 = vld [vmem:[%s5115 + $0x144] sm:$0xf]
  %v5750 = vld [vmem:[%s5115 + $0x148] sm:$0xf]
  %v5751 = vld [vmem:[%s5115 + $0x14c] sm:$0x1]
  %v5752 = vld [vmem:[%s5115 + $0x150] sm:$0xf]
  %v5753 = vld [vmem:[%s5115 + $0x154] sm:$0xf]
  %v5754 = vld [vmem:[%s5115 + $0x158] sm:$0x1]
  %v5755 = vld [vmem:[%s5115 + $0x15c] sm:$0xf]
  %v5756 = vld [vmem:[%s5115 + $0x160] sm:$0xf]
  %v5757 = vld [vmem:[%s5115 + $0x164] sm:$0x1]
  %v5758 = vld [vmem:[%s5115 + $0x168] sm:$0xf]
  %v5759 = vld [vmem:[%s5115 + $0x16c] sm:$0xf]
  %v5760 = vld [vmem:[%s5115 + $0x170] sm:$0x1]
  %v5761 = vld [vmem:[%s5115 + $0x174] sm:$0xf]
  %v5762 = vld [vmem:[%s5115 + $0x178] sm:$0xf]
  %v5763 = vld [vmem:[%s5115 + $0x17c] sm:$0x1]
  %v5764 = vld [vmem:[%s5115 + $0x180] sm:$0xf]
  %v5765 = vld [vmem:[%s5115 + $0x184] sm:$0xf]
  %v5766 = vld [vmem:[%s5115 + $0x188] sm:$0x1]
  %v5767 = vld [vmem:[%s5115 + $0x18c] sm:$0xf]
  %v5768 = vld [vmem:[%s5115 + $0x190] sm:$0xf]
  %v5769 = vld [vmem:[%s5115 + $0x194] sm:$0x1]
  %v5771 = vshrl.u32 %v5674, 16
  %v5773 = vrot.slane %v5771, 4
  %v5774 = vshll.u32 %v5674, 16
  %v5776 = vrot.slane %v5774, 5
  %v5777 = vor.u32 %v5773, %v5776
  %v5778 = vrot.slane %v5777, 4
  %v5780 = vshll.u32 %v5675, 16
  %v5782 = vrot.slane %v5780, 5
  %v5783 = vsel %vm162, %v5778, %v5782
  %v5784 = vshrl.u32 %v5675, 16
  %v5786 = vrot.slane %v5784, 4
  %v5787 = vor.u32 %v5786, %v5782
  %v5788 = vrot.slane %v5787, 4
  %v5790 = vshll.u32 %v5676, 16
  %v5792 = vrot.slane %v5790, 5
  %v5793 = vsel %vm162, %v5788, %v5792
  %v5795 = vshrl.u32 %v5677, 16
  %v5797 = vrot.slane %v5795, 4
  %v5798 = vshll.u32 %v5677, 16
  %v5800 = vrot.slane %v5798, 5
  %v5801 = vor.u32 %v5797, %v5800
  %v5802 = vrot.slane %v5801, 4
  %v5804 = vshll.u32 %v5678, 16
  %v5806 = vrot.slane %v5804, 5
  %v5807 = vsel %vm162, %v5802, %v5806
  %v5808 = vshrl.u32 %v5678, 16
  %v5810 = vrot.slane %v5808, 4
  %v5811 = vor.u32 %v5810, %v5806
  %v5812 = vrot.slane %v5811, 4
  %v5814 = vshll.u32 %v5679, 16
  %v5816 = vrot.slane %v5814, 5
  %v5817 = vsel %vm162, %v5812, %v5816
  %v5819 = vshrl.u32 %v5680, 16
  %v5821 = vrot.slane %v5819, 4
  %v5822 = vshll.u32 %v5680, 16
  %v5824 = vrot.slane %v5822, 5
  %v5825 = vor.u32 %v5821, %v5824
  %v5826 = vrot.slane %v5825, 4
  %v5828 = vshll.u32 %v5681, 16
  %v5830 = vrot.slane %v5828, 5
  %v5831 = vsel %vm162, %v5826, %v5830
  %v5832 = vshrl.u32 %v5681, 16
  %v5834 = vrot.slane %v5832, 4
  %v5835 = vor.u32 %v5834, %v5830
  %v5836 = vrot.slane %v5835, 4
  %v5838 = vshll.u32 %v5682, 16
  %v5840 = vrot.slane %v5838, 5
  %v5841 = vsel %vm162, %v5836, %v5840
  %v5843 = vshrl.u32 %v5683, 16
  %v5845 = vrot.slane %v5843, 4
  %v5846 = vshll.u32 %v5683, 16
  %v5848 = vrot.slane %v5846, 5
  %v5849 = vor.u32 %v5845, %v5848
  %v5850 = vrot.slane %v5849, 4
  %v5852 = vshll.u32 %v5684, 16
  %v5854 = vrot.slane %v5852, 5
  %v5855 = vsel %vm162, %v5850, %v5854
  %v5856 = vshrl.u32 %v5684, 16
  %v5858 = vrot.slane %v5856, 4
  %v5859 = vor.u32 %v5858, %v5854
  %v5860 = vrot.slane %v5859, 4
  %v5862 = vshll.u32 %v5685, 16
  %v5864 = vrot.slane %v5862, 5
  %v5865 = vsel %vm162, %v5860, %v5864
  %v5867 = vshrl.u32 %v5686, 16
  %v5869 = vrot.slane %v5867, 4
  %v5870 = vshll.u32 %v5686, 16
  %v5872 = vrot.slane %v5870, 5
  %v5873 = vor.u32 %v5869, %v5872
  %v5874 = vrot.slane %v5873, 4
  %v5876 = vshll.u32 %v5687, 16
  %v5878 = vrot.slane %v5876, 5
  %v5879 = vsel %vm162, %v5874, %v5878
  %v5880 = vshrl.u32 %v5687, 16
  %v5882 = vrot.slane %v5880, 4
  %v5883 = vor.u32 %v5882, %v5878
  %v5884 = vrot.slane %v5883, 4
  %v5886 = vshll.u32 %v5688, 16
  %v5888 = vrot.slane %v5886, 5
  %v5889 = vsel %vm162, %v5884, %v5888
  %v5891 = vshrl.u32 %v5689, 16
  %v5893 = vrot.slane %v5891, 4
  %v5894 = vshll.u32 %v5689, 16
  %v5896 = vrot.slane %v5894, 5
  %v5897 = vor.u32 %v5893, %v5896
  %v5898 = vrot.slane %v5897, 4
  %v5900 = vshll.u32 %v5690, 16
  %v5902 = vrot.slane %v5900, 5
  %v5903 = vsel %vm162, %v5898, %v5902
  %v5904 = vshrl.u32 %v5690, 16
  %v5906 = vrot.slane %v5904, 4
  %v5907 = vor.u32 %v5906, %v5902
  %v5908 = vrot.slane %v5907, 4
  %v5910 = vshll.u32 %v5691, 16
  %v5912 = vrot.slane %v5910, 5
  %v5913 = vsel %vm162, %v5908, %v5912
  %v5915 = vshrl.u32 %v5692, 16
  %v5917 = vrot.slane %v5915, 4
  %v5918 = vshll.u32 %v5692, 16
  %v5920 = vrot.slane %v5918, 5
  %v5921 = vor.u32 %v5917, %v5920
  %v5922 = vrot.slane %v5921, 4
  %v5924 = vshll.u32 %v5693, 16
  %v5926 = vrot.slane %v5924, 5
  %v5927 = vsel %vm162, %v5922, %v5926
  %v5928 = vshrl.u32 %v5693, 16
  %v5930 = vrot.slane %v5928, 4
  %v5931 = vor.u32 %v5930, %v5926
  %v5932 = vrot.slane %v5931, 4
  %v5934 = vshll.u32 %v5694, 16
  %v5936 = vrot.slane %v5934, 5
  %v5937 = vsel %vm162, %v5932, %v5936
  %v5939 = vshrl.u32 %v5695, 16
  %v5941 = vrot.slane %v5939, 4
  %v5942 = vshll.u32 %v5695, 16
  %v5944 = vrot.slane %v5942, 5
  %v5945 = vor.u32 %v5941, %v5944
  %v5946 = vrot.slane %v5945, 4
  %v5948 = vshll.u32 %v5696, 16
  %v5950 = vrot.slane %v5948, 5
  %v5951 = vsel %vm162, %v5946, %v5950
  %v5952 = vshrl.u32 %v5696, 16
  %v5954 = vrot.slane %v5952, 4
  %v5955 = vor.u32 %v5954, %v5950
  %v5956 = vrot.slane %v5955, 4
  %v5958 = vshll.u32 %v5697, 16
  %v5960 = vrot.slane %v5958, 5
  %v5961 = vsel %vm162, %v5956, %v5960
  %v5963 = vshrl.u32 %v5698, 16
  %v5965 = vrot.slane %v5963, 4
  %v5966 = vshll.u32 %v5698, 16
  %v5968 = vrot.slane %v5966, 5
  %v5969 = vor.u32 %v5965, %v5968
  %v5970 = vrot.slane %v5969, 4
  %v5972 = vshll.u32 %v5699, 16
  %v5974 = vrot.slane %v5972, 5
  %v5975 = vsel %vm162, %v5970, %v5974
  %v5976 = vshrl.u32 %v5699, 16
  %v5978 = vrot.slane %v5976, 4
  %v5979 = vor.u32 %v5978, %v5974
  %v5980 = vrot.slane %v5979, 4
  %v5982 = vshll.u32 %v5700, 16
  %v5984 = vrot.slane %v5982, 5
  %v5985 = vsel %vm162, %v5980, %v5984
  %v5987 = vshrl.u32 %v5701, 16
  %v5989 = vrot.slane %v5987, 4
  %v5990 = vshll.u32 %v5701, 16
  %v5992 = vrot.slane %v5990, 5
  %v5993 = vor.u32 %v5989, %v5992
  %v5994 = vrot.slane %v5993, 4
  %v5996 = vshll.u32 %v5702, 16
  %v5998 = vrot.slane %v5996, 5
  %v5999 = vsel %vm162, %v5994, %v5998
  %v6000 = vshrl.u32 %v5702, 16
  %v6002 = vrot.slane %v6000, 4
  %v6003 = vor.u32 %v6002, %v5998
  %v6004 = vrot.slane %v6003, 4
  %v6006 = vshll.u32 %v5703, 16
  %v6008 = vrot.slane %v6006, 5
  %v6009 = vsel %vm162, %v6004, %v6008
  %v6011 = vshrl.u32 %v5704, 16
  %v6013 = vrot.slane %v6011, 4
  %v6014 = vshll.u32 %v5704, 16
  %v6016 = vrot.slane %v6014, 5
  %v6017 = vor.u32 %v6013, %v6016
  %v6018 = vrot.slane %v6017, 4
  %v6020 = vshll.u32 %v5705, 16
  %v6022 = vrot.slane %v6020, 5
  %v6023 = vsel %vm162, %v6018, %v6022
  %v6024 = vshrl.u32 %v5705, 16
  %v6026 = vrot.slane %v6024, 4
  %v6027 = vor.u32 %v6026, %v6022
  %v6028 = vrot.slane %v6027, 4
  %v6030 = vshll.u32 %v5706, 16
  %v6032 = vrot.slane %v6030, 5
  %v6033 = vsel %vm162, %v6028, %v6032
  %v6035 = vshrl.u32 %v5707, 16
  %v6037 = vrot.slane %v6035, 4
  %v6038 = vshll.u32 %v5707, 16
  %v6040 = vrot.slane %v6038, 5
  %v6041 = vor.u32 %v6037, %v6040
  %v6042 = vrot.slane %v6041, 4
  %v6044 = vshll.u32 %v5708, 16
  %v6046 = vrot.slane %v6044, 5
  %v6047 = vsel %vm162, %v6042, %v6046
  %v6048 = vshrl.u32 %v5708, 16
  %v6050 = vrot.slane %v6048, 4
  %v6051 = vor.u32 %v6050, %v6046
  %v6052 = vrot.slane %v6051, 4
  %v6054 = vshll.u32 %v5709, 16
  %v6056 = vrot.slane %v6054, 5
  %v6057 = vsel %vm162, %v6052, %v6056
  %v6059 = vshrl.u32 %v5710, 16
  %v6061 = vrot.slane %v6059, 4
  %v6062 = vshll.u32 %v5710, 16
  %v6064 = vrot.slane %v6062, 5
  %v6065 = vor.u32 %v6061, %v6064
  %v6066 = vrot.slane %v6065, 4
  %v6068 = vshll.u32 %v5711, 16
  %v6070 = vrot.slane %v6068, 5
  %v6071 = vsel %vm162, %v6066, %v6070
  %v6072 = vshrl.u32 %v5711, 16
  %v6074 = vrot.slane %v6072, 4
  %v6075 = vor.u32 %v6074, %v6070
  %v6076 = vrot.slane %v6075, 4
  %v6078 = vshll.u32 %v5712, 16
  %v6080 = vrot.slane %v6078, 5
  %v6081 = vsel %vm162, %v6076, %v6080
  %v6083 = vshrl.u32 %v5713, 16
  %v6085 = vrot.slane %v6083, 4
  %v6086 = vshll.u32 %v5713, 16
  %v6088 = vrot.slane %v6086, 5
  %v6089 = vor.u32 %v6085, %v6088
  %v6090 = vrot.slane %v6089, 4
  %v6092 = vshll.u32 %v5714, 16
  %v6094 = vrot.slane %v6092, 5
  %v6095 = vsel %vm162, %v6090, %v6094
  %v6096 = vshrl.u32 %v5714, 16
  %v6098 = vrot.slane %v6096, 4
  %v6099 = vor.u32 %v6098, %v6094
  %v6100 = vrot.slane %v6099, 4
  %v6102 = vshll.u32 %v5715, 16
  %v6104 = vrot.slane %v6102, 5
  %v6105 = vsel %vm162, %v6100, %v6104
  %v6107 = vshrl.u32 %v5716, 16
  %v6109 = vrot.slane %v6107, 4
  %v6110 = vshll.u32 %v5716, 16
  %v6112 = vrot.slane %v6110, 5
  %v6113 = vor.u32 %v6109, %v6112
  %v6114 = vrot.slane %v6113, 4
  %v6116 = vshll.u32 %v5717, 16
  %v6118 = vrot.slane %v6116, 5
  %v6119 = vsel %vm162, %v6114, %v6118
  %v6120 = vshrl.u32 %v5717, 16
  %v6122 = vrot.slane %v6120, 4
  %v6123 = vor.u32 %v6122, %v6118
  %v6124 = vrot.slane %v6123, 4
  %v6126 = vshll.u32 %v5718, 16
  %v6128 = vrot.slane %v6126, 5
  %v6129 = vsel %vm162, %v6124, %v6128
  %v6131 = vshrl.u32 %v5719, 16
  %v6133 = vrot.slane %v6131, 4
  %v6134 = vshll.u32 %v5719, 16
  %v6136 = vrot.slane %v6134, 5
  %v6137 = vor.u32 %v6133, %v6136
  %v6138 = vrot.slane %v6137, 4
  %v6140 = vshll.u32 %v5720, 16
  %v6142 = vrot.slane %v6140, 5
  %v6143 = vsel %vm162, %v6138, %v6142
  %v6144 = vshrl.u32 %v5720, 16
  %v6146 = vrot.slane %v6144, 4
  %v6147 = vor.u32 %v6146, %v6142
  %v6148 = vrot.slane %v6147, 4
  %v6150 = vshll.u32 %v5721, 16
  %v6152 = vrot.slane %v6150, 5
  %v6153 = vsel %vm162, %v6148, %v6152
  %v6155 = vshrl.u32 %v5722, 16
  %v6157 = vrot.slane %v6155, 4
  %v6158 = vshll.u32 %v5722, 16
  %v6160 = vrot.slane %v6158, 5
  %v6161 = vor.u32 %v6157, %v6160
  %v6162 = vrot.slane %v6161, 4
  %v6164 = vshll.u32 %v5723, 16
  %v6166 = vrot.slane %v6164, 5
  %v6167 = vsel %vm162, %v6162, %v6166
  %v6168 = vshrl.u32 %v5723, 16
  %v6170 = vrot.slane %v6168, 4
  %v6171 = vor.u32 %v6170, %v6166
  %v6172 = vrot.slane %v6171, 4
  %v6174 = vshll.u32 %v5724, 16
  %v6176 = vrot.slane %v6174, 5
  %v6177 = vsel %vm162, %v6172, %v6176
  %v6179 = vshrl.u32 %v5725, 16
  %v6181 = vrot.slane %v6179, 4
  %v6182 = vshll.u32 %v5725, 16
  %v6184 = vrot.slane %v6182, 5
  %v6185 = vor.u32 %v6181, %v6184
  %v6186 = vrot.slane %v6185, 4
  %v6188 = vshll.u32 %v5726, 16
  %v6190 = vrot.slane %v6188, 5
  %v6191 = vsel %vm162, %v6186, %v6190
  %v6192 = vshrl.u32 %v5726, 16
  %v6194 = vrot.slane %v6192, 4
  %v6195 = vor.u32 %v6194, %v6190
  %v6196 = vrot.slane %v6195, 4
  %v6198 = vshll.u32 %v5727, 16
  %v6200 = vrot.slane %v6198, 5
  %v6201 = vsel %vm162, %v6196, %v6200
  %v6203 = vshrl.u32 %v5728, 16
  %v6205 = vrot.slane %v6203, 4
  %v6206 = vshll.u32 %v5728, 16
  %v6208 = vrot.slane %v6206, 5
  %v6209 = vor.u32 %v6205, %v6208
  %v6210 = vrot.slane %v6209, 4
  %v6212 = vshll.u32 %v5729, 16
  %v6214 = vrot.slane %v6212, 5
  %v6215 = vsel %vm162, %v6210, %v6214
  %v6216 = vshrl.u32 %v5729, 16
  %v6218 = vrot.slane %v6216, 4
  %v6219 = vor.u32 %v6218, %v6214
  %v6220 = vrot.slane %v6219, 4
  %v6222 = vshll.u32 %v5730, 16
  %v6224 = vrot.slane %v6222, 5
  %v6225 = vsel %vm162, %v6220, %v6224
  %v6227 = vshrl.u32 %v5731, 16
  %v6229 = vrot.slane %v6227, 4
  %v6230 = vshll.u32 %v5731, 16
  %v6232 = vrot.slane %v6230, 5
  %v6233 = vor.u32 %v6229, %v6232
  %v6234 = vrot.slane %v6233, 4
  %v6236 = vshll.u32 %v5732, 16
  %v6238 = vrot.slane %v6236, 5
  %v6239 = vsel %vm162, %v6234, %v6238
  %v6240 = vshrl.u32 %v5732, 16
  %v6242 = vrot.slane %v6240, 4
  %v6243 = vor.u32 %v6242, %v6238
  %v6244 = vrot.slane %v6243, 4
  %v6246 = vshll.u32 %v5733, 16
  %v6248 = vrot.slane %v6246, 5
  %v6249 = vsel %vm162, %v6244, %v6248
  %v6251 = vshrl.u32 %v5734, 16
  %v6253 = vrot.slane %v6251, 4
  %v6254 = vshll.u32 %v5734, 16
  %v6256 = vrot.slane %v6254, 5
  %v6257 = vor.u32 %v6253, %v6256
  %v6258 = vrot.slane %v6257, 4
  %v6260 = vshll.u32 %v5735, 16
  %v6262 = vrot.slane %v6260, 5
  %v6263 = vsel %vm162, %v6258, %v6262
  %v6264 = vshrl.u32 %v5735, 16
  %v6266 = vrot.slane %v6264, 4
  %v6267 = vor.u32 %v6266, %v6262
  %v6268 = vrot.slane %v6267, 4
  %v6270 = vshll.u32 %v5736, 16
  %v6272 = vrot.slane %v6270, 5
  %v6273 = vsel %vm162, %v6268, %v6272
  %v6275 = vshrl.u32 %v5737, 16
  %v6277 = vrot.slane %v6275, 4
  %v6278 = vshll.u32 %v5737, 16
  %v6280 = vrot.slane %v6278, 5
  %v6281 = vor.u32 %v6277, %v6280
  %v6282 = vrot.slane %v6281, 4
  %v6284 = vshll.u32 %v5738, 16
  %v6286 = vrot.slane %v6284, 5
  %v6287 = vsel %vm162, %v6282, %v6286
  %v6288 = vshrl.u32 %v5738, 16
  %v6290 = vrot.slane %v6288, 4
  %v6291 = vor.u32 %v6290, %v6286
  %v6292 = vrot.slane %v6291, 4
  %v6294 = vshll.u32 %v5739, 16
  %v6296 = vrot.slane %v6294, 5
  %v6297 = vsel %vm162, %v6292, %v6296
  %v6299 = vshrl.u32 %v5740, 16
  %v6301 = vrot.slane %v6299, 4
  %v6302 = vshll.u32 %v5740, 16
  %v6304 = vrot.slane %v6302, 5
  %v6305 = vor.u32 %v6301, %v6304
  %v6306 = vrot.slane %v6305, 4
  %v6308 = vshll.u32 %v5741, 16
  %v6310 = vrot.slane %v6308, 5
  %v6311 = vsel %vm162, %v6306, %v6310
  %v6312 = vshrl.u32 %v5741, 16
  %v6314 = vrot.slane %v6312, 4
  %v6315 = vor.u32 %v6314, %v6310
  %v6316 = vrot.slane %v6315, 4
  %v6318 = vshll.u32 %v5742, 16
  %v6320 = vrot.slane %v6318, 5
  %v6321 = vsel %vm162, %v6316, %v6320
  %v6323 = vshrl.u32 %v5743, 16
  %v6325 = vrot.slane %v6323, 4
  %v6326 = vshll.u32 %v5743, 16
  %v6328 = vrot.slane %v6326, 5
  %v6329 = vor.u32 %v6325, %v6328
  %v6330 = vrot.slane %v6329, 4
  %v6332 = vshll.u32 %v5744, 16
  %v6334 = vrot.slane %v6332, 5
  %v6335 = vsel %vm162, %v6330, %v6334
  %v6336 = vshrl.u32 %v5744, 16
  %v6338 = vrot.slane %v6336, 4
  %v6339 = vor.u32 %v6338, %v6334
  %v6340 = vrot.slane %v6339, 4
  %v6342 = vshll.u32 %v5745, 16
  %v6344 = vrot.slane %v6342, 5
  %v6345 = vsel %vm162, %v6340, %v6344
  %v6347 = vshrl.u32 %v5746, 16
  %v6349 = vrot.slane %v6347, 4
  %v6350 = vshll.u32 %v5746, 16
  %v6352 = vrot.slane %v6350, 5
  %v6353 = vor.u32 %v6349, %v6352
  %v6354 = vrot.slane %v6353, 4
  %v6356 = vshll.u32 %v5747, 16
  %v6358 = vrot.slane %v6356, 5
  %v6359 = vsel %vm162, %v6354, %v6358
  %v6360 = vshrl.u32 %v5747, 16
  %v6362 = vrot.slane %v6360, 4
  %v6363 = vor.u32 %v6362, %v6358
  %v6364 = vrot.slane %v6363, 4
  %v6366 = vshll.u32 %v5748, 16
  %v6368 = vrot.slane %v6366, 5
  %v6369 = vsel %vm162, %v6364, %v6368
  %v6371 = vshrl.u32 %v5749, 16
  %v6373 = vrot.slane %v6371, 4
  %v6374 = vshll.u32 %v5749, 16
  %v6376 = vrot.slane %v6374, 5
  %v6377 = vor.u32 %v6373, %v6376
  %v6378 = vrot.slane %v6377, 4
  %v6380 = vshll.u32 %v5750, 16
  %v6382 = vrot.slane %v6380, 5
  %v6383 = vsel %vm162, %v6378, %v6382
  %v6384 = vshrl.u32 %v5750, 16
  %v6386 = vrot.slane %v6384, 4
  %v6387 = vor.u32 %v6386, %v6382
  %v6388 = vrot.slane %v6387, 4
  %v6390 = vshll.u32 %v5751, 16
  %v6392 = vrot.slane %v6390, 5
  %v6393 = vsel %vm162, %v6388, %v6392
  %v6395 = vshrl.u32 %v5752, 16
  %v6397 = vrot.slane %v6395, 4
  %v6398 = vshll.u32 %v5752, 16
  %v6400 = vrot.slane %v6398, 5
  %v6401 = vor.u32 %v6397, %v6400
  %v6402 = vrot.slane %v6401, 4
  %v6404 = vshll.u32 %v5753, 16
  %v6406 = vrot.slane %v6404, 5
  %v6407 = vsel %vm162, %v6402, %v6406
  %v6408 = vshrl.u32 %v5753, 16
  %v6410 = vrot.slane %v6408, 4
  %v6411 = vor.u32 %v6410, %v6406
  %v6412 = vrot.slane %v6411, 4
  %v6414 = vshll.u32 %v5754, 16
  %v6416 = vrot.slane %v6414, 5
  %v6417 = vsel %vm162, %v6412, %v6416
  %v6419 = vshrl.u32 %v5755, 16
  %v6421 = vrot.slane %v6419, 4
  %v6422 = vshll.u32 %v5755, 16
  %v6424 = vrot.slane %v6422, 5
  %v6425 = vor.u32 %v6421, %v6424
  %v6426 = vrot.slane %v6425, 4
  %v6428 = vshll.u32 %v5756, 16
  %v6430 = vrot.slane %v6428, 5
  %v6431 = vsel %vm162, %v6426, %v6430
  %v6432 = vshrl.u32 %v5756, 16
  %v6434 = vrot.slane %v6432, 4
  %v6435 = vor.u32 %v6434, %v6430
  %v6436 = vrot.slane %v6435, 4
  %v6438 = vshll.u32 %v5757, 16
  %v6440 = vrot.slane %v6438, 5
  %v6441 = vsel %vm162, %v6436, %v6440
  %v6443 = vshrl.u32 %v5758, 16
  %v6445 = vrot.slane %v6443, 4
  %v6446 = vshll.u32 %v5758, 16
  %v6448 = vrot.slane %v6446, 5
  %v6449 = vor.u32 %v6445, %v6448
  %v6450 = vrot.slane %v6449, 4
  %v6452 = vshll.u32 %v5759, 16
  %v6454 = vrot.slane %v6452, 5
  %v6455 = vsel %vm162, %v6450, %v6454
  %v6456 = vshrl.u32 %v5759, 16
  %v6458 = vrot.slane %v6456, 4
  %v6459 = vor.u32 %v6458, %v6454
  %v6460 = vrot.slane %v6459, 4
  %v6462 = vshll.u32 %v5760, 16
  %v6464 = vrot.slane %v6462, 5
  %v6465 = vsel %vm162, %v6460, %v6464
  %v6467 = vshrl.u32 %v5761, 16
  %v6469 = vrot.slane %v6467, 4
  %v6470 = vshll.u32 %v5761, 16
  %v6472 = vrot.slane %v6470, 5
  %v6473 = vor.u32 %v6469, %v6472
  %v6474 = vrot.slane %v6473, 4
  %v6476 = vshll.u32 %v5762, 16
  %v6478 = vrot.slane %v6476, 5
  %v6479 = vsel %vm162, %v6474, %v6478
  %v6480 = vshrl.u32 %v5762, 16
  %v6482 = vrot.slane %v6480, 4
  %v6483 = vor.u32 %v6482, %v6478
  %v6484 = vrot.slane %v6483, 4
  %v6486 = vshll.u32 %v5763, 16
  %v6488 = vrot.slane %v6486, 5
  %v6489 = vsel %vm162, %v6484, %v6488
  %v6491 = vshrl.u32 %v5764, 16
  %v6493 = vrot.slane %v6491, 4
  %v6494 = vshll.u32 %v5764, 16
  %v6496 = vrot.slane %v6494, 5
  %v6497 = vor.u32 %v6493, %v6496
  %v6498 = vrot.slane %v6497, 4
  %v6500 = vshll.u32 %v5765, 16
  %v6502 = vrot.slane %v6500, 5
  %v6503 = vsel %vm162, %v6498, %v6502
  %v6504 = vshrl.u32 %v5765, 16
  %v6506 = vrot.slane %v6504, 4
  %v6507 = vor.u32 %v6506, %v6502
  %v6508 = vrot.slane %v6507, 4
  %v6510 = vshll.u32 %v5766, 16
  %v6512 = vrot.slane %v6510, 5
  %v6513 = vsel %vm162, %v6508, %v6512
  %v6515 = vshrl.u32 %v5767, 16
  %v6517 = vrot.slane %v6515, 4
  %v6518 = vshll.u32 %v5767, 16
  %v6520 = vrot.slane %v6518, 5
  %v6521 = vor.u32 %v6517, %v6520
  %v6522 = vrot.slane %v6521, 4
  %v6524 = vshll.u32 %v5768, 16
  %v6526 = vrot.slane %v6524, 5
  %v6527 = vsel %vm162, %v6522, %v6526
  %v6528 = vshrl.u32 %v5768, 16
  %v6530 = vrot.slane %v6528, 4
  %v6531 = vor.u32 %v6530, %v6526
  %v6532 = vrot.slane %v6531, 4
  %v6534 = vshll.u32 %v5769, 16
  %v6536 = vrot.slane %v6534, 5
  %v6537 = vsel %vm162, %v6532, %v6536
  %s6538 = scalar_lea.vmem %s1, 28
  %v6539 = vld [vmem:[%s6538] sm:$0xf]
  %v6540 = vunpack.c.l.b16 %v5783
  %v6541 = vunpack.c.l.b16 %v5793
  %v6542 = vunpack.c.l.b16 %v5807
  %v6543 = vunpack.c.l.b16 %v5817
  %v6544 = vunpack.c.l.b16 %v5831
  %v6545 = vunpack.c.l.b16 %v5841
  %v6546 = vunpack.c.l.b16 %v5855
  %v6547 = vunpack.c.l.b16 %v5865
  %v6548 = vunpack.c.l.b16 %v5879
  %v6549 = vunpack.c.l.b16 %v5889
  %v6550 = vunpack.c.l.b16 %v5903
  %v6551 = vunpack.c.l.b16 %v5913
  %v6552 = vunpack.c.l.b16 %v5927
  %v6553 = vunpack.c.l.b16 %v5937
  %v6554 = vunpack.c.l.b16 %v5951
  %v6555 = vunpack.c.l.b16 %v5961
  %v6556 = vunpack.c.l.b16 %v5975
  %v6557 = vunpack.c.l.b16 %v5985
  %v6558 = vunpack.c.l.b16 %v5999
  %v6559 = vunpack.c.l.b16 %v6009
  %v6560 = vunpack.c.l.b16 %v6023
  %v6561 = vunpack.c.l.b16 %v6033
  %v6562 = vunpack.c.l.b16 %v6047
  %v6563 = vunpack.c.l.b16 %v6057
  %v6564 = vunpack.c.l.b16 %v6071
  %v6565 = vunpack.c.l.b16 %v6081
  %v6566 = vunpack.c.l.b16 %v6095
  %v6567 = vunpack.c.l.b16 %v6105
  %v6568 = vunpack.c.l.b16 %v6119
  %v6569 = vunpack.c.l.b16 %v6129
  %v6570 = vunpack.c.l.b16 %v6143
  %v6571 = vunpack.c.l.b16 %v6153
  %v6572 = vunpack.c.l.b16 %v6167
  %v6573 = vunpack.c.l.b16 %v6177
  %v6574 = vunpack.c.l.b16 %v6191
  %v6575 = vunpack.c.l.b16 %v6201
  %v6576 = vunpack.c.l.b16 %v6215
  %v6577 = vunpack.c.l.b16 %v6225
  %v6578 = vunpack.c.l.b16 %v6239
  %v6579 = vunpack.c.l.b16 %v6249
  %v6580 = vunpack.c.l.b16 %v6263
  %v6581 = vunpack.c.l.b16 %v6273
  %v6582 = vunpack.c.l.b16 %v6287
  %v6583 = vunpack.c.l.b16 %v6297
  %v6584 = vunpack.c.l.b16 %v6311
  %v6585 = vunpack.c.l.b16 %v6321
  %v6586 = vunpack.c.l.b16 %v6335
  %v6587 = vunpack.c.l.b16 %v6345
  %v6588 = vunpack.c.l.b16 %v6359
  %v6589 = vunpack.c.l.b16 %v6369
  %v6590 = vunpack.c.l.b16 %v6383
  %v6591 = vunpack.c.l.b16 %v6393
  %v6592 = vunpack.c.l.b16 %v6407
  %v6593 = vunpack.c.l.b16 %v6417
  %v6594 = vunpack.c.l.b16 %v6431
  %v6595 = vunpack.c.l.b16 %v6441
  %v6596 = vunpack.c.l.b16 %v6455
  %v6597 = vunpack.c.l.b16 %v6465
  %v6598 = vunpack.c.l.b16 %v6479
  %v6599 = vunpack.c.l.b16 %v6489
  %v6600 = vunpack.c.l.b16 %v6503
  %v6601 = vunpack.c.l.b16 %v6513
  %v6602 = vunpack.c.l.b16 %v6527
  %v6603 = vunpack.c.l.b16 %v6537
  %v6604 = vpack.c.b16 %v6541, %v6540
  %v6605 = vpack.c.b16 %v6543, %v6542
  %v6606 = vpack.c.b16 %v6545, %v6544
  %v6607 = vpack.c.b16 %v6547, %v6546
  %v6608 = vpack.c.b16 %v6549, %v6548
  %v6609 = vpack.c.b16 %v6551, %v6550
  %v6610 = vpack.c.b16 %v6553, %v6552
  %v6611 = vpack.c.b16 %v6555, %v6554
  %v6612 = vpack.c.b16 %v6557, %v6556
  %v6613 = vpack.c.b16 %v6559, %v6558
  %v6614 = vpack.c.b16 %v6561, %v6560
  %v6615 = vpack.c.b16 %v6563, %v6562
  %v6616 = vpack.c.b16 %v6565, %v6564
  %v6617 = vpack.c.b16 %v6567, %v6566
  %v6618 = vpack.c.b16 %v6569, %v6568
  %v6619 = vpack.c.b16 %v6571, %v6570
  %v6620 = vpack.c.b16 %v6573, %v6572
  %v6621 = vpack.c.b16 %v6575, %v6574
  %v6622 = vpack.c.b16 %v6577, %v6576
  %v6623 = vpack.c.b16 %v6579, %v6578
  %v6624 = vpack.c.b16 %v6581, %v6580
  %v6625 = vpack.c.b16 %v6583, %v6582
  %v6626 = vpack.c.b16 %v6585, %v6584
  %v6627 = vpack.c.b16 %v6587, %v6586
  %v6628 = vpack.c.b16 %v6589, %v6588
  %v6629 = vpack.c.b16 %v6591, %v6590
  %v6630 = vpack.c.b16 %v6593, %v6592
  %v6631 = vpack.c.b16 %v6595, %v6594
  %v6632 = vpack.c.b16 %v6597, %v6596
  %v6633 = vpack.c.b16 %v6599, %v6598
  %v6634 = vpack.c.b16 %v6601, %v6600
  %v6635 = vpack.c.b16 %v6603, %v6602
  %v6637 = vsel %vm1029, %v6604, 0
  %v6640 = vsel %vm1029, %v6605, 0
  %v6643 = vsel %vm1029, %v6606, 0
  %v6646 = vsel %vm1029, %v6607, 0
  %v6649 = vsel %vm1029, %v6608, 0
  %v6652 = vsel %vm1029, %v6609, 0
  %v6655 = vsel %vm1029, %v6610, 0
  %v6658 = vsel %vm1029, %v6611, 0
  %v6661 = vsel %vm1029, %v6612, 0
  %v6664 = vsel %vm1029, %v6613, 0
  %v6667 = vsel %vm1029, %v6614, 0
  %v6670 = vsel %vm1029, %v6615, 0
  %v6673 = vsel %vm1029, %v6616, 0
  %v6676 = vsel %vm1029, %v6617, 0
  %v6679 = vsel %vm1029, %v6618, 0
  %v6682 = vsel %vm1029, %v6619, 0
  %v6685 = vsel %vm1029, %v6620, 0
  %v6688 = vsel %vm1029, %v6621, 0
  %v6691 = vsel %vm1029, %v6622, 0
  %v6694 = vsel %vm1029, %v6623, 0
  %v6697 = vsel %vm1029, %v6624, 0
  %v6700 = vsel %vm1029, %v6625, 0
  %v6703 = vsel %vm1029, %v6626, 0
  %v6706 = vsel %vm1029, %v6627, 0
  %v6709 = vsel %vm1029, %v6628, 0
  %v6712 = vsel %vm1029, %v6629, 0
  %v6715 = vsel %vm1029, %v6630, 0
  %v6718 = vsel %vm1029, %v6631, 0
  %v6721 = vsel %vm1029, %v6632, 0
  %v6724 = vsel %vm1029, %v6633, 0
  %v6727 = vsel %vm1029, %v6634, 0
  %v6730 = vsel %vm1029, %v6635, 0
  %v6733 = vsel %vm1126, %v6539, 0
  %6735 = vmatpush.bf16.msra.mxu0 0
  %6736 = vmatpush.bf16.msra.mxu0 0
  %6737 = vmatpush.bf16.msra.mxu0 0
  %6738 = vmatpush.bf16.msra.mxu0 0
  %6739 = vmatpush.bf16.msra.mxu0 0
  %6740 = vmatpush.bf16.msra.mxu0 0
  %6741 = vmatpush.bf16.msra.mxu0 0
  %6742 = vmatpush.bf16.msra.mxu0 %v6733
  %6743 = vmatmul.bf16.gmra.mxu0 %v6637
  %v6744 = vpop.f32.mrf.mxu0
  %v6745 = vadd.f32 0.0, %v6744
  %v6746 = vpop.f32.mrf.mxu0
  %v6747 = vadd.f32 0.0, %v6746
  %6748 = vmatmul.bf16.gmra.mxu0 %v6640
  %v6749 = vpop.f32.mrf.mxu0
  %v6750 = vadd.f32 0.0, %v6749
  %v6751 = vpop.f32.mrf.mxu0
  %v6752 = vadd.f32 0.0, %v6751
  %6753 = vmatmul.bf16.gmra.mxu0 %v6643
  %v6754 = vpop.f32.mrf.mxu0
  %v6755 = vadd.f32 0.0, %v6754
  %v6756 = vpop.f32.mrf.mxu0
  %v6757 = vadd.f32 0.0, %v6756
  %6758 = vmatmul.bf16.gmra.mxu0 %v6646
  %v6759 = vpop.f32.mrf.mxu0
  %v6760 = vadd.f32 0.0, %v6759
  %v6761 = vpop.f32.mrf.mxu0
  %v6762 = vadd.f32 0.0, %v6761
  %6763 = vmatmul.bf16.gmra.mxu0 %v6649
  %v6764 = vpop.f32.mrf.mxu0
  %v6765 = vadd.f32 0.0, %v6764
  %v6766 = vpop.f32.mrf.mxu0
  %v6767 = vadd.f32 0.0, %v6766
  %6768 = vmatmul.bf16.gmra.mxu0 %v6652
  %v6769 = vpop.f32.mrf.mxu0
  %v6770 = vadd.f32 0.0, %v6769
  %v6771 = vpop.f32.mrf.mxu0
  %v6772 = vadd.f32 0.0, %v6771
  %6773 = vmatmul.bf16.gmra.mxu0 %v6655
  %v6774 = vpop.f32.mrf.mxu0
  %v6775 = vadd.f32 0.0, %v6774
  %v6776 = vpop.f32.mrf.mxu0
  %v6777 = vadd.f32 0.0, %v6776
  %6778 = vmatmul.bf16.gmra.mxu0 %v6658
  %v6779 = vpop.f32.mrf.mxu0
  %v6780 = vadd.f32 0.0, %v6779
  %v6781 = vpop.f32.mrf.mxu0
  %v6782 = vadd.f32 0.0, %v6781
  %6783 = vmatmul.bf16.gmra.mxu0 %v6661
  %v6784 = vpop.f32.mrf.mxu0
  %v6785 = vadd.f32 0.0, %v6784
  %v6786 = vpop.f32.mrf.mxu0
  %v6787 = vadd.f32 0.0, %v6786
  %6788 = vmatmul.bf16.gmra.mxu0 %v6664
  %v6789 = vpop.f32.mrf.mxu0
  %v6790 = vadd.f32 0.0, %v6789
  %v6791 = vpop.f32.mrf.mxu0
  %v6792 = vadd.f32 0.0, %v6791
  %6793 = vmatmul.bf16.gmra.mxu0 %v6667
  %v6794 = vpop.f32.mrf.mxu0
  %v6795 = vadd.f32 0.0, %v6794
  %v6796 = vpop.f32.mrf.mxu0
  %v6797 = vadd.f32 0.0, %v6796
  %6798 = vmatmul.bf16.gmra.mxu0 %v6670
  %v6799 = vpop.f32.mrf.mxu0
  %v6800 = vadd.f32 0.0, %v6799
  %v6801 = vpop.f32.mrf.mxu0
  %v6802 = vadd.f32 0.0, %v6801
  %6803 = vmatmul.bf16.gmra.mxu0 %v6673
  %v6804 = vpop.f32.mrf.mxu0
  %v6805 = vadd.f32 0.0, %v6804
  %v6806 = vpop.f32.mrf.mxu0
  %v6807 = vadd.f32 0.0, %v6806
  %6808 = vmatmul.bf16.gmra.mxu0 %v6676
  %v6809 = vpop.f32.mrf.mxu0
  %v6810 = vadd.f32 0.0, %v6809
  %v6811 = vpop.f32.mrf.mxu0
  %v6812 = vadd.f32 0.0, %v6811
  %6813 = vmatmul.bf16.gmra.mxu0 %v6679
  %v6814 = vpop.f32.mrf.mxu0
  %v6815 = vadd.f32 0.0, %v6814
  %v6816 = vpop.f32.mrf.mxu0
  %v6817 = vadd.f32 0.0, %v6816
  %6818 = vmatmul.bf16.gmra.mxu0 %v6682
  %v6819 = vpop.f32.mrf.mxu0
  %v6820 = vadd.f32 0.0, %v6819
  %v6821 = vpop.f32.mrf.mxu0
  %v6822 = vadd.f32 0.0, %v6821
  %6823 = vmatmul.bf16.gmra.mxu0 %v6685
  %v6824 = vpop.f32.mrf.mxu0
  %v6825 = vadd.f32 0.0, %v6824
  %v6826 = vpop.f32.mrf.mxu0
  %v6827 = vadd.f32 0.0, %v6826
  %6828 = vmatmul.bf16.gmra.mxu0 %v6688
  %v6829 = vpop.f32.mrf.mxu0
  %v6830 = vadd.f32 0.0, %v6829
  %v6831 = vpop.f32.mrf.mxu0
  %v6832 = vadd.f32 0.0, %v6831
  %6833 = vmatmul.bf16.gmra.mxu0 %v6691
  %v6834 = vpop.f32.mrf.mxu0
  %v6835 = vadd.f32 0.0, %v6834
  %v6836 = vpop.f32.mrf.mxu0
  %v6837 = vadd.f32 0.0, %v6836
  %6838 = vmatmul.bf16.gmra.mxu0 %v6694
  %v6839 = vpop.f32.mrf.mxu0
  %v6840 = vadd.f32 0.0, %v6839
  %v6841 = vpop.f32.mrf.mxu0
  %v6842 = vadd.f32 0.0, %v6841
  %6843 = vmatmul.bf16.gmra.mxu0 %v6697
  %v6844 = vpop.f32.mrf.mxu0
  %v6845 = vadd.f32 0.0, %v6844
  %v6846 = vpop.f32.mrf.mxu0
  %v6847 = vadd.f32 0.0, %v6846
  %6848 = vmatmul.bf16.gmra.mxu0 %v6700
  %v6849 = vpop.f32.mrf.mxu0
  %v6850 = vadd.f32 0.0, %v6849
  %v6851 = vpop.f32.mrf.mxu0
  %v6852 = vadd.f32 0.0, %v6851
  %6853 = vmatmul.bf16.gmra.mxu0 %v6703
  %v6854 = vpop.f32.mrf.mxu0
  %v6855 = vadd.f32 0.0, %v6854
  %v6856 = vpop.f32.mrf.mxu0
  %v6857 = vadd.f32 0.0, %v6856
  %6858 = vmatmul.bf16.gmra.mxu0 %v6706
  %v6859 = vpop.f32.mrf.mxu0
  %v6860 = vadd.f32 0.0, %v6859
  %v6861 = vpop.f32.mrf.mxu0
  %v6862 = vadd.f32 0.0, %v6861
  %6863 = vmatmul.bf16.gmra.mxu0 %v6709
  %v6864 = vpop.f32.mrf.mxu0
  %v6865 = vadd.f32 0.0, %v6864
  %v6866 = vpop.f32.mrf.mxu0
  %v6867 = vadd.f32 0.0, %v6866
  %6868 = vmatmul.bf16.gmra.mxu0 %v6712
  %v6869 = vpop.f32.mrf.mxu0
  %v6870 = vadd.f32 0.0, %v6869
  %v6871 = vpop.f32.mrf.mxu0
  %v6872 = vadd.f32 0.0, %v6871
  %6873 = vmatmul.bf16.gmra.mxu0 %v6715
  %v6874 = vpop.f32.mrf.mxu0
  %v6875 = vadd.f32 0.0, %v6874
  %v6876 = vpop.f32.mrf.mxu0
  %v6877 = vadd.f32 0.0, %v6876
  %6878 = vmatmul.bf16.gmra.mxu0 %v6718
  %v6879 = vpop.f32.mrf.mxu0
  %v6880 = vadd.f32 0.0, %v6879
  %v6881 = vpop.f32.mrf.mxu0
  %v6882 = vadd.f32 0.0, %v6881
  %6883 = vmatmul.bf16.gmra.mxu0 %v6721
  %v6884 = vpop.f32.mrf.mxu0
  %v6885 = vadd.f32 0.0, %v6884
  %v6886 = vpop.f32.mrf.mxu0
  %v6887 = vadd.f32 0.0, %v6886
  %6888 = vmatmul.bf16.gmra.mxu0 %v6724
  %v6889 = vpop.f32.mrf.mxu0
  %v6890 = vadd.f32 0.0, %v6889
  %v6891 = vpop.f32.mrf.mxu0
  %v6892 = vadd.f32 0.0, %v6891
  %6893 = vmatmul.bf16.gmra.mxu0 %v6727
  %v6894 = vpop.f32.mrf.mxu0
  %v6895 = vadd.f32 0.0, %v6894
  %v6896 = vpop.f32.mrf.mxu0
  %v6897 = vadd.f32 0.0, %v6896
  %6898 = vmatmul.bf16.gmra.mxu0 %v6730
  %v6899 = vpop.f32.mrf.mxu0
  %v6900 = vadd.f32 0.0, %v6899
  %v6901 = vpop.f32.mrf.mxu0
  %v6902 = vadd.f32 0.0, %v6901
  %6903 = vdwg.mxu0
  %v6904 = vadd.f32 %v5610, %v6745
  %v6905 = vadd.f32 %v5611, %v6747
  %v6906 = vadd.f32 %v5612, %v6750
  %v6907 = vadd.f32 %v5613, %v6752
  %v6908 = vadd.f32 %v5614, %v6755
  %v6909 = vadd.f32 %v5615, %v6757
  %v6910 = vadd.f32 %v5616, %v6760
  %v6911 = vadd.f32 %v5617, %v6762
  %v6912 = vadd.f32 %v5618, %v6765
  %v6913 = vadd.f32 %v5619, %v6767
  %v6914 = vadd.f32 %v5620, %v6770
  %v6915 = vadd.f32 %v5621, %v6772
  %v6916 = vadd.f32 %v5622, %v6775
  %v6917 = vadd.f32 %v5623, %v6777
  %v6918 = vadd.f32 %v5624, %v6780
  %v6919 = vadd.f32 %v5625, %v6782
  %v6920 = vadd.f32 %v5626, %v6785
  %v6921 = vadd.f32 %v5627, %v6787
  %v6922 = vadd.f32 %v5628, %v6790
  %v6923 = vadd.f32 %v5629, %v6792
  %v6924 = vadd.f32 %v5630, %v6795
  %v6925 = vadd.f32 %v5631, %v6797
  %v6926 = vadd.f32 %v5632, %v6800
  %v6927 = vadd.f32 %v5633, %v6802
  %v6928 = vadd.f32 %v5634, %v6805
  %v6929 = vadd.f32 %v5635, %v6807
  %v6930 = vadd.f32 %v5636, %v6810
  %v6931 = vadd.f32 %v5637, %v6812
  %v6932 = vadd.f32 %v5638, %v6815
  %v6933 = vadd.f32 %v5639, %v6817
  %v6934 = vadd.f32 %v5640, %v6820
  %v6935 = vadd.f32 %v5641, %v6822
  %v6936 = vadd.f32 %v5642, %v6825
  %v6937 = vadd.f32 %v5643, %v6827
  %v6938 = vadd.f32 %v5644, %v6830
  %v6939 = vadd.f32 %v5645, %v6832
  %v6940 = vadd.f32 %v5646, %v6835
  %v6941 = vadd.f32 %v5647, %v6837
  %v6942 = vadd.f32 %v5648, %v6840
  %v6943 = vadd.f32 %v5649, %v6842
  %v6944 = vadd.f32 %v5650, %v6845
  %v6945 = vadd.f32 %v5651, %v6847
  %v6946 = vadd.f32 %v5652, %v6850
  %v6947 = vadd.f32 %v5653, %v6852
  %v6948 = vadd.f32 %v5654, %v6855
  %v6949 = vadd.f32 %v5655, %v6857
  %v6950 = vadd.f32 %v5656, %v6860
  %v6951 = vadd.f32 %v5657, %v6862
  %v6952 = vadd.f32 %v5658, %v6865
  %v6953 = vadd.f32 %v5659, %v6867
  %v6954 = vadd.f32 %v5660, %v6870
  %v6955 = vadd.f32 %v5661, %v6872
  %v6956 = vadd.f32 %v5662, %v6875
  %v6957 = vadd.f32 %v5663, %v6877
  %v6958 = vadd.f32 %v5664, %v6880
  %v6959 = vadd.f32 %v5665, %v6882
  %v6960 = vadd.f32 %v5666, %v6885
  %v6961 = vadd.f32 %v5667, %v6887
  %v6962 = vadd.f32 %v5668, %v6890
  %v6963 = vadd.f32 %v5669, %v6892
  %v6964 = vadd.f32 %v5670, %v6895
  %v6965 = vadd.f32 %v5671, %v6897
  %v6966 = vadd.f32 %v5672, %v6900
  %v6967 = vadd.f32 %v5673, %v6902
  %v6968 = vld [vmem:[%s5115] sm:$0xe]
  %v6969 = vld [vmem:[%s5115 + $0xc] sm:$0xe]
  %v6970 = vld [vmem:[%s5115 + $0x18] sm:$0xe]
  %v6971 = vld [vmem:[%s5115 + $0x24] sm:$0xe]
  %v6972 = vld [vmem:[%s5115 + $0x30] sm:$0xe]
  %v6973 = vld [vmem:[%s5115 + $0x3c] sm:$0xe]
  %v6974 = vld [vmem:[%s5115 + $0x48] sm:$0xe]
  %v6975 = vld [vmem:[%s5115 + $0x54] sm:$0xe]
  %v6976 = vld [vmem:[%s5115 + $0x60] sm:$0xe]
  %v6977 = vld [vmem:[%s5115 + $0x6c] sm:$0xe]
  %v6978 = vld [vmem:[%s5115 + $0x78] sm:$0xe]
  %v6979 = vld [vmem:[%s5115 + $0x84] sm:$0xe]
  %v6980 = vld [vmem:[%s5115 + $0x90] sm:$0xe]
  %v6981 = vld [vmem:[%s5115 + $0x9c] sm:$0xe]
  %v6982 = vld [vmem:[%s5115 + $0xa8] sm:$0xe]
  %v6983 = vld [vmem:[%s5115 + $0xb4] sm:$0xe]
  %v6984 = vld [vmem:[%s5115 + $0xd8] sm:$0xe]
  %v6985 = vld [vmem:[%s5115 + $0xe4] sm:$0xe]
  %v6986 = vld [vmem:[%s5115 + $0xf0] sm:$0xe]
  %v6987 = vld [vmem:[%s5115 + $0xfc] sm:$0xe]
  %v6988 = vld [vmem:[%s5115 + $0x108] sm:$0xe]
  %v6989 = vld [vmem:[%s5115 + $0x114] sm:$0xe]
  %v6990 = vld [vmem:[%s5115 + $0x120] sm:$0xe]
  %v6991 = vld [vmem:[%s5115 + $0x12c] sm:$0xe]
  %v6992 = vld [vmem:[%s5115 + $0x138] sm:$0xe]
  %v6993 = vld [vmem:[%s5115 + $0x144] sm:$0xe]
  %v6994 = vld [vmem:[%s5115 + $0x150] sm:$0xe]
  %v6995 = vld [vmem:[%s5115 + $0x15c] sm:$0xe]
  %v6996 = vld [vmem:[%s5115 + $0x168] sm:$0xe]
  %v6997 = vld [vmem:[%s5115 + $0x174] sm:$0xe]
  %v6998 = vld [vmem:[%s5115 + $0x180] sm:$0xe]
  %v6999 = vld [vmem:[%s5115 + $0x18c] sm:$0xe]
  %v7096 = vrot.slane %v6968, 5
  %v7097 = vrot.slane %v7096, 4
  %v7098 = vrot.slane %v5675, 5
  %v7099 = vsel %vm1825, %v7097, %v7098
  %v7100 = vrot.slane %v7098, 4
  %v7101 = vrot.slane %v5676, 5
  %v7102 = vsel %vm1825, %v7100, %v7101
  %v7103 = vrot.slane %v6969, 5
  %v7104 = vrot.slane %v7103, 4
  %v7105 = vrot.slane %v5678, 5
  %v7106 = vsel %vm1825, %v7104, %v7105
  %v7107 = vrot.slane %v7105, 4
  %v7108 = vrot.slane %v5679, 5
  %v7109 = vsel %vm1825, %v7107, %v7108
  %v7110 = vrot.slane %v6970, 5
  %v7111 = vrot.slane %v7110, 4
  %v7112 = vrot.slane %v5681, 5
  %v7113 = vsel %vm1825, %v7111, %v7112
  %v7114 = vrot.slane %v7112, 4
  %v7115 = vrot.slane %v5682, 5
  %v7116 = vsel %vm1825, %v7114, %v7115
  %v7117 = vrot.slane %v6971, 5
  %v7118 = vrot.slane %v7117, 4
  %v7119 = vrot.slane %v5684, 5
  %v7120 = vsel %vm1825, %v7118, %v7119
  %v7121 = vrot.slane %v7119, 4
  %v7122 = vrot.slane %v5685, 5
  %v7123 = vsel %vm1825, %v7121, %v7122
  %v7124 = vrot.slane %v6972, 5
  %v7125 = vrot.slane %v7124, 4
  %v7126 = vrot.slane %v5687, 5
  %v7127 = vsel %vm1825, %v7125, %v7126
  %v7128 = vrot.slane %v7126, 4
  %v7129 = vrot.slane %v5688, 5
  %v7130 = vsel %vm1825, %v7128, %v7129
  %v7131 = vrot.slane %v6973, 5
  %v7132 = vrot.slane %v7131, 4
  %v7133 = vrot.slane %v5690, 5
  %v7134 = vsel %vm1825, %v7132, %v7133
  %v7135 = vrot.slane %v7133, 4
  %v7136 = vrot.slane %v5691, 5
  %v7137 = vsel %vm1825, %v7135, %v7136
  %v7138 = vrot.slane %v6974, 5
  %v7139 = vrot.slane %v7138, 4
  %v7140 = vrot.slane %v5693, 5
  %v7141 = vsel %vm1825, %v7139, %v7140
  %v7142 = vrot.slane %v7140, 4
  %v7143 = vrot.slane %v5694, 5
  %v7144 = vsel %vm1825, %v7142, %v7143
  %v7145 = vrot.slane %v6975, 5
  %v7146 = vrot.slane %v7145, 4
  %v7147 = vrot.slane %v5696, 5
  %v7148 = vsel %vm1825, %v7146, %v7147
  %v7149 = vrot.slane %v7147, 4
  %v7150 = vrot.slane %v5697, 5
  %v7151 = vsel %vm1825, %v7149, %v7150
  %v7152 = vrot.slane %v6976, 5
  %v7153 = vrot.slane %v7152, 4
  %v7154 = vrot.slane %v5699, 5
  %v7155 = vsel %vm1825, %v7153, %v7154
  %v7156 = vrot.slane %v7154, 4
  %v7157 = vrot.slane %v5700, 5
  %v7158 = vsel %vm1825, %v7156, %v7157
  %v7159 = vrot.slane %v6977, 5
  %v7160 = vrot.slane %v7159, 4
  %v7161 = vrot.slane %v5702, 5
  %v7162 = vsel %vm1825, %v7160, %v7161
  %v7163 = vrot.slane %v7161, 4
  %v7164 = vrot.slane %v5703, 5
  %v7165 = vsel %vm1825, %v7163, %v7164
  %v7166 = vrot.slane %v6978, 5
  %v7167 = vrot.slane %v7166, 4
  %v7168 = vrot.slane %v5705, 5
  %v7169 = vsel %vm1825, %v7167, %v7168
  %v7170 = vrot.slane %v7168, 4
  %v7171 = vrot.slane %v5706, 5
  %v7172 = vsel %vm1825, %v7170, %v7171
  %v7173 = vrot.slane %v6979, 5
  %v7174 = vrot.slane %v7173, 4
  %v7175 = vrot.slane %v5708, 5
  %v7176 = vsel %vm1825, %v7174, %v7175
  %v7177 = vrot.slane %v7175, 4
  %v7178 = vrot.slane %v5709, 5
  %v7179 = vsel %vm1825, %v7177, %v7178
  %v7180 = vrot.slane %v6980, 5
  %v7181 = vrot.slane %v7180, 4
  %v7182 = vrot.slane %v5711, 5
  %v7183 = vsel %vm1825, %v7181, %v7182
  %v7184 = vrot.slane %v7182, 4
  %v7185 = vrot.slane %v5712, 5
  %v7186 = vsel %vm1825, %v7184, %v7185
  %v7187 = vrot.slane %v6981, 5
  %v7188 = vrot.slane %v7187, 4
  %v7189 = vrot.slane %v5714, 5
  %v7190 = vsel %vm1825, %v7188, %v7189
  %v7191 = vrot.slane %v7189, 4
  %v7192 = vrot.slane %v5715, 5
  %v7193 = vsel %vm1825, %v7191, %v7192
  %v7194 = vrot.slane %v6982, 5
  %v7195 = vrot.slane %v7194, 4
  %v7196 = vrot.slane %v5717, 5
  %v7197 = vsel %vm1825, %v7195, %v7196
  %v7198 = vrot.slane %v7196, 4
  %v7199 = vrot.slane %v5718, 5
  %v7200 = vsel %vm1825, %v7198, %v7199
  %v7201 = vrot.slane %v6983, 5
  %v7202 = vrot.slane %v7201, 4
  %v7203 = vrot.slane %v5720, 5
  %v7204 = vsel %vm1825, %v7202, %v7203
  %v7205 = vrot.slane %v7203, 4
  %v7206 = vrot.slane %v5721, 5
  %v7207 = vsel %vm1825, %v7205, %v7206
  %v7208 = vrot.slane %v6984, 5
  %v7209 = vrot.slane %v7208, 4
  %v7210 = vrot.slane %v5723, 5
  %v7211 = vsel %vm1825, %v7209, %v7210
  %v7212 = vrot.slane %v7210, 4
  %v7213 = vrot.slane %v5724, 5
  %v7214 = vsel %vm1825, %v7212, %v7213
  %v7215 = vrot.slane %v6985, 5
  %v7216 = vrot.slane %v7215, 4
  %v7217 = vrot.slane %v5726, 5
  %v7218 = vsel %vm1825, %v7216, %v7217
  %v7219 = vrot.slane %v7217, 4
  %v7220 = vrot.slane %v5727, 5
  %v7221 = vsel %vm1825, %v7219, %v7220
  %v7222 = vrot.slane %v6986, 5
  %v7223 = vrot.slane %v7222, 4
  %v7224 = vrot.slane %v5729, 5
  %v7225 = vsel %vm1825, %v7223, %v7224
  %v7226 = vrot.slane %v7224, 4
  %v7227 = vrot.slane %v5730, 5
  %v7228 = vsel %vm1825, %v7226, %v7227
  %v7229 = vrot.slane %v6987, 5
  %v7230 = vrot.slane %v7229, 4
  %v7231 = vrot.slane %v5732, 5
  %v7232 = vsel %vm1825, %v7230, %v7231
  %v7233 = vrot.slane %v7231, 4
  %v7234 = vrot.slane %v5733, 5
  %v7235 = vsel %vm1825, %v7233, %v7234
  %v7236 = vrot.slane %v6988, 5
  %v7237 = vrot.slane %v7236, 4
  %v7238 = vrot.slane %v5735, 5
  %v7239 = vsel %vm1825, %v7237, %v7238
  %v7240 = vrot.slane %v7238, 4
  %v7241 = vrot.slane %v5736, 5
  %v7242 = vsel %vm1825, %v7240, %v7241
  %v7243 = vrot.slane %v6989, 5
  %v7244 = vrot.slane %v7243, 4
  %v7245 = vrot.slane %v5738, 5
  %v7246 = vsel %vm1825, %v7244, %v7245
  %v7247 = vrot.slane %v7245, 4
  %v7248 = vrot.slane %v5739, 5
  %v7249 = vsel %vm1825, %v7247, %v7248
  %v7250 = vrot.slane %v6990, 5
  %v7251 = vrot.slane %v7250, 4
  %v7252 = vrot.slane %v5741, 5
  %v7253 = vsel %vm1825, %v7251, %v7252
  %v7254 = vrot.slane %v7252, 4
  %v7255 = vrot.slane %v5742, 5
  %v7256 = vsel %vm1825, %v7254, %v7255
  %v7257 = vrot.slane %v6991, 5
  %v7258 = vrot.slane %v7257, 4
  %v7259 = vrot.slane %v5744, 5
  %v7260 = vsel %vm1825, %v7258, %v7259
  %v7261 = vrot.slane %v7259, 4
  %v7262 = vrot.slane %v5745, 5
  %v7263 = vsel %vm1825, %v7261, %v7262
  %v7264 = vrot.slane %v6992, 5
  %v7265 = vrot.slane %v7264, 4
  %v7266 = vrot.slane %v5747, 5
  %v7267 = vsel %vm1825, %v7265, %v7266
  %v7268 = vrot.slane %v7266, 4
  %v7269 = vrot.slane %v5748, 5
  %v7270 = vsel %vm1825, %v7268, %v7269
  %v7271 = vrot.slane %v6993, 5
  %v7272 = vrot.slane %v7271, 4
  %v7273 = vrot.slane %v5750, 5
  %v7274 = vsel %vm1825, %v7272, %v7273
  %v7275 = vrot.slane %v7273, 4
  %v7276 = vrot.slane %v5751, 5
  %v7277 = vsel %vm1825, %v7275, %v7276
  %v7278 = vrot.slane %v6994, 5
  %v7279 = vrot.slane %v7278, 4
  %v7280 = vrot.slane %v5753, 5
  %v7281 = vsel %vm1825, %v7279, %v7280
  %v7282 = vrot.slane %v7280, 4
  %v7283 = vrot.slane %v5754, 5
  %v7284 = vsel %vm1825, %v7282, %v7283
  %v7285 = vrot.slane %v6995, 5
  %v7286 = vrot.slane %v7285, 4
  %v7287 = vrot.slane %v5756, 5
  %v7288 = vsel %vm1825, %v7286, %v7287
  %v7289 = vrot.slane %v7287, 4
  %v7290 = vrot.slane %v5757, 5
  %v7291 = vsel %vm1825, %v7289, %v7290
  %v7292 = vrot.slane %v6996, 5
  %v7293 = vrot.slane %v7292, 4
  %v7294 = vrot.slane %v5759, 5
  %v7295 = vsel %vm1825, %v7293, %v7294
  %v7296 = vrot.slane %v7294, 4
  %v7297 = vrot.slane %v5760, 5
  %v7298 = vsel %vm1825, %v7296, %v7297
  %v7299 = vrot.slane %v6997, 5
  %v7300 = vrot.slane %v7299, 4
  %v7301 = vrot.slane %v5762, 5
  %v7302 = vsel %vm1825, %v7300, %v7301
  %v7303 = vrot.slane %v7301, 4
  %v7304 = vrot.slane %v5763, 5
  %v7305 = vsel %vm1825, %v7303, %v7304
  %v7306 = vrot.slane %v6998, 5
  %v7307 = vrot.slane %v7306, 4
  %v7308 = vrot.slane %v5765, 5
  %v7309 = vsel %vm1825, %v7307, %v7308
  %v7310 = vrot.slane %v7308, 4
  %v7311 = vrot.slane %v5766, 5
  %v7312 = vsel %vm1825, %v7310, %v7311
  %v7313 = vrot.slane %v6999, 5
  %v7314 = vrot.slane %v7313, 4
  %v7315 = vrot.slane %v5768, 5
  %v7316 = vsel %vm1825, %v7314, %v7315
  %v7317 = vrot.slane %v7315, 4
  %v7318 = vrot.slane %v5769, 5
  %v7319 = vsel %vm1825, %v7317, %v7318
  %s7320 = scalar_lea.vmem %s1, 32
  %v7321 = vld [vmem:[%s7320] sm:$0xf]
  %v7322 = vunpack.c.l.b16 %v7099
  %v7323 = vunpack.c.l.b16 %v7102
  %v7324 = vunpack.c.l.b16 %v7106
  %v7325 = vunpack.c.l.b16 %v7109
  %v7326 = vunpack.c.l.b16 %v7113
  %v7327 = vunpack.c.l.b16 %v7116
  %v7328 = vunpack.c.l.b16 %v7120
  %v7329 = vunpack.c.l.b16 %v7123
  %v7330 = vunpack.c.l.b16 %v7127
  %v7331 = vunpack.c.l.b16 %v7130
  %v7332 = vunpack.c.l.b16 %v7134
  %v7333 = vunpack.c.l.b16 %v7137
  %v7334 = vunpack.c.l.b16 %v7141
  %v7335 = vunpack.c.l.b16 %v7144
  %v7336 = vunpack.c.l.b16 %v7148
  %v7337 = vunpack.c.l.b16 %v7151
  %v7338 = vunpack.c.l.b16 %v7155
  %v7339 = vunpack.c.l.b16 %v7158
  %v7340 = vunpack.c.l.b16 %v7162
  %v7341 = vunpack.c.l.b16 %v7165
  %v7342 = vunpack.c.l.b16 %v7169
  %v7343 = vunpack.c.l.b16 %v7172
  %v7344 = vunpack.c.l.b16 %v7176
  %v7345 = vunpack.c.l.b16 %v7179
  %v7346 = vunpack.c.l.b16 %v7183
  %v7347 = vunpack.c.l.b16 %v7186
  %v7348 = vunpack.c.l.b16 %v7190
  %v7349 = vunpack.c.l.b16 %v7193
  %v7350 = vunpack.c.l.b16 %v7197
  %v7351 = vunpack.c.l.b16 %v7200
  %v7352 = vunpack.c.l.b16 %v7204
  %v7353 = vunpack.c.l.b16 %v7207
  %v7354 = vunpack.c.l.b16 %v7211
  %v7355 = vunpack.c.l.b16 %v7214
  %v7356 = vunpack.c.l.b16 %v7218
  %v7357 = vunpack.c.l.b16 %v7221
  %v7358 = vunpack.c.l.b16 %v7225
  %v7359 = vunpack.c.l.b16 %v7228
  %v7360 = vunpack.c.l.b16 %v7232
  %v7361 = vunpack.c.l.b16 %v7235
  %v7362 = vunpack.c.l.b16 %v7239
  %v7363 = vunpack.c.l.b16 %v7242
  %v7364 = vunpack.c.l.b16 %v7246
  %v7365 = vunpack.c.l.b16 %v7249
  %v7366 = vunpack.c.l.b16 %v7253
  %v7367 = vunpack.c.l.b16 %v7256
  %v7368 = vunpack.c.l.b16 %v7260
  %v7369 = vunpack.c.l.b16 %v7263
  %v7370 = vunpack.c.l.b16 %v7267
  %v7371 = vunpack.c.l.b16 %v7270
  %v7372 = vunpack.c.l.b16 %v7274
  %v7373 = vunpack.c.l.b16 %v7277
  %v7374 = vunpack.c.l.b16 %v7281
  %v7375 = vunpack.c.l.b16 %v7284
  %v7376 = vunpack.c.l.b16 %v7288
  %v7377 = vunpack.c.l.b16 %v7291
  %v7378 = vunpack.c.l.b16 %v7295
  %v7379 = vunpack.c.l.b16 %v7298
  %v7380 = vunpack.c.l.b16 %v7302
  %v7381 = vunpack.c.l.b16 %v7305
  %v7382 = vunpack.c.l.b16 %v7309
  %v7383 = vunpack.c.l.b16 %v7312
  %v7384 = vunpack.c.l.b16 %v7316
  %v7385 = vunpack.c.l.b16 %v7319
  %v7386 = vpack.c.b16 %v7323, %v7322
  %v7387 = vpack.c.b16 %v7325, %v7324
  %v7388 = vpack.c.b16 %v7327, %v7326
  %v7389 = vpack.c.b16 %v7329, %v7328
  %v7390 = vpack.c.b16 %v7331, %v7330
  %v7391 = vpack.c.b16 %v7333, %v7332
  %v7392 = vpack.c.b16 %v7335, %v7334
  %v7393 = vpack.c.b16 %v7337, %v7336
  %v7394 = vpack.c.b16 %v7339, %v7338
  %v7395 = vpack.c.b16 %v7341, %v7340
  %v7396 = vpack.c.b16 %v7343, %v7342
  %v7397 = vpack.c.b16 %v7345, %v7344
  %v7398 = vpack.c.b16 %v7347, %v7346
  %v7399 = vpack.c.b16 %v7349, %v7348
  %v7400 = vpack.c.b16 %v7351, %v7350
  %v7401 = vpack.c.b16 %v7353, %v7352
  %v7402 = vpack.c.b16 %v7355, %v7354
  %v7403 = vpack.c.b16 %v7357, %v7356
  %v7404 = vpack.c.b16 %v7359, %v7358
  %v7405 = vpack.c.b16 %v7361, %v7360
  %v7406 = vpack.c.b16 %v7363, %v7362
  %v7407 = vpack.c.b16 %v7365, %v7364
  %v7408 = vpack.c.b16 %v7367, %v7366
  %v7409 = vpack.c.b16 %v7369, %v7368
  %v7410 = vpack.c.b16 %v7371, %v7370
  %v7411 = vpack.c.b16 %v7373, %v7372
  %v7412 = vpack.c.b16 %v7375, %v7374
  %v7413 = vpack.c.b16 %v7377, %v7376
  %v7414 = vpack.c.b16 %v7379, %v7378
  %v7415 = vpack.c.b16 %v7381, %v7380
  %v7416 = vpack.c.b16 %v7383, %v7382
  %v7417 = vpack.c.b16 %v7385, %v7384
  %v7419 = vsel %vm1029, %v7386, 0
  %v7422 = vsel %vm1029, %v7387, 0
  %v7425 = vsel %vm1029, %v7388, 0
  %v7428 = vsel %vm1029, %v7389, 0
  %v7431 = vsel %vm1029, %v7390, 0
  %v7434 = vsel %vm1029, %v7391, 0
  %v7437 = vsel %vm1029, %v7392, 0
  %v7440 = vsel %vm1029, %v7393, 0
  %v7443 = vsel %vm1029, %v7394, 0
  %v7446 = vsel %vm1029, %v7395, 0
  %v7449 = vsel %vm1029, %v7396, 0
  %v7452 = vsel %vm1029, %v7397, 0
  %v7455 = vsel %vm1029, %v7398, 0
  %v7458 = vsel %vm1029, %v7399, 0
  %v7461 = vsel %vm1029, %v7400, 0
  %v7464 = vsel %vm1029, %v7401, 0
  %v7467 = vsel %vm1029, %v7402, 0
  %v7470 = vsel %vm1029, %v7403, 0
  %v7473 = vsel %vm1029, %v7404, 0
  %v7476 = vsel %vm1029, %v7405, 0
  %v7479 = vsel %vm1029, %v7406, 0
  %v7482 = vsel %vm1029, %v7407, 0
  %v7485 = vsel %vm1029, %v7408, 0
  %v7488 = vsel %vm1029, %v7409, 0
  %v7491 = vsel %vm1029, %v7410, 0
  %v7494 = vsel %vm1029, %v7411, 0
  %v7497 = vsel %vm1029, %v7412, 0
  %v7500 = vsel %vm1029, %v7413, 0
  %v7503 = vsel %vm1029, %v7414, 0
  %v7506 = vsel %vm1029, %v7415, 0
  %v7509 = vsel %vm1029, %v7416, 0
  %v7512 = vsel %vm1029, %v7417, 0
  %v7515 = vsel %vm1126, %v7321, 0
  %7517 = vmatpush.bf16.msra.mxu0 0
  %7518 = vmatpush.bf16.msra.mxu0 0
  %7519 = vmatpush.bf16.msra.mxu0 0
  %7520 = vmatpush.bf16.msra.mxu0 0
  %7521 = vmatpush.bf16.msra.mxu0 0
  %7522 = vmatpush.bf16.msra.mxu0 0
  %7523 = vmatpush.bf16.msra.mxu0 0
  %7524 = vmatpush.bf16.msra.mxu0 %v7515
  %7525 = vmatmul.bf16.gmra.mxu0 %v7419
  %v7526 = vpop.f32.mrf.mxu0
  %v7527 = vadd.f32 0.0, %v7526
  %v7528 = vpop.f32.mrf.mxu0
  %v7529 = vadd.f32 0.0, %v7528
  %7530 = vmatmul.bf16.gmra.mxu0 %v7422
  %v7531 = vpop.f32.mrf.mxu0
  %v7532 = vadd.f32 0.0, %v7531
  %v7533 = vpop.f32.mrf.mxu0
  %v7534 = vadd.f32 0.0, %v7533
  %7535 = vmatmul.bf16.gmra.mxu0 %v7425
  %v7536 = vpop.f32.mrf.mxu0
  %v7537 = vadd.f32 0.0, %v7536
  %v7538 = vpop.f32.mrf.mxu0
  %v7539 = vadd.f32 0.0, %v7538
  %7540 = vmatmul.bf16.gmra.mxu0 %v7428
  %v7541 = vpop.f32.mrf.mxu0
  %v7542 = vadd.f32 0.0, %v7541
  %v7543 = vpop.f32.mrf.mxu0
  %v7544 = vadd.f32 0.0, %v7543
  %7545 = vmatmul.bf16.gmra.mxu0 %v7431
  %v7546 = vpop.f32.mrf.mxu0
  %v7547 = vadd.f32 0.0, %v7546
  %v7548 = vpop.f32.mrf.mxu0
  %v7549 = vadd.f32 0.0, %v7548
  %7550 = vmatmul.bf16.gmra.mxu0 %v7434
  %v7551 = vpop.f32.mrf.mxu0
  %v7552 = vadd.f32 0.0, %v7551
  %v7553 = vpop.f32.mrf.mxu0
  %v7554 = vadd.f32 0.0, %v7553
  %7555 = vmatmul.bf16.gmra.mxu0 %v7437
  %v7556 = vpop.f32.mrf.mxu0
  %v7557 = vadd.f32 0.0, %v7556
  %v7558 = vpop.f32.mrf.mxu0
  %v7559 = vadd.f32 0.0, %v7558
  %7560 = vmatmul.bf16.gmra.mxu0 %v7440
  %v7561 = vpop.f32.mrf.mxu0
  %v7562 = vadd.f32 0.0, %v7561
  %v7563 = vpop.f32.mrf.mxu0
  %v7564 = vadd.f32 0.0, %v7563
  %7565 = vmatmul.bf16.gmra.mxu0 %v7443
  %v7566 = vpop.f32.mrf.mxu0
  %v7567 = vadd.f32 0.0, %v7566
  %v7568 = vpop.f32.mrf.mxu0
  %v7569 = vadd.f32 0.0, %v7568
  %7570 = vmatmul.bf16.gmra.mxu0 %v7446
  %v7571 = vpop.f32.mrf.mxu0
  %v7572 = vadd.f32 0.0, %v7571
  %v7573 = vpop.f32.mrf.mxu0
  %v7574 = vadd.f32 0.0, %v7573
  %7575 = vmatmul.bf16.gmra.mxu0 %v7449
  %v7576 = vpop.f32.mrf.mxu0
  %v7577 = vadd.f32 0.0, %v7576
  %v7578 = vpop.f32.mrf.mxu0
  %v7579 = vadd.f32 0.0, %v7578
  %7580 = vmatmul.bf16.gmra.mxu0 %v7452
  %v7581 = vpop.f32.mrf.mxu0
  %v7582 = vadd.f32 0.0, %v7581
  %v7583 = vpop.f32.mrf.mxu0
  %v7584 = vadd.f32 0.0, %v7583
  %7585 = vmatmul.bf16.gmra.mxu0 %v7455
  %v7586 = vpop.f32.mrf.mxu0
  %v7587 = vadd.f32 0.0, %v7586
  %v7588 = vpop.f32.mrf.mxu0
  %v7589 = vadd.f32 0.0, %v7588
  %7590 = vmatmul.bf16.gmra.mxu0 %v7458
  %v7591 = vpop.f32.mrf.mxu0
  %v7592 = vadd.f32 0.0, %v7591
  %v7593 = vpop.f32.mrf.mxu0
  %v7594 = vadd.f32 0.0, %v7593
  %7595 = vmatmul.bf16.gmra.mxu0 %v7461
  %v7596 = vpop.f32.mrf.mxu0
  %v7597 = vadd.f32 0.0, %v7596
  %v7598 = vpop.f32.mrf.mxu0
  %v7599 = vadd.f32 0.0, %v7598
  %7600 = vmatmul.bf16.gmra.mxu0 %v7464
  %v7601 = vpop.f32.mrf.mxu0
  %v7602 = vadd.f32 0.0, %v7601
  %v7603 = vpop.f32.mrf.mxu0
  %v7604 = vadd.f32 0.0, %v7603
  %7605 = vmatmul.bf16.gmra.mxu0 %v7467
  %v7606 = vpop.f32.mrf.mxu0
  %v7607 = vadd.f32 0.0, %v7606
  %v7608 = vpop.f32.mrf.mxu0
  %v7609 = vadd.f32 0.0, %v7608
  %7610 = vmatmul.bf16.gmra.mxu0 %v7470
  %v7611 = vpop.f32.mrf.mxu0
  %v7612 = vadd.f32 0.0, %v7611
  %v7613 = vpop.f32.mrf.mxu0
  %v7614 = vadd.f32 0.0, %v7613
  %7615 = vmatmul.bf16.gmra.mxu0 %v7473
  %v7616 = vpop.f32.mrf.mxu0
  %v7617 = vadd.f32 0.0, %v7616
  %v7618 = vpop.f32.mrf.mxu0
  %v7619 = vadd.f32 0.0, %v7618
  %7620 = vmatmul.bf16.gmra.mxu0 %v7476
  %v7621 = vpop.f32.mrf.mxu0
  %v7622 = vadd.f32 0.0, %v7621
  %v7623 = vpop.f32.mrf.mxu0
  %v7624 = vadd.f32 0.0, %v7623
  %7625 = vmatmul.bf16.gmra.mxu0 %v7479
  %v7626 = vpop.f32.mrf.mxu0
  %v7627 = vadd.f32 0.0, %v7626
  %v7628 = vpop.f32.mrf.mxu0
  %v7629 = vadd.f32 0.0, %v7628
  %7630 = vmatmul.bf16.gmra.mxu0 %v7482
  %v7631 = vpop.f32.mrf.mxu0
  %v7632 = vadd.f32 0.0, %v7631
  %v7633 = vpop.f32.mrf.mxu0
  %v7634 = vadd.f32 0.0, %v7633
  %7635 = vmatmul.bf16.gmra.mxu0 %v7485
  %v7636 = vpop.f32.mrf.mxu0
  %v7637 = vadd.f32 0.0, %v7636
  %v7638 = vpop.f32.mrf.mxu0
  %v7639 = vadd.f32 0.0, %v7638
  %7640 = vmatmul.bf16.gmra.mxu0 %v7488
  %v7641 = vpop.f32.mrf.mxu0
  %v7642 = vadd.f32 0.0, %v7641
  %v7643 = vpop.f32.mrf.mxu0
  %v7644 = vadd.f32 0.0, %v7643
  %7645 = vmatmul.bf16.gmra.mxu0 %v7491
  %v7646 = vpop.f32.mrf.mxu0
  %v7647 = vadd.f32 0.0, %v7646
  %v7648 = vpop.f32.mrf.mxu0
  %v7649 = vadd.f32 0.0, %v7648
  %7650 = vmatmul.bf16.gmra.mxu0 %v7494
  %v7651 = vpop.f32.mrf.mxu0
  %v7652 = vadd.f32 0.0, %v7651
  %v7653 = vpop.f32.mrf.mxu0
  %v7654 = vadd.f32 0.0, %v7653
  %7655 = vmatmul.bf16.gmra.mxu0 %v7497
  %v7656 = vpop.f32.mrf.mxu0
  %v7657 = vadd.f32 0.0, %v7656
  %v7658 = vpop.f32.mrf.mxu0
  %v7659 = vadd.f32 0.0, %v7658
  %7660 = vmatmul.bf16.gmra.mxu0 %v7500
  %v7661 = vpop.f32.mrf.mxu0
  %v7662 = vadd.f32 0.0, %v7661
  %v7663 = vpop.f32.mrf.mxu0
  %v7664 = vadd.f32 0.0, %v7663
  %7665 = vmatmul.bf16.gmra.mxu0 %v7503
  %v7666 = vpop.f32.mrf.mxu0
  %v7667 = vadd.f32 0.0, %v7666
  %v7668 = vpop.f32.mrf.mxu0
  %v7669 = vadd.f32 0.0, %v7668
  %7670 = vmatmul.bf16.gmra.mxu0 %v7506
  %v7671 = vpop.f32.mrf.mxu0
  %v7672 = vadd.f32 0.0, %v7671
  %v7673 = vpop.f32.mrf.mxu0
  %v7674 = vadd.f32 0.0, %v7673
  %7675 = vmatmul.bf16.gmra.mxu0 %v7509
  %v7676 = vpop.f32.mrf.mxu0
  %v7677 = vadd.f32 0.0, %v7676
  %v7678 = vpop.f32.mrf.mxu0
  %v7679 = vadd.f32 0.0, %v7678
  %7680 = vmatmul.bf16.gmra.mxu0 %v7512
  %v7681 = vpop.f32.mrf.mxu0
  %v7682 = vadd.f32 0.0, %v7681
  %v7683 = vpop.f32.mrf.mxu0
  %v7684 = vadd.f32 0.0, %v7683
  %7685 = vdwg.mxu0
  %v7686 = vadd.f32 %v6904, %v7527
  %v7687 = vadd.f32 %v6905, %v7529
  %v7688 = vadd.f32 %v6906, %v7532
  %v7689 = vadd.f32 %v6907, %v7534
  %v7690 = vadd.f32 %v6908, %v7537
  %v7691 = vadd.f32 %v6909, %v7539
  %v7692 = vadd.f32 %v6910, %v7542
  %v7693 = vadd.f32 %v6911, %v7544
  %v7694 = vadd.f32 %v6912, %v7547
  %v7695 = vadd.f32 %v6913, %v7549
  %v7696 = vadd.f32 %v6914, %v7552
  %v7697 = vadd.f32 %v6915, %v7554
  %v7698 = vadd.f32 %v6916, %v7557
  %v7699 = vadd.f32 %v6917, %v7559
  %v7700 = vadd.f32 %v6918, %v7562
  %v7701 = vadd.f32 %v6919, %v7564
  %v7702 = vadd.f32 %v6920, %v7567
  %v7703 = vadd.f32 %v6921, %v7569
  %v7704 = vadd.f32 %v6922, %v7572
  %v7705 = vadd.f32 %v6923, %v7574
  %v7706 = vadd.f32 %v6924, %v7577
  %v7707 = vadd.f32 %v6925, %v7579
  %v7708 = vadd.f32 %v6926, %v7582
  %v7709 = vadd.f32 %v6927, %v7584
  %v7710 = vadd.f32 %v6928, %v7587
  %v7711 = vadd.f32 %v6929, %v7589
  %v7712 = vadd.f32 %v6930, %v7592
  %v7713 = vadd.f32 %v6931, %v7594
  %v7714 = vadd.f32 %v6932, %v7597
  %v7715 = vadd.f32 %v6933, %v7599
  %v7716 = vadd.f32 %v6934, %v7602
  %v7717 = vadd.f32 %v6935, %v7604
  %v7718 = vadd.f32 %v6936, %v7607
  %v7719 = vadd.f32 %v6937, %v7609
  %v7720 = vadd.f32 %v6938, %v7612
  %v7721 = vadd.f32 %v6939, %v7614
  %v7722 = vadd.f32 %v6940, %v7617
  %v7723 = vadd.f32 %v6941, %v7619
  %v7724 = vadd.f32 %v6942, %v7622
  %v7725 = vadd.f32 %v6943, %v7624
  %v7726 = vadd.f32 %v6944, %v7627
  %v7727 = vadd.f32 %v6945, %v7629
  %v7728 = vadd.f32 %v6946, %v7632
  %v7729 = vadd.f32 %v6947, %v7634
  %v7730 = vadd.f32 %v6948, %v7637
  %v7731 = vadd.f32 %v6949, %v7639
  %v7732 = vadd.f32 %v6950, %v7642
  %v7733 = vadd.f32 %v6951, %v7644
  %v7734 = vadd.f32 %v6952, %v7647
  %v7735 = vadd.f32 %v6953, %v7649
  %v7736 = vadd.f32 %v6954, %v7652
  %v7737 = vadd.f32 %v6955, %v7654
  %v7738 = vadd.f32 %v6956, %v7657
  %v7739 = vadd.f32 %v6957, %v7659
  %v7740 = vadd.f32 %v6958, %v7662
  %v7741 = vadd.f32 %v6959, %v7664
  %v7742 = vadd.f32 %v6960, %v7667
  %v7743 = vadd.f32 %v6961, %v7669
  %v7744 = vadd.f32 %v6962, %v7672
  %v7745 = vadd.f32 %v6963, %v7674
  %v7746 = vadd.f32 %v6964, %v7677
  %v7747 = vadd.f32 %v6965, %v7679
  %v7748 = vadd.f32 %v6966, %v7682
  %v7749 = vadd.f32 %v6967, %v7684
  %v7750 = vld [vmem:[%s3] sm:$0xff]
  %v7751 = vsel %vm1029, %v7686, 0.0
  %v7752 = vsel %vm1029, %v7687, 0.0
  %v7753 = vadd.f32 %v7751, %v7752
  %v7754 = vsel %vm1029, %v7688, 0.0
  %v7755 = vadd.f32 %v7753, %v7754
  %v7756 = vsel %vm1029, %v7689, 0.0
  %v7757 = vadd.f32 %v7755, %v7756
  %v7758 = vsel %vm1029, %v7690, 0.0
  %v7759 = vadd.f32 %v7757, %v7758
  %v7760 = vsel %vm1029, %v7691, 0.0
  %v7761 = vadd.f32 %v7759, %v7760
  %v7762 = vsel %vm1029, %v7692, 0.0
  %v7763 = vadd.f32 %v7761, %v7762
  %v7764 = vsel %vm1029, %v7693, 0.0
  %v7765 = vadd.f32 %v7763, %v7764
  %v7766 = vsel %vm1029, %v7694, 0.0
  %v7767 = vadd.f32 %v7765, %v7766
  %v7768 = vsel %vm1029, %v7695, 0.0
  %v7769 = vadd.f32 %v7767, %v7768
  %v7770 = vsel %vm1029, %v7696, 0.0
  %v7771 = vadd.f32 %v7769, %v7770
  %v7772 = vsel %vm1029, %v7697, 0.0
  %v7773 = vadd.f32 %v7771, %v7772
  %v7774 = vsel %vm1029, %v7698, 0.0
  %v7775 = vadd.f32 %v7773, %v7774
  %v7776 = vsel %vm1029, %v7699, 0.0
  %v7777 = vadd.f32 %v7775, %v7776
  %v7778 = vsel %vm1029, %v7700, 0.0
  %v7779 = vadd.f32 %v7777, %v7778
  %v7780 = vsel %vm1029, %v7701, 0.0
  %v7781 = vadd.f32 %v7779, %v7780
  %v7782 = vsel %vm1029, %v7702, 0.0
  %v7783 = vadd.f32 %v7781, %v7782
  %v7784 = vsel %vm1029, %v7703, 0.0
  %v7785 = vadd.f32 %v7783, %v7784
  %v7786 = vsel %vm1029, %v7704, 0.0
  %v7787 = vadd.f32 %v7785, %v7786
  %v7788 = vsel %vm1029, %v7705, 0.0
  %v7789 = vadd.f32 %v7787, %v7788
  %v7790 = vsel %vm1029, %v7706, 0.0
  %v7791 = vadd.f32 %v7789, %v7790
  %v7792 = vsel %vm1029, %v7707, 0.0
  %v7793 = vadd.f32 %v7791, %v7792
  %v7794 = vsel %vm1029, %v7708, 0.0
  %v7795 = vadd.f32 %v7793, %v7794
  %v7796 = vsel %vm1029, %v7709, 0.0
  %v7797 = vadd.f32 %v7795, %v7796
  %v7798 = vsel %vm1029, %v7710, 0.0
  %v7799 = vadd.f32 %v7797, %v7798
  %v7800 = vsel %vm1029, %v7711, 0.0
  %v7801 = vadd.f32 %v7799, %v7800
  %v7802 = vsel %vm1029, %v7712, 0.0
  %v7803 = vadd.f32 %v7801, %v7802
  %v7804 = vsel %vm1029, %v7713, 0.0
  %v7805 = vadd.f32 %v7803, %v7804
  %v7806 = vsel %vm1029, %v7714, 0.0
  %v7807 = vadd.f32 %v7805, %v7806
  %v7808 = vsel %vm1029, %v7715, 0.0
  %v7809 = vadd.f32 %v7807, %v7808
  %v7810 = vsel %vm1029, %v7716, 0.0
  %v7811 = vadd.f32 %v7809, %v7810
  %v7812 = vsel %vm1029, %v7717, 0.0
  %v7813 = vadd.f32 %v7811, %v7812
  %v7814 = vsel %vm1029, %v7718, 0.0
  %v7815 = vadd.f32 %v7813, %v7814
  %v7816 = vsel %vm1029, %v7719, 0.0
  %v7817 = vadd.f32 %v7815, %v7816
  %v7818 = vsel %vm1029, %v7720, 0.0
  %v7819 = vadd.f32 %v7817, %v7818
  %v7820 = vsel %vm1029, %v7721, 0.0
  %v7821 = vadd.f32 %v7819, %v7820
  %v7822 = vsel %vm1029, %v7722, 0.0
  %v7823 = vadd.f32 %v7821, %v7822
  %v7824 = vsel %vm1029, %v7723, 0.0
  %v7825 = vadd.f32 %v7823, %v7824
  %v7826 = vsel %vm1029, %v7724, 0.0
  %v7827 = vadd.f32 %v7825, %v7826
  %v7828 = vsel %vm1029, %v7725, 0.0
  %v7829 = vadd.f32 %v7827, %v7828
  %v7830 = vsel %vm1029, %v7726, 0.0
  %v7831 = vadd.f32 %v7829, %v7830
  %v7832 = vsel %vm1029, %v7727, 0.0
  %v7833 = vadd.f32 %v7831, %v7832
  %v7834 = vsel %vm1029, %v7728, 0.0
  %v7835 = vadd.f32 %v7833, %v7834
  %v7836 = vsel %vm1029, %v7729, 0.0
  %v7837 = vadd.f32 %v7835, %v7836
  %v7838 = vsel %vm1029, %v7730, 0.0
  %v7839 = vadd.f32 %v7837, %v7838
  %v7840 = vsel %vm1029, %v7731, 0.0
  %v7841 = vadd.f32 %v7839, %v7840
  %v7842 = vsel %vm1029, %v7732, 0.0
  %v7843 = vadd.f32 %v7841, %v7842
  %v7844 = vsel %vm1029, %v7733, 0.0
  %v7845 = vadd.f32 %v7843, %v7844
  %v7846 = vsel %vm1029, %v7734, 0.0
  %v7847 = vadd.f32 %v7845, %v7846
  %v7848 = vsel %vm1029, %v7735, 0.0
  %v7849 = vadd.f32 %v7847, %v7848
  %v7850 = vsel %vm1029, %v7736, 0.0
  %v7851 = vadd.f32 %v7849, %v7850
  %v7852 = vsel %vm1029, %v7737, 0.0
  %v7853 = vadd.f32 %v7851, %v7852
  %v7854 = vsel %vm1029, %v7738, 0.0
  %v7855 = vadd.f32 %v7853, %v7854
  %v7856 = vsel %vm1029, %v7739, 0.0
  %v7857 = vadd.f32 %v7855, %v7856
  %v7858 = vsel %vm1029, %v7740, 0.0
  %v7859 = vadd.f32 %v7857, %v7858
  %v7860 = vsel %vm1029, %v7741, 0.0
  %v7861 = vadd.f32 %v7859, %v7860
  %v7862 = vsel %vm1029, %v7742, 0.0
  %v7863 = vadd.f32 %v7861, %v7862
  %v7864 = vsel %vm1029, %v7743, 0.0
  %v7865 = vadd.f32 %v7863, %v7864
  %v7866 = vsel %vm1029, %v7744, 0.0
  %v7867 = vadd.f32 %v7865, %v7866
  %v7868 = vsel %vm1029, %v7745, 0.0
  %v7869 = vadd.f32 %v7867, %v7868
  %v7870 = vsel %vm1029, %v7746, 0.0
  %v7871 = vadd.f32 %v7869, %v7870
  %v7872 = vsel %vm1029, %v7747, 0.0
  %v7873 = vadd.f32 %v7871, %v7872
  %v7874 = vsel %vm1029, %v7748, 0.0
  %v7875 = vadd.f32 %v7873, %v7874
  %v7876 = vsel %vm1029, %v7749, 0.0
  %v7877 = vadd.f32 %v7875, %v7876
  %v7878 = vrot.slane %v7877, 4
  %v7879 = vadd.f32 %v7877, %v7878
  %v7880 = vrot.slane %v7879, 2
  %v7881 = vadd.f32 %v7879, %v7880
  %v7882 = vrot.slane %v7881, 1
  %v7883 = vadd.f32 %v7881, %v7882
  %v7884 = vadd.f32 %v7750, %v7883
  %7885 = vst.msk [vmem:[%s3] sm:$0xff] %vm1029, %v7884
  %v7886 = vld [vmem:[%s4] sm:$0xff]
  %v7887 = vmul.f32 %v7686, %v7686
  %v7888 = vmul.f32 %v7687, %v7687
  %v7889 = vmul.f32 %v7688, %v7688
  %v7890 = vmul.f32 %v7689, %v7689
  %v7891 = vmul.f32 %v7690, %v7690
  %v7892 = vmul.f32 %v7691, %v7691
  %v7893 = vmul.f32 %v7692, %v7692
  %v7894 = vmul.f32 %v7693, %v7693
  %v7895 = vmul.f32 %v7694, %v7694
  %v7896 = vmul.f32 %v7695, %v7695
  %v7897 = vmul.f32 %v7696, %v7696
  %v7898 = vmul.f32 %v7697, %v7697
  %v7899 = vmul.f32 %v7698, %v7698
  %v7900 = vmul.f32 %v7699, %v7699
  %v7901 = vmul.f32 %v7700, %v7700
  %v7902 = vmul.f32 %v7701, %v7701
  %v7903 = vmul.f32 %v7702, %v7702
  %v7904 = vmul.f32 %v7703, %v7703
  %v7905 = vmul.f32 %v7704, %v7704
  %v7906 = vmul.f32 %v7705, %v7705
  %v7907 = vmul.f32 %v7706, %v7706
  %v7908 = vmul.f32 %v7707, %v7707
  %v7909 = vmul.f32 %v7708, %v7708
  %v7910 = vmul.f32 %v7709, %v7709
  %v7911 = vmul.f32 %v7710, %v7710
  %v7912 = vmul.f32 %v7711, %v7711
  %v7913 = vmul.f32 %v7712, %v7712
  %v7914 = vmul.f32 %v7713, %v7713
  %v7915 = vmul.f32 %v7714, %v7714
  %v7916 = vmul.f32 %v7715, %v7715
  %v7917 = vmul.f32 %v7716, %v7716
  %v7918 = vmul.f32 %v7717, %v7717
  %v7919 = vmul.f32 %v7718, %v7718
  %v7920 = vmul.f32 %v7719, %v7719
  %v7921 = vmul.f32 %v7720, %v7720
  %v7922 = vmul.f32 %v7721, %v7721
  %v7923 = vmul.f32 %v7722, %v7722
  %v7924 = vmul.f32 %v7723, %v7723
  %v7925 = vmul.f32 %v7724, %v7724
  %v7926 = vmul.f32 %v7725, %v7725
  %v7927 = vmul.f32 %v7726, %v7726
  %v7928 = vmul.f32 %v7727, %v7727
  %v7929 = vmul.f32 %v7728, %v7728
  %v7930 = vmul.f32 %v7729, %v7729
  %v7931 = vmul.f32 %v7730, %v7730
  %v7932 = vmul.f32 %v7731, %v7731
  %v7933 = vmul.f32 %v7732, %v7732
  %v7934 = vmul.f32 %v7733, %v7733
  %v7935 = vmul.f32 %v7734, %v7734
  %v7936 = vmul.f32 %v7735, %v7735
  %v7937 = vmul.f32 %v7736, %v7736
  %v7938 = vmul.f32 %v7737, %v7737
  %v7939 = vmul.f32 %v7738, %v7738
  %v7940 = vmul.f32 %v7739, %v7739
  %v7941 = vmul.f32 %v7740, %v7740
  %v7942 = vmul.f32 %v7741, %v7741
  %v7943 = vmul.f32 %v7742, %v7742
  %v7944 = vmul.f32 %v7743, %v7743
  %v7945 = vmul.f32 %v7744, %v7744
  %v7946 = vmul.f32 %v7745, %v7745
  %v7947 = vmul.f32 %v7746, %v7746
  %v7948 = vmul.f32 %v7747, %v7747
  %v7949 = vmul.f32 %v7748, %v7748
  %v7950 = vmul.f32 %v7749, %v7749
  %v7951 = vsel %vm1029, %v7887, 0.0
  %v7952 = vsel %vm1029, %v7888, 0.0
  %v7953 = vadd.f32 %v7951, %v7952
  %v7954 = vsel %vm1029, %v7889, 0.0
  %v7955 = vadd.f32 %v7953, %v7954
  %v7956 = vsel %vm1029, %v7890, 0.0
  %v7957 = vadd.f32 %v7955, %v7956
  %v7958 = vsel %vm1029, %v7891, 0.0
  %v7959 = vadd.f32 %v7957, %v7958
  %v7960 = vsel %vm1029, %v7892, 0.0
  %v7961 = vadd.f32 %v7959, %v7960
  %v7962 = vsel %vm1029, %v7893, 0.0
  %v7963 = vadd.f32 %v7961, %v7962
  %v7964 = vsel %vm1029, %v7894, 0.0
  %v7965 = vadd.f32 %v7963, %v7964
  %v7966 = vsel %vm1029, %v7895, 0.0
  %v7967 = vadd.f32 %v7965, %v7966
  %v7968 = vsel %vm1029, %v7896, 0.0
  %v7969 = vadd.f32 %v7967, %v7968
  %v7970 = vsel %vm1029, %v7897, 0.0
  %v7971 = vadd.f32 %v7969, %v7970
  %v7972 = vsel %vm1029, %v7898, 0.0
  %v7973 = vadd.f32 %v7971, %v7972
  %v7974 = vsel %vm1029, %v7899, 0.0
  %v7975 = vadd.f32 %v7973, %v7974
  %v7976 = vsel %vm1029, %v7900, 0.0
  %v7977 = vadd.f32 %v7975, %v7976
  %v7978 = vsel %vm1029, %v7901, 0.0
  %v7979 = vadd.f32 %v7977, %v7978
  %v7980 = vsel %vm1029, %v7902, 0.0
  %v7981 = vadd.f32 %v7979, %v7980
  %v7982 = vsel %vm1029, %v7903, 0.0
  %v7983 = vadd.f32 %v7981, %v7982
  %v7984 = vsel %vm1029, %v7904, 0.0
  %v7985 = vadd.f32 %v7983, %v7984
  %v7986 = vsel %vm1029, %v7905, 0.0
  %v7987 = vadd.f32 %v7985, %v7986
  %v7988 = vsel %vm1029, %v7906, 0.0
  %v7989 = vadd.f32 %v7987, %v7988
  %v7990 = vsel %vm1029, %v7907, 0.0
  %v7991 = vadd.f32 %v7989, %v7990
  %v7992 = vsel %vm1029, %v7908, 0.0
  %v7993 = vadd.f32 %v7991, %v7992
  %v7994 = vsel %vm1029, %v7909, 0.0
  %v7995 = vadd.f32 %v7993, %v7994
  %v7996 = vsel %vm1029, %v7910, 0.0
  %v7997 = vadd.f32 %v7995, %v7996
  %v7998 = vsel %vm1029, %v7911, 0.0
  %v7999 = vadd.f32 %v7997, %v7998
  %v8000 = vsel %vm1029, %v7912, 0.0
  %v8001 = vadd.f32 %v7999, %v8000
  %v8002 = vsel %vm1029, %v7913, 0.0
  %v8003 = vadd.f32 %v8001, %v8002
  %v8004 = vsel %vm1029, %v7914, 0.0
  %v8005 = vadd.f32 %v8003, %v8004
  %v8006 = vsel %vm1029, %v7915, 0.0
  %v8007 = vadd.f32 %v8005, %v8006
  %v8008 = vsel %vm1029, %v7916, 0.0
  %v8009 = vadd.f32 %v8007, %v8008
  %v8010 = vsel %vm1029, %v7917, 0.0
  %v8011 = vadd.f32 %v8009, %v8010
  %v8012 = vsel %vm1029, %v7918, 0.0
  %v8013 = vadd.f32 %v8011, %v8012
  %v8014 = vsel %vm1029, %v7919, 0.0
  %v8015 = vadd.f32 %v8013, %v8014
  %v8016 = vsel %vm1029, %v7920, 0.0
  %v8017 = vadd.f32 %v8015, %v8016
  %v8018 = vsel %vm1029, %v7921, 0.0
  %v8019 = vadd.f32 %v8017, %v8018
  %v8020 = vsel %vm1029, %v7922, 0.0
  %v8021 = vadd.f32 %v8019, %v8020
  %v8022 = vsel %vm1029, %v7923, 0.0
  %v8023 = vadd.f32 %v8021, %v8022
  %v8024 = vsel %vm1029, %v7924, 0.0
  %v8025 = vadd.f32 %v8023, %v8024
  %v8026 = vsel %vm1029, %v7925, 0.0
  %v8027 = vadd.f32 %v8025, %v8026
  %v8028 = vsel %vm1029, %v7926, 0.0
  %v8029 = vadd.f32 %v8027, %v8028
  %v8030 = vsel %vm1029, %v7927, 0.0
  %v8031 = vadd.f32 %v8029, %v8030
  %v8032 = vsel %vm1029, %v7928, 0.0
  %v8033 = vadd.f32 %v8031, %v8032
  %v8034 = vsel %vm1029, %v7929, 0.0
  %v8035 = vadd.f32 %v8033, %v8034
  %v8036 = vsel %vm1029, %v7930, 0.0
  %v8037 = vadd.f32 %v8035, %v8036
  %v8038 = vsel %vm1029, %v7931, 0.0
  %v8039 = vadd.f32 %v8037, %v8038
  %v8040 = vsel %vm1029, %v7932, 0.0
  %v8041 = vadd.f32 %v8039, %v8040
  %v8042 = vsel %vm1029, %v7933, 0.0
  %v8043 = vadd.f32 %v8041, %v8042
  %v8044 = vsel %vm1029, %v7934, 0.0
  %v8045 = vadd.f32 %v8043, %v8044
  %v8046 = vsel %vm1029, %v7935, 0.0
  %v8047 = vadd.f32 %v8045, %v8046
  %v8048 = vsel %vm1029, %v7936, 0.0
  %v8049 = vadd.f32 %v8047, %v8048
  %v8050 = vsel %vm1029, %v7937, 0.0
  %v8051 = vadd.f32 %v8049, %v8050
  %v8052 = vsel %vm1029, %v7938, 0.0
  %v8053 = vadd.f32 %v8051, %v8052
  %v8054 = vsel %vm1029, %v7939, 0.0
  %v8055 = vadd.f32 %v8053, %v8054
  %v8056 = vsel %vm1029, %v7940, 0.0
  %v8057 = vadd.f32 %v8055, %v8056
  %v8058 = vsel %vm1029, %v7941, 0.0
  %v8059 = vadd.f32 %v8057, %v8058
  %v8060 = vsel %vm1029, %v7942, 0.0
  %v8061 = vadd.f32 %v8059, %v8060
  %v8062 = vsel %vm1029, %v7943, 0.0
  %v8063 = vadd.f32 %v8061, %v8062
  %v8064 = vsel %vm1029, %v7944, 0.0
  %v8065 = vadd.f32 %v8063, %v8064
  %v8066 = vsel %vm1029, %v7945, 0.0
  %v8067 = vadd.f32 %v8065, %v8066
  %v8068 = vsel %vm1029, %v7946, 0.0
  %v8069 = vadd.f32 %v8067, %v8068
  %v8070 = vsel %vm1029, %v7947, 0.0
  %v8071 = vadd.f32 %v8069, %v8070
  %v8072 = vsel %vm1029, %v7948, 0.0
  %v8073 = vadd.f32 %v8071, %v8072
  %v8074 = vsel %vm1029, %v7949, 0.0
  %v8075 = vadd.f32 %v8073, %v8074
  %v8076 = vsel %vm1029, %v7950, 0.0
  %v8077 = vadd.f32 %v8075, %v8076
  %v8078 = vrot.slane %v8077, 4
  %v8079 = vadd.f32 %v8077, %v8078
  %v8080 = vrot.slane %v8079, 2
  %v8081 = vadd.f32 %v8079, %v8080
  %v8082 = vrot.slane %v8081, 1
  %v8083 = vadd.f32 %v8081, %v8082
  %v8084 = vadd.f32 %v7886, %v8083
  %8085 = vst.msk [vmem:[%s4] sm:$0xff] %vm1029, %v8084
  %8086 = vxpose.xlu0.b32.start [1/16] %v7686, 128
  %8087 = vxpose.xlu0.b32.cont [2/16] %v7687, 128
  %8088 = vxpose.xlu0.b32.cont [3/16] %v7688, 128
  %8089 = vxpose.xlu0.b32.cont [4/16] %v7689, 128
  %8090 = vxpose.xlu0.b32.cont [5/16] %v7690, 128
  %8091 = vxpose.xlu0.b32.cont [6/16] %v7691, 128
  %8092 = vxpose.xlu0.b32.cont [7/16] %v7692, 128
  %8093 = vxpose.xlu0.b32.cont [8/16] %v7693, 128
  %8094 = vxpose.xlu0.b32.cont [9/16] %v7694, 128
  %8095 = vxpose.xlu0.b32.cont [10/16] %v7695, 128
  %8096 = vxpose.xlu0.b32.cont [11/16] %v7696, 128
  %8097 = vxpose.xlu0.b32.cont [12/16] %v7697, 128
  %8098 = vxpose.xlu0.b32.cont [13/16] %v7698, 128
  %8099 = vxpose.xlu0.b32.cont [14/16] %v7699, 128
  %8100 = vxpose.xlu0.b32.cont [15/16] %v7700, 128
  %8101 = vxpose.xlu0.b32.end [16/16] %v7701, 128
  %v8102 = vpop.trf.xlu0
  %v8103 = vpop.trf.xlu0
  %v8104 = vpop.trf.xlu0
  %v8105 = vpop.trf.xlu0
  %v8106 = vpop.trf.xlu0
  %v8107 = vpop.trf.xlu0
  %v8108 = vpop.trf.xlu0
  %v8109 = vpop.trf.xlu0
  %v8110 = vpop.trf.xlu0
  %v8111 = vpop.trf.xlu0
  %v8112 = vpop.trf.xlu0
  %v8113 = vpop.trf.xlu0
  %v8114 = vpop.trf.xlu0
  %v8115 = vpop.trf.xlu0
  %v8116 = vpop.trf.xlu0
  %v8117 = vpop.trf.xlu0
  %8118 = vxpose.xlu0.b32.start [1/16] %v7702, 128
  %8119 = vxpose.xlu0.b32.cont [2/16] %v7703, 128
  %8120 = vxpose.xlu0.b32.cont [3/16] %v7704, 128
  %8121 = vxpose.xlu0.b32.cont [4/16] %v7705, 128
  %8122 = vxpose.xlu0.b32.cont [5/16] %v7706, 128
  %8123 = vxpose.xlu0.b32.cont [6/16] %v7707, 128
  %8124 = vxpose.xlu0.b32.cont [7/16] %v7708, 128
  %8125 = vxpose.xlu0.b32.cont [8/16] %v7709, 128
  %8126 = vxpose.xlu0.b32.cont [9/16] %v7710, 128
  %8127 = vxpose.xlu0.b32.cont [10/16] %v7711, 128
  %8128 = vxpose.xlu0.b32.cont [11/16] %v7712, 128
  %8129 = vxpose.xlu0.b32.cont [12/16] %v7713, 128
  %8130 = vxpose.xlu0.b32.cont [13/16] %v7714, 128
  %8131 = vxpose.xlu0.b32.cont [14/16] %v7715, 128
  %8132 = vxpose.xlu0.b32.cont [15/16] %v7716, 128
  %8133 = vxpose.xlu0.b32.end [16/16] %v7717, 128
  %v8134 = vpop.trf.xlu0
  %v8135 = vpop.trf.xlu0
  %v8136 = vpop.trf.xlu0
  %v8137 = vpop.trf.xlu0
  %v8138 = vpop.trf.xlu0
  %v8139 = vpop.trf.xlu0
  %v8140 = vpop.trf.xlu0
  %v8141 = vpop.trf.xlu0
  %v8142 = vpop.trf.xlu0
  %v8143 = vpop.trf.xlu0
  %v8144 = vpop.trf.xlu0
  %v8145 = vpop.trf.xlu0
  %v8146 = vpop.trf.xlu0
  %v8147 = vpop.trf.xlu0
  %v8148 = vpop.trf.xlu0
  %v8149 = vpop.trf.xlu0
  %v8150 = vpack.c.bf16 %v8134, %v8102
  %8151 = vst [vmem:[%s52] sm:$0xff] %v8150
  %8152 = vxpose.xlu0.b32.start [1/16] %v7718, 128
  %8153 = vxpose.xlu0.b32.cont [2/16] %v7719, 128
  %8154 = vxpose.xlu0.b32.cont [3/16] %v7720, 128
  %8155 = vxpose.xlu0.b32.cont [4/16] %v7721, 128
  %8156 = vxpose.xlu0.b32.cont [5/16] %v7722, 128
  %8157 = vxpose.xlu0.b32.cont [6/16] %v7723, 128
  %8158 = vxpose.xlu0.b32.cont [7/16] %v7724, 128
  %8159 = vxpose.xlu0.b32.cont [8/16] %v7725, 128
  %8160 = vxpose.xlu0.b32.cont [9/16] %v7726, 128
  %8161 = vxpose.xlu0.b32.cont [10/16] %v7727, 128
  %8162 = vxpose.xlu0.b32.cont [11/16] %v7728, 128
  %8163 = vxpose.xlu0.b32.cont [12/16] %v7729, 128
  %8164 = vxpose.xlu0.b32.cont [13/16] %v7730, 128
  %8165 = vxpose.xlu0.b32.cont [14/16] %v7731, 128
  %8166 = vxpose.xlu0.b32.cont [15/16] %v7732, 128
  %8167 = vxpose.xlu0.b32.end [16/16] %v7733, 128
  %v8168 = vpop.trf.xlu0
  %v8169 = vpop.trf.xlu0
  %v8170 = vpop.trf.xlu0
  %v8171 = vpop.trf.xlu0
  %v8172 = vpop.trf.xlu0
  %v8173 = vpop.trf.xlu0
  %v8174 = vpop.trf.xlu0
  %v8175 = vpop.trf.xlu0
  %v8176 = vpop.trf.xlu0
  %v8177 = vpop.trf.xlu0
  %v8178 = vpop.trf.xlu0
  %v8179 = vpop.trf.xlu0
  %v8180 = vpop.trf.xlu0
  %v8181 = vpop.trf.xlu0
  %v8182 = vpop.trf.xlu0
  %v8183 = vpop.trf.xlu0
  %8184 = vxpose.xlu0.b32.start [1/16] %v7734, 128
  %8185 = vxpose.xlu0.b32.cont [2/16] %v7735, 128
  %8186 = vxpose.xlu0.b32.cont [3/16] %v7736, 128
  %8187 = vxpose.xlu0.b32.cont [4/16] %v7737, 128
  %8188 = vxpose.xlu0.b32.cont [5/16] %v7738, 128
  %8189 = vxpose.xlu0.b32.cont [6/16] %v7739, 128
  %8190 = vxpose.xlu0.b32.cont [7/16] %v7740, 128
  %8191 = vxpose.xlu0.b32.cont [8/16] %v7741, 128
  %8192 = vxpose.xlu0.b32.cont [9/16] %v7742, 128
  %8193 = vxpose.xlu0.b32.cont [10/16] %v7743, 128
  %8194 = vxpose.xlu0.b32.cont [11/16] %v7744, 128
  %8195 = vxpose.xlu0.b32.cont [12/16] %v7745, 128
  %8196 = vxpose.xlu0.b32.cont [13/16] %v7746, 128
  %8197 = vxpose.xlu0.b32.cont [14/16] %v7747, 128
  %8198 = vxpose.xlu0.b32.cont [15/16] %v7748, 128
  %8199 = vxpose.xlu0.b32.end [16/16] %v7749, 128
  %v8200 = vpop.trf.xlu0
  %v8201 = vpop.trf.xlu0
  %v8202 = vpop.trf.xlu0
  %v8203 = vpop.trf.xlu0
  %v8204 = vpop.trf.xlu0
  %v8205 = vpop.trf.xlu0
  %v8206 = vpop.trf.xlu0
  %v8207 = vpop.trf.xlu0
  %v8208 = vpop.trf.xlu0
  %v8209 = vpop.trf.xlu0
  %v8210 = vpop.trf.xlu0
  %v8211 = vpop.trf.xlu0
  %v8212 = vpop.trf.xlu0
  %v8213 = vpop.trf.xlu0
  %v8214 = vpop.trf.xlu0
  %v8215 = vpop.trf.xlu0
  %v8216 = vpack.c.bf16 %v8200, %v8168
  %s8217 = scalar_lea.vmem %s52, 8
  %8218 = vst [vmem:[%s8217] sm:$0xff] %v8216
  %s8219 = sadd.s32 0, 0
  %s8220 = smul.u32 2, %s8219
  %p8221 = scmp.lt.s32.totalorder %s8220, 1
  %s8222 = scalar_select %p8221, %s8220, 1
  %s8223 = smul.addr %s8222, 2
  %s8224 = smul.addr %s8223, 4
  %s8225 = scalar_lea.vmem %s2, %s8224
  // Predicated region
  $region14: #{conv_bn_relu.2} parent=0 // pred_check
    _
  $region15: #{conv_bn_relu.2} parent=0 // pred_check_branch
    %8227 = sbr.rel (0) target = $region17
  $region16: #{conv_bn_relu.2} parent=0 // pred_region
    %s8228 = sadd.s32 0, 0
    %s8229 = smul.u32 2, %s8228
  $region17: #{conv_bn_relu.2} parent=0 // pred_fallthru
    _
  // Predicated region
  $region18: #{conv_bn_relu.2} parent=0 // pred_check
    _
  $region19: #{conv_bn_relu.2} parent=0 // pred_check_branch
    %8231 = sbr.rel (0) target = $region21
  $region20: #{conv_bn_relu.2} parent=0 // pred_region
    _
  $region21: #{conv_bn_relu.2} parent=0 // pred_fallthru
    _
  // Predicated region
  $region22: #{conv_bn_relu.2} parent=0 // pred_check
    _
  $region23: #{conv_bn_relu.2} parent=0 // pred_check_branch
    %8233 = sbr.rel (0) target = $region25
  $region24: #{conv_bn_relu.2} parent=0 // pred_region
    _
  $region25: #{conv_bn_relu.2} parent=0 // pred_fallthru
    _
  // Predicated region
  $region26: #{conv_bn_relu.2} parent=0 // pred_check
    _
  $region27: #{conv_bn_relu.2} parent=0 // pred_check_branch
    %8235 = sbr.rel (0) target = $region29
  $region28: #{conv_bn_relu.2} parent=0 // pred_region
    %s8236 = sadd.s32 0, 0
    %s8237 = smul.u32 2, %s8236
    %p8238 = scmp.lt.s32.totalorder %s8237, 1
    %s8239 = scalar_select %p8238, %s8237, 1
    %s8240 = smul.addr %s8239, 2
    %s8241 = smul.addr %s8240, 4
    %s8242 = scalar_lea.vmem %s2, %s8241
  $region29: #{conv_bn_relu.2} parent=0 // pred_fallthru
    _
  // Predicated region
  $region30: #{conv_bn_relu.2} parent=0 // pred_check
    _
  $region31: #{conv_bn_relu.2} parent=0 // pred_check_branch
    %8244 = sbr.rel (0) target = $region33
  $region32: #{conv_bn_relu.2} parent=0 // pred_region
    _
  $region33: #{conv_bn_relu.2} parent=0 // pred_fallthru
    _
  // Predicated region
  $region34: #{conv_bn_relu.2} parent=0 // pred_check
    _
  $region35: #{conv_bn_relu.2} parent=0 // pred_check_branch
    %8246 = sbr.rel (0) target = $region37
  $region36: #{conv_bn_relu.2} parent=0 // pred_region
    _
  $region37: #{conv_bn_relu.2} parent=0 // pred_fallthru
    _

</llo_original>
